<compile_context>
chip_gen: v5e
topology: v5e:2x2
jax: 0.10.0
libtpu: 0.0.40
codegen_flags: <defaults>
</compile_context>

<pallas_src>
import jax
import jax.numpy as jnp
import numpy as np
from jax.experimental import pallas as pl
from jax.experimental.pallas import tpu as pltpu


# ----------------------------- configuration ------------------------------ #
DIM          = 32          # C
WINDOW       = (8, 8)      # (Wh, Ww)  -> N = 64
NUM_HEADS    = 4
GLOBAL_HEADS = 2
MASK_LEVELS  = 3
HEAD_DIM     = DIM // NUM_HEADS                  # 8
HEAD_RATIO   = NUM_HEADS // GLOBAL_HEADS         # 2
TOTAL_HEADS  = 2 * GLOBAL_HEADS + NUM_HEADS      # 8
TOTAL_DIM    = HEAD_DIM * TOTAL_HEADS            # 64 (un-fused, reference only)
QK_DIM       = 2 * GLOBAL_HEADS * HEAD_DIM       # 32 (scaled-Q + K columns)
FUSED_DIM    = QK_DIM + NUM_HEADS * DIM          # 160 (Q | K | per-head V@proj)
N_TOKENS     = WINDOW[0] * WINDOW[1]             # 64
SCALE        = HEAD_DIM ** (-0.5)


def _vmem_capacity_bytes():
    try:
        return int(pltpu.get_tpu_info().vmem_capacity_bytes)
    except Exception:
        return 64 * 1024 * 1024          # conservative (v7x)


def _default_vmem_limit():
    # ~75% of physical VMEM with headroom, capped: 96 MiB on 128-MiB parts
    # (v5e/v6e), 48 MiB on v7x's 64 MiB.
    return int(min(100 * 1024 * 1024, (_vmem_capacity_bytes() * 3) // 4))


def _default_block_windows():
    # Larger tiles where VMEM allows (amortizes ~0.35us/step pipeline overhead).
    return 256 if _vmem_capacity_bytes() >= 96 * 1024 * 1024 else 128


# ------------------------------- the kernel -------------------------------- #
def _fishpp_kernel(x_ref, wqkv_ref, bqkv_ref, mw_ref, bmw_ref, bproj_ref, o_ref):
    """One grid step == BB windows.

    x_ref    : (BB, N, C)          bf16
    wqkv_ref : (C, FUSED_DIM)      bf16  [scaled Q | K | per-head (V @ proj_w[h])]
    bqkv_ref : (1, FUSED_DIM)      f32   (same folding as wqkv)
    mw_ref   : (G, HR, N, N)       f32   mask weights
    bmw_ref  : (G, HR, N, N)       f32   relative-position-bias * mask weights
    bproj_ref: (1, C)              f32   output-projection bias
    o_ref    : (BB, N, C)          bf16
    """
    bb = x_ref.shape[0]
    n, c = N_TOKENS, DIM

    # --- fused QKV(+proj-folded V) projection on the flattened (BB*N, C) slab ---
    x2 = x_ref[...].reshape(bb * n, c)                                   # bf16
    qkv = jnp.dot(x2, wqkv_ref[...],
                  preferred_element_type=jnp.float32) + bqkv_ref[...]
    qkv3 = qkv.astype(jnp.bfloat16).reshape(bb, n, FUSED_DIM)

    # --- per-global-head attention; accumulate proj-folded PV products --- #
    acc = None
    for g in range(GLOBAL_HEADS):
        q_g = qkv3[:, :, g * HEAD_DIM:(g + 1) * HEAD_DIM]                # (BB,N,hd)
        k_g = qkv3[:, :, (GLOBAL_HEADS + g) * HEAD_DIM:
                         (GLOBAL_HEADS + g + 1) * HEAD_DIM]              # (BB,N,hd)
        # scale already folded into q: s_g = q @ k^T, batched over BB
        s_g = jnp.einsum("bnd,bmd->bnm", q_g, k_g,
                         preferred_element_type=jnp.float32)             # (BB,N,N)

        for r in range(HEAD_RATIO):
            h = g * HEAD_RATIO + r
            # logits = (q@kT + relb[g]) * mw[g,r]  ==  s_g*mw + (relb*mw)
            logits = s_g * mw_ref[g, r] + bmw_ref[g, r]                  # (BB,N,N)

            # numerically-stable softmax with DEFERRED normalization:
            # keep un-normalized exp (f32 row sums, bf16 matmul operand),
            # scale the (BB,N,C) PV result by the EUP reciprocal afterwards.
            m = jnp.max(logits, axis=-1, keepdims=True)
            p = jnp.exp(logits - m)                                      # f32, <=1
            rs = jnp.sum(p, axis=-1, keepdims=True)                      # f32
            inv_rs = pl.reciprocal(rs, approx=True)                      # (BB,N,1)

            # V columns already carry the per-head output projection (C wide).
            vproj_h = qkv3[:, :, QK_DIM + h * DIM:QK_DIM + (h + 1) * DIM]
            contrib = jnp.einsum("bnm,bmc->bnc", p.astype(jnp.bfloat16),
                                 vproj_h,
                                 preferred_element_type=jnp.float32) * inv_rs
            acc = contrib if acc is None else acc + contrib

    out = acc + bproj_ref[...]                                           # (BB,N,C)
    o_ref[...] = out.astype(o_ref.dtype)


# ------------------------------ JAX wrapper -------------------------------- #
def _choose_bb(B_, block_windows, min_grid_steps):
    bb = max(1, min(block_windows, B_))
    # >= min_grid_steps grid steps (both TensorCores busy on v7x megacore).
    if min_grid_steps > 1 and B_ >= min_grid_steps:
        bb = min(bb, max(1, B_ // min_grid_steps))
    # Prefer a BB that divides B_ (avoids the wrapper-side jnp.pad of x).
    for cand in range(bb, max(1, bb // 2), -1):
        if B_ % cand == 0:
            return cand
    return bb


def window_attention_fishpp(x, params,
                            block_windows=None,
                            vmem_limit_bytes=None,
                            min_grid_steps=2,
                            out_dtype=jnp.bfloat16):
    """x: (B_, N, C) float32. Returns (B_, N, C) in `out_dtype` (default bf16)."""
    B_, N, C = x.shape
    assert N == N_TOKENS and C == DIM

    if block_windows is None:
        block_windows = _default_block_windows()
    if vmem_limit_bytes is None:
        vmem_limit_bytes = _default_vmem_limit()

    # --- input-independent parameter prep (plain JAX glue, done once) --- #
    # relative position bias: table gather -> (G, N, N)
    relb = params["rel_pos_table"][params["rel_pos_index"].reshape(-1)]
    relb = relb.reshape(N, N, GLOBAL_HEADS).transpose(2, 0, 1)          # (G,N,N)

    # mask weights: masks (N,N,L) @ mask_proj (L,num_heads) -> (G,HR,N,N)
    mw = jnp.einsum("nml,lh->nmh", params["masks"], params["mask_proj"])
    mw = mw.reshape(N, N, GLOBAL_HEADS, HEAD_RATIO).transpose(2, 3, 0, 1)
    mw = mw.astype(jnp.float32)
    bmw = (relb[:, None] * mw).astype(jnp.float32)                      # (G,HR,N,N)

    # Fused projection weight, all folding done in f32 then cast ONCE to bf16:
    #   Q columns:  qkv_w[:, q] * scale           (softmax scale folded)
    #   K columns:  qkv_w[:, k]
    #   V columns:  qkv_w[:, v_h] @ proj_w[h]     (output projection folded,
    #               bias b_v_h @ proj_w[h] folded the same way; exact because
    #               softmax rows sum to 1 after the deferred 1/rs scaling)
    qkv_w, qkv_b = params["qkv_w"], params["qkv_b"]
    proj_w = params["proj_w"]
    g_dim = GLOBAL_HEADS * HEAD_DIM
    wq = qkv_w[:, :g_dim] * SCALE
    bq = qkv_b[:g_dim] * SCALE
    wk = qkv_w[:, g_dim:2 * g_dim]
    bk = qkv_b[g_dim:2 * g_dim]
    w_cols, b_cols = [wq, wk], [bq, bk]
    for h in range(NUM_HEADS):
        lo = 2 * g_dim + h * HEAD_DIM
        hi = lo + HEAD_DIM
        p_h = proj_w[h * HEAD_DIM:(h + 1) * HEAD_DIM, :]                # (hd, C)
        w_cols.append(qkv_w[:, lo:hi] @ p_h)                            # (C, C)
        b_cols.append(qkv_b[lo:hi] @ p_h)                               # (C,)
    wqkv = jnp.concatenate(w_cols, axis=1).astype(jnp.bfloat16)         # (C,160)
    bqkv = jnp.concatenate(b_cols).reshape(1, FUSED_DIM).astype(jnp.float32)
    bproj = params["proj_b"].reshape(1, DIM).astype(jnp.float32)

    # bf16 activations at the kernel boundary (MXU-native, halves DMA/VMEM)
    x_bf = x.astype(jnp.bfloat16)

    # --- batch many windows per grid step; pad batch axis only if unavoidable ---
    BB = _choose_bb(B_, block_windows, min_grid_steps)
    B_pad = pl.cdiv(B_, BB) * BB
    if B_pad != B_:
        x_bf = jnp.pad(x_bf, ((0, B_pad - B_), (0, 0), (0, 0)))
    grid = (B_pad // BB,)

    const = lambda shape: pl.BlockSpec(shape, lambda b: (0,) * len(shape))

    out = pl.pallas_call(
        _fishpp_kernel,
        out_shape=jax.ShapeDtypeStruct((B_pad, N, C), out_dtype),
        grid_spec=pltpu.PrefetchScalarGridSpec(
            num_scalar_prefetch=0,
            grid=grid,
            in_specs=[
                pl.BlockSpec((BB, N, C), lambda b: (b, 0, 0)),          # x
                const((C, FUSED_DIM)),                                  # fused W
                const((1, FUSED_DIM)),                                  # fused b
                const((GLOBAL_HEADS, HEAD_RATIO, N, N)),                # mask w
                const((GLOBAL_HEADS, HEAD_RATIO, N, N)),                # relb*mw
                const((1, C)),                                          # proj b
            ],
            out_specs=pl.BlockSpec((BB, N, C), lambda b: (b, 0, 0)),
        ),
        compiler_params=pltpu.CompilerParams(
            dimension_semantics=("parallel",),
            vmem_limit_bytes=vmem_limit_bytes),
    )(x_bf, wqkv, bqkv, mw, bmw, bproj)

    return out[:B_] if B_pad != B_ else out


# --------------------------- pure-JAX reference ----------------------------- #
def reference(x, params):
    B_, N, C = x.shape
    qkv = jnp.einsum("bnc,cd->bnd", x, params["qkv_w"]) + params["qkv_b"]
    qkv = qkv.reshape(B_, N, TOTAL_HEADS, HEAD_DIM).transpose(0, 2, 1, 3)
    q = qkv[:, :GLOBAL_HEADS] * SCALE
    k = qkv[:, GLOBAL_HEADS:2 * GLOBAL_HEADS]
    v = qkv[:, 2 * GLOBAL_HEADS:]
    attn = jnp.einsum("bgnd,bgmd->bgnm", q, k)                       # (B,G,N,N)
    relb = params["rel_pos_table"][params["rel_pos_index"].reshape(-1)]
    relb = relb.reshape(N, N, GLOBAL_HEADS).transpose(2, 0, 1)
    attn = attn + relb[None]
    mw = jnp.einsum("nml,lh->nmh", params["masks"], params["mask_proj"])
    mw = mw.reshape(1, N, N, GLOBAL_HEADS, HEAD_RATIO).transpose(0, 3, 1, 2, 4)
    attn = attn[..., None] * mw                                      # (B,G,N,N,hr)
    attn = attn.transpose(0, 1, 4, 2, 3).reshape(B_, NUM_HEADS, N, N)
    attn = jax.nn.softmax(attn, axis=-1)
    out = jnp.einsum("bhnm,bhmd->bhnd", attn, v)
    out = out.transpose(0, 2, 1, 3).reshape(B_, N, C)
    out = jnp.einsum("bnc,cd->bnd", out, params["proj_w"]) + params["proj_b"]
    return out


# ------------------------------ param setup -------------------------------- #
def make_params(key):
    ks = jax.random.split(key, 8)
    Wh, Ww = WINDOW
    # relative position index (host side, numpy)
    coords = np.stack(np.meshgrid(np.arange(Wh), np.arange(Ww), indexing="ij"))
    cf = coords.reshape(2, -1)
    rel = cf[:, :, None] - cf[:, None, :]
    rel = rel.transpose(1, 2, 0)
    rel[:, :, 0] += Wh - 1
    rel[:, :, 1] += Ww - 1
    rel[:, :, 0] *= 2 * Ww - 1
    rel_index = rel.sum(-1).astype(np.int32)                       # (N, N)

    return {
        "qkv_w":  jax.random.normal(ks[0], (DIM, TOTAL_DIM), jnp.float32) * 0.05,
        "qkv_b":  jax.random.normal(ks[1], (TOTAL_DIM,), jnp.float32) * 0.01,
        "proj_w": jax.random.normal(ks[2], (DIM, DIM), jnp.float32) * 0.05,
        "proj_b": jax.random.normal(ks[3], (DIM,), jnp.float32) * 0.01,
        "rel_pos_table": jax.random.normal(
            ks[4], ((2 * Wh - 1) * (2 * Ww - 1), GLOBAL_HEADS), jnp.float32) * 0.02,
        "rel_pos_index": jnp.asarray(rel_index),
        "mask_proj": jnp.ones((MASK_LEVELS, NUM_HEADS), jnp.float32)
                     + jax.random.normal(ks[5], (MASK_LEVELS, NUM_HEADS),
                                         jnp.float32) * 0.1,
        "masks": jax.random.uniform(ks[6], (N_TOKENS, N_TOKENS, MASK_LEVELS),
                                    jnp.float32),
    }
# TODO(synk): 'mix' global_proj_type, non_linear head_proj, shift-window mask
#             and dropout branches are not implemented (eval, 'full', mask=None).


if __name__ == "__main__":
    key = jax.random.PRNGKey(0)
    kp, kx, kx2 = jax.random.split(key, 3)
    params = make_params(kp)

    # bf16 MXU operands + bf16 output + approx reciprocal => relaxed tolerance
    RTOL = ATOL = 2e-2

    # Path 1: B_=16 windows, default tiling -> BB=8, grid=(2,) (2 parallel steps).
    B_ = 16
    x = jax.random.normal(kx, (B_, N_TOKENS, DIM), jnp.float32)
    ref = jax.block_until_ready(reference(x, params))
    out = jax.block_until_ready(window_attention_fishpp(x, params))
    np.testing.assert_allclose(np.asarray(out, dtype=np.float32),
                               np.asarray(ref), rtol=RTOL, atol=ATOL)

    # Path 2: ragged batch (B_=7, BB=3) -> exercises the padding fallback.
    x2 = jax.random.normal(kx2, (7, N_TOKENS, DIM), jnp.float32)
    ref2 = jax.block_until_ready(reference(x2, params))
    out2 = jax.block_until_ready(
        window_attention_fishpp(x2, params, block_windows=3, min_grid_steps=1))
    np.testing.assert_allclose(np.asarray(out2, dtype=np.float32),
                               np.asarray(ref2), rtol=RTOL, atol=ATOL)

    print("KERNEL_OK")
</pallas_src>

<mosaic_0001>
module attributes {stable_mosaic.version = 11 : i64} {
  func.func @_fishpp_kernel(%arg0: i32, %arg1: memref<8x64x32xbf16, #tpu.memory_space<vmem>>, %arg2: memref<32x160xbf16, #tpu.memory_space<vmem>>, %arg3: memref<1x160xf32, #tpu.memory_space<vmem>>, %arg4: memref<2x2x64x64xf32, #tpu.memory_space<vmem>>, %arg5: memref<2x2x64x64xf32, #tpu.memory_space<vmem>>, %arg6: memref<1x32xf32, #tpu.memory_space<vmem>>, %arg7: memref<8x64x32xbf16, #tpu.memory_space<vmem>>) attributes {dimension_semantics = [#tpu.dimension_semantics<parallel>], iteration_bounds = array<i64: 2>, scalar_prefetch = 0 : i64, scratch_operands = 0 : i64, tpu.core_type = #tpu.core_type<tc>, window_params = [{transform_indices = @transform_0, window_bounds = array<i64: 8, 64, 32>}, {pipeline_mode = #tpu.pipeline_mode<synchronous>, transform_indices = @transform_1, window_bounds = array<i64: 32, 160>}, {pipeline_mode = #tpu.pipeline_mode<synchronous>, transform_indices = @transform_2, window_bounds = array<i64: 1, 160>}, {pipeline_mode = #tpu.pipeline_mode<synchronous>, transform_indices = @transform_3, window_bounds = array<i64: 2, 2, 64, 64>}, {pipeline_mode = #tpu.pipeline_mode<synchronous>, transform_indices = @transform_4, window_bounds = array<i64: 2, 2, 64, 64>}, {pipeline_mode = #tpu.pipeline_mode<synchronous>, transform_indices = @transform_5, window_bounds = array<i64: 1, 32>}, {transform_indices = @transform_6, window_bounds = array<i64: 8, 64, 32>}]} {
    %c0 = arith.constant 0 : index
    %c0_0 = arith.constant 0 : index
    %c0_1 = arith.constant 0 : index
    %0 = vector.load %arg1[%c0, %c0_0, %c0_1] : memref<8x64x32xbf16, #tpu.memory_space<vmem>>, vector<8x64x32xbf16>
    %1 = vector.shape_cast %0 : vector<8x64x32xbf16> to vector<512x32xbf16>
    %c0_2 = arith.constant 0 : index
    %c0_3 = arith.constant 0 : index
    %2 = vector.load %arg2[%c0_2, %c0_3] : memref<32x160xbf16, #tpu.memory_space<vmem>>, vector<32x160xbf16>
    %cst = arith.constant dense<0.000000e+00> : vector<512x160xf32>
    %3 = tpu.matmul %1, %2, %cst {dimension_numbers = #tpu.dot_dimension_numbers<[1], [0], [0], [1], [0, 0, 1, 1], [], []>} : vector<512x32xbf16>, vector<32x160xbf16>, vector<512x160xf32> -> vector<512x160xf32>
    %c0_4 = arith.constant 0 : index
    %c0_5 = arith.constant 0 : index
    %4 = vector.load %arg3[%c0_4, %c0_5] : memref<1x160xf32, #tpu.memory_space<vmem>>, vector<1x160xf32>
    %5 = vector.broadcast %4 : vector<1x160xf32> to vector<512x160xf32>
    %6 = arith.addf %3, %5 : vector<512x160xf32>
    %7 = arith.truncf %6 : vector<512x160xf32> to vector<512x160xbf16>
    %8 = vector.shape_cast %7 : vector<512x160xbf16> to vector<8x64x160xbf16>
    %9 = vector.extract_strided_slice %8 {offsets = [0, 0, 0], sizes = [8, 64, 8], strides = [1, 1, 1]} : vector<8x64x160xbf16> to vector<8x64x8xbf16>
    %10 = vector.extract_strided_slice %8 {offsets = [0, 0, 16], sizes = [8, 64, 8], strides = [1, 1, 1]} : vector<8x64x160xbf16> to vector<8x64x8xbf16>
    "tpu.trace_start"() <{level = 10 : i32, message = "bnd,bmd->bnm"}> : () -> ()
    %cst_6 = arith.constant dense<0.000000e+00> : vector<8x64x64xf32>
    %11 = tpu.matmul %9, %10, %cst_6 {dimension_numbers = #tpu.dot_dimension_numbers<[2], [2], [1], [1], [0, 0, 0, 1, 1, 1], [0], [0]>} : vector<8x64x8xbf16>, vector<8x64x8xbf16>, vector<8x64x64xf32> -> vector<8x64x64xf32>
    "tpu.trace_stop"() : () -> ()
    %c0_7 = arith.constant 0 : index
    %c0_8 = arith.constant 0 : index
    %c0_9 = arith.constant 0 : index
    %c0_10 = arith.constant 0 : index
    %12 = vector.load %arg4[%c0_7, %c0_8, %c0_9, %c0_10] : memref<2x2x64x64xf32, #tpu.memory_space<vmem>>, vector<1x1x64x64xf32>
    %13 = vector.shape_cast %12 : vector<1x1x64x64xf32> to vector<64x64xf32>
    %14 = vector.shape_cast %13 : vector<64x64xf32> to vector<1x64x64xf32>
    %15 = vector.broadcast %14 : vector<1x64x64xf32> to vector<8x64x64xf32>
    %16 = arith.mulf %11, %15 : vector<8x64x64xf32>
    %c0_11 = arith.constant 0 : index
    %c0_12 = arith.constant 0 : index
    %c0_13 = arith.constant 0 : index
    %c0_14 = arith.constant 0 : index
    %17 = vector.load %arg5[%c0_11, %c0_12, %c0_13, %c0_14] : memref<2x2x64x64xf32, #tpu.memory_space<vmem>>, vector<1x1x64x64xf32>
    %18 = vector.shape_cast %17 : vector<1x1x64x64xf32> to vector<64x64xf32>
    %19 = vector.shape_cast %18 : vector<64x64xf32> to vector<1x64x64xf32>
    %20 = vector.broadcast %19 : vector<1x64x64xf32> to vector<8x64x64xf32>
    %21 = arith.addf %16, %20 : vector<8x64x64xf32>
    %cst_15 = arith.constant dense<0xFF800000> : vector<8x64xf32>
    %22 = vector.multi_reduction <maximumf>, %21, %cst_15 [2] : vector<8x64x64xf32> to vector<8x64xf32>
    %23 = vector.shape_cast %22 : vector<8x64xf32> to vector<8x64x1xf32>
    %24 = vector.broadcast %23 : vector<8x64x1xf32> to vector<8x64x64xf32>
    %25 = arith.subf %21, %24 : vector<8x64x64xf32>
    %26 = math.exp %25 : vector<8x64x64xf32>
    %cst_16 = arith.constant dense<0.000000e+00> : vector<8x64xf32>
    %27 = vector.multi_reduction <add>, %26, %cst_16 [2] : vector<8x64x64xf32> to vector<8x64xf32>
    %28 = vector.shape_cast %27 : vector<8x64xf32> to vector<8x64x1xf32>
    %29 = tpu.reciprocal %28 {approx = true} : vector<8x64x1xf32> -> vector<8x64x1xf32>
    %30 = vector.extract_strided_slice %8 {offsets = [0, 0, 32], sizes = [8, 64, 32], strides = [1, 1, 1]} : vector<8x64x160xbf16> to vector<8x64x32xbf16>
    %31 = arith.truncf %26 : vector<8x64x64xf32> to vector<8x64x64xbf16>
    "tpu.trace_start"() <{level = 10 : i32, message = "bnm,bmc->bnc"}> : () -> ()
    %cst_17 = arith.constant dense<0.000000e+00> : vector<8x64x32xf32>
    %32 = tpu.matmul %31, %30, %cst_17 {dimension_numbers = #tpu.dot_dimension_numbers<[2], [1], [1], [2], [0, 0, 0, 1, 1, 2], [0], [0]>} : vector<8x64x64xbf16>, vector<8x64x32xbf16>, vector<8x64x32xf32> -> vector<8x64x32xf32>
    "tpu.trace_stop"() : () -> ()
    %33 = vector.broadcast %29 : vector<8x64x1xf32> to vector<8x64x32xf32>
    %34 = arith.mulf %32, %33 : vector<8x64x32xf32>
    %c0_18 = arith.constant 0 : index
    %c1 = arith.constant 1 : index
    %c0_19 = arith.constant 0 : index
    %c0_20 = arith.constant 0 : index
    %35 = vector.load %arg4[%c0_18, %c1, %c0_19, %c0_20] : memref<2x2x64x64xf32, #tpu.memory_space<vmem>>, vector<1x1x64x64xf32>
    %36 = vector.shape_cast %35 : vector<1x1x64x64xf32> to vector<64x64xf32>
    %37 = vector.shape_cast %36 : vector<64x64xf32> to vector<1x64x64xf32>
    %38 = vector.broadcast %37 : vector<1x64x64xf32> to vector<8x64x64xf32>
    %39 = arith.mulf %11, %38 : vector<8x64x64xf32>
    %c0_21 = arith.constant 0 : index
    %c1_22 = arith.constant 1 : index
    %c0_23 = arith.constant 0 : index
    %c0_24 = arith.constant 0 : index
    %40 = vector.load %arg5[%c0_21, %c1_22, %c0_23, %c0_24] : memref<2x2x64x64xf32, #tpu.memory_space<vmem>>, vector<1x1x64x64xf32>
    %41 = vector.shape_cast %40 : vector<1x1x64x64xf32> to vector<64x64xf32>
    %42 = vector.shape_cast %41 : vector<64x64xf32> to vector<1x64x64xf32>
    %43 = vector.broadcast %42 : vector<1x64x64xf32> to vector<8x64x64xf32>
    %44 = arith.addf %39, %43 : vector<8x64x64xf32>
    %cst_25 = arith.constant dense<0xFF800000> : vector<8x64xf32>
    %45 = vector.multi_reduction <maximumf>, %44, %cst_25 [2] : vector<8x64x64xf32> to vector<8x64xf32>
    %46 = vector.shape_cast %45 : vector<8x64xf32> to vector<8x64x1xf32>
    %47 = vector.broadcast %46 : vector<8x64x1xf32> to vector<8x64x64xf32>
    %48 = arith.subf %44, %47 : vector<8x64x64xf32>
    %49 = math.exp %48 : vector<8x64x64xf32>
    %cst_26 = arith.constant dense<0.000000e+00> : vector<8x64xf32>
    %50 = vector.multi_reduction <add>, %49, %cst_26 [2] : vector<8x64x64xf32> to vector<8x64xf32>
    %51 = vector.shape_cast %50 : vector<8x64xf32> to vector<8x64x1xf32>
    %52 = tpu.reciprocal %51 {approx = true} : vector<8x64x1xf32> -> vector<8x64x1xf32>
    %53 = vector.extract_strided_slice %8 {offsets = [0, 0, 64], sizes = [8, 64, 32], strides = [1, 1, 1]} : vector<8x64x160xbf16> to vector<8x64x32xbf16>
    %54 = arith.truncf %49 : vector<8x64x64xf32> to vector<8x64x64xbf16>
    "tpu.trace_start"() <{level = 10 : i32, message = "bnm,bmc->bnc"}> : () -> ()
    %cst_27 = arith.constant dense<0.000000e+00> : vector<8x64x32xf32>
    %55 = tpu.matmul %54, %53, %cst_27 {dimension_numbers = #tpu.dot_dimension_numbers<[2], [1], [1], [2], [0, 0, 0, 1, 1, 2], [0], [0]>} : vector<8x64x64xbf16>, vector<8x64x32xbf16>, vector<8x64x32xf32> -> vector<8x64x32xf32>
    "tpu.trace_stop"() : () -> ()
    %56 = vector.broadcast %52 : vector<8x64x1xf32> to vector<8x64x32xf32>
    %57 = arith.mulf %55, %56 : vector<8x64x32xf32>
    %58 = arith.addf %34, %57 : vector<8x64x32xf32>
    %59 = vector.extract_strided_slice %8 {offsets = [0, 0, 8], sizes = [8, 64, 8], strides = [1, 1, 1]} : vector<8x64x160xbf16> to vector<8x64x8xbf16>
    %60 = vector.extract_strided_slice %8 {offsets = [0, 0, 24], sizes = [8, 64, 8], strides = [1, 1, 1]} : vector<8x64x160xbf16> to vector<8x64x8xbf16>
    "tpu.trace_start"() <{level = 10 : i32, message = "bnd,bmd->bnm"}> : () -> ()
    %cst_28 = arith.constant dense<0.000000e+00> : vector<8x64x64xf32>
    %61 = tpu.matmul %59, %60, %cst_28 {dimension_numbers = #tpu.dot_dimension_numbers<[2], [2], [1], [1], [0, 0, 0, 1, 1, 1], [0], [0]>} : vector<8x64x8xbf16>, vector<8x64x8xbf16>, vector<8x64x64xf32> -> vector<8x64x64xf32>
    "tpu.trace_stop"() : () -> ()
    %c1_29 = arith.constant 1 : index
    %c0_30 = arith.constant 0 : index
    %c0_31 = arith.constant 0 : index
    %c0_32 = arith.constant 0 : index
    %62 = vector.load %arg4[%c1_29, %c0_30, %c0_31, %c0_32] : memref<2x2x64x64xf32, #tpu.memory_space<vmem>>, vector<1x1x64x64xf32>
    %63 = vector.shape_cast %62 : vector<1x1x64x64xf32> to vector<64x64xf32>
    %64 = vector.shape_cast %63 : vector<64x64xf32> to vector<1x64x64xf32>
    %65 = vector.broadcast %64 : vector<1x64x64xf32> to vector<8x64x64xf32>
    %66 = arith.mulf %61, %65 : vector<8x64x64xf32>
    %c1_33 = arith.constant 1 : index
    %c0_34 = arith.constant 0 : index
    %c0_35 = arith.constant 0 : index
    %c0_36 = arith.constant 0 : index
    %67 = vector.load %arg5[%c1_33, %c0_34, %c0_35, %c0_36] : memref<2x2x64x64xf32, #tpu.memory_space<vmem>>, vector<1x1x64x64xf32>
    %68 = vector.shape_cast %67 : vector<1x1x64x64xf32> to vector<64x64xf32>
    %69 = vector.shape_cast %68 : vector<64x64xf32> to vector<1x64x64xf32>
    %70 = vector.broadcast %69 : vector<1x64x64xf32> to vector<8x64x64xf32>
    %71 = arith.addf %66, %70 : vector<8x64x64xf32>
    %cst_37 = arith.constant dense<0xFF800000> : vector<8x64xf32>
    %72 = vector.multi_reduction <maximumf>, %71, %cst_37 [2] : vector<8x64x64xf32> to vector<8x64xf32>
    %73 = vector.shape_cast %72 : vector<8x64xf32> to vector<8x64x1xf32>
    %74 = vector.broadcast %73 : vector<8x64x1xf32> to vector<8x64x64xf32>
    %75 = arith.subf %71, %74 : vector<8x64x64xf32>
    %76 = math.exp %75 : vector<8x64x64xf32>
    %cst_38 = arith.constant dense<0.000000e+00> : vector<8x64xf32>
    %77 = vector.multi_reduction <add>, %76, %cst_38 [2] : vector<8x64x64xf32> to vector<8x64xf32>
    %78 = vector.shape_cast %77 : vector<8x64xf32> to vector<8x64x1xf32>
    %79 = tpu.reciprocal %78 {approx = true} : vector<8x64x1xf32> -> vector<8x64x1xf32>
    %80 = vector.extract_strided_slice %8 {offsets = [0, 0, 96], sizes = [8, 64, 32], strides = [1, 1, 1]} : vector<8x64x160xbf16> to vector<8x64x32xbf16>
    %81 = arith.truncf %76 : vector<8x64x64xf32> to vector<8x64x64xbf16>
    "tpu.trace_start"() <{level = 10 : i32, message = "bnm,bmc->bnc"}> : () -> ()
    %cst_39 = arith.constant dense<0.000000e+00> : vector<8x64x32xf32>
    %82 = tpu.matmul %81, %80, %cst_39 {dimension_numbers = #tpu.dot_dimension_numbers<[2], [1], [1], [2], [0, 0, 0, 1, 1, 2], [0], [0]>} : vector<8x64x64xbf16>, vector<8x64x32xbf16>, vector<8x64x32xf32> -> vector<8x64x32xf32>
    "tpu.trace_stop"() : () -> ()
    %83 = vector.broadcast %79 : vector<8x64x1xf32> to vector<8x64x32xf32>
    %84 = arith.mulf %82, %83 : vector<8x64x32xf32>
    %85 = arith.addf %58, %84 : vector<8x64x32xf32>
    %c1_40 = arith.constant 1 : index
    %c1_41 = arith.constant 1 : index
    %c0_42 = arith.constant 0 : index
    %c0_43 = arith.constant 0 : index
    %86 = vector.load %arg4[%c1_40, %c1_41, %c0_42, %c0_43] : memref<2x2x64x64xf32, #tpu.memory_space<vmem>>, vector<1x1x64x64xf32>
    %87 = vector.shape_cast %86 : vector<1x1x64x64xf32> to vector<64x64xf32>
    %88 = vector.shape_cast %87 : vector<64x64xf32> to vector<1x64x64xf32>
    %89 = vector.broadcast %88 : vector<1x64x64xf32> to vector<8x64x64xf32>
    %90 = arith.mulf %61, %89 : vector<8x64x64xf32>
    %c1_44 = arith.constant 1 : index
    %c1_45 = arith.constant 1 : index
    %c0_46 = arith.constant 0 : index
    %c0_47 = arith.constant 0 : index
    %91 = vector.load %arg5[%c1_44, %c1_45, %c0_46, %c0_47] : memref<2x2x64x64xf32, #tpu.memory_space<vmem>>, vector<1x1x64x64xf32>
    %92 = vector.shape_cast %91 : vector<1x1x64x64xf32> to vector<64x64xf32>
    %93 = vector.shape_cast %92 : vector<64x64xf32> to vector<1x64x64xf32>
    %94 = vector.broadcast %93 : vector<1x64x64xf32> to vector<8x64x64xf32>
    %95 = arith.addf %90, %94 : vector<8x64x64xf32>
    %cst_48 = arith.constant dense<0xFF800000> : vector<8x64xf32>
    %96 = vector.multi_reduction <maximumf>, %95, %cst_48 [2] : vector<8x64x64xf32> to vector<8x64xf32>
    %97 = vector.shape_cast %96 : vector<8x64xf32> to vector<8x64x1xf32>
    %98 = vector.broadcast %97 : vector<8x64x1xf32> to vector<8x64x64xf32>
    %99 = arith.subf %95, %98 : vector<8x64x64xf32>
    %100 = math.exp %99 : vector<8x64x64xf32>
    %cst_49 = arith.constant dense<0.000000e+00> : vector<8x64xf32>
    %101 = vector.multi_reduction <add>, %100, %cst_49 [2] : vector<8x64x64xf32> to vector<8x64xf32>
    %102 = vector.shape_cast %101 : vector<8x64xf32> to vector<8x64x1xf32>
    %103 = tpu.reciprocal %102 {approx = true} : vector<8x64x1xf32> -> vector<8x64x1xf32>
    %104 = vector.extract_strided_slice %8 {offsets = [0, 0, 128], sizes = [8, 64, 32], strides = [1, 1, 1]} : vector<8x64x160xbf16> to vector<8x64x32xbf16>
    %105 = arith.truncf %100 : vector<8x64x64xf32> to vector<8x64x64xbf16>
    "tpu.trace_start"() <{level = 10 : i32, message = "bnm,bmc->bnc"}> : () -> ()
    %cst_50 = arith.constant dense<0.000000e+00> : vector<8x64x32xf32>
    %106 = tpu.matmul %105, %104, %cst_50 {dimension_numbers = #tpu.dot_dimension_numbers<[2], [1], [1], [2], [0, 0, 0, 1, 1, 2], [0], [0]>} : vector<8x64x64xbf16>, vector<8x64x32xbf16>, vector<8x64x32xf32> -> vector<8x64x32xf32>
    "tpu.trace_stop"() : () -> ()
    %107 = vector.broadcast %103 : vector<8x64x1xf32> to vector<8x64x32xf32>
    %108 = arith.mulf %106, %107 : vector<8x64x32xf32>
    %109 = arith.addf %85, %108 : vector<8x64x32xf32>
    %c0_51 = arith.constant 0 : index
    %c0_52 = arith.constant 0 : index
    %110 = vector.load %arg6[%c0_51, %c0_52] : memref<1x32xf32, #tpu.memory_space<vmem>>, vector<1x32xf32>
    %111 = vector.shape_cast %110 : vector<1x32xf32> to vector<1x1x32xf32>
    %112 = vector.broadcast %111 : vector<1x1x32xf32> to vector<8x64x32xf32>
    %113 = arith.addf %109, %112 : vector<8x64x32xf32>
    %114 = arith.truncf %113 : vector<8x64x32xf32> to vector<8x64x32xbf16>
    %c0_53 = arith.constant 0 : index
    %c0_54 = arith.constant 0 : index
    %c0_55 = arith.constant 0 : index
    %115 = vector.load %arg7[%c0_53, %c0_54, %c0_55] : memref<8x64x32xbf16, #tpu.memory_space<vmem>>, vector<8x64x32xbf16>
    tpu.vector_store %arg7[%c0_53, %c0_54, %c0_55], %114 {strides = array<i32>} : memref<8x64x32xbf16, #tpu.memory_space<vmem>>, vector<8x64x32xbf16>,
    return
  }
  func.func @transform_0(%arg0: i32) -> (i32, i32, i32) {
    %c0_i32 = arith.constant 0 : i32
    %c0_i32_0 = arith.constant 0 : i32
    %c0_i32_1 = arith.constant 0 : i32
    return %arg0, %c0_i32, %c0_i32_0 : i32, i32, i32
  }
  func.func @transform_1(%arg0: i32) -> (i32, i32) {
    %c0_i32 = arith.constant 0 : i32
    %c0_i32_0 = arith.constant 0 : i32
    %c0_i32_1 = arith.constant 0 : i32
    return %c0_i32, %c0_i32_0 : i32, i32
  }
  func.func @transform_2(%arg0: i32) -> (i32, i32) {
    %c0_i32 = arith.constant 0 : i32
    %c0_i32_0 = arith.constant 0 : i32
    %c0_i32_1 = arith.constant 0 : i32
    return %c0_i32, %c0_i32_0 : i32, i32
  }
  func.func @transform_3(%arg0: i32) -> (i32, i32, i32, i32) {
    %c0_i32 = arith.constant 0 : i32
    %c0_i32_0 = arith.constant 0 : i32
    %c0_i32_1 = arith.constant 0 : i32
    %c0_i32_2 = arith.constant 0 : i32
    %c0_i32_3 = arith.constant 0 : i32
    return %c0_i32, %c0_i32_0, %c0_i32_1, %c0_i32_2 : i32, i32, i32, i32
  }
  func.func @transform_4(%arg0: i32) -> (i32, i32, i32, i32) {
    %c0_i32 = arith.constant 0 : i32
    %c0_i32_0 = arith.constant 0 : i32
    %c0_i32_1 = arith.constant 0 : i32
    %c0_i32_2 = arith.constant 0 : i32
    %c0_i32_3 = arith.constant 0 : i32
    return %c0_i32, %c0_i32_0, %c0_i32_1, %c0_i32_2 : i32, i32, i32, i32
  }
  func.func @transform_5(%arg0: i32) -> (i32, i32) {
    %c0_i32 = arith.constant 0 : i32
    %c0_i32_0 = arith.constant 0 : i32
    %c0_i32_1 = arith.constant 0 : i32
    return %c0_i32, %c0_i32_0 : i32, i32
  }
  func.func @transform_6(%arg0: i32) -> (i32, i32, i32) {
    %c0_i32 = arith.constant 0 : i32
    %c0_i32_0 = arith.constant 0 : i32
    %c0_i32_1 = arith.constant 0 : i32
    return %arg0, %c0_i32, %c0_i32_0 : i32, i32, i32
  }
}

</mosaic_0001>

<llo_original>
// kernel: tpu_custom_call.1
$region0: #{tpu_custom_call.1}
  #allocation0 [shape = 'u32[]', space=smem, size = 0x4, offset = 0x4, fixed_abs, tag = 'smem constant byte address 0x4 - core index']
  #allocation1 [shape = 'u32[72,128]{1,0:T(1,128)}', space=vmem, size = 0x9000, scoped, tag = 'internal scratch']
  %s0 = inlined_call_operand.vmem [shape: bf16[16,64,32], index: 0, kind: input, shape index: {}]
  %s1 = inlined_call_operand.vmem [shape: bf16[32,160], index: 1, kind: input, shape index: {}]
  %s2 = inlined_call_operand.vmem [shape: f32[1,160], index: 2, kind: input, shape index: {}]
  %s3 = inlined_call_operand.vmem [shape: f32[2,2,64,64], index: 3, kind: input, shape index: {}]
  %s4 = inlined_call_operand.vmem [shape: f32[2,2,64,64], index: 4, kind: input, shape index: {}]
  %s5 = inlined_call_operand.vmem [shape: f32[1,32], index: 5, kind: input, shape index: {}]
  %s6 = inlined_call_operand.vmem [shape: bf16[16,64,32], index: 6, kind: output, shape index: {}]
  %s7 = sld [smem:[#allocation0]]
  $region57: #{tpu_custom_call.1} parent=0
    _
  %s9 = ssub.s32 1, %s7
  %s10 = scalar_select 0, %s9, %s7
  loop: start=0, step=1, limit=4
  $region2: #{tpu_custom_call.1} parent=0 // loop_pre_header
    _
  $region3: #{tpu_custom_call.1} parent=0 // loop_header
    %s12 = sphi 0, %s16
    %p13 = scmp.ge.s32.totalorder %s12, 4
    %s22 = sphi 0, %s24
    %s25 = sphi 0, %s22
    %s26 = sphi 0, %s25
    %s42 = sphi 0, %s26
    %s46 = sphi 0, %s46
    %s48 = sphi 0, %s46
    %s49 = sphi 0, %s48
    %s63 = sphi 0, %s49
    %s67 = sphi 0, %s67
    %s69 = sphi 0, %s67
    %s70 = sphi 0, %s69
    %s84 = sphi 0, %s70
    %s88 = sphi 0, %s88
    %s90 = sphi 0, %s88
    %s91 = sphi 0, %s90
    %s105 = sphi 0, %s91
    %s109 = sphi 0, %s109
    %s111 = sphi 0, %s109
    %s112 = sphi 0, %s111
    %s126 = sphi 0, %s112
    %s130 = sphi 0, %s130
    %s132 = sphi 0, %s130
    %s133 = sphi 0, %s132
    %s147 = sphi 0, %s133
    %s153 = sphi 0, %s155
    %s156 = sphi 0, %s153
    %s157 = sphi 0, %s156
    %s173 = sphi 0, %s157
  $region4: #{tpu_custom_call.1} parent=0 // loop_header_branch
    %15 = sbr.rel (%p13) target = $region8
  $region5: #{tpu_custom_call.1} parent=0 // loop_body
    %s17 = ssub.s32 %s12, 1
    %s18 = ssub.s32 %s12, 2
    %s19 = sadd.s32 %s12, 1
    %s20 = ssub.s32 %s12, %s19
    %p21 = scmp.eq.s32.totalorder %s20, 0
    %s23 = sadd.s32 %s22, 1
    %s24 = scalar_select %p21, %s22, %s23
    %p27 = pneg %p21
    %p28 = scmp.eq.s32.totalorder %s12, 1
    %p29 = por %p27, %p28
    %p30 = scmp.ne.s32.totalorder %s22, %s25
    %p31 = scmp.eq.s32.totalorder %s12, 0
    %p32 = por %p30, %p31
    %p33 = scmp.ne.s32.totalorder %s22, %s25
    %p34 = scmp.eq.s32.totalorder %s17, 1
    %p35 = por %p33, %p34
    %p36 = scmp.ne.s32.totalorder %s25, %s26
    %p37 = scmp.eq.s32.totalorder %s17, 0
    %p38 = por %p36, %p37
    %p39 = scmp.ne.s32.totalorder %s25, %s26
    %p40 = scmp.eq.s32.totalorder %s18, 1
    %p41 = por %p39, %p40
    %p43 = scmp.ne.s32.totalorder %s26, %s42
    %p44 = scmp.eq.s32.totalorder %s18, 0
    %p45 = por %p43, %p44
    %s47 = sadd.s32 %s46, 1
    %p50 = scmp.eq.s32.totalorder %s12, 1
    %p51 = scmp.ne.s32.totalorder %s46, %s48
    %p52 = scmp.eq.s32.totalorder %s12, 0
    %p53 = por %p51, %p52
    %p54 = scmp.ne.s32.totalorder %s46, %s48
    %p55 = scmp.eq.s32.totalorder %s17, 1
    %p56 = por %p54, %p55
    %p57 = scmp.ne.s32.totalorder %s48, %s49
    %p58 = scmp.eq.s32.totalorder %s17, 0
    %p59 = por %p57, %p58
    %p60 = scmp.ne.s32.totalorder %s48, %s49
    %p61 = scmp.eq.s32.totalorder %s18, 1
    %p62 = por %p60, %p61
    %p64 = scmp.ne.s32.totalorder %s49, %s63
    %p65 = scmp.eq.s32.totalorder %s18, 0
    %p66 = por %p64, %p65
    %s68 = sadd.s32 %s67, 1
    %p71 = scmp.eq.s32.totalorder %s12, 1
    %p72 = scmp.ne.s32.totalorder %s67, %s69
    %p73 = scmp.eq.s32.totalorder %s12, 0
    %p74 = por %p72, %p73
    %p75 = scmp.ne.s32.totalorder %s67, %s69
    %p76 = scmp.eq.s32.totalorder %s17, 1
    %p77 = por %p75, %p76
    %p78 = scmp.ne.s32.totalorder %s69, %s70
    %p79 = scmp.eq.s32.totalorder %s17, 0
    %p80 = por %p78, %p79
    %p81 = scmp.ne.s32.totalorder %s69, %s70
    %p82 = scmp.eq.s32.totalorder %s18, 1
    %p83 = por %p81, %p82
    %p85 = scmp.ne.s32.totalorder %s70, %s84
    %p86 = scmp.eq.s32.totalorder %s18, 0
    %p87 = por %p85, %p86
    %s89 = sadd.s32 %s88, 1
    %p92 = scmp.eq.s32.totalorder %s12, 1
    %p93 = scmp.ne.s32.totalorder %s88, %s90
    %p94 = scmp.eq.s32.totalorder %s12, 0
    %p95 = por %p93, %p94
    %p96 = scmp.ne.s32.totalorder %s88, %s90
    %p97 = scmp.eq.s32.totalorder %s17, 1
    %p98 = por %p96, %p97
    %p99 = scmp.ne.s32.totalorder %s90, %s91
    %p100 = scmp.eq.s32.totalorder %s17, 0
    %p101 = por %p99, %p100
    %p102 = scmp.ne.s32.totalorder %s90, %s91
    %p103 = scmp.eq.s32.totalorder %s18, 1
    %p104 = por %p102, %p103
    %p106 = scmp.ne.s32.totalorder %s91, %s105
    %p107 = scmp.eq.s32.totalorder %s18, 0
    %p108 = por %p106, %p107
    %s110 = sadd.s32 %s109, 1
    %p113 = scmp.eq.s32.totalorder %s12, 1
    %p114 = scmp.ne.s32.totalorder %s109, %s111
    %p115 = scmp.eq.s32.totalorder %s12, 0
    %p116 = por %p114, %p115
    %p117 = scmp.ne.s32.totalorder %s109, %s111
    %p118 = scmp.eq.s32.totalorder %s17, 1
    %p119 = por %p117, %p118
    %p120 = scmp.ne.s32.totalorder %s111, %s112
    %p121 = scmp.eq.s32.totalorder %s17, 0
    %p122 = por %p120, %p121
    %p123 = scmp.ne.s32.totalorder %s111, %s112
    %p124 = scmp.eq.s32.totalorder %s18, 1
    %p125 = por %p123, %p124
    %p127 = scmp.ne.s32.totalorder %s112, %s126
    %p128 = scmp.eq.s32.totalorder %s18, 0
    %p129 = por %p127, %p128
    %s131 = sadd.s32 %s130, 1
    %p134 = scmp.eq.s32.totalorder %s12, 1
    %p135 = scmp.ne.s32.totalorder %s130, %s132
    %p136 = scmp.eq.s32.totalorder %s12, 0
    %p137 = por %p135, %p136
    %p138 = scmp.ne.s32.totalorder %s130, %s132
    %p139 = scmp.eq.s32.totalorder %s17, 1
    %p140 = por %p138, %p139
    %p141 = scmp.ne.s32.totalorder %s132, %s133
    %p142 = scmp.eq.s32.totalorder %s17, 0
    %p143 = por %p141, %p142
    %p144 = scmp.ne.s32.totalorder %s132, %s133
    %p145 = scmp.eq.s32.totalorder %s18, 1
    %p146 = por %p144, %p145
    %p148 = scmp.ne.s32.totalorder %s133, %s147
    %p149 = scmp.eq.s32.totalorder %s18, 0
    %p150 = por %p148, %p149
    %s151 = ssub.s32 %s12, %s19
    %p152 = scmp.eq.s32.totalorder %s151, 0
    %s154 = sadd.s32 %s153, 1
    %s155 = scalar_select %p152, %s153, %s154
    %p158 = pneg %p152
    %p159 = scmp.eq.s32.totalorder %s12, 1
    %p160 = por %p158, %p159
    %p161 = scmp.ne.s32.totalorder %s153, %s156
    %p162 = scmp.eq.s32.totalorder %s12, 0
    %p163 = por %p161, %p162
    %p164 = scmp.ne.s32.totalorder %s153, %s156
    %p165 = scmp.eq.s32.totalorder %s17, 1
    %p166 = por %p164, %p165
    %p167 = scmp.ne.s32.totalorder %s156, %s157
    %p168 = scmp.eq.s32.totalorder %s17, 0
    %p169 = por %p167, %p168
    %p170 = scmp.ne.s32.totalorder %s156, %s157
    %p171 = scmp.eq.s32.totalorder %s18, 1
    %p172 = por %p170, %p171
    %p174 = scmp.ne.s32.totalorder %s157, %s173
    %p175 = scmp.eq.s32.totalorder %s18, 0
    %p176 = por %p174, %p175
    %p177 = scmp.le.s32.totalorder 1, %s12
    %p178 = scmp.lt.s32.totalorder %s12, 3
    %p179 = pnand %p177, %p178
    %p180 = pneg %p179
    // Predicated region
    $region9: #{tpu_custom_call.1} parent=5 // pred_check
      _
    $region10: #{tpu_custom_call.1} parent=5 // pred_check_branch
      %182 = sbr.rel (%p179) target = $region12
    $region11: #{tpu_custom_call.1} parent=5 // pred_region
      %s183 = ssub.s32 %s12, 1
      // Predicated region
      $region13: #{tpu_custom_call.1} parent=11 // pred_check
        %p184 = pneg %p59
      $region14: #{tpu_custom_call.1} parent=11 // pred_check_branch
        %186 = sbr.rel (%p184) target = $region16
      $region15: #{tpu_custom_call.1} parent=11 // pred_region
        _
      $region16: #{tpu_custom_call.1} parent=11 // pred_fallthru
        _
      // Predicated region
      $region17: #{tpu_custom_call.1} parent=11 // pred_check
        %p187 = pneg %p80
      $region18: #{tpu_custom_call.1} parent=11 // pred_check_branch
        %189 = sbr.rel (%p187) target = $region20
      $region19: #{tpu_custom_call.1} parent=11 // pred_region
        _
      $region20: #{tpu_custom_call.1} parent=11 // pred_fallthru
        _
      // Predicated region
      $region21: #{tpu_custom_call.1} parent=11 // pred_check
        %p190 = pneg %p101
      $region22: #{tpu_custom_call.1} parent=11 // pred_check_branch
        %192 = sbr.rel (%p190) target = $region24
      $region23: #{tpu_custom_call.1} parent=11 // pred_region
        _
      $region24: #{tpu_custom_call.1} parent=11 // pred_fallthru
        _
      // Predicated region
      $region25: #{tpu_custom_call.1} parent=11 // pred_check
        %p193 = pneg %p122
      $region26: #{tpu_custom_call.1} parent=11 // pred_check_branch
        %195 = sbr.rel (%p193) target = $region28
      $region27: #{tpu_custom_call.1} parent=11 // pred_region
        _
      $region28: #{tpu_custom_call.1} parent=11 // pred_fallthru
        _
      // Predicated region
      $region29: #{tpu_custom_call.1} parent=11 // pred_check
        %p196 = pneg %p143
      $region30: #{tpu_custom_call.1} parent=11 // pred_check_branch
        %198 = sbr.rel (%p196) target = $region32
      $region31: #{tpu_custom_call.1} parent=11 // pred_region
        _
      $region32: #{tpu_custom_call.1} parent=11 // pred_fallthru
        _
    $region12: #{tpu_custom_call.1} parent=5 // pred_fallthru
      _
    %p199 = scmp.lt.s32.totalorder %s12, 2
    // Predicated region
    $region33: #{tpu_custom_call.1} parent=5 // pred_check
      %p200 = pneg %p199
    $region34: #{tpu_custom_call.1} parent=5 // pred_check_branch
      %202 = sbr.rel (%p200) target = $region36
    $region35: #{tpu_custom_call.1} parent=5 // pred_region
      // Predicated region
      $region37: #{tpu_custom_call.1} parent=35 // pred_check
        %p203 = pneg %p32
      $region38: #{tpu_custom_call.1} parent=35 // pred_check_branch
        %205 = sbr.rel (%p203) target = $region40
      $region39: #{tpu_custom_call.1} parent=35 // pred_region
        %s206 = smul.u32 8, %s12
        %p207 = scmp.lt.s32.totalorder %s206, 15
        %s208 = scalar_select %p207, %s206, 15
        %s209 = smul.addr %s208, 8
        %s210 = smul.addr %s209, 4
        %s211 = scalar_lea.vmem %s0, %s210
        %s212 = smul.u32 8, %s12
      $region40: #{tpu_custom_call.1} parent=35 // pred_fallthru
        _
    $region36: #{tpu_custom_call.1} parent=5 // pred_fallthru
      _
    %p213 = scmp.le.s32.totalorder 1, %s12
    %p214 = scmp.lt.s32.totalorder %s12, 3
    %p215 = pnand %p213, %p214
    %p216 = pneg %p215
    // Predicated region
    $region41: #{tpu_custom_call.1} parent=5 // pred_check
      _
    $region42: #{tpu_custom_call.1} parent=5 // pred_check_branch
      %218 = sbr.rel (%p215) target = $region44
    $region43: #{tpu_custom_call.1} parent=5 // pred_region
      %s219 = ssub.s32 %s12, 1
      %s220 = smul.u32 8, %s17
      %p221 = scmp.lt.s32.totalorder %s220, 15
      %s222 = scalar_select %p221, %s220, 15
      %s223 = smul.addr %s222, 8
      %s224 = smul.addr %s223, 4
      %s225 = scalar_lea.vmem %s0, %s224
      %p226 = pneg %p38
      %p227 = pneg %p35
      %p228 = pneg %p59
      %p229 = pneg %p56
      %p230 = pneg %p80
      %p231 = pneg %p77
      %p232 = pneg %p101
      %p233 = pneg %p98
      %p234 = pneg %p122
      %p235 = pneg %p119
      %p236 = pneg %p143
      %p237 = pneg %p140
      %p238 = pneg %p169
      %p239 = pneg %p166
      %s240 = smul.u32 8, %s17
      %p241 = scmp.lt.s32.totalorder %s240, 15
      %s242 = scalar_select %p241, %s240, 15
      %s243 = smul.addr %s242, 8
      %s244 = smul.addr %s243, 4
      %s245 = scalar_lea.vmem %s6, %s244
      %s246 = smul.u32 8, %s17
      %p247 = scmp.lt.s32.totalorder %s246, 15
      %s248 = scalar_select %p247, %s246, 15
      %s249 = smul.addr %s248, 8
      %s250 = smul.addr %s249, 4
      %s251 = scalar_lea.vmem %s0, %s250
      %s252 = smul.u32 8, %s17
      %s253 = smul.u32 8, %s17
      %p254 = scmp.lt.s32.totalorder %s253, 15
      %s255 = scalar_select %p254, %s253, 15
      %s256 = smul.addr %s255, 8
      %s257 = smul.addr %s256, 4
      %s258 = scalar_lea.vmem %s6, %s257
      %s259 = smul.u32 8, %s17
      %v261 = vld [vmem:[%s251] sm:$0xf]
      %v262 = vld [vmem:[%s251 + $0x4] sm:$0xf]
      %v263 = vld [vmem:[%s251 + $0x8] sm:$0xf]
      %v264 = vld [vmem:[%s251 + $0xc] sm:$0xf]
      %v265 = vld [vmem:[%s251 + $0x10] sm:$0xf]
      %v266 = vld [vmem:[%s251 + $0x14] sm:$0xf]
      %v267 = vld [vmem:[%s251 + $0x18] sm:$0xf]
      %v268 = vld [vmem:[%s251 + $0x1c] sm:$0xf]
      %v269 = vld [vmem:[%s251 + $0x20] sm:$0xf]
      %v270 = vld [vmem:[%s251 + $0x24] sm:$0xf]
      %v271 = vld [vmem:[%s251 + $0x28] sm:$0xf]
      %v272 = vld [vmem:[%s251 + $0x2c] sm:$0xf]
      %v273 = vld [vmem:[%s251 + $0x30] sm:$0xf]
      %v274 = vld [vmem:[%s251 + $0x34] sm:$0xf]
      %v275 = vld [vmem:[%s251 + $0x38] sm:$0xf]
      %v276 = vld [vmem:[%s251 + $0x3c] sm:$0xf]
      %v277 = vld [vmem:[%s251 + $0x40] sm:$0xf]
      %v278 = vld [vmem:[%s251 + $0x44] sm:$0xf]
      %v279 = vld [vmem:[%s251 + $0x48] sm:$0xf]
      %v280 = vld [vmem:[%s251 + $0x4c] sm:$0xf]
      %v281 = vld [vmem:[%s251 + $0x50] sm:$0xf]
      %v282 = vld [vmem:[%s251 + $0x54] sm:$0xf]
      %v283 = vld [vmem:[%s251 + $0x58] sm:$0xf]
      %v284 = vld [vmem:[%s251 + $0x5c] sm:$0xf]
      %v285 = vld [vmem:[%s251 + $0x60] sm:$0xf]
      %v286 = vld [vmem:[%s251 + $0x64] sm:$0xf]
      %v287 = vld [vmem:[%s251 + $0x68] sm:$0xf]
      %v288 = vld [vmem:[%s251 + $0x6c] sm:$0xf]
      %v289 = vld [vmem:[%s251 + $0x70] sm:$0xf]
      %v290 = vld [vmem:[%s251 + $0x74] sm:$0xf]
      %v291 = vld [vmem:[%s251 + $0x78] sm:$0xf]
      %v292 = vld [vmem:[%s251 + $0x7c] sm:$0xf]
      %v293 = vld [vmem:[%s251 + $0x80] sm:$0xf]
      %v294 = vld [vmem:[%s251 + $0x84] sm:$0xf]
      %v295 = vld [vmem:[%s251 + $0x88] sm:$0xf]
      %v296 = vld [vmem:[%s251 + $0x8c] sm:$0xf]
      %v297 = vld [vmem:[%s251 + $0x90] sm:$0xf]
      %v298 = vld [vmem:[%s251 + $0x94] sm:$0xf]
      %v299 = vld [vmem:[%s251 + $0x98] sm:$0xf]
      %v300 = vld [vmem:[%s251 + $0x9c] sm:$0xf]
      %v301 = vld [vmem:[%s251 + $0xa0] sm:$0xf]
      %v302 = vld [vmem:[%s251 + $0xa4] sm:$0xf]
      %v303 = vld [vmem:[%s251 + $0xa8] sm:$0xf]
      %v304 = vld [vmem:[%s251 + $0xac] sm:$0xf]
      %v305 = vld [vmem:[%s251 + $0xb0] sm:$0xf]
      %v306 = vld [vmem:[%s251 + $0xb4] sm:$0xf]
      %v307 = vld [vmem:[%s251 + $0xb8] sm:$0xf]
      %v308 = vld [vmem:[%s251 + $0xbc] sm:$0xf]
      %v309 = vld [vmem:[%s251 + $0xc0] sm:$0xf]
      %v310 = vld [vmem:[%s251 + $0xc4] sm:$0xf]
      %v311 = vld [vmem:[%s251 + $0xc8] sm:$0xf]
      %v312 = vld [vmem:[%s251 + $0xcc] sm:$0xf]
      %v313 = vld [vmem:[%s251 + $0xd0] sm:$0xf]
      %v314 = vld [vmem:[%s251 + $0xd4] sm:$0xf]
      %v315 = vld [vmem:[%s251 + $0xd8] sm:$0xf]
      %v316 = vld [vmem:[%s251 + $0xdc] sm:$0xf]
      %v317 = vld [vmem:[%s251 + $0xe0] sm:$0xf]
      %v318 = vld [vmem:[%s251 + $0xe4] sm:$0xf]
      %v319 = vld [vmem:[%s251 + $0xe8] sm:$0xf]
      %v320 = vld [vmem:[%s251 + $0xec] sm:$0xf]
      %v321 = vld [vmem:[%s251 + $0xf0] sm:$0xf]
      %v322 = vld [vmem:[%s251 + $0xf4] sm:$0xf]
      %v323 = vld [vmem:[%s251 + $0xf8] sm:$0xf]
      %v324 = vld [vmem:[%s251 + $0xfc] sm:$0xf]
      %v325 = vld [vmem:[%s1] sm:$0xff]
      %v326 = vld [vmem:[%s1 + $0x8] sm:$0xff]
      %v327 = vld [vmem:[%s1 + $0x10] sm:$0xff]
      %v328 = vld [vmem:[%s1 + $0x18] sm:$0xff]
      %v329 = vld [vmem:[%s2] sm:$0x3]
      %v331 = vperm.slane %v329, 0
      %v332 = vperm.slane %v329, 1
      %v399 = vunpack.c.l.b16 %v261
      %v400 = vunpack.c.l.b16 %v262
      %v401 = vunpack.c.l.b16 %v263
      %v402 = vunpack.c.l.b16 %v264
      %v403 = vunpack.c.l.b16 %v265
      %v404 = vunpack.c.l.b16 %v266
      %v405 = vunpack.c.l.b16 %v267
      %v406 = vunpack.c.l.b16 %v268
      %v407 = vunpack.c.l.b16 %v269
      %v408 = vunpack.c.l.b16 %v270
      %v409 = vunpack.c.l.b16 %v271
      %v410 = vunpack.c.l.b16 %v272
      %v411 = vunpack.c.l.b16 %v273
      %v412 = vunpack.c.l.b16 %v274
      %v413 = vunpack.c.l.b16 %v275
      %v414 = vunpack.c.l.b16 %v276
      %v415 = vunpack.c.l.b16 %v277
      %v416 = vunpack.c.l.b16 %v278
      %v417 = vunpack.c.l.b16 %v279
      %v418 = vunpack.c.l.b16 %v280
      %v419 = vunpack.c.l.b16 %v281
      %v420 = vunpack.c.l.b16 %v282
      %v421 = vunpack.c.l.b16 %v283
      %v422 = vunpack.c.l.b16 %v284
      %v423 = vunpack.c.l.b16 %v285
      %v424 = vunpack.c.l.b16 %v286
      %v425 = vunpack.c.l.b16 %v287
      %v426 = vunpack.c.l.b16 %v288
      %v427 = vunpack.c.l.b16 %v289
      %v428 = vunpack.c.l.b16 %v290
      %v429 = vunpack.c.l.b16 %v291
      %v430 = vunpack.c.l.b16 %v292
      %v431 = vunpack.c.l.b16 %v293
      %v432 = vunpack.c.l.b16 %v294
      %v433 = vunpack.c.l.b16 %v295
      %v434 = vunpack.c.l.b16 %v296
      %v435 = vunpack.c.l.b16 %v297
      %v436 = vunpack.c.l.b16 %v298
      %v437 = vunpack.c.l.b16 %v299
      %v438 = vunpack.c.l.b16 %v300
      %v439 = vunpack.c.l.b16 %v301
      %v440 = vunpack.c.l.b16 %v302
      %v441 = vunpack.c.l.b16 %v303
      %v442 = vunpack.c.l.b16 %v304
      %v443 = vunpack.c.l.b16 %v305
      %v444 = vunpack.c.l.b16 %v306
      %v445 = vunpack.c.l.b16 %v307
      %v446 = vunpack.c.l.b16 %v308
      %v447 = vunpack.c.l.b16 %v309
      %v448 = vunpack.c.l.b16 %v310
      %v449 = vunpack.c.l.b16 %v311
      %v450 = vunpack.c.l.b16 %v312
      %v451 = vunpack.c.l.b16 %v313
      %v452 = vunpack.c.l.b16 %v314
      %v453 = vunpack.c.l.b16 %v315
      %v454 = vunpack.c.l.b16 %v316
      %v455 = vunpack.c.l.b16 %v317
      %v456 = vunpack.c.l.b16 %v318
      %v457 = vunpack.c.l.b16 %v319
      %v458 = vunpack.c.l.b16 %v320
      %v459 = vunpack.c.l.b16 %v321
      %v460 = vunpack.c.l.b16 %v322
      %v461 = vunpack.c.l.b16 %v323
      %v462 = vunpack.c.l.b16 %v324
      %v463 = vpack.c.b16 %v400, %v399
      %v464 = vpack.c.b16 %v402, %v401
      %v465 = vpack.c.b16 %v404, %v403
      %v466 = vpack.c.b16 %v406, %v405
      %v467 = vpack.c.b16 %v408, %v407
      %v468 = vpack.c.b16 %v410, %v409
      %v469 = vpack.c.b16 %v412, %v411
      %v470 = vpack.c.b16 %v414, %v413
      %v471 = vpack.c.b16 %v416, %v415
      %v472 = vpack.c.b16 %v418, %v417
      %v473 = vpack.c.b16 %v420, %v419
      %v474 = vpack.c.b16 %v422, %v421
      %v475 = vpack.c.b16 %v424, %v423
      %v476 = vpack.c.b16 %v426, %v425
      %v477 = vpack.c.b16 %v428, %v427
      %v478 = vpack.c.b16 %v430, %v429
      %v479 = vpack.c.b16 %v432, %v431
      %v480 = vpack.c.b16 %v434, %v433
      %v481 = vpack.c.b16 %v436, %v435
      %v482 = vpack.c.b16 %v438, %v437
      %v483 = vpack.c.b16 %v440, %v439
      %v484 = vpack.c.b16 %v442, %v441
      %v485 = vpack.c.b16 %v444, %v443
      %v486 = vpack.c.b16 %v446, %v445
      %v487 = vpack.c.b16 %v448, %v447
      %v488 = vpack.c.b16 %v450, %v449
      %v489 = vpack.c.b16 %v452, %v451
      %v490 = vpack.c.b16 %v454, %v453
      %v491 = vpack.c.b16 %v456, %v455
      %v492 = vpack.c.b16 %v458, %v457
      %v493 = vpack.c.b16 %v460, %v459
      %v494 = vpack.c.b16 %v462, %v461
      %v499 = vunpack.c.l.b16 %v325
      %v500 = vunpack.c.h.b16 %v325
      %v501 = vunpack.c.l.b16 %v326
      %v502 = vunpack.c.h.b16 %v326
      %v503 = vunpack.c.l.b16 %v327
      %v504 = vunpack.c.h.b16 %v327
      %v505 = vunpack.c.l.b16 %v328
      %v506 = vunpack.c.h.b16 %v328
      %v507 = vpack.c.b16 %v501, %v499
      %v508 = vpack.c.b16 %v502, %v500
      %v509 = vpack.c.b16 %v505, %v503
      %v510 = vpack.c.b16 %v506, %v504
      %vm515 = vcmask 261120
      %v517 = vsel %vm515, %v463, 0
      %v520 = vsel %vm515, %v464, 0
      %v523 = vsel %vm515, %v465, 0
      %v526 = vsel %vm515, %v466, 0
      %v529 = vsel %vm515, %v467, 0
      %v532 = vsel %vm515, %v468, 0
      %v535 = vsel %vm515, %v469, 0
      %v538 = vsel %vm515, %v470, 0
      %v541 = vsel %vm515, %v471, 0
      %v544 = vsel %vm515, %v472, 0
      %v547 = vsel %vm515, %v473, 0
      %v550 = vsel %vm515, %v474, 0
      %v553 = vsel %vm515, %v475, 0
      %v556 = vsel %vm515, %v476, 0
      %v559 = vsel %vm515, %v477, 0
      %v562 = vsel %vm515, %v478, 0
      %v565 = vsel %vm515, %v479, 0
      %v568 = vsel %vm515, %v480, 0
      %v571 = vsel %vm515, %v481, 0
      %v574 = vsel %vm515, %v482, 0
      %v577 = vsel %vm515, %v483, 0
      %v580 = vsel %vm515, %v484, 0
      %v583 = vsel %vm515, %v485, 0
      %v586 = vsel %vm515, %v486, 0
      %v589 = vsel %vm515, %v487, 0
      %v592 = vsel %vm515, %v488, 0
      %v595 = vsel %vm515, %v489, 0
      %v598 = vsel %vm515, %v490, 0
      %v601 = vsel %vm515, %v491, 0
      %v604 = vsel %vm515, %v492, 0
      %v607 = vsel %vm515, %v493, 0
      %v610 = vsel %vm515, %v494, 0
      %612 = vmatpush.bf16.msra.mxu0 0
      %613 = vmatpush.bf16.msra.mxu0 0
      %614 = vmatpush.bf16.msra.mxu0 0
      %615 = vmatpush.bf16.msra.mxu0 0
      %616 = vmatpush.bf16.msra.mxu0 0
      %617 = vmatpush.bf16.msra.mxu0 0
      %618 = vmatpush.bf16.msra.mxu0 %v509
      %619 = vmatpush.bf16.msra.mxu0 %v507
      %620 = vmatmul.bf16.gmra.mxu0 %v517
      %v621 = vpop.f32.mrf.mxu0
      %v622 = vadd.f32 %v331, %v621
      %v623 = vpop.f32.mrf.mxu0
      %v624 = vadd.f32 %v331, %v623
      %625 = vmatmul.bf16.gmra.mxu0 %v520
      %v626 = vpop.f32.mrf.mxu0
      %v627 = vadd.f32 %v331, %v626
      %v628 = vpop.f32.mrf.mxu0
      %v629 = vadd.f32 %v331, %v628
      %630 = vmatmul.bf16.gmra.mxu0 %v523
      %v631 = vpop.f32.mrf.mxu0
      %v632 = vadd.f32 %v331, %v631
      %v633 = vpop.f32.mrf.mxu0
      %v634 = vadd.f32 %v331, %v633
      %635 = vmatmul.bf16.gmra.mxu0 %v526
      %v636 = vpop.f32.mrf.mxu0
      %v637 = vadd.f32 %v331, %v636
      %v638 = vpop.f32.mrf.mxu0
      %v639 = vadd.f32 %v331, %v638
      %640 = vmatmul.bf16.gmra.mxu0 %v529
      %v641 = vpop.f32.mrf.mxu0
      %v642 = vadd.f32 %v331, %v641
      %v643 = vpop.f32.mrf.mxu0
      %v644 = vadd.f32 %v331, %v643
      %645 = vmatmul.bf16.gmra.mxu0 %v532
      %v646 = vpop.f32.mrf.mxu0
      %v647 = vadd.f32 %v331, %v646
      %v648 = vpop.f32.mrf.mxu0
      %v649 = vadd.f32 %v331, %v648
      %650 = vmatmul.bf16.gmra.mxu0 %v535
      %v651 = vpop.f32.mrf.mxu0
      %v652 = vadd.f32 %v331, %v651
      %v653 = vpop.f32.mrf.mxu0
      %v654 = vadd.f32 %v331, %v653
      %655 = vmatmul.bf16.gmra.mxu0 %v538
      %v656 = vpop.f32.mrf.mxu0
      %v657 = vadd.f32 %v331, %v656
      %v658 = vpop.f32.mrf.mxu0
      %v659 = vadd.f32 %v331, %v658
      %660 = vmatmul.bf16.gmra.mxu0 %v541
      %v661 = vpop.f32.mrf.mxu0
      %v662 = vadd.f32 %v331, %v661
      %v663 = vpop.f32.mrf.mxu0
      %v664 = vadd.f32 %v331, %v663
      %665 = vmatmul.bf16.gmra.mxu0 %v544
      %v666 = vpop.f32.mrf.mxu0
      %v667 = vadd.f32 %v331, %v666
      %v668 = vpop.f32.mrf.mxu0
      %v669 = vadd.f32 %v331, %v668
      %670 = vmatmul.bf16.gmra.mxu0 %v547
      %v671 = vpop.f32.mrf.mxu0
      %v672 = vadd.f32 %v331, %v671
      %v673 = vpop.f32.mrf.mxu0
      %v674 = vadd.f32 %v331, %v673
      %675 = vmatmul.bf16.gmra.mxu0 %v550
      %v676 = vpop.f32.mrf.mxu0
      %v677 = vadd.f32 %v331, %v676
      %v678 = vpop.f32.mrf.mxu0
      %v679 = vadd.f32 %v331, %v678
      %680 = vmatmul.bf16.gmra.mxu0 %v553
      %v681 = vpop.f32.mrf.mxu0
      %v682 = vadd.f32 %v331, %v681
      %v683 = vpop.f32.mrf.mxu0
      %v684 = vadd.f32 %v331, %v683
      %685 = vmatmul.bf16.gmra.mxu0 %v556
      %v686 = vpop.f32.mrf.mxu0
      %v687 = vadd.f32 %v331, %v686
      %v688 = vpop.f32.mrf.mxu0
      %v689 = vadd.f32 %v331, %v688
      %690 = vmatmul.bf16.gmra.mxu0 %v559
      %v691 = vpop.f32.mrf.mxu0
      %v692 = vadd.f32 %v331, %v691
      %v693 = vpop.f32.mrf.mxu0
      %v694 = vadd.f32 %v331, %v693
      %695 = vmatmul.bf16.gmra.mxu0 %v562
      %v696 = vpop.f32.mrf.mxu0
      %v697 = vadd.f32 %v331, %v696
      %v698 = vpop.f32.mrf.mxu0
      %v699 = vadd.f32 %v331, %v698
      %700 = vmatmul.bf16.gmra.mxu0 %v565
      %v701 = vpop.f32.mrf.mxu0
      %v702 = vadd.f32 %v331, %v701
      %v703 = vpop.f32.mrf.mxu0
      %v704 = vadd.f32 %v331, %v703
      %705 = vmatmul.bf16.gmra.mxu0 %v568
      %v706 = vpop.f32.mrf.mxu0
      %v707 = vadd.f32 %v331, %v706
      %v708 = vpop.f32.mrf.mxu0
      %v709 = vadd.f32 %v331, %v708
      %710 = vmatmul.bf16.gmra.mxu0 %v571
      %v711 = vpop.f32.mrf.mxu0
      %v712 = vadd.f32 %v331, %v711
      %v713 = vpop.f32.mrf.mxu0
      %v714 = vadd.f32 %v331, %v713
      %715 = vmatmul.bf16.gmra.mxu0 %v574
      %v716 = vpop.f32.mrf.mxu0
      %v717 = vadd.f32 %v331, %v716
      %v718 = vpop.f32.mrf.mxu0
      %v719 = vadd.f32 %v331, %v718
      %720 = vmatmul.bf16.gmra.mxu0 %v577
      %v721 = vpop.f32.mrf.mxu0
      %v722 = vadd.f32 %v331, %v721
      %v723 = vpop.f32.mrf.mxu0
      %v724 = vadd.f32 %v331, %v723
      %725 = vmatmul.bf16.gmra.mxu0 %v580
      %v726 = vpop.f32.mrf.mxu0
      %v727 = vadd.f32 %v331, %v726
      %v728 = vpop.f32.mrf.mxu0
      %v729 = vadd.f32 %v331, %v728
      %730 = vmatmul.bf16.gmra.mxu0 %v583
      %v731 = vpop.f32.mrf.mxu0
      %v732 = vadd.f32 %v331, %v731
      %v733 = vpop.f32.mrf.mxu0
      %v734 = vadd.f32 %v331, %v733
      %735 = vmatmul.bf16.gmra.mxu0 %v586
      %v736 = vpop.f32.mrf.mxu0
      %v737 = vadd.f32 %v331, %v736
      %v738 = vpop.f32.mrf.mxu0
      %v739 = vadd.f32 %v331, %v738
      %740 = vmatmul.bf16.gmra.mxu0 %v589
      %v741 = vpop.f32.mrf.mxu0
      %v742 = vadd.f32 %v331, %v741
      %v743 = vpop.f32.mrf.mxu0
      %v744 = vadd.f32 %v331, %v743
      %745 = vmatmul.bf16.gmra.mxu0 %v592
      %v746 = vpop.f32.mrf.mxu0
      %v747 = vadd.f32 %v331, %v746
      %v748 = vpop.f32.mrf.mxu0
      %v749 = vadd.f32 %v331, %v748
      %750 = vmatmul.bf16.gmra.mxu0 %v595
      %v751 = vpop.f32.mrf.mxu0
      %v752 = vadd.f32 %v331, %v751
      %v753 = vpop.f32.mrf.mxu0
      %v754 = vadd.f32 %v331, %v753
      %755 = vmatmul.bf16.gmra.mxu0 %v598
      %v756 = vpop.f32.mrf.mxu0
      %v757 = vadd.f32 %v331, %v756
      %v758 = vpop.f32.mrf.mxu0
      %v759 = vadd.f32 %v331, %v758
      %760 = vmatmul.bf16.gmra.mxu0 %v601
      %v761 = vpop.f32.mrf.mxu0
      %v762 = vadd.f32 %v331, %v761
      %v763 = vpop.f32.mrf.mxu0
      %v764 = vadd.f32 %v331, %v763
      %765 = vmatmul.bf16.gmra.mxu0 %v604
      %v766 = vpop.f32.mrf.mxu0
      %v767 = vadd.f32 %v331, %v766
      %v768 = vpop.f32.mrf.mxu0
      %v769 = vadd.f32 %v331, %v768
      %770 = vmatmul.bf16.gmra.mxu0 %v607
      %v771 = vpop.f32.mrf.mxu0
      %v772 = vadd.f32 %v331, %v771
      %v773 = vpop.f32.mrf.mxu0
      %v774 = vadd.f32 %v331, %v773
      %775 = vmatmul.bf16.gmra.mxu0 %v610
      %v776 = vpop.f32.mrf.mxu0
      %v777 = vadd.f32 %v331, %v776
      %v778 = vpop.f32.mrf.mxu0
      %v779 = vadd.f32 %v331, %v778
      %780 = vdwg.mxu0
      %781 = vmatpush.bf16.msra.mxu0 0
      %782 = vmatpush.bf16.msra.mxu0 0
      %783 = vmatpush.bf16.msra.mxu0 0
      %784 = vmatpush.bf16.msra.mxu0 0
      %785 = vmatpush.bf16.msra.mxu0 0
      %786 = vmatpush.bf16.msra.mxu0 0
      %787 = vmatpush.bf16.msra.mxu0 %v510
      %788 = vmatpush.bf16.msra.mxu0 %v508
      %789 = vmatmul.bf16.gmra.mxu0 %v517
      %v790 = vpop.f32.mrf.mxu0
      %v791 = vadd.f32 %v332, %v790
      %v792 = vpop.f32.mrf.mxu0
      %v793 = vadd.f32 %v332, %v792
      %794 = vmatmul.bf16.gmra.mxu0 %v520
      %v795 = vpop.f32.mrf.mxu0
      %v796 = vadd.f32 %v332, %v795
      %v797 = vpop.f32.mrf.mxu0
      %v798 = vadd.f32 %v332, %v797
      %799 = vmatmul.bf16.gmra.mxu0 %v523
      %v800 = vpop.f32.mrf.mxu0
      %v801 = vadd.f32 %v332, %v800
      %v802 = vpop.f32.mrf.mxu0
      %v803 = vadd.f32 %v332, %v802
      %804 = vmatmul.bf16.gmra.mxu0 %v526
      %v805 = vpop.f32.mrf.mxu0
      %v806 = vadd.f32 %v332, %v805
      %v807 = vpop.f32.mrf.mxu0
      %v808 = vadd.f32 %v332, %v807
      %809 = vmatmul.bf16.gmra.mxu0 %v529
      %v810 = vpop.f32.mrf.mxu0
      %v811 = vadd.f32 %v332, %v810
      %v812 = vpop.f32.mrf.mxu0
      %v813 = vadd.f32 %v332, %v812
      %814 = vmatmul.bf16.gmra.mxu0 %v532
      %v815 = vpop.f32.mrf.mxu0
      %v816 = vadd.f32 %v332, %v815
      %v817 = vpop.f32.mrf.mxu0
      %v818 = vadd.f32 %v332, %v817
      %819 = vmatmul.bf16.gmra.mxu0 %v535
      %v820 = vpop.f32.mrf.mxu0
      %v821 = vadd.f32 %v332, %v820
      %v822 = vpop.f32.mrf.mxu0
      %v823 = vadd.f32 %v332, %v822
      %824 = vmatmul.bf16.gmra.mxu0 %v538
      %v825 = vpop.f32.mrf.mxu0
      %v826 = vadd.f32 %v332, %v825
      %v827 = vpop.f32.mrf.mxu0
      %v828 = vadd.f32 %v332, %v827
      %829 = vmatmul.bf16.gmra.mxu0 %v541
      %v830 = vpop.f32.mrf.mxu0
      %v831 = vadd.f32 %v332, %v830
      %v832 = vpop.f32.mrf.mxu0
      %v833 = vadd.f32 %v332, %v832
      %834 = vmatmul.bf16.gmra.mxu0 %v544
      %v835 = vpop.f32.mrf.mxu0
      %v836 = vadd.f32 %v332, %v835
      %v837 = vpop.f32.mrf.mxu0
      %v838 = vadd.f32 %v332, %v837
      %839 = vmatmul.bf16.gmra.mxu0 %v547
      %v840 = vpop.f32.mrf.mxu0
      %v841 = vadd.f32 %v332, %v840
      %v842 = vpop.f32.mrf.mxu0
      %v843 = vadd.f32 %v332, %v842
      %844 = vmatmul.bf16.gmra.mxu0 %v550
      %v845 = vpop.f32.mrf.mxu0
      %v846 = vadd.f32 %v332, %v845
      %v847 = vpop.f32.mrf.mxu0
      %v848 = vadd.f32 %v332, %v847
      %849 = vmatmul.bf16.gmra.mxu0 %v553
      %v850 = vpop.f32.mrf.mxu0
      %v851 = vadd.f32 %v332, %v850
      %v852 = vpop.f32.mrf.mxu0
      %v853 = vadd.f32 %v332, %v852
      %854 = vmatmul.bf16.gmra.mxu0 %v556
      %v855 = vpop.f32.mrf.mxu0
      %v856 = vadd.f32 %v332, %v855
      %v857 = vpop.f32.mrf.mxu0
      %v858 = vadd.f32 %v332, %v857
      %859 = vmatmul.bf16.gmra.mxu0 %v559
      %v860 = vpop.f32.mrf.mxu0
      %v861 = vadd.f32 %v332, %v860
      %v862 = vpop.f32.mrf.mxu0
      %v863 = vadd.f32 %v332, %v862
      %864 = vmatmul.bf16.gmra.mxu0 %v562
      %v865 = vpop.f32.mrf.mxu0
      %v866 = vadd.f32 %v332, %v865
      %v867 = vpop.f32.mrf.mxu0
      %v868 = vadd.f32 %v332, %v867
      %869 = vmatmul.bf16.gmra.mxu0 %v565
      %v870 = vpop.f32.mrf.mxu0
      %v871 = vadd.f32 %v332, %v870
      %v872 = vpop.f32.mrf.mxu0
      %v873 = vadd.f32 %v332, %v872
      %874 = vmatmul.bf16.gmra.mxu0 %v568
      %v875 = vpop.f32.mrf.mxu0
      %v876 = vadd.f32 %v332, %v875
      %v877 = vpop.f32.mrf.mxu0
      %v878 = vadd.f32 %v332, %v877
      %879 = vmatmul.bf16.gmra.mxu0 %v571
      %v880 = vpop.f32.mrf.mxu0
      %v881 = vadd.f32 %v332, %v880
      %v882 = vpop.f32.mrf.mxu0
      %v883 = vadd.f32 %v332, %v882
      %884 = vmatmul.bf16.gmra.mxu0 %v574
      %v885 = vpop.f32.mrf.mxu0
      %v886 = vadd.f32 %v332, %v885
      %v887 = vpop.f32.mrf.mxu0
      %v888 = vadd.f32 %v332, %v887
      %889 = vmatmul.bf16.gmra.mxu0 %v577
      %v890 = vpop.f32.mrf.mxu0
      %v891 = vadd.f32 %v332, %v890
      %v892 = vpop.f32.mrf.mxu0
      %v893 = vadd.f32 %v332, %v892
      %894 = vmatmul.bf16.gmra.mxu0 %v580
      %v895 = vpop.f32.mrf.mxu0
      %v896 = vadd.f32 %v332, %v895
      %v897 = vpop.f32.mrf.mxu0
      %v898 = vadd.f32 %v332, %v897
      %899 = vmatmul.bf16.gmra.mxu0 %v583
      %v900 = vpop.f32.mrf.mxu0
      %v901 = vadd.f32 %v332, %v900
      %v902 = vpop.f32.mrf.mxu0
      %v903 = vadd.f32 %v332, %v902
      %904 = vmatmul.bf16.gmra.mxu0 %v586
      %v905 = vpop.f32.mrf.mxu0
      %v906 = vadd.f32 %v332, %v905
      %v907 = vpop.f32.mrf.mxu0
      %v908 = vadd.f32 %v332, %v907
      %909 = vmatmul.bf16.gmra.mxu0 %v589
      %v910 = vpop.f32.mrf.mxu0
      %v911 = vadd.f32 %v332, %v910
      %v912 = vpop.f32.mrf.mxu0
      %v913 = vadd.f32 %v332, %v912
      %914 = vmatmul.bf16.gmra.mxu0 %v592
      %v915 = vpop.f32.mrf.mxu0
      %v916 = vadd.f32 %v332, %v915
      %v917 = vpop.f32.mrf.mxu0
      %v918 = vadd.f32 %v332, %v917
      %919 = vmatmul.bf16.gmra.mxu0 %v595
      %v920 = vpop.f32.mrf.mxu0
      %v921 = vadd.f32 %v332, %v920
      %v922 = vpop.f32.mrf.mxu0
      %v923 = vadd.f32 %v332, %v922
      %924 = vmatmul.bf16.gmra.mxu0 %v598
      %v925 = vpop.f32.mrf.mxu0
      %v926 = vadd.f32 %v332, %v925
      %v927 = vpop.f32.mrf.mxu0
      %v928 = vadd.f32 %v332, %v927
      %929 = vmatmul.bf16.gmra.mxu0 %v601
      %v930 = vpop.f32.mrf.mxu0
      %v931 = vadd.f32 %v332, %v930
      %v932 = vpop.f32.mrf.mxu0
      %v933 = vadd.f32 %v332, %v932
      %934 = vmatmul.bf16.gmra.mxu0 %v604
      %v935 = vpop.f32.mrf.mxu0
      %v936 = vadd.f32 %v332, %v935
      %v937 = vpop.f32.mrf.mxu0
      %v938 = vadd.f32 %v332, %v937
      %939 = vmatmul.bf16.gmra.mxu0 %v607
      %v940 = vpop.f32.mrf.mxu0
      %v941 = vadd.f32 %v332, %v940
      %v942 = vpop.f32.mrf.mxu0
      %v943 = vadd.f32 %v332, %v942
      %944 = vmatmul.bf16.gmra.mxu0 %v610
      %v945 = vpop.f32.mrf.mxu0
      %v946 = vadd.f32 %v332, %v945
      %v947 = vpop.f32.mrf.mxu0
      %v948 = vadd.f32 %v332, %v947
      %949 = vdwg.mxu0
      %v950 = vpack.c.bf16 %v791, %v622
      %v951 = vpack.c.bf16 %v793, %v624
      %v952 = vpack.c.bf16 %v796, %v627
      %v953 = vpack.c.bf16 %v798, %v629
      %v954 = vpack.c.bf16 %v801, %v632
      %v955 = vpack.c.bf16 %v803, %v634
      %v956 = vpack.c.bf16 %v806, %v637
      %v957 = vpack.c.bf16 %v808, %v639
      %v958 = vpack.c.bf16 %v811, %v642
      %v959 = vpack.c.bf16 %v813, %v644
      %v960 = vpack.c.bf16 %v816, %v647
      %v961 = vpack.c.bf16 %v818, %v649
      %v962 = vpack.c.bf16 %v821, %v652
      %v963 = vpack.c.bf16 %v823, %v654
      %v964 = vpack.c.bf16 %v826, %v657
      %v965 = vpack.c.bf16 %v828, %v659
      %v966 = vpack.c.bf16 %v831, %v662
      %v967 = vpack.c.bf16 %v833, %v664
      %v968 = vpack.c.bf16 %v836, %v667
      %v969 = vpack.c.bf16 %v838, %v669
      %v970 = vpack.c.bf16 %v841, %v672
      %v971 = vpack.c.bf16 %v843, %v674
      %v972 = vpack.c.bf16 %v846, %v677
      %v973 = vpack.c.bf16 %v848, %v679
      %v974 = vpack.c.bf16 %v851, %v682
      %v975 = vpack.c.bf16 %v853, %v684
      %v976 = vpack.c.bf16 %v856, %v687
      %v977 = vpack.c.bf16 %v858, %v689
      %v978 = vpack.c.bf16 %v861, %v692
      %v979 = vpack.c.bf16 %v863, %v694
      %v980 = vpack.c.bf16 %v866, %v697
      %v981 = vpack.c.bf16 %v868, %v699
      %v982 = vpack.c.bf16 %v871, %v702
      %v983 = vpack.c.bf16 %v873, %v704
      %v984 = vpack.c.bf16 %v876, %v707
      %v985 = vpack.c.bf16 %v878, %v709
      %v986 = vpack.c.bf16 %v881, %v712
      %v987 = vpack.c.bf16 %v883, %v714
      %v988 = vpack.c.bf16 %v886, %v717
      %v989 = vpack.c.bf16 %v888, %v719
      %v990 = vpack.c.bf16 %v891, %v722
      %v991 = vpack.c.bf16 %v893, %v724
      %v992 = vpack.c.bf16 %v896, %v727
      %v993 = vpack.c.bf16 %v898, %v729
      %v994 = vpack.c.bf16 %v901, %v732
      %v995 = vpack.c.bf16 %v903, %v734
      %v996 = vpack.c.bf16 %v906, %v737
      %v997 = vpack.c.bf16 %v908, %v739
      %v998 = vpack.c.bf16 %v911, %v742
      %v999 = vpack.c.bf16 %v913, %v744
      %v1000 = vpack.c.bf16 %v916, %v747
      %v1001 = vpack.c.bf16 %v918, %v749
      %v1002 = vpack.c.bf16 %v921, %v752
      %v1003 = vpack.c.bf16 %v923, %v754
      %v1004 = vpack.c.bf16 %v926, %v757
      %v1005 = vpack.c.bf16 %v928, %v759
      %v1006 = vpack.c.bf16 %v931, %v762
      %v1007 = vpack.c.bf16 %v933, %v764
      %v1008 = vpack.c.bf16 %v936, %v767
      %v1009 = vpack.c.bf16 %v938, %v769
      %v1010 = vpack.c.bf16 %v941, %v772
      %v1011 = vpack.c.bf16 %v943, %v774
      %v1012 = vpack.c.bf16 %v946, %v777
      %v1013 = vpack.c.bf16 %v948, %v779
      %v1022 = vunpack.c.l.b16 %v950
      %v1023 = vunpack.c.l.b16 %v951
      %v1024 = vunpack.c.l.b16 %v952
      %v1025 = vunpack.c.l.b16 %v953
      %v1026 = vunpack.c.l.b16 %v954
      %v1027 = vunpack.c.l.b16 %v955
      %v1028 = vunpack.c.l.b16 %v956
      %v1029 = vunpack.c.l.b16 %v957
      %v1030 = vpack.c.b16 %v1023, %v1022
      %v1031 = vpack.c.b16 %v1025, %v1024
      %v1032 = vpack.c.b16 %v1027, %v1026
      %v1033 = vpack.c.b16 %v1029, %v1028
      %1034 = vrot.lane.b32.xlu0 %v1030, 112
      %v1035 = vpop.permute.xlu0 %1034
      %1036 = vrot.lane.b32.xlu0 %v1031, 112
      %v1037 = vpop.permute.xlu0 %1036
      %1038 = vrot.lane.b32.xlu0 %v1032, 112
      %v1039 = vpop.permute.xlu0 %1038
      %1040 = vrot.lane.b32.xlu0 %v1033, 112
      %v1041 = vpop.permute.xlu0 %1040
      %vm1042 = vcmask 64512
      %v1044 = vsel %vm1042, %v1030, 0
      %v1047 = vsel %vm1042, %v1031, 0
      %v1050 = vsel %vm1042, %v1032, 0
      %v1053 = vsel %vm1042, %v1033, 0
      %v1056 = vsel %vm1042, %v1035, 0
      %v1059 = vsel %vm1042, %v1037, 0
      %v1062 = vsel %vm1042, %v1039, 0
      %v1065 = vsel %vm1042, %v1041, 0
      %1067 = vmatpush.bf16.xpose.msra.mxu0 0
      %1068 = vmatpush.bf16.xpose.msra.mxu0 0
      %1069 = vmatpush.bf16.xpose.msra.mxu0 0
      %1070 = vmatpush.bf16.xpose.msra.mxu0 0
      %1071 = vmatpush.bf16.xpose.msra.mxu0 %v1065
      %1072 = vmatpush.bf16.xpose.msra.mxu0 %v1062
      %1073 = vmatpush.bf16.xpose.msra.mxu0 %v1059
      %1074 = vmatpush.bf16.xpose.msra.mxu0 %v1056
      %1075 = vmatmul.bf16.gmra.mxu0 %v1044
      %v1076 = vpop.f32.mrf.mxu0
      %v1077 = vadd.f32 0.0, %v1076
      %v1078 = vpop.f32.mrf.mxu0
      %v1079 = vadd.f32 0.0, %v1078
      %1080 = vmatmul.bf16.gmra.mxu0 %v1047
      %v1081 = vpop.f32.mrf.mxu0
      %v1082 = vadd.f32 0.0, %v1081
      %v1083 = vpop.f32.mrf.mxu0
      %v1084 = vadd.f32 0.0, %v1083
      %1085 = vmatmul.bf16.gmra.mxu0 %v1050
      %v1086 = vpop.f32.mrf.mxu0
      %v1087 = vadd.f32 0.0, %v1086
      %v1088 = vpop.f32.mrf.mxu0
      %v1089 = vadd.f32 0.0, %v1088
      %1090 = vmatmul.bf16.gmra.mxu0 %v1053
      %v1091 = vpop.f32.mrf.mxu0
      %v1092 = vadd.f32 0.0, %v1091
      %v1093 = vpop.f32.mrf.mxu0
      %v1094 = vadd.f32 0.0, %v1093
      %1095 = vdwg.mxu0
      %v1104 = vunpack.c.l.b16 %v958
      %v1105 = vunpack.c.l.b16 %v959
      %v1106 = vunpack.c.l.b16 %v960
      %v1107 = vunpack.c.l.b16 %v961
      %v1108 = vunpack.c.l.b16 %v962
      %v1109 = vunpack.c.l.b16 %v963
      %v1110 = vunpack.c.l.b16 %v964
      %v1111 = vunpack.c.l.b16 %v965
      %v1112 = vpack.c.b16 %v1105, %v1104
      %v1113 = vpack.c.b16 %v1107, %v1106
      %v1114 = vpack.c.b16 %v1109, %v1108
      %v1115 = vpack.c.b16 %v1111, %v1110
      %1116 = vrot.lane.b32.xlu0 %v1112, 112
      %v1117 = vpop.permute.xlu0 %1116
      %1118 = vrot.lane.b32.xlu0 %v1113, 112
      %v1119 = vpop.permute.xlu0 %1118
      %1120 = vrot.lane.b32.xlu0 %v1114, 112
      %v1121 = vpop.permute.xlu0 %1120
      %1122 = vrot.lane.b32.xlu0 %v1115, 112
      %v1123 = vpop.permute.xlu0 %1122
      %v1125 = vsel %vm1042, %v1112, 0
      %v1128 = vsel %vm1042, %v1113, 0
      %v1131 = vsel %vm1042, %v1114, 0
      %v1134 = vsel %vm1042, %v1115, 0
      %v1137 = vsel %vm1042, %v1117, 0
      %v1140 = vsel %vm1042, %v1119, 0
      %v1143 = vsel %vm1042, %v1121, 0
      %v1146 = vsel %vm1042, %v1123, 0
      %1148 = vmatpush.bf16.xpose.msra.mxu0 0
      %1149 = vmatpush.bf16.xpose.msra.mxu0 0
      %1150 = vmatpush.bf16.xpose.msra.mxu0 0
      %1151 = vmatpush.bf16.xpose.msra.mxu0 0
      %1152 = vmatpush.bf16.xpose.msra.mxu0 %v1146
      %1153 = vmatpush.bf16.xpose.msra.mxu0 %v1143
      %1154 = vmatpush.bf16.xpose.msra.mxu0 %v1140
      %1155 = vmatpush.bf16.xpose.msra.mxu0 %v1137
      %1156 = vmatmul.bf16.gmra.mxu0 %v1125
      %v1157 = vpop.f32.mrf.mxu0
      %v1158 = vadd.f32 0.0, %v1157
      %v1159 = vpop.f32.mrf.mxu0
      %v1160 = vadd.f32 0.0, %v1159
      %1161 = vmatmul.bf16.gmra.mxu0 %v1128
      %v1162 = vpop.f32.mrf.mxu0
      %v1163 = vadd.f32 0.0, %v1162
      %v1164 = vpop.f32.mrf.mxu0
      %v1165 = vadd.f32 0.0, %v1164
      %1166 = vmatmul.bf16.gmra.mxu0 %v1131
      %v1167 = vpop.f32.mrf.mxu0
      %v1168 = vadd.f32 0.0, %v1167
      %v1169 = vpop.f32.mrf.mxu0
      %v1170 = vadd.f32 0.0, %v1169
      %1171 = vmatmul.bf16.gmra.mxu0 %v1134
      %v1172 = vpop.f32.mrf.mxu0
      %v1173 = vadd.f32 0.0, %v1172
      %v1174 = vpop.f32.mrf.mxu0
      %v1175 = vadd.f32 0.0, %v1174
      %1176 = vdwg.mxu0
      %v1185 = vunpack.c.l.b16 %v966
      %v1186 = vunpack.c.l.b16 %v967
      %v1187 = vunpack.c.l.b16 %v968
      %v1188 = vunpack.c.l.b16 %v969
      %v1189 = vunpack.c.l.b16 %v970
      %v1190 = vunpack.c.l.b16 %v971
      %v1191 = vunpack.c.l.b16 %v972
      %v1192 = vunpack.c.l.b16 %v973
      %v1193 = vpack.c.b16 %v1186, %v1185
      %v1194 = vpack.c.b16 %v1188, %v1187
      %v1195 = vpack.c.b16 %v1190, %v1189
      %v1196 = vpack.c.b16 %v1192, %v1191
      %1197 = vrot.lane.b32.xlu0 %v1193, 112
      %v1198 = vpop.permute.xlu0 %1197
      %1199 = vrot.lane.b32.xlu0 %v1194, 112
      %v1200 = vpop.permute.xlu0 %1199
      %1201 = vrot.lane.b32.xlu0 %v1195, 112
      %v1202 = vpop.permute.xlu0 %1201
      %1203 = vrot.lane.b32.xlu0 %v1196, 112
      %v1204 = vpop.permute.xlu0 %1203
      %v1206 = vsel %vm1042, %v1193, 0
      %v1209 = vsel %vm1042, %v1194, 0
      %v1212 = vsel %vm1042, %v1195, 0
      %v1215 = vsel %vm1042, %v1196, 0
      %v1218 = vsel %vm1042, %v1198, 0
      %v1221 = vsel %vm1042, %v1200, 0
      %v1224 = vsel %vm1042, %v1202, 0
      %v1227 = vsel %vm1042, %v1204, 0
      %1229 = vmatpush.bf16.xpose.msra.mxu0 0
      %1230 = vmatpush.bf16.xpose.msra.mxu0 0
      %1231 = vmatpush.bf16.xpose.msra.mxu0 0
      %1232 = vmatpush.bf16.xpose.msra.mxu0 0
      %1233 = vmatpush.bf16.xpose.msra.mxu0 %v1227
      %1234 = vmatpush.bf16.xpose.msra.mxu0 %v1224
      %1235 = vmatpush.bf16.xpose.msra.mxu0 %v1221
      %1236 = vmatpush.bf16.xpose.msra.mxu0 %v1218
      %1237 = vmatmul.bf16.gmra.mxu0 %v1206
      %v1238 = vpop.f32.mrf.mxu0
      %v1239 = vadd.f32 0.0, %v1238
      %v1240 = vpop.f32.mrf.mxu0
      %v1241 = vadd.f32 0.0, %v1240
      %1242 = vmatmul.bf16.gmra.mxu0 %v1209
      %v1243 = vpop.f32.mrf.mxu0
      %v1244 = vadd.f32 0.0, %v1243
      %v1245 = vpop.f32.mrf.mxu0
      %v1246 = vadd.f32 0.0, %v1245
      %1247 = vmatmul.bf16.gmra.mxu0 %v1212
      %v1248 = vpop.f32.mrf.mxu0
      %v1249 = vadd.f32 0.0, %v1248
      %v1250 = vpop.f32.mrf.mxu0
      %v1251 = vadd.f32 0.0, %v1250
      %1252 = vmatmul.bf16.gmra.mxu0 %v1215
      %v1253 = vpop.f32.mrf.mxu0
      %v1254 = vadd.f32 0.0, %v1253
      %v1255 = vpop.f32.mrf.mxu0
      %v1256 = vadd.f32 0.0, %v1255
      %1257 = vdwg.mxu0
      %v1266 = vunpack.c.l.b16 %v974
      %v1267 = vunpack.c.l.b16 %v975
      %v1268 = vunpack.c.l.b16 %v976
      %v1269 = vunpack.c.l.b16 %v977
      %v1270 = vunpack.c.l.b16 %v978
      %v1271 = vunpack.c.l.b16 %v979
      %v1272 = vunpack.c.l.b16 %v980
      %v1273 = vunpack.c.l.b16 %v981
      %v1274 = vpack.c.b16 %v1267, %v1266
      %v1275 = vpack.c.b16 %v1269, %v1268
      %v1276 = vpack.c.b16 %v1271, %v1270
      %v1277 = vpack.c.b16 %v1273, %v1272
      %1278 = vrot.lane.b32.xlu0 %v1274, 112
      %v1279 = vpop.permute.xlu0 %1278
      %1280 = vrot.lane.b32.xlu0 %v1275, 112
      %v1281 = vpop.permute.xlu0 %1280
      %1282 = vrot.lane.b32.xlu0 %v1276, 112
      %v1283 = vpop.permute.xlu0 %1282
      %1284 = vrot.lane.b32.xlu0 %v1277, 112
      %v1285 = vpop.permute.xlu0 %1284
      %v1287 = vsel %vm1042, %v1274, 0
      %v1290 = vsel %vm1042, %v1275, 0
      %v1293 = vsel %vm1042, %v1276, 0
      %v1296 = vsel %vm1042, %v1277, 0
      %v1299 = vsel %vm1042, %v1279, 0
      %v1302 = vsel %vm1042, %v1281, 0
      %v1305 = vsel %vm1042, %v1283, 0
      %v1308 = vsel %vm1042, %v1285, 0
      %1310 = vmatpush.bf16.xpose.msra.mxu0 0
      %1311 = vmatpush.bf16.xpose.msra.mxu0 0
      %1312 = vmatpush.bf16.xpose.msra.mxu0 0
      %1313 = vmatpush.bf16.xpose.msra.mxu0 0
      %1314 = vmatpush.bf16.xpose.msra.mxu0 %v1308
      %1315 = vmatpush.bf16.xpose.msra.mxu0 %v1305
      %1316 = vmatpush.bf16.xpose.msra.mxu0 %v1302
      %1317 = vmatpush.bf16.xpose.msra.mxu0 %v1299
      %1318 = vmatmul.bf16.gmra.mxu0 %v1287
      %v1319 = vpop.f32.mrf.mxu0
      %v1320 = vadd.f32 0.0, %v1319
      %v1321 = vpop.f32.mrf.mxu0
      %v1322 = vadd.f32 0.0, %v1321
      %1323 = vmatmul.bf16.gmra.mxu0 %v1290
      %v1324 = vpop.f32.mrf.mxu0
      %v1325 = vadd.f32 0.0, %v1324
      %v1326 = vpop.f32.mrf.mxu0
      %v1327 = vadd.f32 0.0, %v1326
      %1328 = vmatmul.bf16.gmra.mxu0 %v1293
      %v1329 = vpop.f32.mrf.mxu0
      %v1330 = vadd.f32 0.0, %v1329
      %v1331 = vpop.f32.mrf.mxu0
      %v1332 = vadd.f32 0.0, %v1331
      %1333 = vmatmul.bf16.gmra.mxu0 %v1296
      %v1334 = vpop.f32.mrf.mxu0
      %v1335 = vadd.f32 0.0, %v1334
      %v1336 = vpop.f32.mrf.mxu0
      %v1337 = vadd.f32 0.0, %v1336
      %1338 = vdwg.mxu0
      %v1347 = vunpack.c.l.b16 %v982
      %v1348 = vunpack.c.l.b16 %v983
      %v1349 = vunpack.c.l.b16 %v984
      %v1350 = vunpack.c.l.b16 %v985
      %v1351 = vunpack.c.l.b16 %v986
      %v1352 = vunpack.c.l.b16 %v987
      %v1353 = vunpack.c.l.b16 %v988
      %v1354 = vunpack.c.l.b16 %v989
      %v1355 = vpack.c.b16 %v1348, %v1347
      %v1356 = vpack.c.b16 %v1350, %v1349
      %v1357 = vpack.c.b16 %v1352, %v1351
      %v1358 = vpack.c.b16 %v1354, %v1353
      %1359 = vrot.lane.b32.xlu0 %v1355, 112
      %v1360 = vpop.permute.xlu0 %1359
      %1361 = vrot.lane.b32.xlu0 %v1356, 112
      %v1362 = vpop.permute.xlu0 %1361
      %1363 = vrot.lane.b32.xlu0 %v1357, 112
      %v1364 = vpop.permute.xlu0 %1363
      %1365 = vrot.lane.b32.xlu0 %v1358, 112
      %v1366 = vpop.permute.xlu0 %1365
      %v1368 = vsel %vm1042, %v1355, 0
      %v1371 = vsel %vm1042, %v1356, 0
      %v1374 = vsel %vm1042, %v1357, 0
      %v1377 = vsel %vm1042, %v1358, 0
      %v1380 = vsel %vm1042, %v1360, 0
      %v1383 = vsel %vm1042, %v1362, 0
      %v1386 = vsel %vm1042, %v1364, 0
      %v1389 = vsel %vm1042, %v1366, 0
      %1391 = vmatpush.bf16.xpose.msra.mxu0 0
      %1392 = vmatpush.bf16.xpose.msra.mxu0 0
      %1393 = vmatpush.bf16.xpose.msra.mxu0 0
      %1394 = vmatpush.bf16.xpose.msra.mxu0 0
      %1395 = vmatpush.bf16.xpose.msra.mxu0 %v1389
      %1396 = vmatpush.bf16.xpose.msra.mxu0 %v1386
      %1397 = vmatpush.bf16.xpose.msra.mxu0 %v1383
      %1398 = vmatpush.bf16.xpose.msra.mxu0 %v1380
      %1399 = vmatmul.bf16.gmra.mxu0 %v1368
      %v1400 = vpop.f32.mrf.mxu0
      %v1401 = vadd.f32 0.0, %v1400
      %v1402 = vpop.f32.mrf.mxu0
      %v1403 = vadd.f32 0.0, %v1402
      %1404 = vmatmul.bf16.gmra.mxu0 %v1371
      %v1405 = vpop.f32.mrf.mxu0
      %v1406 = vadd.f32 0.0, %v1405
      %v1407 = vpop.f32.mrf.mxu0
      %v1408 = vadd.f32 0.0, %v1407
      %1409 = vmatmul.bf16.gmra.mxu0 %v1374
      %v1410 = vpop.f32.mrf.mxu0
      %v1411 = vadd.f32 0.0, %v1410
      %v1412 = vpop.f32.mrf.mxu0
      %v1413 = vadd.f32 0.0, %v1412
      %1414 = vmatmul.bf16.gmra.mxu0 %v1377
      %v1415 = vpop.f32.mrf.mxu0
      %v1416 = vadd.f32 0.0, %v1415
      %v1417 = vpop.f32.mrf.mxu0
      %v1418 = vadd.f32 0.0, %v1417
      %1419 = vdwg.mxu0
      %v1428 = vunpack.c.l.b16 %v990
      %v1429 = vunpack.c.l.b16 %v991
      %v1430 = vunpack.c.l.b16 %v992
      %v1431 = vunpack.c.l.b16 %v993
      %v1432 = vunpack.c.l.b16 %v994
      %v1433 = vunpack.c.l.b16 %v995
      %v1434 = vunpack.c.l.b16 %v996
      %v1435 = vunpack.c.l.b16 %v997
      %v1436 = vpack.c.b16 %v1429, %v1428
      %v1437 = vpack.c.b16 %v1431, %v1430
      %v1438 = vpack.c.b16 %v1433, %v1432
      %v1439 = vpack.c.b16 %v1435, %v1434
      %1440 = vrot.lane.b32.xlu0 %v1436, 112
      %v1441 = vpop.permute.xlu0 %1440
      %1442 = vrot.lane.b32.xlu0 %v1437, 112
      %v1443 = vpop.permute.xlu0 %1442
      %1444 = vrot.lane.b32.xlu0 %v1438, 112
      %v1445 = vpop.permute.xlu0 %1444
      %1446 = vrot.lane.b32.xlu0 %v1439, 112
      %v1447 = vpop.permute.xlu0 %1446
      %v1449 = vsel %vm1042, %v1436, 0
      %v1452 = vsel %vm1042, %v1437, 0
      %v1455 = vsel %vm1042, %v1438, 0
      %v1458 = vsel %vm1042, %v1439, 0
      %v1461 = vsel %vm1042, %v1441, 0
      %v1464 = vsel %vm1042, %v1443, 0
      %v1467 = vsel %vm1042, %v1445, 0
      %v1470 = vsel %vm1042, %v1447, 0
      %1472 = vmatpush.bf16.xpose.msra.mxu0 0
      %1473 = vmatpush.bf16.xpose.msra.mxu0 0
      %1474 = vmatpush.bf16.xpose.msra.mxu0 0
      %1475 = vmatpush.bf16.xpose.msra.mxu0 0
      %1476 = vmatpush.bf16.xpose.msra.mxu0 %v1470
      %1477 = vmatpush.bf16.xpose.msra.mxu0 %v1467
      %1478 = vmatpush.bf16.xpose.msra.mxu0 %v1464
      %1479 = vmatpush.bf16.xpose.msra.mxu0 %v1461
      %1480 = vmatmul.bf16.gmra.mxu0 %v1449
      %v1481 = vpop.f32.mrf.mxu0
      %v1482 = vadd.f32 0.0, %v1481
      %v1483 = vpop.f32.mrf.mxu0
      %v1484 = vadd.f32 0.0, %v1483
      %1485 = vmatmul.bf16.gmra.mxu0 %v1452
      %v1486 = vpop.f32.mrf.mxu0
      %v1487 = vadd.f32 0.0, %v1486
      %v1488 = vpop.f32.mrf.mxu0
      %v1489 = vadd.f32 0.0, %v1488
      %1490 = vmatmul.bf16.gmra.mxu0 %v1455
      %v1491 = vpop.f32.mrf.mxu0
      %v1492 = vadd.f32 0.0, %v1491
      %v1493 = vpop.f32.mrf.mxu0
      %v1494 = vadd.f32 0.0, %v1493
      %1495 = vmatmul.bf16.gmra.mxu0 %v1458
      %v1496 = vpop.f32.mrf.mxu0
      %v1497 = vadd.f32 0.0, %v1496
      %v1498 = vpop.f32.mrf.mxu0
      %v1499 = vadd.f32 0.0, %v1498
      %1500 = vdwg.mxu0
      %v1509 = vunpack.c.l.b16 %v998
      %v1510 = vunpack.c.l.b16 %v999
      %v1511 = vunpack.c.l.b16 %v1000
      %v1512 = vunpack.c.l.b16 %v1001
      %v1513 = vunpack.c.l.b16 %v1002
      %v1514 = vunpack.c.l.b16 %v1003
      %v1515 = vunpack.c.l.b16 %v1004
      %v1516 = vunpack.c.l.b16 %v1005
      %v1517 = vpack.c.b16 %v1510, %v1509
      %v1518 = vpack.c.b16 %v1512, %v1511
      %v1519 = vpack.c.b16 %v1514, %v1513
      %v1520 = vpack.c.b16 %v1516, %v1515
      %1521 = vrot.lane.b32.xlu0 %v1517, 112
      %v1522 = vpop.permute.xlu0 %1521
      %1523 = vrot.lane.b32.xlu0 %v1518, 112
      %v1524 = vpop.permute.xlu0 %1523
      %1525 = vrot.lane.b32.xlu0 %v1519, 112
      %v1526 = vpop.permute.xlu0 %1525
      %1527 = vrot.lane.b32.xlu0 %v1520, 112
      %v1528 = vpop.permute.xlu0 %1527
      %v1530 = vsel %vm1042, %v1517, 0
      %v1533 = vsel %vm1042, %v1518, 0
      %v1536 = vsel %vm1042, %v1519, 0
      %v1539 = vsel %vm1042, %v1520, 0
      %v1542 = vsel %vm1042, %v1522, 0
      %v1545 = vsel %vm1042, %v1524, 0
      %v1548 = vsel %vm1042, %v1526, 0
      %v1551 = vsel %vm1042, %v1528, 0
      %1553 = vmatpush.bf16.xpose.msra.mxu0 0
      %1554 = vmatpush.bf16.xpose.msra.mxu0 0
      %1555 = vmatpush.bf16.xpose.msra.mxu0 0
      %1556 = vmatpush.bf16.xpose.msra.mxu0 0
      %1557 = vmatpush.bf16.xpose.msra.mxu0 %v1551
      %1558 = vmatpush.bf16.xpose.msra.mxu0 %v1548
      %1559 = vmatpush.bf16.xpose.msra.mxu0 %v1545
      %1560 = vmatpush.bf16.xpose.msra.mxu0 %v1542
      %1561 = vmatmul.bf16.gmra.mxu0 %v1530
      %v1562 = vpop.f32.mrf.mxu0
      %v1563 = vadd.f32 0.0, %v1562
      %v1564 = vpop.f32.mrf.mxu0
      %v1565 = vadd.f32 0.0, %v1564
      %1566 = vmatmul.bf16.gmra.mxu0 %v1533
      %v1567 = vpop.f32.mrf.mxu0
      %v1568 = vadd.f32 0.0, %v1567
      %v1569 = vpop.f32.mrf.mxu0
      %v1570 = vadd.f32 0.0, %v1569
      %1571 = vmatmul.bf16.gmra.mxu0 %v1536
      %v1572 = vpop.f32.mrf.mxu0
      %v1573 = vadd.f32 0.0, %v1572
      %v1574 = vpop.f32.mrf.mxu0
      %v1575 = vadd.f32 0.0, %v1574
      %1576 = vmatmul.bf16.gmra.mxu0 %v1539
      %v1577 = vpop.f32.mrf.mxu0
      %v1578 = vadd.f32 0.0, %v1577
      %v1579 = vpop.f32.mrf.mxu0
      %v1580 = vadd.f32 0.0, %v1579
      %1581 = vdwg.mxu0
      %v1590 = vunpack.c.l.b16 %v1006
      %v1591 = vunpack.c.l.b16 %v1007
      %v1592 = vunpack.c.l.b16 %v1008
      %v1593 = vunpack.c.l.b16 %v1009
      %v1594 = vunpack.c.l.b16 %v1010
      %v1595 = vunpack.c.l.b16 %v1011
      %v1596 = vunpack.c.l.b16 %v1012
      %v1597 = vunpack.c.l.b16 %v1013
      %v1598 = vpack.c.b16 %v1591, %v1590
      %v1599 = vpack.c.b16 %v1593, %v1592
      %v1600 = vpack.c.b16 %v1595, %v1594
      %v1601 = vpack.c.b16 %v1597, %v1596
      %1602 = vrot.lane.b32.xlu0 %v1598, 112
      %v1603 = vpop.permute.xlu0 %1602
      %1604 = vrot.lane.b32.xlu0 %v1599, 112
      %v1605 = vpop.permute.xlu0 %1604
      %1606 = vrot.lane.b32.xlu0 %v1600, 112
      %v1607 = vpop.permute.xlu0 %1606
      %1608 = vrot.lane.b32.xlu0 %v1601, 112
      %v1609 = vpop.permute.xlu0 %1608
      %v1611 = vsel %vm1042, %v1598, 0
      %v1614 = vsel %vm1042, %v1599, 0
      %v1617 = vsel %vm1042, %v1600, 0
      %v1620 = vsel %vm1042, %v1601, 0
      %v1623 = vsel %vm1042, %v1603, 0
      %v1626 = vsel %vm1042, %v1605, 0
      %v1629 = vsel %vm1042, %v1607, 0
      %v1632 = vsel %vm1042, %v1609, 0
      %1634 = vmatpush.bf16.xpose.msra.mxu0 0
      %1635 = vmatpush.bf16.xpose.msra.mxu0 0
      %1636 = vmatpush.bf16.xpose.msra.mxu0 0
      %1637 = vmatpush.bf16.xpose.msra.mxu0 0
      %1638 = vmatpush.bf16.xpose.msra.mxu0 %v1632
      %1639 = vmatpush.bf16.xpose.msra.mxu0 %v1629
      %1640 = vmatpush.bf16.xpose.msra.mxu0 %v1626
      %1641 = vmatpush.bf16.xpose.msra.mxu0 %v1623
      %1642 = vmatmul.bf16.gmra.mxu0 %v1611
      %v1643 = vpop.f32.mrf.mxu0
      %v1644 = vadd.f32 0.0, %v1643
      %v1645 = vpop.f32.mrf.mxu0
      %v1646 = vadd.f32 0.0, %v1645
      %1647 = vmatmul.bf16.gmra.mxu0 %v1614
      %v1648 = vpop.f32.mrf.mxu0
      %v1649 = vadd.f32 0.0, %v1648
      %v1650 = vpop.f32.mrf.mxu0
      %v1651 = vadd.f32 0.0, %v1650
      %1652 = vmatmul.bf16.gmra.mxu0 %v1617
      %v1653 = vpop.f32.mrf.mxu0
      %v1654 = vadd.f32 0.0, %v1653
      %v1655 = vpop.f32.mrf.mxu0
      %v1656 = vadd.f32 0.0, %v1655
      %1657 = vmatmul.bf16.gmra.mxu0 %v1620
      %v1658 = vpop.f32.mrf.mxu0
      %v1659 = vadd.f32 0.0, %v1658
      %v1660 = vpop.f32.mrf.mxu0
      %v1661 = vadd.f32 0.0, %v1660
      %1662 = vdwg.mxu0
      %v1663 = vld [vmem:[%s3] sm:$0xff]
      %v1664 = vld [vmem:[%s3 + $0x8] sm:$0xff]
      %v1665 = vld [vmem:[%s3 + $0x10] sm:$0xff]
      %v1666 = vld [vmem:[%s3 + $0x18] sm:$0xff]
      %v1667 = vld [vmem:[%s3 + $0x20] sm:$0xff]
      %v1668 = vld [vmem:[%s3 + $0x28] sm:$0xff]
      %v1669 = vld [vmem:[%s3 + $0x30] sm:$0xff]
      %v1670 = vld [vmem:[%s3 + $0x38] sm:$0xff]
      %v1671 = vmul.f32 %v1077, %v1663
      %v1672 = vmul.f32 %v1079, %v1664
      %v1673 = vmul.f32 %v1082, %v1665
      %v1674 = vmul.f32 %v1084, %v1666
      %v1675 = vmul.f32 %v1087, %v1667
      %v1676 = vmul.f32 %v1089, %v1668
      %v1677 = vmul.f32 %v1092, %v1669
      %v1678 = vmul.f32 %v1094, %v1670
      %v1679 = vmul.f32 %v1158, %v1663
      %v1680 = vmul.f32 %v1160, %v1664
      %v1681 = vmul.f32 %v1163, %v1665
      %v1682 = vmul.f32 %v1165, %v1666
      %v1683 = vmul.f32 %v1168, %v1667
      %v1684 = vmul.f32 %v1170, %v1668
      %v1685 = vmul.f32 %v1173, %v1669
      %v1686 = vmul.f32 %v1175, %v1670
      %v1687 = vmul.f32 %v1239, %v1663
      %v1688 = vmul.f32 %v1241, %v1664
      %v1689 = vmul.f32 %v1244, %v1665
      %v1690 = vmul.f32 %v1246, %v1666
      %v1691 = vmul.f32 %v1249, %v1667
      %v1692 = vmul.f32 %v1251, %v1668
      %v1693 = vmul.f32 %v1254, %v1669
      %v1694 = vmul.f32 %v1256, %v1670
      %v1695 = vmul.f32 %v1320, %v1663
      %v1696 = vmul.f32 %v1322, %v1664
      %v1697 = vmul.f32 %v1325, %v1665
      %v1698 = vmul.f32 %v1327, %v1666
      %v1699 = vmul.f32 %v1330, %v1667
      %v1700 = vmul.f32 %v1332, %v1668
      %v1701 = vmul.f32 %v1335, %v1669
      %v1702 = vmul.f32 %v1337, %v1670
      %v1703 = vmul.f32 %v1401, %v1663
      %v1704 = vmul.f32 %v1403, %v1664
      %v1705 = vmul.f32 %v1406, %v1665
      %v1706 = vmul.f32 %v1408, %v1666
      %v1707 = vmul.f32 %v1411, %v1667
      %v1708 = vmul.f32 %v1413, %v1668
      %v1709 = vmul.f32 %v1416, %v1669
      %v1710 = vmul.f32 %v1418, %v1670
      %v1711 = vmul.f32 %v1482, %v1663
      %v1712 = vmul.f32 %v1484, %v1664
      %v1713 = vmul.f32 %v1487, %v1665
      %v1714 = vmul.f32 %v1489, %v1666
      %v1715 = vmul.f32 %v1492, %v1667
      %v1716 = vmul.f32 %v1494, %v1668
      %v1717 = vmul.f32 %v1497, %v1669
      %v1718 = vmul.f32 %v1499, %v1670
      %v1719 = vmul.f32 %v1563, %v1663
      %v1720 = vmul.f32 %v1565, %v1664
      %v1721 = vmul.f32 %v1568, %v1665
      %v1722 = vmul.f32 %v1570, %v1666
      %v1723 = vmul.f32 %v1573, %v1667
      %v1724 = vmul.f32 %v1575, %v1668
      %v1725 = vmul.f32 %v1578, %v1669
      %v1726 = vmul.f32 %v1580, %v1670
      %v1727 = vmul.f32 %v1644, %v1663
      %v1728 = vmul.f32 %v1646, %v1664
      %v1729 = vmul.f32 %v1649, %v1665
      %v1730 = vmul.f32 %v1651, %v1666
      %v1731 = vmul.f32 %v1654, %v1667
      %v1732 = vmul.f32 %v1656, %v1668
      %v1733 = vmul.f32 %v1659, %v1669
      %v1734 = vmul.f32 %v1661, %v1670
      %v1735 = vld [vmem:[%s4] sm:$0xff]
      %v1736 = vld [vmem:[%s4 + $0x8] sm:$0xff]
      %v1737 = vld [vmem:[%s4 + $0x10] sm:$0xff]
      %v1738 = vld [vmem:[%s4 + $0x18] sm:$0xff]
      %v1739 = vld [vmem:[%s4 + $0x20] sm:$0xff]
      %v1740 = vld [vmem:[%s4 + $0x28] sm:$0xff]
      %v1741 = vld [vmem:[%s4 + $0x30] sm:$0xff]
      %v1742 = vld [vmem:[%s4 + $0x38] sm:$0xff]
      %v1743 = vadd.f32 %v1671, %v1735
      %v1744 = vadd.f32 %v1672, %v1736
      %v1745 = vadd.f32 %v1673, %v1737
      %v1746 = vadd.f32 %v1674, %v1738
      %v1747 = vadd.f32 %v1675, %v1739
      %v1748 = vadd.f32 %v1676, %v1740
      %v1749 = vadd.f32 %v1677, %v1741
      %v1750 = vadd.f32 %v1678, %v1742
      %v1751 = vadd.f32 %v1679, %v1735
      %v1752 = vadd.f32 %v1680, %v1736
      %v1753 = vadd.f32 %v1681, %v1737
      %v1754 = vadd.f32 %v1682, %v1738
      %v1755 = vadd.f32 %v1683, %v1739
      %v1756 = vadd.f32 %v1684, %v1740
      %v1757 = vadd.f32 %v1685, %v1741
      %v1758 = vadd.f32 %v1686, %v1742
      %v1759 = vadd.f32 %v1687, %v1735
      %v1760 = vadd.f32 %v1688, %v1736
      %v1761 = vadd.f32 %v1689, %v1737
      %v1762 = vadd.f32 %v1690, %v1738
      %v1763 = vadd.f32 %v1691, %v1739
      %v1764 = vadd.f32 %v1692, %v1740
      %v1765 = vadd.f32 %v1693, %v1741
      %v1766 = vadd.f32 %v1694, %v1742
      %v1767 = vadd.f32 %v1695, %v1735
      %v1768 = vadd.f32 %v1696, %v1736
      %v1769 = vadd.f32 %v1697, %v1737
      %v1770 = vadd.f32 %v1698, %v1738
      %v1771 = vadd.f32 %v1699, %v1739
      %v1772 = vadd.f32 %v1700, %v1740
      %v1773 = vadd.f32 %v1701, %v1741
      %v1774 = vadd.f32 %v1702, %v1742
      %v1775 = vadd.f32 %v1703, %v1735
      %v1776 = vadd.f32 %v1704, %v1736
      %v1777 = vadd.f32 %v1705, %v1737
      %v1778 = vadd.f32 %v1706, %v1738
      %v1779 = vadd.f32 %v1707, %v1739
      %v1780 = vadd.f32 %v1708, %v1740
      %v1781 = vadd.f32 %v1709, %v1741
      %v1782 = vadd.f32 %v1710, %v1742
      %v1783 = vadd.f32 %v1711, %v1735
      %v1784 = vadd.f32 %v1712, %v1736
      %v1785 = vadd.f32 %v1713, %v1737
      %v1786 = vadd.f32 %v1714, %v1738
      %v1787 = vadd.f32 %v1715, %v1739
      %v1788 = vadd.f32 %v1716, %v1740
      %v1789 = vadd.f32 %v1717, %v1741
      %v1790 = vadd.f32 %v1718, %v1742
      %v1791 = vadd.f32 %v1719, %v1735
      %v1792 = vadd.f32 %v1720, %v1736
      %v1793 = vadd.f32 %v1721, %v1737
      %v1794 = vadd.f32 %v1722, %v1738
      %v1795 = vadd.f32 %v1723, %v1739
      %v1796 = vadd.f32 %v1724, %v1740
      %v1797 = vadd.f32 %v1725, %v1741
      %v1798 = vadd.f32 %v1726, %v1742
      %v1799 = vadd.f32 %v1727, %v1735
      %v1800 = vadd.f32 %v1728, %v1736
      %v1801 = vadd.f32 %v1729, %v1737
      %v1802 = vadd.f32 %v1730, %v1738
      %v1803 = vadd.f32 %v1731, %v1739
      %v1804 = vadd.f32 %v1732, %v1740
      %v1805 = vadd.f32 %v1733, %v1741
      %v1806 = vadd.f32 %v1734, %v1742
      %vm1807 = vcmask 523264
      %v1808 = vsel %vm1807, %v1743, -inf
      %1809 = vmax.xlane.f32.xlu0 %v1808
      %v1810 = vpop.xlane.xlu0 %1809
      %v1811 = vsel %vm1807, %v1744, -inf
      %1812 = vmax.xlane.f32.xlu0 %v1811
      %v1813 = vpop.xlane.xlu0 %1812
      %v1814 = vsel %vm1807, %v1745, -inf
      %1815 = vmax.xlane.f32.xlu0 %v1814
      %v1816 = vpop.xlane.xlu0 %1815
      %v1817 = vsel %vm1807, %v1746, -inf
      %1818 = vmax.xlane.f32.xlu0 %v1817
      %v1819 = vpop.xlane.xlu0 %1818
      %v1820 = vsel %vm1807, %v1747, -inf
      %1821 = vmax.xlane.f32.xlu0 %v1820
      %v1822 = vpop.xlane.xlu0 %1821
      %v1823 = vsel %vm1807, %v1748, -inf
      %1824 = vmax.xlane.f32.xlu0 %v1823
      %v1825 = vpop.xlane.xlu0 %1824
      %v1826 = vsel %vm1807, %v1749, -inf
      %1827 = vmax.xlane.f32.xlu0 %v1826
      %v1828 = vpop.xlane.xlu0 %1827
      %v1829 = vsel %vm1807, %v1750, -inf
      %1830 = vmax.xlane.f32.xlu0 %v1829
      %v1831 = vpop.xlane.xlu0 %1830
      %v1832 = vsel %vm1807, %v1751, -inf
      %1833 = vmax.xlane.f32.xlu0 %v1832
      %v1834 = vpop.xlane.xlu0 %1833
      %v1835 = vsel %vm1807, %v1752, -inf
      %1836 = vmax.xlane.f32.xlu0 %v1835
      %v1837 = vpop.xlane.xlu0 %1836
      %v1838 = vsel %vm1807, %v1753, -inf
      %1839 = vmax.xlane.f32.xlu0 %v1838
      %v1840 = vpop.xlane.xlu0 %1839
      %v1841 = vsel %vm1807, %v1754, -inf
      %1842 = vmax.xlane.f32.xlu0 %v1841
      %v1843 = vpop.xlane.xlu0 %1842
      %v1844 = vsel %vm1807, %v1755, -inf
      %1845 = vmax.xlane.f32.xlu0 %v1844
      %v1846 = vpop.xlane.xlu0 %1845
      %v1847 = vsel %vm1807, %v1756, -inf
      %1848 = vmax.xlane.f32.xlu0 %v1847
      %v1849 = vpop.xlane.xlu0 %1848
      %v1850 = vsel %vm1807, %v1757, -inf
      %1851 = vmax.xlane.f32.xlu0 %v1850
      %v1852 = vpop.xlane.xlu0 %1851
      %v1853 = vsel %vm1807, %v1758, -inf
      %1854 = vmax.xlane.f32.xlu0 %v1853
      %v1855 = vpop.xlane.xlu0 %1854
      %v1856 = vsel %vm1807, %v1759, -inf
      %1857 = vmax.xlane.f32.xlu0 %v1856
      %v1858 = vpop.xlane.xlu0 %1857
      %v1859 = vsel %vm1807, %v1760, -inf
      %1860 = vmax.xlane.f32.xlu0 %v1859
      %v1861 = vpop.xlane.xlu0 %1860
      %v1862 = vsel %vm1807, %v1761, -inf
      %1863 = vmax.xlane.f32.xlu0 %v1862
      %v1864 = vpop.xlane.xlu0 %1863
      %v1865 = vsel %vm1807, %v1762, -inf
      %1866 = vmax.xlane.f32.xlu0 %v1865
      %v1867 = vpop.xlane.xlu0 %1866
      %v1868 = vsel %vm1807, %v1763, -inf
      %1869 = vmax.xlane.f32.xlu0 %v1868
      %v1870 = vpop.xlane.xlu0 %1869
      %v1871 = vsel %vm1807, %v1764, -inf
      %1872 = vmax.xlane.f32.xlu0 %v1871
      %v1873 = vpop.xlane.xlu0 %1872
      %v1874 = vsel %vm1807, %v1765, -inf
      %1875 = vmax.xlane.f32.xlu0 %v1874
      %v1876 = vpop.xlane.xlu0 %1875
      %v1877 = vsel %vm1807, %v1766, -inf
      %1878 = vmax.xlane.f32.xlu0 %v1877
      %v1879 = vpop.xlane.xlu0 %1878
      %v1880 = vsel %vm1807, %v1767, -inf
      %1881 = vmax.xlane.f32.xlu0 %v1880
      %v1882 = vpop.xlane.xlu0 %1881
      %v1883 = vsel %vm1807, %v1768, -inf
      %1884 = vmax.xlane.f32.xlu0 %v1883
      %v1885 = vpop.xlane.xlu0 %1884
      %v1886 = vsel %vm1807, %v1769, -inf
      %1887 = vmax.xlane.f32.xlu0 %v1886
      %v1888 = vpop.xlane.xlu0 %1887
      %v1889 = vsel %vm1807, %v1770, -inf
      %1890 = vmax.xlane.f32.xlu0 %v1889
      %v1891 = vpop.xlane.xlu0 %1890
      %v1892 = vsel %vm1807, %v1771, -inf
      %1893 = vmax.xlane.f32.xlu0 %v1892
      %v1894 = vpop.xlane.xlu0 %1893
      %v1895 = vsel %vm1807, %v1772, -inf
      %1896 = vmax.xlane.f32.xlu0 %v1895
      %v1897 = vpop.xlane.xlu0 %1896
      %v1898 = vsel %vm1807, %v1773, -inf
      %1899 = vmax.xlane.f32.xlu0 %v1898
      %v1900 = vpop.xlane.xlu0 %1899
      %v1901 = vsel %vm1807, %v1774, -inf
      %1902 = vmax.xlane.f32.xlu0 %v1901
      %v1903 = vpop.xlane.xlu0 %1902
      %v1904 = vsel %vm1807, %v1775, -inf
      %1905 = vmax.xlane.f32.xlu0 %v1904
      %v1906 = vpop.xlane.xlu0 %1905
      %v1907 = vsel %vm1807, %v1776, -inf
      %1908 = vmax.xlane.f32.xlu0 %v1907
      %v1909 = vpop.xlane.xlu0 %1908
      %v1910 = vsel %vm1807, %v1777, -inf
      %1911 = vmax.xlane.f32.xlu0 %v1910
      %v1912 = vpop.xlane.xlu0 %1911
      %v1913 = vsel %vm1807, %v1778, -inf
      %1914 = vmax.xlane.f32.xlu0 %v1913
      %v1915 = vpop.xlane.xlu0 %1914
      %v1916 = vsel %vm1807, %v1779, -inf
      %1917 = vmax.xlane.f32.xlu0 %v1916
      %v1918 = vpop.xlane.xlu0 %1917
      %v1919 = vsel %vm1807, %v1780, -inf
      %1920 = vmax.xlane.f32.xlu0 %v1919
      %v1921 = vpop.xlane.xlu0 %1920
      %v1922 = vsel %vm1807, %v1781, -inf
      %1923 = vmax.xlane.f32.xlu0 %v1922
      %v1924 = vpop.xlane.xlu0 %1923
      %v1925 = vsel %vm1807, %v1782, -inf
      %1926 = vmax.xlane.f32.xlu0 %v1925
      %v1927 = vpop.xlane.xlu0 %1926
      %v1928 = vsel %vm1807, %v1783, -inf
      %1929 = vmax.xlane.f32.xlu0 %v1928
      %v1930 = vpop.xlane.xlu0 %1929
      %v1931 = vsel %vm1807, %v1784, -inf
      %1932 = vmax.xlane.f32.xlu0 %v1931
      %v1933 = vpop.xlane.xlu0 %1932
      %v1934 = vsel %vm1807, %v1785, -inf
      %1935 = vmax.xlane.f32.xlu0 %v1934
      %v1936 = vpop.xlane.xlu0 %1935
      %v1937 = vsel %vm1807, %v1786, -inf
      %1938 = vmax.xlane.f32.xlu0 %v1937
      %v1939 = vpop.xlane.xlu0 %1938
      %v1940 = vsel %vm1807, %v1787, -inf
      %1941 = vmax.xlane.f32.xlu0 %v1940
      %v1942 = vpop.xlane.xlu0 %1941
      %v1943 = vsel %vm1807, %v1788, -inf
      %1944 = vmax.xlane.f32.xlu0 %v1943
      %v1945 = vpop.xlane.xlu0 %1944
      %v1946 = vsel %vm1807, %v1789, -inf
      %1947 = vmax.xlane.f32.xlu0 %v1946
      %v1948 = vpop.xlane.xlu0 %1947
      %v1949 = vsel %vm1807, %v1790, -inf
      %1950 = vmax.xlane.f32.xlu0 %v1949
      %v1951 = vpop.xlane.xlu0 %1950
      %v1952 = vsel %vm1807, %v1791, -inf
      %1953 = vmax.xlane.f32.xlu0 %v1952
      %v1954 = vpop.xlane.xlu0 %1953
      %v1955 = vsel %vm1807, %v1792, -inf
      %1956 = vmax.xlane.f32.xlu0 %v1955
      %v1957 = vpop.xlane.xlu0 %1956
      %v1958 = vsel %vm1807, %v1793, -inf
      %1959 = vmax.xlane.f32.xlu0 %v1958
      %v1960 = vpop.xlane.xlu0 %1959
      %v1961 = vsel %vm1807, %v1794, -inf
      %1962 = vmax.xlane.f32.xlu0 %v1961
      %v1963 = vpop.xlane.xlu0 %1962
      %v1964 = vsel %vm1807, %v1795, -inf
      %1965 = vmax.xlane.f32.xlu0 %v1964
      %v1966 = vpop.xlane.xlu0 %1965
      %v1967 = vsel %vm1807, %v1796, -inf
      %1968 = vmax.xlane.f32.xlu0 %v1967
      %v1969 = vpop.xlane.xlu0 %1968
      %v1970 = vsel %vm1807, %v1797, -inf
      %1971 = vmax.xlane.f32.xlu0 %v1970
      %v1972 = vpop.xlane.xlu0 %1971
      %v1973 = vsel %vm1807, %v1798, -inf
      %1974 = vmax.xlane.f32.xlu0 %v1973
      %v1975 = vpop.xlane.xlu0 %1974
      %v1976 = vsel %vm1807, %v1799, -inf
      %1977 = vmax.xlane.f32.xlu0 %v1976
      %v1978 = vpop.xlane.xlu0 %1977
      %v1979 = vsel %vm1807, %v1800, -inf
      %1980 = vmax.xlane.f32.xlu0 %v1979
      %v1981 = vpop.xlane.xlu0 %1980
      %v1982 = vsel %vm1807, %v1801, -inf
      %1983 = vmax.xlane.f32.xlu0 %v1982
      %v1984 = vpop.xlane.xlu0 %1983
      %v1985 = vsel %vm1807, %v1802, -inf
      %1986 = vmax.xlane.f32.xlu0 %v1985
      %v1987 = vpop.xlane.xlu0 %1986
      %v1988 = vsel %vm1807, %v1803, -inf
      %1989 = vmax.xlane.f32.xlu0 %v1988
      %v1990 = vpop.xlane.xlu0 %1989
      %v1991 = vsel %vm1807, %v1804, -inf
      %1992 = vmax.xlane.f32.xlu0 %v1991
      %v1993 = vpop.xlane.xlu0 %1992
      %v1994 = vsel %vm1807, %v1805, -inf
      %1995 = vmax.xlane.f32.xlu0 %v1994
      %v1996 = vpop.xlane.xlu0 %1995
      %v1997 = vsel %vm1807, %v1806, -inf
      %1998 = vmax.xlane.f32.xlu0 %v1997
      %v1999 = vpop.xlane.xlu0 %1998
      %v2000 = vsub.f32 %v1743, %v1810
      %v2001 = vsub.f32 %v1744, %v1813
      %v2002 = vsub.f32 %v1745, %v1816
      %v2003 = vsub.f32 %v1746, %v1819
      %v2004 = vsub.f32 %v1747, %v1822
      %v2005 = vsub.f32 %v1748, %v1825
      %v2006 = vsub.f32 %v1749, %v1828
      %v2007 = vsub.f32 %v1750, %v1831
      %v2008 = vsub.f32 %v1751, %v1834
      %v2009 = vsub.f32 %v1752, %v1837
      %v2010 = vsub.f32 %v1753, %v1840
      %v2011 = vsub.f32 %v1754, %v1843
      %v2012 = vsub.f32 %v1755, %v1846
      %v2013 = vsub.f32 %v1756, %v1849
      %v2014 = vsub.f32 %v1757, %v1852
      %v2015 = vsub.f32 %v1758, %v1855
      %v2016 = vsub.f32 %v1759, %v1858
      %v2017 = vsub.f32 %v1760, %v1861
      %v2018 = vsub.f32 %v1761, %v1864
      %v2019 = vsub.f32 %v1762, %v1867
      %v2020 = vsub.f32 %v1763, %v1870
      %v2021 = vsub.f32 %v1764, %v1873
      %v2022 = vsub.f32 %v1765, %v1876
      %v2023 = vsub.f32 %v1766, %v1879
      %v2024 = vsub.f32 %v1767, %v1882
      %v2025 = vsub.f32 %v1768, %v1885
      %v2026 = vsub.f32 %v1769, %v1888
      %v2027 = vsub.f32 %v1770, %v1891
      %v2028 = vsub.f32 %v1771, %v1894
      %v2029 = vsub.f32 %v1772, %v1897
      %v2030 = vsub.f32 %v1773, %v1900
      %v2031 = vsub.f32 %v1774, %v1903
      %v2032 = vsub.f32 %v1775, %v1906
      %v2033 = vsub.f32 %v1776, %v1909
      %v2034 = vsub.f32 %v1777, %v1912
      %v2035 = vsub.f32 %v1778, %v1915
      %v2036 = vsub.f32 %v1779, %v1918
      %v2037 = vsub.f32 %v1780, %v1921
      %v2038 = vsub.f32 %v1781, %v1924
      %v2039 = vsub.f32 %v1782, %v1927
      %v2040 = vsub.f32 %v1783, %v1930
      %v2041 = vsub.f32 %v1784, %v1933
      %v2042 = vsub.f32 %v1785, %v1936
      %v2043 = vsub.f32 %v1786, %v1939
      %v2044 = vsub.f32 %v1787, %v1942
      %v2045 = vsub.f32 %v1788, %v1945
      %v2046 = vsub.f32 %v1789, %v1948
      %v2047 = vsub.f32 %v1790, %v1951
      %v2048 = vsub.f32 %v1791, %v1954
      %v2049 = vsub.f32 %v1792, %v1957
      %v2050 = vsub.f32 %v1793, %v1960
      %v2051 = vsub.f32 %v1794, %v1963
      %v2052 = vsub.f32 %v1795, %v1966
      %v2053 = vsub.f32 %v1796, %v1969
      %v2054 = vsub.f32 %v1797, %v1972
      %v2055 = vsub.f32 %v1798, %v1975
      %v2056 = vsub.f32 %v1799, %v1978
      %v2057 = vsub.f32 %v1800, %v1981
      %v2058 = vsub.f32 %v1801, %v1984
      %v2059 = vsub.f32 %v1802, %v1987
      %v2060 = vsub.f32 %v1803, %v1990
      %v2061 = vsub.f32 %v1804, %v1993
      %v2062 = vsub.f32 %v1805, %v1996
      %v2063 = vsub.f32 %v1806, %v1999
      %v2064 = vmul.f32 %v2000, 1.442695
      %v2065 = vpow.pop %v2064
      %v2066 = vmul.f32 %v2001, 1.442695
      %v2067 = vpow.pop %v2066
      %v2068 = vmul.f32 %v2002, 1.442695
      %v2069 = vpow.pop %v2068
      %v2070 = vmul.f32 %v2003, 1.442695
      %v2071 = vpow.pop %v2070
      %v2072 = vmul.f32 %v2004, 1.442695
      %v2073 = vpow.pop %v2072
      %v2074 = vmul.f32 %v2005, 1.442695
      %v2075 = vpow.pop %v2074
      %v2076 = vmul.f32 %v2006, 1.442695
      %v2077 = vpow.pop %v2076
      %v2078 = vmul.f32 %v2007, 1.442695
      %v2079 = vpow.pop %v2078
      %v2080 = vmul.f32 %v2008, 1.442695
      %v2081 = vpow.pop %v2080
      %v2082 = vmul.f32 %v2009, 1.442695
      %v2083 = vpow.pop %v2082
      %v2084 = vmul.f32 %v2010, 1.442695
      %v2085 = vpow.pop %v2084
      %v2086 = vmul.f32 %v2011, 1.442695
      %v2087 = vpow.pop %v2086
      %v2088 = vmul.f32 %v2012, 1.442695
      %v2089 = vpow.pop %v2088
      %v2090 = vmul.f32 %v2013, 1.442695
      %v2091 = vpow.pop %v2090
      %v2092 = vmul.f32 %v2014, 1.442695
      %v2093 = vpow.pop %v2092
      %v2094 = vmul.f32 %v2015, 1.442695
      %v2095 = vpow.pop %v2094
      %v2096 = vmul.f32 %v2016, 1.442695
      %v2097 = vpow.pop %v2096
      %v2098 = vmul.f32 %v2017, 1.442695
      %v2099 = vpow.pop %v2098
      %v2100 = vmul.f32 %v2018, 1.442695
      %v2101 = vpow.pop %v2100
      %v2102 = vmul.f32 %v2019, 1.442695
      %v2103 = vpow.pop %v2102
      %v2104 = vmul.f32 %v2020, 1.442695
      %v2105 = vpow.pop %v2104
      %v2106 = vmul.f32 %v2021, 1.442695
      %v2107 = vpow.pop %v2106
      %v2108 = vmul.f32 %v2022, 1.442695
      %v2109 = vpow.pop %v2108
      %v2110 = vmul.f32 %v2023, 1.442695
      %v2111 = vpow.pop %v2110
      %v2112 = vmul.f32 %v2024, 1.442695
      %v2113 = vpow.pop %v2112
      %v2114 = vmul.f32 %v2025, 1.442695
      %v2115 = vpow.pop %v2114
      %v2116 = vmul.f32 %v2026, 1.442695
      %v2117 = vpow.pop %v2116
      %v2118 = vmul.f32 %v2027, 1.442695
      %v2119 = vpow.pop %v2118
      %v2120 = vmul.f32 %v2028, 1.442695
      %v2121 = vpow.pop %v2120
      %v2122 = vmul.f32 %v2029, 1.442695
      %v2123 = vpow.pop %v2122
      %v2124 = vmul.f32 %v2030, 1.442695
      %v2125 = vpow.pop %v2124
      %v2126 = vmul.f32 %v2031, 1.442695
      %v2127 = vpow.pop %v2126
      %v2128 = vmul.f32 %v2032, 1.442695
      %v2129 = vpow.pop %v2128
      %v2130 = vmul.f32 %v2033, 1.442695
      %v2131 = vpow.pop %v2130
      %v2132 = vmul.f32 %v2034, 1.442695
      %v2133 = vpow.pop %v2132
      %v2134 = vmul.f32 %v2035, 1.442695
      %v2135 = vpow.pop %v2134
      %v2136 = vmul.f32 %v2036, 1.442695
      %v2137 = vpow.pop %v2136
      %v2138 = vmul.f32 %v2037, 1.442695
      %v2139 = vpow.pop %v2138
      %v2140 = vmul.f32 %v2038, 1.442695
      %v2141 = vpow.pop %v2140
      %v2142 = vmul.f32 %v2039, 1.442695
      %v2143 = vpow.pop %v2142
      %v2144 = vmul.f32 %v2040, 1.442695
      %v2145 = vpow.pop %v2144
      %v2146 = vmul.f32 %v2041, 1.442695
      %v2147 = vpow.pop %v2146
      %v2148 = vmul.f32 %v2042, 1.442695
      %v2149 = vpow.pop %v2148
      %v2150 = vmul.f32 %v2043, 1.442695
      %v2151 = vpow.pop %v2150
      %v2152 = vmul.f32 %v2044, 1.442695
      %v2153 = vpow.pop %v2152
      %v2154 = vmul.f32 %v2045, 1.442695
      %v2155 = vpow.pop %v2154
      %v2156 = vmul.f32 %v2046, 1.442695
      %v2157 = vpow.pop %v2156
      %v2158 = vmul.f32 %v2047, 1.442695
      %v2159 = vpow.pop %v2158
      %v2160 = vmul.f32 %v2048, 1.442695
      %v2161 = vpow.pop %v2160
      %v2162 = vmul.f32 %v2049, 1.442695
      %v2163 = vpow.pop %v2162
      %v2164 = vmul.f32 %v2050, 1.442695
      %v2165 = vpow.pop %v2164
      %v2166 = vmul.f32 %v2051, 1.442695
      %v2167 = vpow.pop %v2166
      %v2168 = vmul.f32 %v2052, 1.442695
      %v2169 = vpow.pop %v2168
      %v2170 = vmul.f32 %v2053, 1.442695
      %v2171 = vpow.pop %v2170
      %v2172 = vmul.f32 %v2054, 1.442695
      %v2173 = vpow.pop %v2172
      %v2174 = vmul.f32 %v2055, 1.442695
      %v2175 = vpow.pop %v2174
      %v2176 = vmul.f32 %v2056, 1.442695
      %v2177 = vpow.pop %v2176
      %v2178 = vmul.f32 %v2057, 1.442695
      %v2179 = vpow.pop %v2178
      %v2180 = vmul.f32 %v2058, 1.442695
      %v2181 = vpow.pop %v2180
      %v2182 = vmul.f32 %v2059, 1.442695
      %v2183 = vpow.pop %v2182
      %v2184 = vmul.f32 %v2060, 1.442695
      %v2185 = vpow.pop %v2184
      %v2186 = vmul.f32 %v2061, 1.442695
      %v2187 = vpow.pop %v2186
      %v2188 = vmul.f32 %v2062, 1.442695
      %v2189 = vpow.pop %v2188
      %v2190 = vmul.f32 %v2063, 1.442695
      %v2191 = vpow.pop %v2190
      %v2192 = vsel %vm1807, %v2065, 0.0
      %2193 = vadd.xlane.f32.xlu0 %v2192
      %v2194 = vpop.xlane.xlu0 %2193
      %v2195 = vsel %vm1807, %v2067, 0.0
      %2196 = vadd.xlane.f32.xlu0 %v2195
      %v2197 = vpop.xlane.xlu0 %2196
      %v2198 = vsel %vm1807, %v2069, 0.0
      %2199 = vadd.xlane.f32.xlu0 %v2198
      %v2200 = vpop.xlane.xlu0 %2199
      %v2201 = vsel %vm1807, %v2071, 0.0
      %2202 = vadd.xlane.f32.xlu0 %v2201
      %v2203 = vpop.xlane.xlu0 %2202
      %v2204 = vsel %vm1807, %v2073, 0.0
      %2205 = vadd.xlane.f32.xlu0 %v2204
      %v2206 = vpop.xlane.xlu0 %2205
      %v2207 = vsel %vm1807, %v2075, 0.0
      %2208 = vadd.xlane.f32.xlu0 %v2207
      %v2209 = vpop.xlane.xlu0 %2208
      %v2210 = vsel %vm1807, %v2077, 0.0
      %2211 = vadd.xlane.f32.xlu0 %v2210
      %v2212 = vpop.xlane.xlu0 %2211
      %v2213 = vsel %vm1807, %v2079, 0.0
      %2214 = vadd.xlane.f32.xlu0 %v2213
      %v2215 = vpop.xlane.xlu0 %2214
      %v2216 = vsel %vm1807, %v2081, 0.0
      %2217 = vadd.xlane.f32.xlu0 %v2216
      %v2218 = vpop.xlane.xlu0 %2217
      %v2219 = vsel %vm1807, %v2083, 0.0
      %2220 = vadd.xlane.f32.xlu0 %v2219
      %v2221 = vpop.xlane.xlu0 %2220
      %v2222 = vsel %vm1807, %v2085, 0.0
      %2223 = vadd.xlane.f32.xlu0 %v2222
      %v2224 = vpop.xlane.xlu0 %2223
      %v2225 = vsel %vm1807, %v2087, 0.0
      %2226 = vadd.xlane.f32.xlu0 %v2225
      %v2227 = vpop.xlane.xlu0 %2226
      %v2228 = vsel %vm1807, %v2089, 0.0
      %2229 = vadd.xlane.f32.xlu0 %v2228
      %v2230 = vpop.xlane.xlu0 %2229
      %v2231 = vsel %vm1807, %v2091, 0.0
      %2232 = vadd.xlane.f32.xlu0 %v2231
      %v2233 = vpop.xlane.xlu0 %2232
      %v2234 = vsel %vm1807, %v2093, 0.0
      %2235 = vadd.xlane.f32.xlu0 %v2234
      %v2236 = vpop.xlane.xlu0 %2235
      %v2237 = vsel %vm1807, %v2095, 0.0
      %2238 = vadd.xlane.f32.xlu0 %v2237
      %v2239 = vpop.xlane.xlu0 %2238
      %v2240 = vsel %vm1807, %v2097, 0.0
      %2241 = vadd.xlane.f32.xlu0 %v2240
      %v2242 = vpop.xlane.xlu0 %2241
      %v2243 = vsel %vm1807, %v2099, 0.0
      %2244 = vadd.xlane.f32.xlu0 %v2243
      %v2245 = vpop.xlane.xlu0 %2244
      %v2246 = vsel %vm1807, %v2101, 0.0
      %2247 = vadd.xlane.f32.xlu0 %v2246
      %v2248 = vpop.xlane.xlu0 %2247
      %v2249 = vsel %vm1807, %v2103, 0.0
      %2250 = vadd.xlane.f32.xlu0 %v2249
      %v2251 = vpop.xlane.xlu0 %2250
      %v2252 = vsel %vm1807, %v2105, 0.0
      %2253 = vadd.xlane.f32.xlu0 %v2252
      %v2254 = vpop.xlane.xlu0 %2253
      %v2255 = vsel %vm1807, %v2107, 0.0
      %2256 = vadd.xlane.f32.xlu0 %v2255
      %v2257 = vpop.xlane.xlu0 %2256
      %v2258 = vsel %vm1807, %v2109, 0.0
      %2259 = vadd.xlane.f32.xlu0 %v2258
      %v2260 = vpop.xlane.xlu0 %2259
      %v2261 = vsel %vm1807, %v2111, 0.0
      %2262 = vadd.xlane.f32.xlu0 %v2261
      %v2263 = vpop.xlane.xlu0 %2262
      %v2264 = vsel %vm1807, %v2113, 0.0
      %2265 = vadd.xlane.f32.xlu0 %v2264
      %v2266 = vpop.xlane.xlu0 %2265
      %v2267 = vsel %vm1807, %v2115, 0.0
      %2268 = vadd.xlane.f32.xlu0 %v2267
      %v2269 = vpop.xlane.xlu0 %2268
      %v2270 = vsel %vm1807, %v2117, 0.0
      %2271 = vadd.xlane.f32.xlu0 %v2270
      %v2272 = vpop.xlane.xlu0 %2271
      %v2273 = vsel %vm1807, %v2119, 0.0
      %2274 = vadd.xlane.f32.xlu0 %v2273
      %v2275 = vpop.xlane.xlu0 %2274
      %v2276 = vsel %vm1807, %v2121, 0.0
      %2277 = vadd.xlane.f32.xlu0 %v2276
      %v2278 = vpop.xlane.xlu0 %2277
      %v2279 = vsel %vm1807, %v2123, 0.0
      %2280 = vadd.xlane.f32.xlu0 %v2279
      %v2281 = vpop.xlane.xlu0 %2280
      %v2282 = vsel %vm1807, %v2125, 0.0
      %2283 = vadd.xlane.f32.xlu0 %v2282
      %v2284 = vpop.xlane.xlu0 %2283
      %v2285 = vsel %vm1807, %v2127, 0.0
      %2286 = vadd.xlane.f32.xlu0 %v2285
      %v2287 = vpop.xlane.xlu0 %2286
      %v2288 = vsel %vm1807, %v2129, 0.0
      %2289 = vadd.xlane.f32.xlu0 %v2288
      %v2290 = vpop.xlane.xlu0 %2289
      %v2291 = vsel %vm1807, %v2131, 0.0
      %2292 = vadd.xlane.f32.xlu0 %v2291
      %v2293 = vpop.xlane.xlu0 %2292
      %v2294 = vsel %vm1807, %v2133, 0.0
      %2295 = vadd.xlane.f32.xlu0 %v2294
      %v2296 = vpop.xlane.xlu0 %2295
      %v2297 = vsel %vm1807, %v2135, 0.0
      %2298 = vadd.xlane.f32.xlu0 %v2297
      %v2299 = vpop.xlane.xlu0 %2298
      %v2300 = vsel %vm1807, %v2137, 0.0
      %2301 = vadd.xlane.f32.xlu0 %v2300
      %v2302 = vpop.xlane.xlu0 %2301
      %v2303 = vsel %vm1807, %v2139, 0.0
      %2304 = vadd.xlane.f32.xlu0 %v2303
      %v2305 = vpop.xlane.xlu0 %2304
      %v2306 = vsel %vm1807, %v2141, 0.0
      %2307 = vadd.xlane.f32.xlu0 %v2306
      %v2308 = vpop.xlane.xlu0 %2307
      %v2309 = vsel %vm1807, %v2143, 0.0
      %2310 = vadd.xlane.f32.xlu0 %v2309
      %v2311 = vpop.xlane.xlu0 %2310
      %v2312 = vsel %vm1807, %v2145, 0.0
      %2313 = vadd.xlane.f32.xlu0 %v2312
      %v2314 = vpop.xlane.xlu0 %2313
      %v2315 = vsel %vm1807, %v2147, 0.0
      %2316 = vadd.xlane.f32.xlu0 %v2315
      %v2317 = vpop.xlane.xlu0 %2316
      %v2318 = vsel %vm1807, %v2149, 0.0
      %2319 = vadd.xlane.f32.xlu0 %v2318
      %v2320 = vpop.xlane.xlu0 %2319
      %v2321 = vsel %vm1807, %v2151, 0.0
      %2322 = vadd.xlane.f32.xlu0 %v2321
      %v2323 = vpop.xlane.xlu0 %2322
      %v2324 = vsel %vm1807, %v2153, 0.0
      %2325 = vadd.xlane.f32.xlu0 %v2324
      %v2326 = vpop.xlane.xlu0 %2325
      %v2327 = vsel %vm1807, %v2155, 0.0
      %2328 = vadd.xlane.f32.xlu0 %v2327
      %v2329 = vpop.xlane.xlu0 %2328
      %v2330 = vsel %vm1807, %v2157, 0.0
      %2331 = vadd.xlane.f32.xlu0 %v2330
      %v2332 = vpop.xlane.xlu0 %2331
      %v2333 = vsel %vm1807, %v2159, 0.0
      %2334 = vadd.xlane.f32.xlu0 %v2333
      %v2335 = vpop.xlane.xlu0 %2334
      %v2336 = vsel %vm1807, %v2161, 0.0
      %2337 = vadd.xlane.f32.xlu0 %v2336
      %v2338 = vpop.xlane.xlu0 %2337
      %v2339 = vsel %vm1807, %v2163, 0.0
      %2340 = vadd.xlane.f32.xlu0 %v2339
      %v2341 = vpop.xlane.xlu0 %2340
      %v2342 = vsel %vm1807, %v2165, 0.0
      %2343 = vadd.xlane.f32.xlu0 %v2342
      %v2344 = vpop.xlane.xlu0 %2343
      %v2345 = vsel %vm1807, %v2167, 0.0
      %2346 = vadd.xlane.f32.xlu0 %v2345
      %v2347 = vpop.xlane.xlu0 %2346
      %v2348 = vsel %vm1807, %v2169, 0.0
      %2349 = vadd.xlane.f32.xlu0 %v2348
      %v2350 = vpop.xlane.xlu0 %2349
      %v2351 = vsel %vm1807, %v2171, 0.0
      %2352 = vadd.xlane.f32.xlu0 %v2351
      %v2353 = vpop.xlane.xlu0 %2352
      %v2354 = vsel %vm1807, %v2173, 0.0
      %2355 = vadd.xlane.f32.xlu0 %v2354
      %v2356 = vpop.xlane.xlu0 %2355
      %v2357 = vsel %vm1807, %v2175, 0.0
      %2358 = vadd.xlane.f32.xlu0 %v2357
      %v2359 = vpop.xlane.xlu0 %2358
      %v2360 = vsel %vm1807, %v2177, 0.0
      %2361 = vadd.xlane.f32.xlu0 %v2360
      %v2362 = vpop.xlane.xlu0 %2361
      %v2363 = vsel %vm1807, %v2179, 0.0
      %2364 = vadd.xlane.f32.xlu0 %v2363
      %v2365 = vpop.xlane.xlu0 %2364
      %v2366 = vsel %vm1807, %v2181, 0.0
      %2367 = vadd.xlane.f32.xlu0 %v2366
      %v2368 = vpop.xlane.xlu0 %2367
      %v2369 = vsel %vm1807, %v2183, 0.0
      %2370 = vadd.xlane.f32.xlu0 %v2369
      %v2371 = vpop.xlane.xlu0 %2370
      %v2372 = vsel %vm1807, %v2185, 0.0
      %2373 = vadd.xlane.f32.xlu0 %v2372
      %v2374 = vpop.xlane.xlu0 %2373
      %v2375 = vsel %vm1807, %v2187, 0.0
      %2376 = vadd.xlane.f32.xlu0 %v2375
      %v2377 = vpop.xlane.xlu0 %2376
      %v2378 = vsel %vm1807, %v2189, 0.0
      %2379 = vadd.xlane.f32.xlu0 %v2378
      %v2380 = vpop.xlane.xlu0 %2379
      %v2381 = vsel %vm1807, %v2191, 0.0
      %2382 = vadd.xlane.f32.xlu0 %v2381
      %v2383 = vpop.xlane.xlu0 %2382
      %v2384 = vrcp.pop %v2194
      %v2385 = vrcp.pop %v2197
      %v2386 = vrcp.pop %v2200
      %v2387 = vrcp.pop %v2203
      %v2388 = vrcp.pop %v2206
      %v2389 = vrcp.pop %v2209
      %v2390 = vrcp.pop %v2212
      %v2391 = vrcp.pop %v2215
      %v2392 = vrcp.pop %v2218
      %v2393 = vrcp.pop %v2221
      %v2394 = vrcp.pop %v2224
      %v2395 = vrcp.pop %v2227
      %v2396 = vrcp.pop %v2230
      %v2397 = vrcp.pop %v2233
      %v2398 = vrcp.pop %v2236
      %v2399 = vrcp.pop %v2239
      %v2400 = vrcp.pop %v2242
      %v2401 = vrcp.pop %v2245
      %v2402 = vrcp.pop %v2248
      %v2403 = vrcp.pop %v2251
      %v2404 = vrcp.pop %v2254
      %v2405 = vrcp.pop %v2257
      %v2406 = vrcp.pop %v2260
      %v2407 = vrcp.pop %v2263
      %v2408 = vrcp.pop %v2266
      %v2409 = vrcp.pop %v2269
      %v2410 = vrcp.pop %v2272
      %v2411 = vrcp.pop %v2275
      %v2412 = vrcp.pop %v2278
      %v2413 = vrcp.pop %v2281
      %v2414 = vrcp.pop %v2284
      %v2415 = vrcp.pop %v2287
      %v2416 = vrcp.pop %v2290
      %v2417 = vrcp.pop %v2293
      %v2418 = vrcp.pop %v2296
      %v2419 = vrcp.pop %v2299
      %v2420 = vrcp.pop %v2302
      %v2421 = vrcp.pop %v2305
      %v2422 = vrcp.pop %v2308
      %v2423 = vrcp.pop %v2311
      %v2424 = vrcp.pop %v2314
      %v2425 = vrcp.pop %v2317
      %v2426 = vrcp.pop %v2320
      %v2427 = vrcp.pop %v2323
      %v2428 = vrcp.pop %v2326
      %v2429 = vrcp.pop %v2329
      %v2430 = vrcp.pop %v2332
      %v2431 = vrcp.pop %v2335
      %v2432 = vrcp.pop %v2338
      %v2433 = vrcp.pop %v2341
      %v2434 = vrcp.pop %v2344
      %v2435 = vrcp.pop %v2347
      %v2436 = vrcp.pop %v2350
      %v2437 = vrcp.pop %v2353
      %v2438 = vrcp.pop %v2356
      %v2439 = vrcp.pop %v2359
      %v2440 = vrcp.pop %v2362
      %v2441 = vrcp.pop %v2365
      %v2442 = vrcp.pop %v2368
      %v2443 = vrcp.pop %v2371
      %v2444 = vrcp.pop %v2374
      %v2445 = vrcp.pop %v2377
      %v2446 = vrcp.pop %v2380
      %v2447 = vrcp.pop %v2383
      %v2448 = vpack.c.bf16 %v2065, %v2065
      %v2449 = vpack.c.bf16 %v2067, %v2067
      %v2450 = vpack.c.bf16 %v2069, %v2069
      %v2451 = vpack.c.bf16 %v2071, %v2071
      %v2452 = vpack.c.bf16 %v2073, %v2073
      %v2453 = vpack.c.bf16 %v2075, %v2075
      %v2454 = vpack.c.bf16 %v2077, %v2077
      %v2455 = vpack.c.bf16 %v2079, %v2079
      %v2456 = vpack.c.bf16 %v2081, %v2081
      %v2457 = vpack.c.bf16 %v2083, %v2083
      %v2458 = vpack.c.bf16 %v2085, %v2085
      %v2459 = vpack.c.bf16 %v2087, %v2087
      %v2460 = vpack.c.bf16 %v2089, %v2089
      %v2461 = vpack.c.bf16 %v2091, %v2091
      %v2462 = vpack.c.bf16 %v2093, %v2093
      %v2463 = vpack.c.bf16 %v2095, %v2095
      %v2464 = vpack.c.bf16 %v2097, %v2097
      %v2465 = vpack.c.bf16 %v2099, %v2099
      %v2466 = vpack.c.bf16 %v2101, %v2101
      %v2467 = vpack.c.bf16 %v2103, %v2103
      %v2468 = vpack.c.bf16 %v2105, %v2105
      %v2469 = vpack.c.bf16 %v2107, %v2107
      %v2470 = vpack.c.bf16 %v2109, %v2109
      %v2471 = vpack.c.bf16 %v2111, %v2111
      %v2472 = vpack.c.bf16 %v2113, %v2113
      %v2473 = vpack.c.bf16 %v2115, %v2115
      %v2474 = vpack.c.bf16 %v2117, %v2117
      %v2475 = vpack.c.bf16 %v2119, %v2119
      %v2476 = vpack.c.bf16 %v2121, %v2121
      %v2477 = vpack.c.bf16 %v2123, %v2123
      %v2478 = vpack.c.bf16 %v2125, %v2125
      %v2479 = vpack.c.bf16 %v2127, %v2127
      %v2480 = vpack.c.bf16 %v2129, %v2129
      %v2481 = vpack.c.bf16 %v2131, %v2131
      %v2482 = vpack.c.bf16 %v2133, %v2133
      %v2483 = vpack.c.bf16 %v2135, %v2135
      %v2484 = vpack.c.bf16 %v2137, %v2137
      %v2485 = vpack.c.bf16 %v2139, %v2139
      %v2486 = vpack.c.bf16 %v2141, %v2141
      %v2487 = vpack.c.bf16 %v2143, %v2143
      %v2488 = vpack.c.bf16 %v2145, %v2145
      %v2489 = vpack.c.bf16 %v2147, %v2147
      %v2490 = vpack.c.bf16 %v2149, %v2149
      %v2491 = vpack.c.bf16 %v2151, %v2151
      %v2492 = vpack.c.bf16 %v2153, %v2153
      %v2493 = vpack.c.bf16 %v2155, %v2155
      %v2494 = vpack.c.bf16 %v2157, %v2157
      %v2495 = vpack.c.bf16 %v2159, %v2159
      %v2496 = vpack.c.bf16 %v2161, %v2161
      %v2497 = vpack.c.bf16 %v2163, %v2163
      %v2498 = vpack.c.bf16 %v2165, %v2165
      %v2499 = vpack.c.bf16 %v2167, %v2167
      %v2500 = vpack.c.bf16 %v2169, %v2169
      %v2501 = vpack.c.bf16 %v2171, %v2171
      %v2502 = vpack.c.bf16 %v2173, %v2173
      %v2503 = vpack.c.bf16 %v2175, %v2175
      %v2504 = vpack.c.bf16 %v2177, %v2177
      %v2505 = vpack.c.bf16 %v2179, %v2179
      %v2506 = vpack.c.bf16 %v2181, %v2181
      %v2507 = vpack.c.bf16 %v2183, %v2183
      %v2508 = vpack.c.bf16 %v2185, %v2185
      %v2509 = vpack.c.bf16 %v2187, %v2187
      %v2510 = vpack.c.bf16 %v2189, %v2189
      %v2511 = vpack.c.bf16 %v2191, %v2191
      %v2520 = vunpack.c.l.b16 %v2448
      %v2521 = vunpack.c.l.b16 %v2449
      %v2522 = vunpack.c.l.b16 %v2450
      %v2523 = vunpack.c.l.b16 %v2451
      %v2524 = vunpack.c.l.b16 %v2452
      %v2525 = vunpack.c.l.b16 %v2453
      %v2526 = vunpack.c.l.b16 %v2454
      %v2527 = vunpack.c.l.b16 %v2455
      %v2528 = vpack.c.b16 %v2521, %v2520
      %v2529 = vpack.c.b16 %v2523, %v2522
      %v2530 = vpack.c.b16 %v2525, %v2524
      %v2531 = vpack.c.b16 %v2527, %v2526
      %2532 = vrot.lane.b32.xlu0 %v1030, 96
      %v2533 = vpop.permute.xlu0 %2532
      %2534 = vrot.lane.b32.xlu0 %v1031, 96
      %v2535 = vpop.permute.xlu0 %2534
      %2536 = vrot.lane.b32.xlu0 %v1032, 96
      %v2537 = vpop.permute.xlu0 %2536
      %2538 = vrot.lane.b32.xlu0 %v1033, 96
      %v2539 = vpop.permute.xlu0 %2538
      %v2545 = vsel %vm1807, %v2528, 0
      %v2548 = vsel %vm1807, %v2529, 0
      %v2551 = vsel %vm1807, %v2530, 0
      %v2554 = vsel %vm1807, %v2531, 0
      %2556 = vmatpush.bf16.msra.mxu0 0
      %2557 = vmatpush.bf16.msra.mxu0 0
      %2558 = vmatpush.bf16.msra.mxu0 0
      %2559 = vmatpush.bf16.msra.mxu0 0
      %2560 = vmatpush.bf16.msra.mxu0 %v2539
      %2561 = vmatpush.bf16.msra.mxu0 %v2537
      %2562 = vmatpush.bf16.msra.mxu0 %v2535
      %2563 = vmatpush.bf16.msra.mxu0 %v2533
      %2564 = vmatmul.bf16.gmra.mxu0 %v2545
      %v2565 = vpop.f32.mrf.mxu0
      %v2566 = vadd.f32 0.0, %v2565
      %v2567 = vpop.f32.mrf.mxu0
      %v2568 = vadd.f32 0.0, %v2567
      %2569 = vmatmul.bf16.gmra.mxu0 %v2548
      %v2570 = vpop.f32.mrf.mxu0
      %v2571 = vadd.f32 0.0, %v2570
      %v2572 = vpop.f32.mrf.mxu0
      %v2573 = vadd.f32 0.0, %v2572
      %2574 = vmatmul.bf16.gmra.mxu0 %v2551
      %v2575 = vpop.f32.mrf.mxu0
      %v2576 = vadd.f32 0.0, %v2575
      %v2577 = vpop.f32.mrf.mxu0
      %v2578 = vadd.f32 0.0, %v2577
      %2579 = vmatmul.bf16.gmra.mxu0 %v2554
      %v2580 = vpop.f32.mrf.mxu0
      %v2581 = vadd.f32 0.0, %v2580
      %v2582 = vpop.f32.mrf.mxu0
      %v2583 = vadd.f32 0.0, %v2582
      %2584 = vdwg.mxu0
      %v2593 = vunpack.c.l.b16 %v2456
      %v2594 = vunpack.c.l.b16 %v2457
      %v2595 = vunpack.c.l.b16 %v2458
      %v2596 = vunpack.c.l.b16 %v2459
      %v2597 = vunpack.c.l.b16 %v2460
      %v2598 = vunpack.c.l.b16 %v2461
      %v2599 = vunpack.c.l.b16 %v2462
      %v2600 = vunpack.c.l.b16 %v2463
      %v2601 = vpack.c.b16 %v2594, %v2593
      %v2602 = vpack.c.b16 %v2596, %v2595
      %v2603 = vpack.c.b16 %v2598, %v2597
      %v2604 = vpack.c.b16 %v2600, %v2599
      %2605 = vrot.lane.b32.xlu0 %v1112, 96
      %v2606 = vpop.permute.xlu0 %2605
      %2607 = vrot.lane.b32.xlu0 %v1113, 96
      %v2608 = vpop.permute.xlu0 %2607
      %2609 = vrot.lane.b32.xlu0 %v1114, 96
      %v2610 = vpop.permute.xlu0 %2609
      %2611 = vrot.lane.b32.xlu0 %v1115, 96
      %v2612 = vpop.permute.xlu0 %2611
      %v2618 = vsel %vm1807, %v2601, 0
      %v2621 = vsel %vm1807, %v2602, 0
      %v2624 = vsel %vm1807, %v2603, 0
      %v2627 = vsel %vm1807, %v2604, 0
      %2629 = vmatpush.bf16.msra.mxu0 0
      %2630 = vmatpush.bf16.msra.mxu0 0
      %2631 = vmatpush.bf16.msra.mxu0 0
      %2632 = vmatpush.bf16.msra.mxu0 0
      %2633 = vmatpush.bf16.msra.mxu0 %v2612
      %2634 = vmatpush.bf16.msra.mxu0 %v2610
      %2635 = vmatpush.bf16.msra.mxu0 %v2608
      %2636 = vmatpush.bf16.msra.mxu0 %v2606
      %2637 = vmatmul.bf16.gmra.mxu0 %v2618
      %v2638 = vpop.f32.mrf.mxu0
      %v2639 = vadd.f32 0.0, %v2638
      %v2640 = vpop.f32.mrf.mxu0
      %v2641 = vadd.f32 0.0, %v2640
      %2642 = vmatmul.bf16.gmra.mxu0 %v2621
      %v2643 = vpop.f32.mrf.mxu0
      %v2644 = vadd.f32 0.0, %v2643
      %v2645 = vpop.f32.mrf.mxu0
      %v2646 = vadd.f32 0.0, %v2645
      %2647 = vmatmul.bf16.gmra.mxu0 %v2624
      %v2648 = vpop.f32.mrf.mxu0
      %v2649 = vadd.f32 0.0, %v2648
      %v2650 = vpop.f32.mrf.mxu0
      %v2651 = vadd.f32 0.0, %v2650
      %2652 = vmatmul.bf16.gmra.mxu0 %v2627
      %v2653 = vpop.f32.mrf.mxu0
      %v2654 = vadd.f32 0.0, %v2653
      %v2655 = vpop.f32.mrf.mxu0
      %v2656 = vadd.f32 0.0, %v2655
      %2657 = vdwg.mxu0
      %v2666 = vunpack.c.l.b16 %v2464
      %v2667 = vunpack.c.l.b16 %v2465
      %v2668 = vunpack.c.l.b16 %v2466
      %v2669 = vunpack.c.l.b16 %v2467
      %v2670 = vunpack.c.l.b16 %v2468
      %v2671 = vunpack.c.l.b16 %v2469
      %v2672 = vunpack.c.l.b16 %v2470
      %v2673 = vunpack.c.l.b16 %v2471
      %v2674 = vpack.c.b16 %v2667, %v2666
      %v2675 = vpack.c.b16 %v2669, %v2668
      %v2676 = vpack.c.b16 %v2671, %v2670
      %v2677 = vpack.c.b16 %v2673, %v2672
      %2678 = vrot.lane.b32.xlu0 %v1193, 96
      %v2679 = vpop.permute.xlu0 %2678
      %2680 = vrot.lane.b32.xlu0 %v1194, 96
      %v2681 = vpop.permute.xlu0 %2680
      %2682 = vrot.lane.b32.xlu0 %v1195, 96
      %v2683 = vpop.permute.xlu0 %2682
      %2684 = vrot.lane.b32.xlu0 %v1196, 96
      %v2685 = vpop.permute.xlu0 %2684
      %v2691 = vsel %vm1807, %v2674, 0
      %v2694 = vsel %vm1807, %v2675, 0
      %v2697 = vsel %vm1807, %v2676, 0
      %v2700 = vsel %vm1807, %v2677, 0
      %2702 = vmatpush.bf16.msra.mxu0 0
      %2703 = vmatpush.bf16.msra.mxu0 0
      %2704 = vmatpush.bf16.msra.mxu0 0
      %2705 = vmatpush.bf16.msra.mxu0 0
      %2706 = vmatpush.bf16.msra.mxu0 %v2685
      %2707 = vmatpush.bf16.msra.mxu0 %v2683
      %2708 = vmatpush.bf16.msra.mxu0 %v2681
      %2709 = vmatpush.bf16.msra.mxu0 %v2679
      %2710 = vmatmul.bf16.gmra.mxu0 %v2691
      %v2711 = vpop.f32.mrf.mxu0
      %v2712 = vadd.f32 0.0, %v2711
      %v2713 = vpop.f32.mrf.mxu0
      %v2714 = vadd.f32 0.0, %v2713
      %2715 = vmatmul.bf16.gmra.mxu0 %v2694
      %v2716 = vpop.f32.mrf.mxu0
      %v2717 = vadd.f32 0.0, %v2716
      %v2718 = vpop.f32.mrf.mxu0
      %v2719 = vadd.f32 0.0, %v2718
      %2720 = vmatmul.bf16.gmra.mxu0 %v2697
      %v2721 = vpop.f32.mrf.mxu0
      %v2722 = vadd.f32 0.0, %v2721
      %v2723 = vpop.f32.mrf.mxu0
      %v2724 = vadd.f32 0.0, %v2723
      %2725 = vmatmul.bf16.gmra.mxu0 %v2700
      %v2726 = vpop.f32.mrf.mxu0
      %v2727 = vadd.f32 0.0, %v2726
      %v2728 = vpop.f32.mrf.mxu0
      %v2729 = vadd.f32 0.0, %v2728
      %2730 = vdwg.mxu0
      %v2739 = vunpack.c.l.b16 %v2472
      %v2740 = vunpack.c.l.b16 %v2473
      %v2741 = vunpack.c.l.b16 %v2474
      %v2742 = vunpack.c.l.b16 %v2475
      %v2743 = vunpack.c.l.b16 %v2476
      %v2744 = vunpack.c.l.b16 %v2477
      %v2745 = vunpack.c.l.b16 %v2478
      %v2746 = vunpack.c.l.b16 %v2479
      %v2747 = vpack.c.b16 %v2740, %v2739
      %v2748 = vpack.c.b16 %v2742, %v2741
      %v2749 = vpack.c.b16 %v2744, %v2743
      %v2750 = vpack.c.b16 %v2746, %v2745
      %2751 = vrot.lane.b32.xlu0 %v1274, 96
      %v2752 = vpop.permute.xlu0 %2751
      %2753 = vrot.lane.b32.xlu0 %v1275, 96
      %v2754 = vpop.permute.xlu0 %2753
      %2755 = vrot.lane.b32.xlu0 %v1276, 96
      %v2756 = vpop.permute.xlu0 %2755
      %2757 = vrot.lane.b32.xlu0 %v1277, 96
      %v2758 = vpop.permute.xlu0 %2757
      %v2764 = vsel %vm1807, %v2747, 0
      %v2767 = vsel %vm1807, %v2748, 0
      %v2770 = vsel %vm1807, %v2749, 0
      %v2773 = vsel %vm1807, %v2750, 0
      %2775 = vmatpush.bf16.msra.mxu0 0
      %2776 = vmatpush.bf16.msra.mxu0 0
      %2777 = vmatpush.bf16.msra.mxu0 0
      %2778 = vmatpush.bf16.msra.mxu0 0
      %2779 = vmatpush.bf16.msra.mxu0 %v2758
      %2780 = vmatpush.bf16.msra.mxu0 %v2756
      %2781 = vmatpush.bf16.msra.mxu0 %v2754
      %2782 = vmatpush.bf16.msra.mxu0 %v2752
      %2783 = vmatmul.bf16.gmra.mxu0 %v2764
      %v2784 = vpop.f32.mrf.mxu0
      %v2785 = vadd.f32 0.0, %v2784
      %v2786 = vpop.f32.mrf.mxu0
      %v2787 = vadd.f32 0.0, %v2786
      %2788 = vmatmul.bf16.gmra.mxu0 %v2767
      %v2789 = vpop.f32.mrf.mxu0
      %v2790 = vadd.f32 0.0, %v2789
      %v2791 = vpop.f32.mrf.mxu0
      %v2792 = vadd.f32 0.0, %v2791
      %2793 = vmatmul.bf16.gmra.mxu0 %v2770
      %v2794 = vpop.f32.mrf.mxu0
      %v2795 = vadd.f32 0.0, %v2794
      %v2796 = vpop.f32.mrf.mxu0
      %v2797 = vadd.f32 0.0, %v2796
      %2798 = vmatmul.bf16.gmra.mxu0 %v2773
      %v2799 = vpop.f32.mrf.mxu0
      %v2800 = vadd.f32 0.0, %v2799
      %v2801 = vpop.f32.mrf.mxu0
      %v2802 = vadd.f32 0.0, %v2801
      %2803 = vdwg.mxu0
      %v2812 = vunpack.c.l.b16 %v2480
      %v2813 = vunpack.c.l.b16 %v2481
      %v2814 = vunpack.c.l.b16 %v2482
      %v2815 = vunpack.c.l.b16 %v2483
      %v2816 = vunpack.c.l.b16 %v2484
      %v2817 = vunpack.c.l.b16 %v2485
      %v2818 = vunpack.c.l.b16 %v2486
      %v2819 = vunpack.c.l.b16 %v2487
      %v2820 = vpack.c.b16 %v2813, %v2812
      %v2821 = vpack.c.b16 %v2815, %v2814
      %v2822 = vpack.c.b16 %v2817, %v2816
      %v2823 = vpack.c.b16 %v2819, %v2818
      %2824 = vrot.lane.b32.xlu0 %v1355, 96
      %v2825 = vpop.permute.xlu0 %2824
      %2826 = vrot.lane.b32.xlu0 %v1356, 96
      %v2827 = vpop.permute.xlu0 %2826
      %2828 = vrot.lane.b32.xlu0 %v1357, 96
      %v2829 = vpop.permute.xlu0 %2828
      %2830 = vrot.lane.b32.xlu0 %v1358, 96
      %v2831 = vpop.permute.xlu0 %2830
      %v2837 = vsel %vm1807, %v2820, 0
      %v2840 = vsel %vm1807, %v2821, 0
      %v2843 = vsel %vm1807, %v2822, 0
      %v2846 = vsel %vm1807, %v2823, 0
      %2848 = vmatpush.bf16.msra.mxu0 0
      %2849 = vmatpush.bf16.msra.mxu0 0
      %2850 = vmatpush.bf16.msra.mxu0 0
      %2851 = vmatpush.bf16.msra.mxu0 0
      %2852 = vmatpush.bf16.msra.mxu0 %v2831
      %2853 = vmatpush.bf16.msra.mxu0 %v2829
      %2854 = vmatpush.bf16.msra.mxu0 %v2827
      %2855 = vmatpush.bf16.msra.mxu0 %v2825
      %2856 = vmatmul.bf16.gmra.mxu0 %v2837
      %v2857 = vpop.f32.mrf.mxu0
      %v2858 = vadd.f32 0.0, %v2857
      %v2859 = vpop.f32.mrf.mxu0
      %v2860 = vadd.f32 0.0, %v2859
      %2861 = vmatmul.bf16.gmra.mxu0 %v2840
      %v2862 = vpop.f32.mrf.mxu0
      %v2863 = vadd.f32 0.0, %v2862
      %v2864 = vpop.f32.mrf.mxu0
      %v2865 = vadd.f32 0.0, %v2864
      %2866 = vmatmul.bf16.gmra.mxu0 %v2843
      %v2867 = vpop.f32.mrf.mxu0
      %v2868 = vadd.f32 0.0, %v2867
      %v2869 = vpop.f32.mrf.mxu0
      %v2870 = vadd.f32 0.0, %v2869
      %2871 = vmatmul.bf16.gmra.mxu0 %v2846
      %v2872 = vpop.f32.mrf.mxu0
      %v2873 = vadd.f32 0.0, %v2872
      %v2874 = vpop.f32.mrf.mxu0
      %v2875 = vadd.f32 0.0, %v2874
      %2876 = vdwg.mxu0
      %v2885 = vunpack.c.l.b16 %v2488
      %v2886 = vunpack.c.l.b16 %v2489
      %v2887 = vunpack.c.l.b16 %v2490
      %v2888 = vunpack.c.l.b16 %v2491
      %v2889 = vunpack.c.l.b16 %v2492
      %v2890 = vunpack.c.l.b16 %v2493
      %v2891 = vunpack.c.l.b16 %v2494
      %v2892 = vunpack.c.l.b16 %v2495
      %v2893 = vpack.c.b16 %v2886, %v2885
      %v2894 = vpack.c.b16 %v2888, %v2887
      %v2895 = vpack.c.b16 %v2890, %v2889
      %v2896 = vpack.c.b16 %v2892, %v2891
      %2897 = vrot.lane.b32.xlu0 %v1436, 96
      %v2898 = vpop.permute.xlu0 %2897
      %2899 = vrot.lane.b32.xlu0 %v1437, 96
      %v2900 = vpop.permute.xlu0 %2899
      %2901 = vrot.lane.b32.xlu0 %v1438, 96
      %v2902 = vpop.permute.xlu0 %2901
      %2903 = vrot.lane.b32.xlu0 %v1439, 96
      %v2904 = vpop.permute.xlu0 %2903
      %v2910 = vsel %vm1807, %v2893, 0
      %v2913 = vsel %vm1807, %v2894, 0
      %v2916 = vsel %vm1807, %v2895, 0
      %v2919 = vsel %vm1807, %v2896, 0
      %2921 = vmatpush.bf16.msra.mxu0 0
      %2922 = vmatpush.bf16.msra.mxu0 0
      %2923 = vmatpush.bf16.msra.mxu0 0
      %2924 = vmatpush.bf16.msra.mxu0 0
      %2925 = vmatpush.bf16.msra.mxu0 %v2904
      %2926 = vmatpush.bf16.msra.mxu0 %v2902
      %2927 = vmatpush.bf16.msra.mxu0 %v2900
      %2928 = vmatpush.bf16.msra.mxu0 %v2898
      %2929 = vmatmul.bf16.gmra.mxu0 %v2910
      %v2930 = vpop.f32.mrf.mxu0
      %v2931 = vadd.f32 0.0, %v2930
      %v2932 = vpop.f32.mrf.mxu0
      %v2933 = vadd.f32 0.0, %v2932
      %2934 = vmatmul.bf16.gmra.mxu0 %v2913
      %v2935 = vpop.f32.mrf.mxu0
      %v2936 = vadd.f32 0.0, %v2935
      %v2937 = vpop.f32.mrf.mxu0
      %v2938 = vadd.f32 0.0, %v2937
      %2939 = vmatmul.bf16.gmra.mxu0 %v2916
      %v2940 = vpop.f32.mrf.mxu0
      %v2941 = vadd.f32 0.0, %v2940
      %v2942 = vpop.f32.mrf.mxu0
      %v2943 = vadd.f32 0.0, %v2942
      %2944 = vmatmul.bf16.gmra.mxu0 %v2919
      %v2945 = vpop.f32.mrf.mxu0
      %v2946 = vadd.f32 0.0, %v2945
      %v2947 = vpop.f32.mrf.mxu0
      %v2948 = vadd.f32 0.0, %v2947
      %2949 = vdwg.mxu0
      %v2958 = vunpack.c.l.b16 %v2496
      %v2959 = vunpack.c.l.b16 %v2497
      %v2960 = vunpack.c.l.b16 %v2498
      %v2961 = vunpack.c.l.b16 %v2499
      %v2962 = vunpack.c.l.b16 %v2500
      %v2963 = vunpack.c.l.b16 %v2501
      %v2964 = vunpack.c.l.b16 %v2502
      %v2965 = vunpack.c.l.b16 %v2503
      %v2966 = vpack.c.b16 %v2959, %v2958
      %v2967 = vpack.c.b16 %v2961, %v2960
      %v2968 = vpack.c.b16 %v2963, %v2962
      %v2969 = vpack.c.b16 %v2965, %v2964
      %2970 = vrot.lane.b32.xlu0 %v1517, 96
      %v2971 = vpop.permute.xlu0 %2970
      %2972 = vrot.lane.b32.xlu0 %v1518, 96
      %v2973 = vpop.permute.xlu0 %2972
      %2974 = vrot.lane.b32.xlu0 %v1519, 96
      %v2975 = vpop.permute.xlu0 %2974
      %2976 = vrot.lane.b32.xlu0 %v1520, 96
      %v2977 = vpop.permute.xlu0 %2976
      %v2983 = vsel %vm1807, %v2966, 0
      %v2986 = vsel %vm1807, %v2967, 0
      %v2989 = vsel %vm1807, %v2968, 0
      %v2992 = vsel %vm1807, %v2969, 0
      %2994 = vmatpush.bf16.msra.mxu0 0
      %2995 = vmatpush.bf16.msra.mxu0 0
      %2996 = vmatpush.bf16.msra.mxu0 0
      %2997 = vmatpush.bf16.msra.mxu0 0
      %2998 = vmatpush.bf16.msra.mxu0 %v2977
      %2999 = vmatpush.bf16.msra.mxu0 %v2975
      %3000 = vmatpush.bf16.msra.mxu0 %v2973
      %3001 = vmatpush.bf16.msra.mxu0 %v2971
      %3002 = vmatmul.bf16.gmra.mxu0 %v2983
      %v3003 = vpop.f32.mrf.mxu0
      %v3004 = vadd.f32 0.0, %v3003
      %v3005 = vpop.f32.mrf.mxu0
      %v3006 = vadd.f32 0.0, %v3005
      %3007 = vmatmul.bf16.gmra.mxu0 %v2986
      %v3008 = vpop.f32.mrf.mxu0
      %v3009 = vadd.f32 0.0, %v3008
      %v3010 = vpop.f32.mrf.mxu0
      %v3011 = vadd.f32 0.0, %v3010
      %3012 = vmatmul.bf16.gmra.mxu0 %v2989
      %v3013 = vpop.f32.mrf.mxu0
      %v3014 = vadd.f32 0.0, %v3013
      %v3015 = vpop.f32.mrf.mxu0
      %v3016 = vadd.f32 0.0, %v3015
      %3017 = vmatmul.bf16.gmra.mxu0 %v2992
      %v3018 = vpop.f32.mrf.mxu0
      %v3019 = vadd.f32 0.0, %v3018
      %v3020 = vpop.f32.mrf.mxu0
      %v3021 = vadd.f32 0.0, %v3020
      %3022 = vdwg.mxu0
      %v3031 = vunpack.c.l.b16 %v2504
      %v3032 = vunpack.c.l.b16 %v2505
      %v3033 = vunpack.c.l.b16 %v2506
      %v3034 = vunpack.c.l.b16 %v2507
      %v3035 = vunpack.c.l.b16 %v2508
      %v3036 = vunpack.c.l.b16 %v2509
      %v3037 = vunpack.c.l.b16 %v2510
      %v3038 = vunpack.c.l.b16 %v2511
      %v3039 = vpack.c.b16 %v3032, %v3031
      %v3040 = vpack.c.b16 %v3034, %v3033
      %v3041 = vpack.c.b16 %v3036, %v3035
      %v3042 = vpack.c.b16 %v3038, %v3037
      %3043 = vrot.lane.b32.xlu0 %v1598, 96
      %v3044 = vpop.permute.xlu0 %3043
      %3045 = vrot.lane.b32.xlu0 %v1599, 96
      %v3046 = vpop.permute.xlu0 %3045
      %3047 = vrot.lane.b32.xlu0 %v1600, 96
      %v3048 = vpop.permute.xlu0 %3047
      %3049 = vrot.lane.b32.xlu0 %v1601, 96
      %v3050 = vpop.permute.xlu0 %3049
      %v3056 = vsel %vm1807, %v3039, 0
      %v3059 = vsel %vm1807, %v3040, 0
      %v3062 = vsel %vm1807, %v3041, 0
      %v3065 = vsel %vm1807, %v3042, 0
      %3067 = vmatpush.bf16.msra.mxu0 0
      %3068 = vmatpush.bf16.msra.mxu0 0
      %3069 = vmatpush.bf16.msra.mxu0 0
      %3070 = vmatpush.bf16.msra.mxu0 0
      %3071 = vmatpush.bf16.msra.mxu0 %v3050
      %3072 = vmatpush.bf16.msra.mxu0 %v3048
      %3073 = vmatpush.bf16.msra.mxu0 %v3046
      %3074 = vmatpush.bf16.msra.mxu0 %v3044
      %3075 = vmatmul.bf16.gmra.mxu0 %v3056
      %v3076 = vpop.f32.mrf.mxu0
      %v3077 = vadd.f32 0.0, %v3076
      %v3078 = vpop.f32.mrf.mxu0
      %v3079 = vadd.f32 0.0, %v3078
      %3080 = vmatmul.bf16.gmra.mxu0 %v3059
      %v3081 = vpop.f32.mrf.mxu0
      %v3082 = vadd.f32 0.0, %v3081
      %v3083 = vpop.f32.mrf.mxu0
      %v3084 = vadd.f32 0.0, %v3083
      %3085 = vmatmul.bf16.gmra.mxu0 %v3062
      %v3086 = vpop.f32.mrf.mxu0
      %v3087 = vadd.f32 0.0, %v3086
      %v3088 = vpop.f32.mrf.mxu0
      %v3089 = vadd.f32 0.0, %v3088
      %3090 = vmatmul.bf16.gmra.mxu0 %v3065
      %v3091 = vpop.f32.mrf.mxu0
      %v3092 = vadd.f32 0.0, %v3091
      %v3093 = vpop.f32.mrf.mxu0
      %v3094 = vadd.f32 0.0, %v3093
      %3095 = vdwg.mxu0
      %v3096 = vmul.f32 %v2566, %v2384
      %v3097 = vmul.f32 %v2568, %v2385
      %v3098 = vmul.f32 %v2571, %v2386
      %v3099 = vmul.f32 %v2573, %v2387
      %v3100 = vmul.f32 %v2576, %v2388
      %v3101 = vmul.f32 %v2578, %v2389
      %v3102 = vmul.f32 %v2581, %v2390
      %v3103 = vmul.f32 %v2583, %v2391
      %v3104 = vmul.f32 %v2639, %v2392
      %v3105 = vmul.f32 %v2641, %v2393
      %v3106 = vmul.f32 %v2644, %v2394
      %v3107 = vmul.f32 %v2646, %v2395
      %v3108 = vmul.f32 %v2649, %v2396
      %v3109 = vmul.f32 %v2651, %v2397
      %v3110 = vmul.f32 %v2654, %v2398
      %v3111 = vmul.f32 %v2656, %v2399
      %v3112 = vmul.f32 %v2712, %v2400
      %v3113 = vmul.f32 %v2714, %v2401
      %v3114 = vmul.f32 %v2717, %v2402
      %v3115 = vmul.f32 %v2719, %v2403
      %v3116 = vmul.f32 %v2722, %v2404
      %v3117 = vmul.f32 %v2724, %v2405
      %v3118 = vmul.f32 %v2727, %v2406
      %v3119 = vmul.f32 %v2729, %v2407
      %v3120 = vmul.f32 %v2785, %v2408
      %v3121 = vmul.f32 %v2787, %v2409
      %v3122 = vmul.f32 %v2790, %v2410
      %v3123 = vmul.f32 %v2792, %v2411
      %v3124 = vmul.f32 %v2795, %v2412
      %v3125 = vmul.f32 %v2797, %v2413
      %v3126 = vmul.f32 %v2800, %v2414
      %v3127 = vmul.f32 %v2802, %v2415
      %v3128 = vmul.f32 %v2858, %v2416
      %v3129 = vmul.f32 %v2860, %v2417
      %v3130 = vmul.f32 %v2863, %v2418
      %v3131 = vmul.f32 %v2865, %v2419
      %v3132 = vmul.f32 %v2868, %v2420
      %v3133 = vmul.f32 %v2870, %v2421
      %v3134 = vmul.f32 %v2873, %v2422
      %v3135 = vmul.f32 %v2875, %v2423
      %v3136 = vmul.f32 %v2931, %v2424
      %v3137 = vmul.f32 %v2933, %v2425
      %v3138 = vmul.f32 %v2936, %v2426
      %v3139 = vmul.f32 %v2938, %v2427
      %v3140 = vmul.f32 %v2941, %v2428
      %v3141 = vmul.f32 %v2943, %v2429
      %v3142 = vmul.f32 %v2946, %v2430
      %v3143 = vmul.f32 %v2948, %v2431
      %v3144 = vmul.f32 %v3004, %v2432
      %v3145 = vmul.f32 %v3006, %v2433
      %v3146 = vmul.f32 %v3009, %v2434
      %v3147 = vmul.f32 %v3011, %v2435
      %v3148 = vmul.f32 %v3014, %v2436
      %v3149 = vmul.f32 %v3016, %v2437
      %v3150 = vmul.f32 %v3019, %v2438
      %v3151 = vmul.f32 %v3021, %v2439
      %v3152 = vmul.f32 %v3077, %v2440
      %v3153 = vmul.f32 %v3079, %v2441
      %v3154 = vmul.f32 %v3082, %v2442
      %v3155 = vmul.f32 %v3084, %v2443
      %v3156 = vmul.f32 %v3087, %v2444
      %v3157 = vmul.f32 %v3089, %v2445
      %v3158 = vmul.f32 %v3092, %v2446
      %v3159 = vmul.f32 %v3094, %v2447
      %s3160 = scalar_lea.vmem %s3, 64
      %v3161 = vld [vmem:[%s3160] sm:$0xff]
      %v3162 = vld [vmem:[%s3160 + $0x8] sm:$0xff]
      %v3163 = vld [vmem:[%s3160 + $0x10] sm:$0xff]
      %v3164 = vld [vmem:[%s3160 + $0x18] sm:$0xff]
      %v3165 = vld [vmem:[%s3160 + $0x20] sm:$0xff]
      %v3166 = vld [vmem:[%s3160 + $0x28] sm:$0xff]
      %v3167 = vld [vmem:[%s3160 + $0x30] sm:$0xff]
      %v3168 = vld [vmem:[%s3160 + $0x38] sm:$0xff]
      %v3169 = vmul.f32 %v1077, %v3161
      %v3170 = vmul.f32 %v1079, %v3162
      %v3171 = vmul.f32 %v1082, %v3163
      %v3172 = vmul.f32 %v1084, %v3164
      %v3173 = vmul.f32 %v1087, %v3165
      %v3174 = vmul.f32 %v1089, %v3166
      %v3175 = vmul.f32 %v1092, %v3167
      %v3176 = vmul.f32 %v1094, %v3168
      %v3177 = vmul.f32 %v1158, %v3161
      %v3178 = vmul.f32 %v1160, %v3162
      %v3179 = vmul.f32 %v1163, %v3163
      %v3180 = vmul.f32 %v1165, %v3164
      %v3181 = vmul.f32 %v1168, %v3165
      %v3182 = vmul.f32 %v1170, %v3166
      %v3183 = vmul.f32 %v1173, %v3167
      %v3184 = vmul.f32 %v1175, %v3168
      %v3185 = vmul.f32 %v1239, %v3161
      %v3186 = vmul.f32 %v1241, %v3162
      %v3187 = vmul.f32 %v1244, %v3163
      %v3188 = vmul.f32 %v1246, %v3164
      %v3189 = vmul.f32 %v1249, %v3165
      %v3190 = vmul.f32 %v1251, %v3166
      %v3191 = vmul.f32 %v1254, %v3167
      %v3192 = vmul.f32 %v1256, %v3168
      %v3193 = vmul.f32 %v1320, %v3161
      %v3194 = vmul.f32 %v1322, %v3162
      %v3195 = vmul.f32 %v1325, %v3163
      %v3196 = vmul.f32 %v1327, %v3164
      %v3197 = vmul.f32 %v1330, %v3165
      %v3198 = vmul.f32 %v1332, %v3166
      %v3199 = vmul.f32 %v1335, %v3167
      %v3200 = vmul.f32 %v1337, %v3168
      %v3201 = vmul.f32 %v1401, %v3161
      %v3202 = vmul.f32 %v1403, %v3162
      %v3203 = vmul.f32 %v1406, %v3163
      %v3204 = vmul.f32 %v1408, %v3164
      %v3205 = vmul.f32 %v1411, %v3165
      %v3206 = vmul.f32 %v1413, %v3166
      %v3207 = vmul.f32 %v1416, %v3167
      %v3208 = vmul.f32 %v1418, %v3168
      %v3209 = vmul.f32 %v1482, %v3161
      %v3210 = vmul.f32 %v1484, %v3162
      %v3211 = vmul.f32 %v1487, %v3163
      %v3212 = vmul.f32 %v1489, %v3164
      %v3213 = vmul.f32 %v1492, %v3165
      %v3214 = vmul.f32 %v1494, %v3166
      %v3215 = vmul.f32 %v1497, %v3167
      %v3216 = vmul.f32 %v1499, %v3168
      %v3217 = vmul.f32 %v1563, %v3161
      %v3218 = vmul.f32 %v1565, %v3162
      %v3219 = vmul.f32 %v1568, %v3163
      %v3220 = vmul.f32 %v1570, %v3164
      %v3221 = vmul.f32 %v1573, %v3165
      %v3222 = vmul.f32 %v1575, %v3166
      %v3223 = vmul.f32 %v1578, %v3167
      %v3224 = vmul.f32 %v1580, %v3168
      %v3225 = vmul.f32 %v1644, %v3161
      %v3226 = vmul.f32 %v1646, %v3162
      %v3227 = vmul.f32 %v1649, %v3163
      %v3228 = vmul.f32 %v1651, %v3164
      %v3229 = vmul.f32 %v1654, %v3165
      %v3230 = vmul.f32 %v1656, %v3166
      %v3231 = vmul.f32 %v1659, %v3167
      %v3232 = vmul.f32 %v1661, %v3168
      %s3233 = scalar_lea.vmem %s4, 64
      %v3234 = vld [vmem:[%s3233] sm:$0xff]
      %v3235 = vld [vmem:[%s3233 + $0x8] sm:$0xff]
      %v3236 = vld [vmem:[%s3233 + $0x10] sm:$0xff]
      %v3237 = vld [vmem:[%s3233 + $0x18] sm:$0xff]
      %v3238 = vld [vmem:[%s3233 + $0x20] sm:$0xff]
      %v3239 = vld [vmem:[%s3233 + $0x28] sm:$0xff]
      %v3240 = vld [vmem:[%s3233 + $0x30] sm:$0xff]
      %v3241 = vld [vmem:[%s3233 + $0x38] sm:$0xff]
      %v3242 = vadd.f32 %v3169, %v3234
      %v3243 = vadd.f32 %v3170, %v3235
      %v3244 = vadd.f32 %v3171, %v3236
      %v3245 = vadd.f32 %v3172, %v3237
      %v3246 = vadd.f32 %v3173, %v3238
      %v3247 = vadd.f32 %v3174, %v3239
      %v3248 = vadd.f32 %v3175, %v3240
      %v3249 = vadd.f32 %v3176, %v3241
      %v3250 = vadd.f32 %v3177, %v3234
      %v3251 = vadd.f32 %v3178, %v3235
      %v3252 = vadd.f32 %v3179, %v3236
      %v3253 = vadd.f32 %v3180, %v3237
      %v3254 = vadd.f32 %v3181, %v3238
      %v3255 = vadd.f32 %v3182, %v3239
      %v3256 = vadd.f32 %v3183, %v3240
      %v3257 = vadd.f32 %v3184, %v3241
      %v3258 = vadd.f32 %v3185, %v3234
      %v3259 = vadd.f32 %v3186, %v3235
      %v3260 = vadd.f32 %v3187, %v3236
      %v3261 = vadd.f32 %v3188, %v3237
      %v3262 = vadd.f32 %v3189, %v3238
      %v3263 = vadd.f32 %v3190, %v3239
      %v3264 = vadd.f32 %v3191, %v3240
      %v3265 = vadd.f32 %v3192, %v3241
      %v3266 = vadd.f32 %v3193, %v3234
      %v3267 = vadd.f32 %v3194, %v3235
      %v3268 = vadd.f32 %v3195, %v3236
      %v3269 = vadd.f32 %v3196, %v3237
      %v3270 = vadd.f32 %v3197, %v3238
      %v3271 = vadd.f32 %v3198, %v3239
      %v3272 = vadd.f32 %v3199, %v3240
      %v3273 = vadd.f32 %v3200, %v3241
      %v3274 = vadd.f32 %v3201, %v3234
      %v3275 = vadd.f32 %v3202, %v3235
      %v3276 = vadd.f32 %v3203, %v3236
      %v3277 = vadd.f32 %v3204, %v3237
      %v3278 = vadd.f32 %v3205, %v3238
      %v3279 = vadd.f32 %v3206, %v3239
      %v3280 = vadd.f32 %v3207, %v3240
      %v3281 = vadd.f32 %v3208, %v3241
      %v3282 = vadd.f32 %v3209, %v3234
      %v3283 = vadd.f32 %v3210, %v3235
      %v3284 = vadd.f32 %v3211, %v3236
      %v3285 = vadd.f32 %v3212, %v3237
      %v3286 = vadd.f32 %v3213, %v3238
      %v3287 = vadd.f32 %v3214, %v3239
      %v3288 = vadd.f32 %v3215, %v3240
      %v3289 = vadd.f32 %v3216, %v3241
      %v3290 = vadd.f32 %v3217, %v3234
      %v3291 = vadd.f32 %v3218, %v3235
      %v3292 = vadd.f32 %v3219, %v3236
      %v3293 = vadd.f32 %v3220, %v3237
      %v3294 = vadd.f32 %v3221, %v3238
      %v3295 = vadd.f32 %v3222, %v3239
      %v3296 = vadd.f32 %v3223, %v3240
      %v3297 = vadd.f32 %v3224, %v3241
      %v3298 = vadd.f32 %v3225, %v3234
      %v3299 = vadd.f32 %v3226, %v3235
      %v3300 = vadd.f32 %v3227, %v3236
      %v3301 = vadd.f32 %v3228, %v3237
      %v3302 = vadd.f32 %v3229, %v3238
      %v3303 = vadd.f32 %v3230, %v3239
      %v3304 = vadd.f32 %v3231, %v3240
      %v3305 = vadd.f32 %v3232, %v3241
      %v3306 = vsel %vm1807, %v3242, -inf
      %3307 = vmax.xlane.f32.xlu0 %v3306
      %v3308 = vpop.xlane.xlu0 %3307
      %v3309 = vsel %vm1807, %v3243, -inf
      %3310 = vmax.xlane.f32.xlu0 %v3309
      %v3311 = vpop.xlane.xlu0 %3310
      %v3312 = vsel %vm1807, %v3244, -inf
      %3313 = vmax.xlane.f32.xlu0 %v3312
      %v3314 = vpop.xlane.xlu0 %3313
      %v3315 = vsel %vm1807, %v3245, -inf
      %3316 = vmax.xlane.f32.xlu0 %v3315
      %v3317 = vpop.xlane.xlu0 %3316
      %v3318 = vsel %vm1807, %v3246, -inf
      %3319 = vmax.xlane.f32.xlu0 %v3318
      %v3320 = vpop.xlane.xlu0 %3319
      %v3321 = vsel %vm1807, %v3247, -inf
      %3322 = vmax.xlane.f32.xlu0 %v3321
      %v3323 = vpop.xlane.xlu0 %3322
      %v3324 = vsel %vm1807, %v3248, -inf
      %3325 = vmax.xlane.f32.xlu0 %v3324
      %v3326 = vpop.xlane.xlu0 %3325
      %v3327 = vsel %vm1807, %v3249, -inf
      %3328 = vmax.xlane.f32.xlu0 %v3327
      %v3329 = vpop.xlane.xlu0 %3328
      %v3330 = vsel %vm1807, %v3250, -inf
      %3331 = vmax.xlane.f32.xlu0 %v3330
      %v3332 = vpop.xlane.xlu0 %3331
      %v3333 = vsel %vm1807, %v3251, -inf
      %3334 = vmax.xlane.f32.xlu0 %v3333
      %v3335 = vpop.xlane.xlu0 %3334
      %v3336 = vsel %vm1807, %v3252, -inf
      %3337 = vmax.xlane.f32.xlu0 %v3336
      %v3338 = vpop.xlane.xlu0 %3337
      %v3339 = vsel %vm1807, %v3253, -inf
      %3340 = vmax.xlane.f32.xlu0 %v3339
      %v3341 = vpop.xlane.xlu0 %3340
      %v3342 = vsel %vm1807, %v3254, -inf
      %3343 = vmax.xlane.f32.xlu0 %v3342
      %v3344 = vpop.xlane.xlu0 %3343
      %v3345 = vsel %vm1807, %v3255, -inf
      %3346 = vmax.xlane.f32.xlu0 %v3345
      %v3347 = vpop.xlane.xlu0 %3346
      %v3348 = vsel %vm1807, %v3256, -inf
      %3349 = vmax.xlane.f32.xlu0 %v3348
      %v3350 = vpop.xlane.xlu0 %3349
      %v3351 = vsel %vm1807, %v3257, -inf
      %3352 = vmax.xlane.f32.xlu0 %v3351
      %v3353 = vpop.xlane.xlu0 %3352
      %v3354 = vsel %vm1807, %v3258, -inf
      %3355 = vmax.xlane.f32.xlu0 %v3354
      %v3356 = vpop.xlane.xlu0 %3355
      %v3357 = vsel %vm1807, %v3259, -inf
      %3358 = vmax.xlane.f32.xlu0 %v3357
      %v3359 = vpop.xlane.xlu0 %3358
      %v3360 = vsel %vm1807, %v3260, -inf
      %3361 = vmax.xlane.f32.xlu0 %v3360
      %v3362 = vpop.xlane.xlu0 %3361
      %v3363 = vsel %vm1807, %v3261, -inf
      %3364 = vmax.xlane.f32.xlu0 %v3363
      %v3365 = vpop.xlane.xlu0 %3364
      %v3366 = vsel %vm1807, %v3262, -inf
      %3367 = vmax.xlane.f32.xlu0 %v3366
      %v3368 = vpop.xlane.xlu0 %3367
      %v3369 = vsel %vm1807, %v3263, -inf
      %3370 = vmax.xlane.f32.xlu0 %v3369
      %v3371 = vpop.xlane.xlu0 %3370
      %v3372 = vsel %vm1807, %v3264, -inf
      %3373 = vmax.xlane.f32.xlu0 %v3372
      %v3374 = vpop.xlane.xlu0 %3373
      %v3375 = vsel %vm1807, %v3265, -inf
      %3376 = vmax.xlane.f32.xlu0 %v3375
      %v3377 = vpop.xlane.xlu0 %3376
      %v3378 = vsel %vm1807, %v3266, -inf
      %3379 = vmax.xlane.f32.xlu0 %v3378
      %v3380 = vpop.xlane.xlu0 %3379
      %v3381 = vsel %vm1807, %v3267, -inf
      %3382 = vmax.xlane.f32.xlu0 %v3381
      %v3383 = vpop.xlane.xlu0 %3382
      %v3384 = vsel %vm1807, %v3268, -inf
      %3385 = vmax.xlane.f32.xlu0 %v3384
      %v3386 = vpop.xlane.xlu0 %3385
      %v3387 = vsel %vm1807, %v3269, -inf
      %3388 = vmax.xlane.f32.xlu0 %v3387
      %v3389 = vpop.xlane.xlu0 %3388
      %v3390 = vsel %vm1807, %v3270, -inf
      %3391 = vmax.xlane.f32.xlu0 %v3390
      %v3392 = vpop.xlane.xlu0 %3391
      %v3393 = vsel %vm1807, %v3271, -inf
      %3394 = vmax.xlane.f32.xlu0 %v3393
      %v3395 = vpop.xlane.xlu0 %3394
      %v3396 = vsel %vm1807, %v3272, -inf
      %3397 = vmax.xlane.f32.xlu0 %v3396
      %v3398 = vpop.xlane.xlu0 %3397
      %v3399 = vsel %vm1807, %v3273, -inf
      %3400 = vmax.xlane.f32.xlu0 %v3399
      %v3401 = vpop.xlane.xlu0 %3400
      %v3402 = vsel %vm1807, %v3274, -inf
      %3403 = vmax.xlane.f32.xlu0 %v3402
      %v3404 = vpop.xlane.xlu0 %3403
      %v3405 = vsel %vm1807, %v3275, -inf
      %3406 = vmax.xlane.f32.xlu0 %v3405
      %v3407 = vpop.xlane.xlu0 %3406
      %v3408 = vsel %vm1807, %v3276, -inf
      %3409 = vmax.xlane.f32.xlu0 %v3408
      %v3410 = vpop.xlane.xlu0 %3409
      %v3411 = vsel %vm1807, %v3277, -inf
      %3412 = vmax.xlane.f32.xlu0 %v3411
      %v3413 = vpop.xlane.xlu0 %3412
      %v3414 = vsel %vm1807, %v3278, -inf
      %3415 = vmax.xlane.f32.xlu0 %v3414
      %v3416 = vpop.xlane.xlu0 %3415
      %v3417 = vsel %vm1807, %v3279, -inf
      %3418 = vmax.xlane.f32.xlu0 %v3417
      %v3419 = vpop.xlane.xlu0 %3418
      %v3420 = vsel %vm1807, %v3280, -inf
      %3421 = vmax.xlane.f32.xlu0 %v3420
      %v3422 = vpop.xlane.xlu0 %3421
      %v3423 = vsel %vm1807, %v3281, -inf
      %3424 = vmax.xlane.f32.xlu0 %v3423
      %v3425 = vpop.xlane.xlu0 %3424
      %v3426 = vsel %vm1807, %v3282, -inf
      %3427 = vmax.xlane.f32.xlu0 %v3426
      %v3428 = vpop.xlane.xlu0 %3427
      %v3429 = vsel %vm1807, %v3283, -inf
      %3430 = vmax.xlane.f32.xlu0 %v3429
      %v3431 = vpop.xlane.xlu0 %3430
      %v3432 = vsel %vm1807, %v3284, -inf
      %3433 = vmax.xlane.f32.xlu0 %v3432
      %v3434 = vpop.xlane.xlu0 %3433
      %v3435 = vsel %vm1807, %v3285, -inf
      %3436 = vmax.xlane.f32.xlu0 %v3435
      %v3437 = vpop.xlane.xlu0 %3436
      %v3438 = vsel %vm1807, %v3286, -inf
      %3439 = vmax.xlane.f32.xlu0 %v3438
      %v3440 = vpop.xlane.xlu0 %3439
      %v3441 = vsel %vm1807, %v3287, -inf
      %3442 = vmax.xlane.f32.xlu0 %v3441
      %v3443 = vpop.xlane.xlu0 %3442
      %v3444 = vsel %vm1807, %v3288, -inf
      %3445 = vmax.xlane.f32.xlu0 %v3444
      %v3446 = vpop.xlane.xlu0 %3445
      %v3447 = vsel %vm1807, %v3289, -inf
      %3448 = vmax.xlane.f32.xlu0 %v3447
      %v3449 = vpop.xlane.xlu0 %3448
      %v3450 = vsel %vm1807, %v3290, -inf
      %3451 = vmax.xlane.f32.xlu0 %v3450
      %v3452 = vpop.xlane.xlu0 %3451
      %v3453 = vsel %vm1807, %v3291, -inf
      %3454 = vmax.xlane.f32.xlu0 %v3453
      %v3455 = vpop.xlane.xlu0 %3454
      %v3456 = vsel %vm1807, %v3292, -inf
      %3457 = vmax.xlane.f32.xlu0 %v3456
      %v3458 = vpop.xlane.xlu0 %3457
      %v3459 = vsel %vm1807, %v3293, -inf
      %3460 = vmax.xlane.f32.xlu0 %v3459
      %v3461 = vpop.xlane.xlu0 %3460
      %v3462 = vsel %vm1807, %v3294, -inf
      %3463 = vmax.xlane.f32.xlu0 %v3462
      %v3464 = vpop.xlane.xlu0 %3463
      %v3465 = vsel %vm1807, %v3295, -inf
      %3466 = vmax.xlane.f32.xlu0 %v3465
      %v3467 = vpop.xlane.xlu0 %3466
      %v3468 = vsel %vm1807, %v3296, -inf
      %3469 = vmax.xlane.f32.xlu0 %v3468
      %v3470 = vpop.xlane.xlu0 %3469
      %v3471 = vsel %vm1807, %v3297, -inf
      %3472 = vmax.xlane.f32.xlu0 %v3471
      %v3473 = vpop.xlane.xlu0 %3472
      %v3474 = vsel %vm1807, %v3298, -inf
      %3475 = vmax.xlane.f32.xlu0 %v3474
      %v3476 = vpop.xlane.xlu0 %3475
      %v3477 = vsel %vm1807, %v3299, -inf
      %3478 = vmax.xlane.f32.xlu0 %v3477
      %v3479 = vpop.xlane.xlu0 %3478
      %v3480 = vsel %vm1807, %v3300, -inf
      %3481 = vmax.xlane.f32.xlu0 %v3480
      %v3482 = vpop.xlane.xlu0 %3481
      %v3483 = vsel %vm1807, %v3301, -inf
      %3484 = vmax.xlane.f32.xlu0 %v3483
      %v3485 = vpop.xlane.xlu0 %3484
      %v3486 = vsel %vm1807, %v3302, -inf
      %3487 = vmax.xlane.f32.xlu0 %v3486
      %v3488 = vpop.xlane.xlu0 %3487
      %v3489 = vsel %vm1807, %v3303, -inf
      %3490 = vmax.xlane.f32.xlu0 %v3489
      %v3491 = vpop.xlane.xlu0 %3490
      %v3492 = vsel %vm1807, %v3304, -inf
      %3493 = vmax.xlane.f32.xlu0 %v3492
      %v3494 = vpop.xlane.xlu0 %3493
      %v3495 = vsel %vm1807, %v3305, -inf
      %3496 = vmax.xlane.f32.xlu0 %v3495
      %v3497 = vpop.xlane.xlu0 %3496
      %v3498 = vsub.f32 %v3242, %v3308
      %v3499 = vsub.f32 %v3243, %v3311
      %v3500 = vsub.f32 %v3244, %v3314
      %v3501 = vsub.f32 %v3245, %v3317
      %v3502 = vsub.f32 %v3246, %v3320
      %v3503 = vsub.f32 %v3247, %v3323
      %v3504 = vsub.f32 %v3248, %v3326
      %v3505 = vsub.f32 %v3249, %v3329
      %v3506 = vsub.f32 %v3250, %v3332
      %v3507 = vsub.f32 %v3251, %v3335
      %v3508 = vsub.f32 %v3252, %v3338
      %v3509 = vsub.f32 %v3253, %v3341
      %v3510 = vsub.f32 %v3254, %v3344
      %v3511 = vsub.f32 %v3255, %v3347
      %v3512 = vsub.f32 %v3256, %v3350
      %v3513 = vsub.f32 %v3257, %v3353
      %v3514 = vsub.f32 %v3258, %v3356
      %v3515 = vsub.f32 %v3259, %v3359
      %v3516 = vsub.f32 %v3260, %v3362
      %v3517 = vsub.f32 %v3261, %v3365
      %v3518 = vsub.f32 %v3262, %v3368
      %v3519 = vsub.f32 %v3263, %v3371
      %v3520 = vsub.f32 %v3264, %v3374
      %v3521 = vsub.f32 %v3265, %v3377
      %v3522 = vsub.f32 %v3266, %v3380
      %v3523 = vsub.f32 %v3267, %v3383
      %v3524 = vsub.f32 %v3268, %v3386
      %v3525 = vsub.f32 %v3269, %v3389
      %v3526 = vsub.f32 %v3270, %v3392
      %v3527 = vsub.f32 %v3271, %v3395
      %v3528 = vsub.f32 %v3272, %v3398
      %v3529 = vsub.f32 %v3273, %v3401
      %v3530 = vsub.f32 %v3274, %v3404
      %v3531 = vsub.f32 %v3275, %v3407
      %v3532 = vsub.f32 %v3276, %v3410
      %v3533 = vsub.f32 %v3277, %v3413
      %v3534 = vsub.f32 %v3278, %v3416
      %v3535 = vsub.f32 %v3279, %v3419
      %v3536 = vsub.f32 %v3280, %v3422
      %v3537 = vsub.f32 %v3281, %v3425
      %v3538 = vsub.f32 %v3282, %v3428
      %v3539 = vsub.f32 %v3283, %v3431
      %v3540 = vsub.f32 %v3284, %v3434
      %v3541 = vsub.f32 %v3285, %v3437
      %v3542 = vsub.f32 %v3286, %v3440
      %v3543 = vsub.f32 %v3287, %v3443
      %v3544 = vsub.f32 %v3288, %v3446
      %v3545 = vsub.f32 %v3289, %v3449
      %v3546 = vsub.f32 %v3290, %v3452
      %v3547 = vsub.f32 %v3291, %v3455
      %v3548 = vsub.f32 %v3292, %v3458
      %v3549 = vsub.f32 %v3293, %v3461
      %v3550 = vsub.f32 %v3294, %v3464
      %v3551 = vsub.f32 %v3295, %v3467
      %v3552 = vsub.f32 %v3296, %v3470
      %v3553 = vsub.f32 %v3297, %v3473
      %v3554 = vsub.f32 %v3298, %v3476
      %v3555 = vsub.f32 %v3299, %v3479
      %v3556 = vsub.f32 %v3300, %v3482
      %v3557 = vsub.f32 %v3301, %v3485
      %v3558 = vsub.f32 %v3302, %v3488
      %v3559 = vsub.f32 %v3303, %v3491
      %v3560 = vsub.f32 %v3304, %v3494
      %v3561 = vsub.f32 %v3305, %v3497
      %v3562 = vmul.f32 %v3498, 1.442695
      %v3563 = vpow.pop %v3562
      %v3564 = vmul.f32 %v3499, 1.442695
      %v3565 = vpow.pop %v3564
      %v3566 = vmul.f32 %v3500, 1.442695
      %v3567 = vpow.pop %v3566
      %v3568 = vmul.f32 %v3501, 1.442695
      %v3569 = vpow.pop %v3568
      %v3570 = vmul.f32 %v3502, 1.442695
      %v3571 = vpow.pop %v3570
      %v3572 = vmul.f32 %v3503, 1.442695
      %v3573 = vpow.pop %v3572
      %v3574 = vmul.f32 %v3504, 1.442695
      %v3575 = vpow.pop %v3574
      %v3576 = vmul.f32 %v3505, 1.442695
      %v3577 = vpow.pop %v3576
      %v3578 = vmul.f32 %v3506, 1.442695
      %v3579 = vpow.pop %v3578
      %v3580 = vmul.f32 %v3507, 1.442695
      %v3581 = vpow.pop %v3580
      %v3582 = vmul.f32 %v3508, 1.442695
      %v3583 = vpow.pop %v3582
      %v3584 = vmul.f32 %v3509, 1.442695
      %v3585 = vpow.pop %v3584
      %v3586 = vmul.f32 %v3510, 1.442695
      %v3587 = vpow.pop %v3586
      %v3588 = vmul.f32 %v3511, 1.442695
      %v3589 = vpow.pop %v3588
      %v3590 = vmul.f32 %v3512, 1.442695
      %v3591 = vpow.pop %v3590
      %v3592 = vmul.f32 %v3513, 1.442695
      %v3593 = vpow.pop %v3592
      %v3594 = vmul.f32 %v3514, 1.442695
      %v3595 = vpow.pop %v3594
      %v3596 = vmul.f32 %v3515, 1.442695
      %v3597 = vpow.pop %v3596
      %v3598 = vmul.f32 %v3516, 1.442695
      %v3599 = vpow.pop %v3598
      %v3600 = vmul.f32 %v3517, 1.442695
      %v3601 = vpow.pop %v3600
      %v3602 = vmul.f32 %v3518, 1.442695
      %v3603 = vpow.pop %v3602
      %v3604 = vmul.f32 %v3519, 1.442695
      %v3605 = vpow.pop %v3604
      %v3606 = vmul.f32 %v3520, 1.442695
      %v3607 = vpow.pop %v3606
      %v3608 = vmul.f32 %v3521, 1.442695
      %v3609 = vpow.pop %v3608
      %v3610 = vmul.f32 %v3522, 1.442695
      %v3611 = vpow.pop %v3610
      %v3612 = vmul.f32 %v3523, 1.442695
      %v3613 = vpow.pop %v3612
      %v3614 = vmul.f32 %v3524, 1.442695
      %v3615 = vpow.pop %v3614
      %v3616 = vmul.f32 %v3525, 1.442695
      %v3617 = vpow.pop %v3616
      %v3618 = vmul.f32 %v3526, 1.442695
      %v3619 = vpow.pop %v3618
      %v3620 = vmul.f32 %v3527, 1.442695
      %v3621 = vpow.pop %v3620
      %v3622 = vmul.f32 %v3528, 1.442695
      %v3623 = vpow.pop %v3622
      %v3624 = vmul.f32 %v3529, 1.442695
      %v3625 = vpow.pop %v3624
      %v3626 = vmul.f32 %v3530, 1.442695
      %v3627 = vpow.pop %v3626
      %v3628 = vmul.f32 %v3531, 1.442695
      %v3629 = vpow.pop %v3628
      %v3630 = vmul.f32 %v3532, 1.442695
      %v3631 = vpow.pop %v3630
      %v3632 = vmul.f32 %v3533, 1.442695
      %v3633 = vpow.pop %v3632
      %v3634 = vmul.f32 %v3534, 1.442695
      %v3635 = vpow.pop %v3634
      %v3636 = vmul.f32 %v3535, 1.442695
      %v3637 = vpow.pop %v3636
      %v3638 = vmul.f32 %v3536, 1.442695
      %v3639 = vpow.pop %v3638
      %v3640 = vmul.f32 %v3537, 1.442695
      %v3641 = vpow.pop %v3640
      %v3642 = vmul.f32 %v3538, 1.442695
      %v3643 = vpow.pop %v3642
      %v3644 = vmul.f32 %v3539, 1.442695
      %v3645 = vpow.pop %v3644
      %v3646 = vmul.f32 %v3540, 1.442695
      %v3647 = vpow.pop %v3646
      %v3648 = vmul.f32 %v3541, 1.442695
      %v3649 = vpow.pop %v3648
      %v3650 = vmul.f32 %v3542, 1.442695
      %v3651 = vpow.pop %v3650
      %v3652 = vmul.f32 %v3543, 1.442695
      %v3653 = vpow.pop %v3652
      %v3654 = vmul.f32 %v3544, 1.442695
      %v3655 = vpow.pop %v3654
      %v3656 = vmul.f32 %v3545, 1.442695
      %v3657 = vpow.pop %v3656
      %v3658 = vmul.f32 %v3546, 1.442695
      %v3659 = vpow.pop %v3658
      %v3660 = vmul.f32 %v3547, 1.442695
      %v3661 = vpow.pop %v3660
      %v3662 = vmul.f32 %v3548, 1.442695
      %v3663 = vpow.pop %v3662
      %v3664 = vmul.f32 %v3549, 1.442695
      %v3665 = vpow.pop %v3664
      %v3666 = vmul.f32 %v3550, 1.442695
      %v3667 = vpow.pop %v3666
      %v3668 = vmul.f32 %v3551, 1.442695
      %v3669 = vpow.pop %v3668
      %v3670 = vmul.f32 %v3552, 1.442695
      %v3671 = vpow.pop %v3670
      %v3672 = vmul.f32 %v3553, 1.442695
      %v3673 = vpow.pop %v3672
      %v3674 = vmul.f32 %v3554, 1.442695
      %v3675 = vpow.pop %v3674
      %v3676 = vmul.f32 %v3555, 1.442695
      %v3677 = vpow.pop %v3676
      %v3678 = vmul.f32 %v3556, 1.442695
      %v3679 = vpow.pop %v3678
      %v3680 = vmul.f32 %v3557, 1.442695
      %v3681 = vpow.pop %v3680
      %v3682 = vmul.f32 %v3558, 1.442695
      %v3683 = vpow.pop %v3682
      %v3684 = vmul.f32 %v3559, 1.442695
      %v3685 = vpow.pop %v3684
      %v3686 = vmul.f32 %v3560, 1.442695
      %v3687 = vpow.pop %v3686
      %v3688 = vmul.f32 %v3561, 1.442695
      %v3689 = vpow.pop %v3688
      %v3690 = vsel %vm1807, %v3563, 0.0
      %3691 = vadd.xlane.f32.xlu0 %v3690
      %v3692 = vpop.xlane.xlu0 %3691
      %v3693 = vsel %vm1807, %v3565, 0.0
      %3694 = vadd.xlane.f32.xlu0 %v3693
      %v3695 = vpop.xlane.xlu0 %3694
      %v3696 = vsel %vm1807, %v3567, 0.0
      %3697 = vadd.xlane.f32.xlu0 %v3696
      %v3698 = vpop.xlane.xlu0 %3697
      %v3699 = vsel %vm1807, %v3569, 0.0
      %3700 = vadd.xlane.f32.xlu0 %v3699
      %v3701 = vpop.xlane.xlu0 %3700
      %v3702 = vsel %vm1807, %v3571, 0.0
      %3703 = vadd.xlane.f32.xlu0 %v3702
      %v3704 = vpop.xlane.xlu0 %3703
      %v3705 = vsel %vm1807, %v3573, 0.0
      %3706 = vadd.xlane.f32.xlu0 %v3705
      %v3707 = vpop.xlane.xlu0 %3706
      %v3708 = vsel %vm1807, %v3575, 0.0
      %3709 = vadd.xlane.f32.xlu0 %v3708
      %v3710 = vpop.xlane.xlu0 %3709
      %v3711 = vsel %vm1807, %v3577, 0.0
      %3712 = vadd.xlane.f32.xlu0 %v3711
      %v3713 = vpop.xlane.xlu0 %3712
      %v3714 = vsel %vm1807, %v3579, 0.0
      %3715 = vadd.xlane.f32.xlu0 %v3714
      %v3716 = vpop.xlane.xlu0 %3715
      %v3717 = vsel %vm1807, %v3581, 0.0
      %3718 = vadd.xlane.f32.xlu0 %v3717
      %v3719 = vpop.xlane.xlu0 %3718
      %v3720 = vsel %vm1807, %v3583, 0.0
      %3721 = vadd.xlane.f32.xlu0 %v3720
      %v3722 = vpop.xlane.xlu0 %3721
      %v3723 = vsel %vm1807, %v3585, 0.0
      %3724 = vadd.xlane.f32.xlu0 %v3723
      %v3725 = vpop.xlane.xlu0 %3724
      %v3726 = vsel %vm1807, %v3587, 0.0
      %3727 = vadd.xlane.f32.xlu0 %v3726
      %v3728 = vpop.xlane.xlu0 %3727
      %v3729 = vsel %vm1807, %v3589, 0.0
      %3730 = vadd.xlane.f32.xlu0 %v3729
      %v3731 = vpop.xlane.xlu0 %3730
      %v3732 = vsel %vm1807, %v3591, 0.0
      %3733 = vadd.xlane.f32.xlu0 %v3732
      %v3734 = vpop.xlane.xlu0 %3733
      %v3735 = vsel %vm1807, %v3593, 0.0
      %3736 = vadd.xlane.f32.xlu0 %v3735
      %v3737 = vpop.xlane.xlu0 %3736
      %v3738 = vsel %vm1807, %v3595, 0.0
      %3739 = vadd.xlane.f32.xlu0 %v3738
      %v3740 = vpop.xlane.xlu0 %3739
      %v3741 = vsel %vm1807, %v3597, 0.0
      %3742 = vadd.xlane.f32.xlu0 %v3741
      %v3743 = vpop.xlane.xlu0 %3742
      %v3744 = vsel %vm1807, %v3599, 0.0
      %3745 = vadd.xlane.f32.xlu0 %v3744
      %v3746 = vpop.xlane.xlu0 %3745
      %v3747 = vsel %vm1807, %v3601, 0.0
      %3748 = vadd.xlane.f32.xlu0 %v3747
      %v3749 = vpop.xlane.xlu0 %3748
      %v3750 = vsel %vm1807, %v3603, 0.0
      %3751 = vadd.xlane.f32.xlu0 %v3750
      %v3752 = vpop.xlane.xlu0 %3751
      %v3753 = vsel %vm1807, %v3605, 0.0
      %3754 = vadd.xlane.f32.xlu0 %v3753
      %v3755 = vpop.xlane.xlu0 %3754
      %v3756 = vsel %vm1807, %v3607, 0.0
      %3757 = vadd.xlane.f32.xlu0 %v3756
      %v3758 = vpop.xlane.xlu0 %3757
      %v3759 = vsel %vm1807, %v3609, 0.0
      %3760 = vadd.xlane.f32.xlu0 %v3759
      %v3761 = vpop.xlane.xlu0 %3760
      %v3762 = vsel %vm1807, %v3611, 0.0
      %3763 = vadd.xlane.f32.xlu0 %v3762
      %v3764 = vpop.xlane.xlu0 %3763
      %v3765 = vsel %vm1807, %v3613, 0.0
      %3766 = vadd.xlane.f32.xlu0 %v3765
      %v3767 = vpop.xlane.xlu0 %3766
      %v3768 = vsel %vm1807, %v3615, 0.0
      %3769 = vadd.xlane.f32.xlu0 %v3768
      %v3770 = vpop.xlane.xlu0 %3769
      %v3771 = vsel %vm1807, %v3617, 0.0
      %3772 = vadd.xlane.f32.xlu0 %v3771
      %v3773 = vpop.xlane.xlu0 %3772
      %v3774 = vsel %vm1807, %v3619, 0.0
      %3775 = vadd.xlane.f32.xlu0 %v3774
      %v3776 = vpop.xlane.xlu0 %3775
      %v3777 = vsel %vm1807, %v3621, 0.0
      %3778 = vadd.xlane.f32.xlu0 %v3777
      %v3779 = vpop.xlane.xlu0 %3778
      %v3780 = vsel %vm1807, %v3623, 0.0
      %3781 = vadd.xlane.f32.xlu0 %v3780
      %v3782 = vpop.xlane.xlu0 %3781
      %v3783 = vsel %vm1807, %v3625, 0.0
      %3784 = vadd.xlane.f32.xlu0 %v3783
      %v3785 = vpop.xlane.xlu0 %3784
      %v3786 = vsel %vm1807, %v3627, 0.0
      %3787 = vadd.xlane.f32.xlu0 %v3786
      %v3788 = vpop.xlane.xlu0 %3787
      %v3789 = vsel %vm1807, %v3629, 0.0
      %3790 = vadd.xlane.f32.xlu0 %v3789
      %v3791 = vpop.xlane.xlu0 %3790
      %v3792 = vsel %vm1807, %v3631, 0.0
      %3793 = vadd.xlane.f32.xlu0 %v3792
      %v3794 = vpop.xlane.xlu0 %3793
      %v3795 = vsel %vm1807, %v3633, 0.0
      %3796 = vadd.xlane.f32.xlu0 %v3795
      %v3797 = vpop.xlane.xlu0 %3796
      %v3798 = vsel %vm1807, %v3635, 0.0
      %3799 = vadd.xlane.f32.xlu0 %v3798
      %v3800 = vpop.xlane.xlu0 %3799
      %v3801 = vsel %vm1807, %v3637, 0.0
      %3802 = vadd.xlane.f32.xlu0 %v3801
      %v3803 = vpop.xlane.xlu0 %3802
      %v3804 = vsel %vm1807, %v3639, 0.0
      %3805 = vadd.xlane.f32.xlu0 %v3804
      %v3806 = vpop.xlane.xlu0 %3805
      %v3807 = vsel %vm1807, %v3641, 0.0
      %3808 = vadd.xlane.f32.xlu0 %v3807
      %v3809 = vpop.xlane.xlu0 %3808
      %v3810 = vsel %vm1807, %v3643, 0.0
      %3811 = vadd.xlane.f32.xlu0 %v3810
      %v3812 = vpop.xlane.xlu0 %3811
      %v3813 = vsel %vm1807, %v3645, 0.0
      %3814 = vadd.xlane.f32.xlu0 %v3813
      %v3815 = vpop.xlane.xlu0 %3814
      %v3816 = vsel %vm1807, %v3647, 0.0
      %3817 = vadd.xlane.f32.xlu0 %v3816
      %v3818 = vpop.xlane.xlu0 %3817
      %v3819 = vsel %vm1807, %v3649, 0.0
      %3820 = vadd.xlane.f32.xlu0 %v3819
      %v3821 = vpop.xlane.xlu0 %3820
      %v3822 = vsel %vm1807, %v3651, 0.0
      %3823 = vadd.xlane.f32.xlu0 %v3822
      %v3824 = vpop.xlane.xlu0 %3823
      %v3825 = vsel %vm1807, %v3653, 0.0
      %3826 = vadd.xlane.f32.xlu0 %v3825
      %v3827 = vpop.xlane.xlu0 %3826
      %v3828 = vsel %vm1807, %v3655, 0.0
      %3829 = vadd.xlane.f32.xlu0 %v3828
      %v3830 = vpop.xlane.xlu0 %3829
      %v3831 = vsel %vm1807, %v3657, 0.0
      %3832 = vadd.xlane.f32.xlu0 %v3831
      %v3833 = vpop.xlane.xlu0 %3832
      %v3834 = vsel %vm1807, %v3659, 0.0
      %3835 = vadd.xlane.f32.xlu0 %v3834
      %v3836 = vpop.xlane.xlu0 %3835
      %v3837 = vsel %vm1807, %v3661, 0.0
      %3838 = vadd.xlane.f32.xlu0 %v3837
      %v3839 = vpop.xlane.xlu0 %3838
      %v3840 = vsel %vm1807, %v3663, 0.0
      %3841 = vadd.xlane.f32.xlu0 %v3840
      %v3842 = vpop.xlane.xlu0 %3841
      %v3843 = vsel %vm1807, %v3665, 0.0
      %3844 = vadd.xlane.f32.xlu0 %v3843
      %v3845 = vpop.xlane.xlu0 %3844
      %v3846 = vsel %vm1807, %v3667, 0.0
      %3847 = vadd.xlane.f32.xlu0 %v3846
      %v3848 = vpop.xlane.xlu0 %3847
      %v3849 = vsel %vm1807, %v3669, 0.0
      %3850 = vadd.xlane.f32.xlu0 %v3849
      %v3851 = vpop.xlane.xlu0 %3850
      %v3852 = vsel %vm1807, %v3671, 0.0
      %3853 = vadd.xlane.f32.xlu0 %v3852
      %v3854 = vpop.xlane.xlu0 %3853
      %v3855 = vsel %vm1807, %v3673, 0.0
      %3856 = vadd.xlane.f32.xlu0 %v3855
      %v3857 = vpop.xlane.xlu0 %3856
      %v3858 = vsel %vm1807, %v3675, 0.0
      %3859 = vadd.xlane.f32.xlu0 %v3858
      %v3860 = vpop.xlane.xlu0 %3859
      %v3861 = vsel %vm1807, %v3677, 0.0
      %3862 = vadd.xlane.f32.xlu0 %v3861
      %v3863 = vpop.xlane.xlu0 %3862
      %v3864 = vsel %vm1807, %v3679, 0.0
      %3865 = vadd.xlane.f32.xlu0 %v3864
      %v3866 = vpop.xlane.xlu0 %3865
      %v3867 = vsel %vm1807, %v3681, 0.0
      %3868 = vadd.xlane.f32.xlu0 %v3867
      %v3869 = vpop.xlane.xlu0 %3868
      %v3870 = vsel %vm1807, %v3683, 0.0
      %3871 = vadd.xlane.f32.xlu0 %v3870
      %v3872 = vpop.xlane.xlu0 %3871
      %v3873 = vsel %vm1807, %v3685, 0.0
      %3874 = vadd.xlane.f32.xlu0 %v3873
      %v3875 = vpop.xlane.xlu0 %3874
      %v3876 = vsel %vm1807, %v3687, 0.0
      %3877 = vadd.xlane.f32.xlu0 %v3876
      %v3878 = vpop.xlane.xlu0 %3877
      %v3879 = vsel %vm1807, %v3689, 0.0
      %3880 = vadd.xlane.f32.xlu0 %v3879
      %v3881 = vpop.xlane.xlu0 %3880
      %v3882 = vrcp.pop %v3692
      %v3883 = vrcp.pop %v3695
      %v3884 = vrcp.pop %v3698
      %v3885 = vrcp.pop %v3701
      %v3886 = vrcp.pop %v3704
      %v3887 = vrcp.pop %v3707
      %v3888 = vrcp.pop %v3710
      %v3889 = vrcp.pop %v3713
      %v3890 = vrcp.pop %v3716
      %v3891 = vrcp.pop %v3719
      %v3892 = vrcp.pop %v3722
      %v3893 = vrcp.pop %v3725
      %v3894 = vrcp.pop %v3728
      %v3895 = vrcp.pop %v3731
      %v3896 = vrcp.pop %v3734
      %v3897 = vrcp.pop %v3737
      %v3898 = vrcp.pop %v3740
      %v3899 = vrcp.pop %v3743
      %v3900 = vrcp.pop %v3746
      %v3901 = vrcp.pop %v3749
      %v3902 = vrcp.pop %v3752
      %v3903 = vrcp.pop %v3755
      %v3904 = vrcp.pop %v3758
      %v3905 = vrcp.pop %v3761
      %v3906 = vrcp.pop %v3764
      %v3907 = vrcp.pop %v3767
      %v3908 = vrcp.pop %v3770
      %v3909 = vrcp.pop %v3773
      %v3910 = vrcp.pop %v3776
      %v3911 = vrcp.pop %v3779
      %v3912 = vrcp.pop %v3782
      %v3913 = vrcp.pop %v3785
      %v3914 = vrcp.pop %v3788
      %v3915 = vrcp.pop %v3791
      %v3916 = vrcp.pop %v3794
      %v3917 = vrcp.pop %v3797
      %v3918 = vrcp.pop %v3800
      %v3919 = vrcp.pop %v3803
      %v3920 = vrcp.pop %v3806
      %v3921 = vrcp.pop %v3809
      %v3922 = vrcp.pop %v3812
      %v3923 = vrcp.pop %v3815
      %v3924 = vrcp.pop %v3818
      %v3925 = vrcp.pop %v3821
      %v3926 = vrcp.pop %v3824
      %v3927 = vrcp.pop %v3827
      %v3928 = vrcp.pop %v3830
      %v3929 = vrcp.pop %v3833
      %v3930 = vrcp.pop %v3836
      %v3931 = vrcp.pop %v3839
      %v3932 = vrcp.pop %v3842
      %v3933 = vrcp.pop %v3845
      %v3934 = vrcp.pop %v3848
      %v3935 = vrcp.pop %v3851
      %v3936 = vrcp.pop %v3854
      %v3937 = vrcp.pop %v3857
      %v3938 = vrcp.pop %v3860
      %v3939 = vrcp.pop %v3863
      %v3940 = vrcp.pop %v3866
      %v3941 = vrcp.pop %v3869
      %v3942 = vrcp.pop %v3872
      %v3943 = vrcp.pop %v3875
      %v3944 = vrcp.pop %v3878
      %v3945 = vrcp.pop %v3881
      %v3946 = vpack.c.bf16 %v3563, %v3563
      %v3947 = vpack.c.bf16 %v3565, %v3565
      %v3948 = vpack.c.bf16 %v3567, %v3567
      %v3949 = vpack.c.bf16 %v3569, %v3569
      %v3950 = vpack.c.bf16 %v3571, %v3571
      %v3951 = vpack.c.bf16 %v3573, %v3573
      %v3952 = vpack.c.bf16 %v3575, %v3575
      %v3953 = vpack.c.bf16 %v3577, %v3577
      %v3954 = vpack.c.bf16 %v3579, %v3579
      %v3955 = vpack.c.bf16 %v3581, %v3581
      %v3956 = vpack.c.bf16 %v3583, %v3583
      %v3957 = vpack.c.bf16 %v3585, %v3585
      %v3958 = vpack.c.bf16 %v3587, %v3587
      %v3959 = vpack.c.bf16 %v3589, %v3589
      %v3960 = vpack.c.bf16 %v3591, %v3591
      %v3961 = vpack.c.bf16 %v3593, %v3593
      %v3962 = vpack.c.bf16 %v3595, %v3595
      %v3963 = vpack.c.bf16 %v3597, %v3597
      %v3964 = vpack.c.bf16 %v3599, %v3599
      %v3965 = vpack.c.bf16 %v3601, %v3601
      %v3966 = vpack.c.bf16 %v3603, %v3603
      %v3967 = vpack.c.bf16 %v3605, %v3605
      %v3968 = vpack.c.bf16 %v3607, %v3607
      %v3969 = vpack.c.bf16 %v3609, %v3609
      %v3970 = vpack.c.bf16 %v3611, %v3611
      %v3971 = vpack.c.bf16 %v3613, %v3613
      %v3972 = vpack.c.bf16 %v3615, %v3615
      %v3973 = vpack.c.bf16 %v3617, %v3617
      %v3974 = vpack.c.bf16 %v3619, %v3619
      %v3975 = vpack.c.bf16 %v3621, %v3621
      %v3976 = vpack.c.bf16 %v3623, %v3623
      %v3977 = vpack.c.bf16 %v3625, %v3625
      %v3978 = vpack.c.bf16 %v3627, %v3627
      %v3979 = vpack.c.bf16 %v3629, %v3629
      %v3980 = vpack.c.bf16 %v3631, %v3631
      %v3981 = vpack.c.bf16 %v3633, %v3633
      %v3982 = vpack.c.bf16 %v3635, %v3635
      %v3983 = vpack.c.bf16 %v3637, %v3637
      %v3984 = vpack.c.bf16 %v3639, %v3639
      %v3985 = vpack.c.bf16 %v3641, %v3641
      %v3986 = vpack.c.bf16 %v3643, %v3643
      %v3987 = vpack.c.bf16 %v3645, %v3645
      %v3988 = vpack.c.bf16 %v3647, %v3647
      %v3989 = vpack.c.bf16 %v3649, %v3649
      %v3990 = vpack.c.bf16 %v3651, %v3651
      %v3991 = vpack.c.bf16 %v3653, %v3653
      %v3992 = vpack.c.bf16 %v3655, %v3655
      %v3993 = vpack.c.bf16 %v3657, %v3657
      %v3994 = vpack.c.bf16 %v3659, %v3659
      %v3995 = vpack.c.bf16 %v3661, %v3661
      %v3996 = vpack.c.bf16 %v3663, %v3663
      %v3997 = vpack.c.bf16 %v3665, %v3665
      %v3998 = vpack.c.bf16 %v3667, %v3667
      %v3999 = vpack.c.bf16 %v3669, %v3669
      %v4000 = vpack.c.bf16 %v3671, %v3671
      %v4001 = vpack.c.bf16 %v3673, %v3673
      %v4002 = vpack.c.bf16 %v3675, %v3675
      %v4003 = vpack.c.bf16 %v3677, %v3677
      %v4004 = vpack.c.bf16 %v3679, %v3679
      %v4005 = vpack.c.bf16 %v3681, %v3681
      %v4006 = vpack.c.bf16 %v3683, %v3683
      %v4007 = vpack.c.bf16 %v3685, %v3685
      %v4008 = vpack.c.bf16 %v3687, %v3687
      %v4009 = vpack.c.bf16 %v3689, %v3689
      %v4018 = vunpack.c.l.b16 %v3946
      %v4019 = vunpack.c.l.b16 %v3947
      %v4020 = vunpack.c.l.b16 %v3948
      %v4021 = vunpack.c.l.b16 %v3949
      %v4022 = vunpack.c.l.b16 %v3950
      %v4023 = vunpack.c.l.b16 %v3951
      %v4024 = vunpack.c.l.b16 %v3952
      %v4025 = vunpack.c.l.b16 %v3953
      %v4026 = vpack.c.b16 %v4019, %v4018
      %v4027 = vpack.c.b16 %v4021, %v4020
      %v4028 = vpack.c.b16 %v4023, %v4022
      %v4029 = vpack.c.b16 %v4025, %v4024
      %4030 = vrot.lane.b32.xlu0 %v1030, 64
      %v4031 = vpop.permute.xlu0 %4030
      %4032 = vrot.lane.b32.xlu0 %v1031, 64
      %v4033 = vpop.permute.xlu0 %4032
      %4034 = vrot.lane.b32.xlu0 %v1032, 64
      %v4035 = vpop.permute.xlu0 %4034
      %4036 = vrot.lane.b32.xlu0 %v1033, 64
      %v4037 = vpop.permute.xlu0 %4036
      %v4043 = vsel %vm1807, %v4026, 0
      %v4046 = vsel %vm1807, %v4027, 0
      %v4049 = vsel %vm1807, %v4028, 0
      %v4052 = vsel %vm1807, %v4029, 0
      %4054 = vmatpush.bf16.msra.mxu0 0
      %4055 = vmatpush.bf16.msra.mxu0 0
      %4056 = vmatpush.bf16.msra.mxu0 0
      %4057 = vmatpush.bf16.msra.mxu0 0
      %4058 = vmatpush.bf16.msra.mxu0 %v4037
      %4059 = vmatpush.bf16.msra.mxu0 %v4035
      %4060 = vmatpush.bf16.msra.mxu0 %v4033
      %4061 = vmatpush.bf16.msra.mxu0 %v4031
      %4062 = vmatmul.bf16.gmra.mxu0 %v4043
      %v4063 = vpop.f32.mrf.mxu0
      %v4064 = vadd.f32 0.0, %v4063
      %v4065 = vpop.f32.mrf.mxu0
      %v4066 = vadd.f32 0.0, %v4065
      %4067 = vmatmul.bf16.gmra.mxu0 %v4046
      %v4068 = vpop.f32.mrf.mxu0
      %v4069 = vadd.f32 0.0, %v4068
      %v4070 = vpop.f32.mrf.mxu0
      %v4071 = vadd.f32 0.0, %v4070
      %4072 = vmatmul.bf16.gmra.mxu0 %v4049
      %v4073 = vpop.f32.mrf.mxu0
      %v4074 = vadd.f32 0.0, %v4073
      %v4075 = vpop.f32.mrf.mxu0
      %v4076 = vadd.f32 0.0, %v4075
      %4077 = vmatmul.bf16.gmra.mxu0 %v4052
      %v4078 = vpop.f32.mrf.mxu0
      %v4079 = vadd.f32 0.0, %v4078
      %v4080 = vpop.f32.mrf.mxu0
      %v4081 = vadd.f32 0.0, %v4080
      %4082 = vdwg.mxu0
      %v4091 = vunpack.c.l.b16 %v3954
      %v4092 = vunpack.c.l.b16 %v3955
      %v4093 = vunpack.c.l.b16 %v3956
      %v4094 = vunpack.c.l.b16 %v3957
      %v4095 = vunpack.c.l.b16 %v3958
      %v4096 = vunpack.c.l.b16 %v3959
      %v4097 = vunpack.c.l.b16 %v3960
      %v4098 = vunpack.c.l.b16 %v3961
      %v4099 = vpack.c.b16 %v4092, %v4091
      %v4100 = vpack.c.b16 %v4094, %v4093
      %v4101 = vpack.c.b16 %v4096, %v4095
      %v4102 = vpack.c.b16 %v4098, %v4097
      %4103 = vrot.lane.b32.xlu0 %v1112, 64
      %v4104 = vpop.permute.xlu0 %4103
      %4105 = vrot.lane.b32.xlu0 %v1113, 64
      %v4106 = vpop.permute.xlu0 %4105
      %4107 = vrot.lane.b32.xlu0 %v1114, 64
      %v4108 = vpop.permute.xlu0 %4107
      %4109 = vrot.lane.b32.xlu0 %v1115, 64
      %v4110 = vpop.permute.xlu0 %4109
      %v4116 = vsel %vm1807, %v4099, 0
      %v4119 = vsel %vm1807, %v4100, 0
      %v4122 = vsel %vm1807, %v4101, 0
      %v4125 = vsel %vm1807, %v4102, 0
      %4127 = vmatpush.bf16.msra.mxu0 0
      %4128 = vmatpush.bf16.msra.mxu0 0
      %4129 = vmatpush.bf16.msra.mxu0 0
      %4130 = vmatpush.bf16.msra.mxu0 0
      %4131 = vmatpush.bf16.msra.mxu0 %v4110
      %4132 = vmatpush.bf16.msra.mxu0 %v4108
      %4133 = vmatpush.bf16.msra.mxu0 %v4106
      %4134 = vmatpush.bf16.msra.mxu0 %v4104
      %4135 = vmatmul.bf16.gmra.mxu0 %v4116
      %v4136 = vpop.f32.mrf.mxu0
      %v4137 = vadd.f32 0.0, %v4136
      %v4138 = vpop.f32.mrf.mxu0
      %v4139 = vadd.f32 0.0, %v4138
      %4140 = vmatmul.bf16.gmra.mxu0 %v4119
      %v4141 = vpop.f32.mrf.mxu0
      %v4142 = vadd.f32 0.0, %v4141
      %v4143 = vpop.f32.mrf.mxu0
      %v4144 = vadd.f32 0.0, %v4143
      %4145 = vmatmul.bf16.gmra.mxu0 %v4122
      %v4146 = vpop.f32.mrf.mxu0
      %v4147 = vadd.f32 0.0, %v4146
      %v4148 = vpop.f32.mrf.mxu0
      %v4149 = vadd.f32 0.0, %v4148
      %4150 = vmatmul.bf16.gmra.mxu0 %v4125
      %v4151 = vpop.f32.mrf.mxu0
      %v4152 = vadd.f32 0.0, %v4151
      %v4153 = vpop.f32.mrf.mxu0
      %v4154 = vadd.f32 0.0, %v4153
      %4155 = vdwg.mxu0
      %v4164 = vunpack.c.l.b16 %v3962
      %v4165 = vunpack.c.l.b16 %v3963
      %v4166 = vunpack.c.l.b16 %v3964
      %v4167 = vunpack.c.l.b16 %v3965
      %v4168 = vunpack.c.l.b16 %v3966
      %v4169 = vunpack.c.l.b16 %v3967
      %v4170 = vunpack.c.l.b16 %v3968
      %v4171 = vunpack.c.l.b16 %v3969
      %v4172 = vpack.c.b16 %v4165, %v4164
      %v4173 = vpack.c.b16 %v4167, %v4166
      %v4174 = vpack.c.b16 %v4169, %v4168
      %v4175 = vpack.c.b16 %v4171, %v4170
      %4176 = vrot.lane.b32.xlu0 %v1193, 64
      %v4177 = vpop.permute.xlu0 %4176
      %4178 = vrot.lane.b32.xlu0 %v1194, 64
      %v4179 = vpop.permute.xlu0 %4178
      %4180 = vrot.lane.b32.xlu0 %v1195, 64
      %v4181 = vpop.permute.xlu0 %4180
      %4182 = vrot.lane.b32.xlu0 %v1196, 64
      %v4183 = vpop.permute.xlu0 %4182
      %v4189 = vsel %vm1807, %v4172, 0
      %v4192 = vsel %vm1807, %v4173, 0
      %v4195 = vsel %vm1807, %v4174, 0
      %v4198 = vsel %vm1807, %v4175, 0
      %4200 = vmatpush.bf16.msra.mxu0 0
      %4201 = vmatpush.bf16.msra.mxu0 0
      %4202 = vmatpush.bf16.msra.mxu0 0
      %4203 = vmatpush.bf16.msra.mxu0 0
      %4204 = vmatpush.bf16.msra.mxu0 %v4183
      %4205 = vmatpush.bf16.msra.mxu0 %v4181
      %4206 = vmatpush.bf16.msra.mxu0 %v4179
      %4207 = vmatpush.bf16.msra.mxu0 %v4177
      %4208 = vmatmul.bf16.gmra.mxu0 %v4189
      %v4209 = vpop.f32.mrf.mxu0
      %v4210 = vadd.f32 0.0, %v4209
      %v4211 = vpop.f32.mrf.mxu0
      %v4212 = vadd.f32 0.0, %v4211
      %4213 = vmatmul.bf16.gmra.mxu0 %v4192
      %v4214 = vpop.f32.mrf.mxu0
      %v4215 = vadd.f32 0.0, %v4214
      %v4216 = vpop.f32.mrf.mxu0
      %v4217 = vadd.f32 0.0, %v4216
      %4218 = vmatmul.bf16.gmra.mxu0 %v4195
      %v4219 = vpop.f32.mrf.mxu0
      %v4220 = vadd.f32 0.0, %v4219
      %v4221 = vpop.f32.mrf.mxu0
      %v4222 = vadd.f32 0.0, %v4221
      %4223 = vmatmul.bf16.gmra.mxu0 %v4198
      %v4224 = vpop.f32.mrf.mxu0
      %v4225 = vadd.f32 0.0, %v4224
      %v4226 = vpop.f32.mrf.mxu0
      %v4227 = vadd.f32 0.0, %v4226
      %4228 = vdwg.mxu0
      %v4237 = vunpack.c.l.b16 %v3970
      %v4238 = vunpack.c.l.b16 %v3971
      %v4239 = vunpack.c.l.b16 %v3972
      %v4240 = vunpack.c.l.b16 %v3973
      %v4241 = vunpack.c.l.b16 %v3974
      %v4242 = vunpack.c.l.b16 %v3975
      %v4243 = vunpack.c.l.b16 %v3976
      %v4244 = vunpack.c.l.b16 %v3977
      %v4245 = vpack.c.b16 %v4238, %v4237
      %v4246 = vpack.c.b16 %v4240, %v4239
      %v4247 = vpack.c.b16 %v4242, %v4241
      %v4248 = vpack.c.b16 %v4244, %v4243
      %4249 = vrot.lane.b32.xlu0 %v1274, 64
      %v4250 = vpop.permute.xlu0 %4249
      %4251 = vrot.lane.b32.xlu0 %v1275, 64
      %v4252 = vpop.permute.xlu0 %4251
      %4253 = vrot.lane.b32.xlu0 %v1276, 64
      %v4254 = vpop.permute.xlu0 %4253
      %4255 = vrot.lane.b32.xlu0 %v1277, 64
      %v4256 = vpop.permute.xlu0 %4255
      %v4262 = vsel %vm1807, %v4245, 0
      %v4265 = vsel %vm1807, %v4246, 0
      %v4268 = vsel %vm1807, %v4247, 0
      %v4271 = vsel %vm1807, %v4248, 0
      %4273 = vmatpush.bf16.msra.mxu0 0
      %4274 = vmatpush.bf16.msra.mxu0 0
      %4275 = vmatpush.bf16.msra.mxu0 0
      %4276 = vmatpush.bf16.msra.mxu0 0
      %4277 = vmatpush.bf16.msra.mxu0 %v4256
      %4278 = vmatpush.bf16.msra.mxu0 %v4254
      %4279 = vmatpush.bf16.msra.mxu0 %v4252
      %4280 = vmatpush.bf16.msra.mxu0 %v4250
      %4281 = vmatmul.bf16.gmra.mxu0 %v4262
      %v4282 = vpop.f32.mrf.mxu0
      %v4283 = vadd.f32 0.0, %v4282
      %v4284 = vpop.f32.mrf.mxu0
      %v4285 = vadd.f32 0.0, %v4284
      %4286 = vmatmul.bf16.gmra.mxu0 %v4265
      %v4287 = vpop.f32.mrf.mxu0
      %v4288 = vadd.f32 0.0, %v4287
      %v4289 = vpop.f32.mrf.mxu0
      %v4290 = vadd.f32 0.0, %v4289
      %4291 = vmatmul.bf16.gmra.mxu0 %v4268
      %v4292 = vpop.f32.mrf.mxu0
      %v4293 = vadd.f32 0.0, %v4292
      %v4294 = vpop.f32.mrf.mxu0
      %v4295 = vadd.f32 0.0, %v4294
      %4296 = vmatmul.bf16.gmra.mxu0 %v4271
      %v4297 = vpop.f32.mrf.mxu0
      %v4298 = vadd.f32 0.0, %v4297
      %v4299 = vpop.f32.mrf.mxu0
      %v4300 = vadd.f32 0.0, %v4299
      %4301 = vdwg.mxu0
      %v4310 = vunpack.c.l.b16 %v3978
      %v4311 = vunpack.c.l.b16 %v3979
      %v4312 = vunpack.c.l.b16 %v3980
      %v4313 = vunpack.c.l.b16 %v3981
      %v4314 = vunpack.c.l.b16 %v3982
      %v4315 = vunpack.c.l.b16 %v3983
      %v4316 = vunpack.c.l.b16 %v3984
      %v4317 = vunpack.c.l.b16 %v3985
      %v4318 = vpack.c.b16 %v4311, %v4310
      %v4319 = vpack.c.b16 %v4313, %v4312
      %v4320 = vpack.c.b16 %v4315, %v4314
      %v4321 = vpack.c.b16 %v4317, %v4316
      %4322 = vrot.lane.b32.xlu0 %v1355, 64
      %v4323 = vpop.permute.xlu0 %4322
      %4324 = vrot.lane.b32.xlu0 %v1356, 64
      %v4325 = vpop.permute.xlu0 %4324
      %4326 = vrot.lane.b32.xlu0 %v1357, 64
      %v4327 = vpop.permute.xlu0 %4326
      %4328 = vrot.lane.b32.xlu0 %v1358, 64
      %v4329 = vpop.permute.xlu0 %4328
      %v4335 = vsel %vm1807, %v4318, 0
      %v4338 = vsel %vm1807, %v4319, 0
      %v4341 = vsel %vm1807, %v4320, 0
      %v4344 = vsel %vm1807, %v4321, 0
      %4346 = vmatpush.bf16.msra.mxu0 0
      %4347 = vmatpush.bf16.msra.mxu0 0
      %4348 = vmatpush.bf16.msra.mxu0 0
      %4349 = vmatpush.bf16.msra.mxu0 0
      %4350 = vmatpush.bf16.msra.mxu0 %v4329
      %4351 = vmatpush.bf16.msra.mxu0 %v4327
      %4352 = vmatpush.bf16.msra.mxu0 %v4325
      %4353 = vmatpush.bf16.msra.mxu0 %v4323
      %4354 = vmatmul.bf16.gmra.mxu0 %v4335
      %v4355 = vpop.f32.mrf.mxu0
      %v4356 = vadd.f32 0.0, %v4355
      %v4357 = vpop.f32.mrf.mxu0
      %v4358 = vadd.f32 0.0, %v4357
      %4359 = vmatmul.bf16.gmra.mxu0 %v4338
      %v4360 = vpop.f32.mrf.mxu0
      %v4361 = vadd.f32 0.0, %v4360
      %v4362 = vpop.f32.mrf.mxu0
      %v4363 = vadd.f32 0.0, %v4362
      %4364 = vmatmul.bf16.gmra.mxu0 %v4341
      %v4365 = vpop.f32.mrf.mxu0
      %v4366 = vadd.f32 0.0, %v4365
      %v4367 = vpop.f32.mrf.mxu0
      %v4368 = vadd.f32 0.0, %v4367
      %4369 = vmatmul.bf16.gmra.mxu0 %v4344
      %v4370 = vpop.f32.mrf.mxu0
      %v4371 = vadd.f32 0.0, %v4370
      %v4372 = vpop.f32.mrf.mxu0
      %v4373 = vadd.f32 0.0, %v4372
      %4374 = vdwg.mxu0
      %v4383 = vunpack.c.l.b16 %v3986
      %v4384 = vunpack.c.l.b16 %v3987
      %v4385 = vunpack.c.l.b16 %v3988
      %v4386 = vunpack.c.l.b16 %v3989
      %v4387 = vunpack.c.l.b16 %v3990
      %v4388 = vunpack.c.l.b16 %v3991
      %v4389 = vunpack.c.l.b16 %v3992
      %v4390 = vunpack.c.l.b16 %v3993
      %v4391 = vpack.c.b16 %v4384, %v4383
      %v4392 = vpack.c.b16 %v4386, %v4385
      %v4393 = vpack.c.b16 %v4388, %v4387
      %v4394 = vpack.c.b16 %v4390, %v4389
      %4395 = vrot.lane.b32.xlu0 %v1436, 64
      %v4396 = vpop.permute.xlu0 %4395
      %4397 = vrot.lane.b32.xlu0 %v1437, 64
      %v4398 = vpop.permute.xlu0 %4397
      %4399 = vrot.lane.b32.xlu0 %v1438, 64
      %v4400 = vpop.permute.xlu0 %4399
      %4401 = vrot.lane.b32.xlu0 %v1439, 64
      %v4402 = vpop.permute.xlu0 %4401
      %v4408 = vsel %vm1807, %v4391, 0
      %v4411 = vsel %vm1807, %v4392, 0
      %v4414 = vsel %vm1807, %v4393, 0
      %v4417 = vsel %vm1807, %v4394, 0
      %4419 = vmatpush.bf16.msra.mxu0 0
      %4420 = vmatpush.bf16.msra.mxu0 0
      %4421 = vmatpush.bf16.msra.mxu0 0
      %4422 = vmatpush.bf16.msra.mxu0 0
      %4423 = vmatpush.bf16.msra.mxu0 %v4402
      %4424 = vmatpush.bf16.msra.mxu0 %v4400
      %4425 = vmatpush.bf16.msra.mxu0 %v4398
      %4426 = vmatpush.bf16.msra.mxu0 %v4396
      %4427 = vmatmul.bf16.gmra.mxu0 %v4408
      %v4428 = vpop.f32.mrf.mxu0
      %v4429 = vadd.f32 0.0, %v4428
      %v4430 = vpop.f32.mrf.mxu0
      %v4431 = vadd.f32 0.0, %v4430
      %4432 = vmatmul.bf16.gmra.mxu0 %v4411
      %v4433 = vpop.f32.mrf.mxu0
      %v4434 = vadd.f32 0.0, %v4433
      %v4435 = vpop.f32.mrf.mxu0
      %v4436 = vadd.f32 0.0, %v4435
      %4437 = vmatmul.bf16.gmra.mxu0 %v4414
      %v4438 = vpop.f32.mrf.mxu0
      %v4439 = vadd.f32 0.0, %v4438
      %v4440 = vpop.f32.mrf.mxu0
      %v4441 = vadd.f32 0.0, %v4440
      %4442 = vmatmul.bf16.gmra.mxu0 %v4417
      %v4443 = vpop.f32.mrf.mxu0
      %v4444 = vadd.f32 0.0, %v4443
      %v4445 = vpop.f32.mrf.mxu0
      %v4446 = vadd.f32 0.0, %v4445
      %4447 = vdwg.mxu0
      %v4456 = vunpack.c.l.b16 %v3994
      %v4457 = vunpack.c.l.b16 %v3995
      %v4458 = vunpack.c.l.b16 %v3996
      %v4459 = vunpack.c.l.b16 %v3997
      %v4460 = vunpack.c.l.b16 %v3998
      %v4461 = vunpack.c.l.b16 %v3999
      %v4462 = vunpack.c.l.b16 %v4000
      %v4463 = vunpack.c.l.b16 %v4001
      %v4464 = vpack.c.b16 %v4457, %v4456
      %v4465 = vpack.c.b16 %v4459, %v4458
      %v4466 = vpack.c.b16 %v4461, %v4460
      %v4467 = vpack.c.b16 %v4463, %v4462
      %4468 = vrot.lane.b32.xlu0 %v1517, 64
      %v4469 = vpop.permute.xlu0 %4468
      %4470 = vrot.lane.b32.xlu0 %v1518, 64
      %v4471 = vpop.permute.xlu0 %4470
      %4472 = vrot.lane.b32.xlu0 %v1519, 64
      %v4473 = vpop.permute.xlu0 %4472
      %4474 = vrot.lane.b32.xlu0 %v1520, 64
      %v4475 = vpop.permute.xlu0 %4474
      %v4481 = vsel %vm1807, %v4464, 0
      %v4484 = vsel %vm1807, %v4465, 0
      %v4487 = vsel %vm1807, %v4466, 0
      %v4490 = vsel %vm1807, %v4467, 0
      %4492 = vmatpush.bf16.msra.mxu0 0
      %4493 = vmatpush.bf16.msra.mxu0 0
      %4494 = vmatpush.bf16.msra.mxu0 0
      %4495 = vmatpush.bf16.msra.mxu0 0
      %4496 = vmatpush.bf16.msra.mxu0 %v4475
      %4497 = vmatpush.bf16.msra.mxu0 %v4473
      %4498 = vmatpush.bf16.msra.mxu0 %v4471
      %4499 = vmatpush.bf16.msra.mxu0 %v4469
      %4500 = vmatmul.bf16.gmra.mxu0 %v4481
      %v4501 = vpop.f32.mrf.mxu0
      %v4502 = vadd.f32 0.0, %v4501
      %v4503 = vpop.f32.mrf.mxu0
      %v4504 = vadd.f32 0.0, %v4503
      %4505 = vmatmul.bf16.gmra.mxu0 %v4484
      %v4506 = vpop.f32.mrf.mxu0
      %v4507 = vadd.f32 0.0, %v4506
      %v4508 = vpop.f32.mrf.mxu0
      %v4509 = vadd.f32 0.0, %v4508
      %4510 = vmatmul.bf16.gmra.mxu0 %v4487
      %v4511 = vpop.f32.mrf.mxu0
      %v4512 = vadd.f32 0.0, %v4511
      %v4513 = vpop.f32.mrf.mxu0
      %v4514 = vadd.f32 0.0, %v4513
      %4515 = vmatmul.bf16.gmra.mxu0 %v4490
      %v4516 = vpop.f32.mrf.mxu0
      %v4517 = vadd.f32 0.0, %v4516
      %v4518 = vpop.f32.mrf.mxu0
      %v4519 = vadd.f32 0.0, %v4518
      %4520 = vdwg.mxu0
      %v4529 = vunpack.c.l.b16 %v4002
      %v4530 = vunpack.c.l.b16 %v4003
      %v4531 = vunpack.c.l.b16 %v4004
      %v4532 = vunpack.c.l.b16 %v4005
      %v4533 = vunpack.c.l.b16 %v4006
      %v4534 = vunpack.c.l.b16 %v4007
      %v4535 = vunpack.c.l.b16 %v4008
      %v4536 = vunpack.c.l.b16 %v4009
      %v4537 = vpack.c.b16 %v4530, %v4529
      %v4538 = vpack.c.b16 %v4532, %v4531
      %v4539 = vpack.c.b16 %v4534, %v4533
      %v4540 = vpack.c.b16 %v4536, %v4535
      %4541 = vrot.lane.b32.xlu0 %v1598, 64
      %v4542 = vpop.permute.xlu0 %4541
      %4543 = vrot.lane.b32.xlu0 %v1599, 64
      %v4544 = vpop.permute.xlu0 %4543
      %4545 = vrot.lane.b32.xlu0 %v1600, 64
      %v4546 = vpop.permute.xlu0 %4545
      %4547 = vrot.lane.b32.xlu0 %v1601, 64
      %v4548 = vpop.permute.xlu0 %4547
      %v4554 = vsel %vm1807, %v4537, 0
      %v4557 = vsel %vm1807, %v4538, 0
      %v4560 = vsel %vm1807, %v4539, 0
      %v4563 = vsel %vm1807, %v4540, 0
      %4565 = vmatpush.bf16.msra.mxu0 0
      %4566 = vmatpush.bf16.msra.mxu0 0
      %4567 = vmatpush.bf16.msra.mxu0 0
      %4568 = vmatpush.bf16.msra.mxu0 0
      %4569 = vmatpush.bf16.msra.mxu0 %v4548
      %4570 = vmatpush.bf16.msra.mxu0 %v4546
      %4571 = vmatpush.bf16.msra.mxu0 %v4544
      %4572 = vmatpush.bf16.msra.mxu0 %v4542
      %4573 = vmatmul.bf16.gmra.mxu0 %v4554
      %v4574 = vpop.f32.mrf.mxu0
      %v4575 = vadd.f32 0.0, %v4574
      %v4576 = vpop.f32.mrf.mxu0
      %v4577 = vadd.f32 0.0, %v4576
      %4578 = vmatmul.bf16.gmra.mxu0 %v4557
      %v4579 = vpop.f32.mrf.mxu0
      %v4580 = vadd.f32 0.0, %v4579
      %v4581 = vpop.f32.mrf.mxu0
      %v4582 = vadd.f32 0.0, %v4581
      %4583 = vmatmul.bf16.gmra.mxu0 %v4560
      %v4584 = vpop.f32.mrf.mxu0
      %v4585 = vadd.f32 0.0, %v4584
      %v4586 = vpop.f32.mrf.mxu0
      %v4587 = vadd.f32 0.0, %v4586
      %4588 = vmatmul.bf16.gmra.mxu0 %v4563
      %v4589 = vpop.f32.mrf.mxu0
      %v4590 = vadd.f32 0.0, %v4589
      %v4591 = vpop.f32.mrf.mxu0
      %v4592 = vadd.f32 0.0, %v4591
      %4593 = vdwg.mxu0
      %v4594 = vmul.f32 %v4064, %v3882
      %v4595 = vmul.f32 %v4066, %v3883
      %v4596 = vmul.f32 %v4069, %v3884
      %v4597 = vmul.f32 %v4071, %v3885
      %v4598 = vmul.f32 %v4074, %v3886
      %v4599 = vmul.f32 %v4076, %v3887
      %v4600 = vmul.f32 %v4079, %v3888
      %v4601 = vmul.f32 %v4081, %v3889
      %v4602 = vmul.f32 %v4137, %v3890
      %v4603 = vmul.f32 %v4139, %v3891
      %v4604 = vmul.f32 %v4142, %v3892
      %v4605 = vmul.f32 %v4144, %v3893
      %v4606 = vmul.f32 %v4147, %v3894
      %v4607 = vmul.f32 %v4149, %v3895
      %v4608 = vmul.f32 %v4152, %v3896
      %v4609 = vmul.f32 %v4154, %v3897
      %v4610 = vmul.f32 %v4210, %v3898
      %v4611 = vmul.f32 %v4212, %v3899
      %v4612 = vmul.f32 %v4215, %v3900
      %v4613 = vmul.f32 %v4217, %v3901
      %v4614 = vmul.f32 %v4220, %v3902
      %v4615 = vmul.f32 %v4222, %v3903
      %v4616 = vmul.f32 %v4225, %v3904
      %v4617 = vmul.f32 %v4227, %v3905
      %v4618 = vmul.f32 %v4283, %v3906
      %v4619 = vmul.f32 %v4285, %v3907
      %v4620 = vmul.f32 %v4288, %v3908
      %v4621 = vmul.f32 %v4290, %v3909
      %v4622 = vmul.f32 %v4293, %v3910
      %v4623 = vmul.f32 %v4295, %v3911
      %v4624 = vmul.f32 %v4298, %v3912
      %v4625 = vmul.f32 %v4300, %v3913
      %v4626 = vmul.f32 %v4356, %v3914
      %v4627 = vmul.f32 %v4358, %v3915
      %v4628 = vmul.f32 %v4361, %v3916
      %v4629 = vmul.f32 %v4363, %v3917
      %v4630 = vmul.f32 %v4366, %v3918
      %v4631 = vmul.f32 %v4368, %v3919
      %v4632 = vmul.f32 %v4371, %v3920
      %v4633 = vmul.f32 %v4373, %v3921
      %v4634 = vmul.f32 %v4429, %v3922
      %v4635 = vmul.f32 %v4431, %v3923
      %v4636 = vmul.f32 %v4434, %v3924
      %v4637 = vmul.f32 %v4436, %v3925
      %v4638 = vmul.f32 %v4439, %v3926
      %v4639 = vmul.f32 %v4441, %v3927
      %v4640 = vmul.f32 %v4444, %v3928
      %v4641 = vmul.f32 %v4446, %v3929
      %v4642 = vmul.f32 %v4502, %v3930
      %v4643 = vmul.f32 %v4504, %v3931
      %v4644 = vmul.f32 %v4507, %v3932
      %v4645 = vmul.f32 %v4509, %v3933
      %v4646 = vmul.f32 %v4512, %v3934
      %v4647 = vmul.f32 %v4514, %v3935
      %v4648 = vmul.f32 %v4517, %v3936
      %v4649 = vmul.f32 %v4519, %v3937
      %v4650 = vmul.f32 %v4575, %v3938
      %v4651 = vmul.f32 %v4577, %v3939
      %v4652 = vmul.f32 %v4580, %v3940
      %v4653 = vmul.f32 %v4582, %v3941
      %v4654 = vmul.f32 %v4585, %v3942
      %v4655 = vmul.f32 %v4587, %v3943
      %v4656 = vmul.f32 %v4590, %v3944
      %v4657 = vmul.f32 %v4592, %v3945
      %v4658 = vadd.f32 %v3096, %v4594
      %v4659 = vadd.f32 %v3097, %v4595
      %v4660 = vadd.f32 %v3098, %v4596
      %v4661 = vadd.f32 %v3099, %v4597
      %v4662 = vadd.f32 %v3100, %v4598
      %v4663 = vadd.f32 %v3101, %v4599
      %v4664 = vadd.f32 %v3102, %v4600
      %v4665 = vadd.f32 %v3103, %v4601
      %v4666 = vadd.f32 %v3104, %v4602
      %v4667 = vadd.f32 %v3105, %v4603
      %v4668 = vadd.f32 %v3106, %v4604
      %v4669 = vadd.f32 %v3107, %v4605
      %v4670 = vadd.f32 %v3108, %v4606
      %v4671 = vadd.f32 %v3109, %v4607
      %v4672 = vadd.f32 %v3110, %v4608
      %v4673 = vadd.f32 %v3111, %v4609
      %v4674 = vadd.f32 %v3112, %v4610
      %v4675 = vadd.f32 %v3113, %v4611
      %v4676 = vadd.f32 %v3114, %v4612
      %v4677 = vadd.f32 %v3115, %v4613
      %v4678 = vadd.f32 %v3116, %v4614
      %v4679 = vadd.f32 %v3117, %v4615
      %v4680 = vadd.f32 %v3118, %v4616
      %v4681 = vadd.f32 %v3119, %v4617
      %v4682 = vadd.f32 %v3120, %v4618
      %v4683 = vadd.f32 %v3121, %v4619
      %v4684 = vadd.f32 %v3122, %v4620
      %v4685 = vadd.f32 %v3123, %v4621
      %v4686 = vadd.f32 %v3124, %v4622
      %v4687 = vadd.f32 %v3125, %v4623
      %v4688 = vadd.f32 %v3126, %v4624
      %v4689 = vadd.f32 %v3127, %v4625
      %v4690 = vadd.f32 %v3128, %v4626
      %v4691 = vadd.f32 %v3129, %v4627
      %v4692 = vadd.f32 %v3130, %v4628
      %v4693 = vadd.f32 %v3131, %v4629
      %v4694 = vadd.f32 %v3132, %v4630
      %v4695 = vadd.f32 %v3133, %v4631
      %v4696 = vadd.f32 %v3134, %v4632
      %v4697 = vadd.f32 %v3135, %v4633
      %v4698 = vadd.f32 %v3136, %v4634
      %v4699 = vadd.f32 %v3137, %v4635
      %v4700 = vadd.f32 %v3138, %v4636
      %v4701 = vadd.f32 %v3139, %v4637
      %v4702 = vadd.f32 %v3140, %v4638
      %v4703 = vadd.f32 %v3141, %v4639
      %v4704 = vadd.f32 %v3142, %v4640
      %v4705 = vadd.f32 %v3143, %v4641
      %v4706 = vadd.f32 %v3144, %v4642
      %v4707 = vadd.f32 %v3145, %v4643
      %v4708 = vadd.f32 %v3146, %v4644
      %v4709 = vadd.f32 %v3147, %v4645
      %v4710 = vadd.f32 %v3148, %v4646
      %v4711 = vadd.f32 %v3149, %v4647
      %v4712 = vadd.f32 %v3150, %v4648
      %v4713 = vadd.f32 %v3151, %v4649
      %v4714 = vadd.f32 %v3152, %v4650
      %v4715 = vadd.f32 %v3153, %v4651
      %v4716 = vadd.f32 %v3154, %v4652
      %v4717 = vadd.f32 %v3155, %v4653
      %v4718 = vadd.f32 %v3156, %v4654
      %v4719 = vadd.f32 %v3157, %v4655
      %v4720 = vadd.f32 %v3158, %v4656
      %v4721 = vadd.f32 %v3159, %v4657
      %4722 = vrot.lane.b32.xlu0 %v1030, 120
      %v4723 = vpop.permute.xlu0 %4722
      %4724 = vrot.lane.b32.xlu0 %v1031, 120
      %v4725 = vpop.permute.xlu0 %4724
      %4726 = vrot.lane.b32.xlu0 %v1032, 120
      %v4727 = vpop.permute.xlu0 %4726
      %4728 = vrot.lane.b32.xlu0 %v1033, 120
      %v4729 = vpop.permute.xlu0 %4728
      %4730 = vrot.lane.b32.xlu0 %v1030, 104
      %v4731 = vpop.permute.xlu0 %4730
      %4732 = vrot.lane.b32.xlu0 %v1031, 104
      %v4733 = vpop.permute.xlu0 %4732
      %4734 = vrot.lane.b32.xlu0 %v1032, 104
      %v4735 = vpop.permute.xlu0 %4734
      %4736 = vrot.lane.b32.xlu0 %v1033, 104
      %v4737 = vpop.permute.xlu0 %4736
      %v4739 = vsel %vm1042, %v4723, 0
      %v4742 = vsel %vm1042, %v4725, 0
      %v4745 = vsel %vm1042, %v4727, 0
      %v4748 = vsel %vm1042, %v4729, 0
      %v4751 = vsel %vm1042, %v4731, 0
      %v4754 = vsel %vm1042, %v4733, 0
      %v4757 = vsel %vm1042, %v4735, 0
      %v4760 = vsel %vm1042, %v4737, 0
      %4762 = vmatpush.bf16.xpose.msra.mxu0 0
      %4763 = vmatpush.bf16.xpose.msra.mxu0 0
      %4764 = vmatpush.bf16.xpose.msra.mxu0 0
      %4765 = vmatpush.bf16.xpose.msra.mxu0 0
      %4766 = vmatpush.bf16.xpose.msra.mxu0 %v4760
      %4767 = vmatpush.bf16.xpose.msra.mxu0 %v4757
      %4768 = vmatpush.bf16.xpose.msra.mxu0 %v4754
      %4769 = vmatpush.bf16.xpose.msra.mxu0 %v4751
      %4770 = vmatmul.bf16.gmra.mxu0 %v4739
      %v4771 = vpop.f32.mrf.mxu0
      %v4772 = vadd.f32 0.0, %v4771
      %v4773 = vpop.f32.mrf.mxu0
      %v4774 = vadd.f32 0.0, %v4773
      %4775 = vmatmul.bf16.gmra.mxu0 %v4742
      %v4776 = vpop.f32.mrf.mxu0
      %v4777 = vadd.f32 0.0, %v4776
      %v4778 = vpop.f32.mrf.mxu0
      %v4779 = vadd.f32 0.0, %v4778
      %4780 = vmatmul.bf16.gmra.mxu0 %v4745
      %v4781 = vpop.f32.mrf.mxu0
      %v4782 = vadd.f32 0.0, %v4781
      %v4783 = vpop.f32.mrf.mxu0
      %v4784 = vadd.f32 0.0, %v4783
      %4785 = vmatmul.bf16.gmra.mxu0 %v4748
      %v4786 = vpop.f32.mrf.mxu0
      %v4787 = vadd.f32 0.0, %v4786
      %v4788 = vpop.f32.mrf.mxu0
      %v4789 = vadd.f32 0.0, %v4788
      %4790 = vdwg.mxu0
      %4791 = vrot.lane.b32.xlu0 %v1112, 120
      %v4792 = vpop.permute.xlu0 %4791
      %4793 = vrot.lane.b32.xlu0 %v1113, 120
      %v4794 = vpop.permute.xlu0 %4793
      %4795 = vrot.lane.b32.xlu0 %v1114, 120
      %v4796 = vpop.permute.xlu0 %4795
      %4797 = vrot.lane.b32.xlu0 %v1115, 120
      %v4798 = vpop.permute.xlu0 %4797
      %4799 = vrot.lane.b32.xlu0 %v1112, 104
      %v4800 = vpop.permute.xlu0 %4799
      %4801 = vrot.lane.b32.xlu0 %v1113, 104
      %v4802 = vpop.permute.xlu0 %4801
      %4803 = vrot.lane.b32.xlu0 %v1114, 104
      %v4804 = vpop.permute.xlu0 %4803
      %4805 = vrot.lane.b32.xlu0 %v1115, 104
      %v4806 = vpop.permute.xlu0 %4805
      %v4808 = vsel %vm1042, %v4792, 0
      %v4811 = vsel %vm1042, %v4794, 0
      %v4814 = vsel %vm1042, %v4796, 0
      %v4817 = vsel %vm1042, %v4798, 0
      %v4820 = vsel %vm1042, %v4800, 0
      %v4823 = vsel %vm1042, %v4802, 0
      %v4826 = vsel %vm1042, %v4804, 0
      %v4829 = vsel %vm1042, %v4806, 0
      %4831 = vmatpush.bf16.xpose.msra.mxu0 0
      %4832 = vmatpush.bf16.xpose.msra.mxu0 0
      %4833 = vmatpush.bf16.xpose.msra.mxu0 0
      %4834 = vmatpush.bf16.xpose.msra.mxu0 0
      %4835 = vmatpush.bf16.xpose.msra.mxu0 %v4829
      %4836 = vmatpush.bf16.xpose.msra.mxu0 %v4826
      %4837 = vmatpush.bf16.xpose.msra.mxu0 %v4823
      %4838 = vmatpush.bf16.xpose.msra.mxu0 %v4820
      %4839 = vmatmul.bf16.gmra.mxu0 %v4808
      %v4840 = vpop.f32.mrf.mxu0
      %v4841 = vadd.f32 0.0, %v4840
      %v4842 = vpop.f32.mrf.mxu0
      %v4843 = vadd.f32 0.0, %v4842
      %4844 = vmatmul.bf16.gmra.mxu0 %v4811
      %v4845 = vpop.f32.mrf.mxu0
      %v4846 = vadd.f32 0.0, %v4845
      %v4847 = vpop.f32.mrf.mxu0
      %v4848 = vadd.f32 0.0, %v4847
      %4849 = vmatmul.bf16.gmra.mxu0 %v4814
      %v4850 = vpop.f32.mrf.mxu0
      %v4851 = vadd.f32 0.0, %v4850
      %v4852 = vpop.f32.mrf.mxu0
      %v4853 = vadd.f32 0.0, %v4852
      %4854 = vmatmul.bf16.gmra.mxu0 %v4817
      %v4855 = vpop.f32.mrf.mxu0
      %v4856 = vadd.f32 0.0, %v4855
      %v4857 = vpop.f32.mrf.mxu0
      %v4858 = vadd.f32 0.0, %v4857
      %4859 = vdwg.mxu0
      %4860 = vrot.lane.b32.xlu0 %v1193, 120
      %v4861 = vpop.permute.xlu0 %4860
      %4862 = vrot.lane.b32.xlu0 %v1194, 120
      %v4863 = vpop.permute.xlu0 %4862
      %4864 = vrot.lane.b32.xlu0 %v1195, 120
      %v4865 = vpop.permute.xlu0 %4864
      %4866 = vrot.lane.b32.xlu0 %v1196, 120
      %v4867 = vpop.permute.xlu0 %4866
      %4868 = vrot.lane.b32.xlu0 %v1193, 104
      %v4869 = vpop.permute.xlu0 %4868
      %4870 = vrot.lane.b32.xlu0 %v1194, 104
      %v4871 = vpop.permute.xlu0 %4870
      %4872 = vrot.lane.b32.xlu0 %v1195, 104
      %v4873 = vpop.permute.xlu0 %4872
      %4874 = vrot.lane.b32.xlu0 %v1196, 104
      %v4875 = vpop.permute.xlu0 %4874
      %v4877 = vsel %vm1042, %v4861, 0
      %v4880 = vsel %vm1042, %v4863, 0
      %v4883 = vsel %vm1042, %v4865, 0
      %v4886 = vsel %vm1042, %v4867, 0
      %v4889 = vsel %vm1042, %v4869, 0
      %v4892 = vsel %vm1042, %v4871, 0
      %v4895 = vsel %vm1042, %v4873, 0
      %v4898 = vsel %vm1042, %v4875, 0
      %4900 = vmatpush.bf16.xpose.msra.mxu0 0
      %4901 = vmatpush.bf16.xpose.msra.mxu0 0
      %4902 = vmatpush.bf16.xpose.msra.mxu0 0
      %4903 = vmatpush.bf16.xpose.msra.mxu0 0
      %4904 = vmatpush.bf16.xpose.msra.mxu0 %v4898
      %4905 = vmatpush.bf16.xpose.msra.mxu0 %v4895
      %4906 = vmatpush.bf16.xpose.msra.mxu0 %v4892
      %4907 = vmatpush.bf16.xpose.msra.mxu0 %v4889
      %4908 = vmatmul.bf16.gmra.mxu0 %v4877
      %v4909 = vpop.f32.mrf.mxu0
      %v4910 = vadd.f32 0.0, %v4909
      %v4911 = vpop.f32.mrf.mxu0
      %v4912 = vadd.f32 0.0, %v4911
      %4913 = vmatmul.bf16.gmra.mxu0 %v4880
      %v4914 = vpop.f32.mrf.mxu0
      %v4915 = vadd.f32 0.0, %v4914
      %v4916 = vpop.f32.mrf.mxu0
      %v4917 = vadd.f32 0.0, %v4916
      %4918 = vmatmul.bf16.gmra.mxu0 %v4883
      %v4919 = vpop.f32.mrf.mxu0
      %v4920 = vadd.f32 0.0, %v4919
      %v4921 = vpop.f32.mrf.mxu0
      %v4922 = vadd.f32 0.0, %v4921
      %4923 = vmatmul.bf16.gmra.mxu0 %v4886
      %v4924 = vpop.f32.mrf.mxu0
      %v4925 = vadd.f32 0.0, %v4924
      %v4926 = vpop.f32.mrf.mxu0
      %v4927 = vadd.f32 0.0, %v4926
      %4928 = vdwg.mxu0
      %4929 = vrot.lane.b32.xlu0 %v1274, 120
      %v4930 = vpop.permute.xlu0 %4929
      %4931 = vrot.lane.b32.xlu0 %v1275, 120
      %v4932 = vpop.permute.xlu0 %4931
      %4933 = vrot.lane.b32.xlu0 %v1276, 120
      %v4934 = vpop.permute.xlu0 %4933
      %4935 = vrot.lane.b32.xlu0 %v1277, 120
      %v4936 = vpop.permute.xlu0 %4935
      %4937 = vrot.lane.b32.xlu0 %v1274, 104
      %v4938 = vpop.permute.xlu0 %4937
      %4939 = vrot.lane.b32.xlu0 %v1275, 104
      %v4940 = vpop.permute.xlu0 %4939
      %4941 = vrot.lane.b32.xlu0 %v1276, 104
      %v4942 = vpop.permute.xlu0 %4941
      %4943 = vrot.lane.b32.xlu0 %v1277, 104
      %v4944 = vpop.permute.xlu0 %4943
      %v4946 = vsel %vm1042, %v4930, 0
      %v4949 = vsel %vm1042, %v4932, 0
      %v4952 = vsel %vm1042, %v4934, 0
      %v4955 = vsel %vm1042, %v4936, 0
      %v4958 = vsel %vm1042, %v4938, 0
      %v4961 = vsel %vm1042, %v4940, 0
      %v4964 = vsel %vm1042, %v4942, 0
      %v4967 = vsel %vm1042, %v4944, 0
      %4969 = vmatpush.bf16.xpose.msra.mxu0 0
      %4970 = vmatpush.bf16.xpose.msra.mxu0 0
      %4971 = vmatpush.bf16.xpose.msra.mxu0 0
      %4972 = vmatpush.bf16.xpose.msra.mxu0 0
      %4973 = vmatpush.bf16.xpose.msra.mxu0 %v4967
      %4974 = vmatpush.bf16.xpose.msra.mxu0 %v4964
      %4975 = vmatpush.bf16.xpose.msra.mxu0 %v4961
      %4976 = vmatpush.bf16.xpose.msra.mxu0 %v4958
      %4977 = vmatmul.bf16.gmra.mxu0 %v4946
      %v4978 = vpop.f32.mrf.mxu0
      %v4979 = vadd.f32 0.0, %v4978
      %v4980 = vpop.f32.mrf.mxu0
      %v4981 = vadd.f32 0.0, %v4980
      %4982 = vmatmul.bf16.gmra.mxu0 %v4949
      %v4983 = vpop.f32.mrf.mxu0
      %v4984 = vadd.f32 0.0, %v4983
      %v4985 = vpop.f32.mrf.mxu0
      %v4986 = vadd.f32 0.0, %v4985
      %4987 = vmatmul.bf16.gmra.mxu0 %v4952
      %v4988 = vpop.f32.mrf.mxu0
      %v4989 = vadd.f32 0.0, %v4988
      %v4990 = vpop.f32.mrf.mxu0
      %v4991 = vadd.f32 0.0, %v4990
      %4992 = vmatmul.bf16.gmra.mxu0 %v4955
      %v4993 = vpop.f32.mrf.mxu0
      %v4994 = vadd.f32 0.0, %v4993
      %v4995 = vpop.f32.mrf.mxu0
      %v4996 = vadd.f32 0.0, %v4995
      %4997 = vdwg.mxu0
      %4998 = vrot.lane.b32.xlu0 %v1355, 120
      %v4999 = vpop.permute.xlu0 %4998
      %5000 = vrot.lane.b32.xlu0 %v1356, 120
      %v5001 = vpop.permute.xlu0 %5000
      %5002 = vrot.lane.b32.xlu0 %v1357, 120
      %v5003 = vpop.permute.xlu0 %5002
      %5004 = vrot.lane.b32.xlu0 %v1358, 120
      %v5005 = vpop.permute.xlu0 %5004
      %5006 = vrot.lane.b32.xlu0 %v1355, 104
      %v5007 = vpop.permute.xlu0 %5006
      %5008 = vrot.lane.b32.xlu0 %v1356, 104
      %v5009 = vpop.permute.xlu0 %5008
      %5010 = vrot.lane.b32.xlu0 %v1357, 104
      %v5011 = vpop.permute.xlu0 %5010
      %5012 = vrot.lane.b32.xlu0 %v1358, 104
      %v5013 = vpop.permute.xlu0 %5012
      %v5015 = vsel %vm1042, %v4999, 0
      %v5018 = vsel %vm1042, %v5001, 0
      %v5021 = vsel %vm1042, %v5003, 0
      %v5024 = vsel %vm1042, %v5005, 0
      %v5027 = vsel %vm1042, %v5007, 0
      %v5030 = vsel %vm1042, %v5009, 0
      %v5033 = vsel %vm1042, %v5011, 0
      %v5036 = vsel %vm1042, %v5013, 0
      %5038 = vmatpush.bf16.xpose.msra.mxu0 0
      %5039 = vmatpush.bf16.xpose.msra.mxu0 0
      %5040 = vmatpush.bf16.xpose.msra.mxu0 0
      %5041 = vmatpush.bf16.xpose.msra.mxu0 0
      %5042 = vmatpush.bf16.xpose.msra.mxu0 %v5036
      %5043 = vmatpush.bf16.xpose.msra.mxu0 %v5033
      %5044 = vmatpush.bf16.xpose.msra.mxu0 %v5030
      %5045 = vmatpush.bf16.xpose.msra.mxu0 %v5027
      %5046 = vmatmul.bf16.gmra.mxu0 %v5015
      %v5047 = vpop.f32.mrf.mxu0
      %v5048 = vadd.f32 0.0, %v5047
      %v5049 = vpop.f32.mrf.mxu0
      %v5050 = vadd.f32 0.0, %v5049
      %5051 = vmatmul.bf16.gmra.mxu0 %v5018
      %v5052 = vpop.f32.mrf.mxu0
      %v5053 = vadd.f32 0.0, %v5052
      %v5054 = vpop.f32.mrf.mxu0
      %v5055 = vadd.f32 0.0, %v5054
      %5056 = vmatmul.bf16.gmra.mxu0 %v5021
      %v5057 = vpop.f32.mrf.mxu0
      %v5058 = vadd.f32 0.0, %v5057
      %v5059 = vpop.f32.mrf.mxu0
      %v5060 = vadd.f32 0.0, %v5059
      %5061 = vmatmul.bf16.gmra.mxu0 %v5024
      %v5062 = vpop.f32.mrf.mxu0
      %v5063 = vadd.f32 0.0, %v5062
      %v5064 = vpop.f32.mrf.mxu0
      %v5065 = vadd.f32 0.0, %v5064
      %5066 = vdwg.mxu0
      %5067 = vrot.lane.b32.xlu0 %v1436, 120
      %v5068 = vpop.permute.xlu0 %5067
      %5069 = vrot.lane.b32.xlu0 %v1437, 120
      %v5070 = vpop.permute.xlu0 %5069
      %5071 = vrot.lane.b32.xlu0 %v1438, 120
      %v5072 = vpop.permute.xlu0 %5071
      %5073 = vrot.lane.b32.xlu0 %v1439, 120
      %v5074 = vpop.permute.xlu0 %5073
      %5075 = vrot.lane.b32.xlu0 %v1436, 104
      %v5076 = vpop.permute.xlu0 %5075
      %5077 = vrot.lane.b32.xlu0 %v1437, 104
      %v5078 = vpop.permute.xlu0 %5077
      %5079 = vrot.lane.b32.xlu0 %v1438, 104
      %v5080 = vpop.permute.xlu0 %5079
      %5081 = vrot.lane.b32.xlu0 %v1439, 104
      %v5082 = vpop.permute.xlu0 %5081
      %v5084 = vsel %vm1042, %v5068, 0
      %v5087 = vsel %vm1042, %v5070, 0
      %v5090 = vsel %vm1042, %v5072, 0
      %v5093 = vsel %vm1042, %v5074, 0
      %v5096 = vsel %vm1042, %v5076, 0
      %v5099 = vsel %vm1042, %v5078, 0
      %v5102 = vsel %vm1042, %v5080, 0
      %v5105 = vsel %vm1042, %v5082, 0
      %5107 = vmatpush.bf16.xpose.msra.mxu0 0
      %5108 = vmatpush.bf16.xpose.msra.mxu0 0
      %5109 = vmatpush.bf16.xpose.msra.mxu0 0
      %5110 = vmatpush.bf16.xpose.msra.mxu0 0
      %5111 = vmatpush.bf16.xpose.msra.mxu0 %v5105
      %5112 = vmatpush.bf16.xpose.msra.mxu0 %v5102
      %5113 = vmatpush.bf16.xpose.msra.mxu0 %v5099
      %5114 = vmatpush.bf16.xpose.msra.mxu0 %v5096
      %5115 = vmatmul.bf16.gmra.mxu0 %v5084
      %v5116 = vpop.f32.mrf.mxu0
      %v5117 = vadd.f32 0.0, %v5116
      %v5118 = vpop.f32.mrf.mxu0
      %v5119 = vadd.f32 0.0, %v5118
      %5120 = vmatmul.bf16.gmra.mxu0 %v5087
      %v5121 = vpop.f32.mrf.mxu0
      %v5122 = vadd.f32 0.0, %v5121
      %v5123 = vpop.f32.mrf.mxu0
      %v5124 = vadd.f32 0.0, %v5123
      %5125 = vmatmul.bf16.gmra.mxu0 %v5090
      %v5126 = vpop.f32.mrf.mxu0
      %v5127 = vadd.f32 0.0, %v5126
      %v5128 = vpop.f32.mrf.mxu0
      %v5129 = vadd.f32 0.0, %v5128
      %5130 = vmatmul.bf16.gmra.mxu0 %v5093
      %v5131 = vpop.f32.mrf.mxu0
      %v5132 = vadd.f32 0.0, %v5131
      %v5133 = vpop.f32.mrf.mxu0
      %v5134 = vadd.f32 0.0, %v5133
      %5135 = vdwg.mxu0
      %5136 = vrot.lane.b32.xlu0 %v1517, 120
      %v5137 = vpop.permute.xlu0 %5136
      %5138 = vrot.lane.b32.xlu0 %v1518, 120
      %v5139 = vpop.permute.xlu0 %5138
      %5140 = vrot.lane.b32.xlu0 %v1519, 120
      %v5141 = vpop.permute.xlu0 %5140
      %5142 = vrot.lane.b32.xlu0 %v1520, 120
      %v5143 = vpop.permute.xlu0 %5142
      %5144 = vrot.lane.b32.xlu0 %v1517, 104
      %v5145 = vpop.permute.xlu0 %5144
      %5146 = vrot.lane.b32.xlu0 %v1518, 104
      %v5147 = vpop.permute.xlu0 %5146
      %5148 = vrot.lane.b32.xlu0 %v1519, 104
      %v5149 = vpop.permute.xlu0 %5148
      %5150 = vrot.lane.b32.xlu0 %v1520, 104
      %v5151 = vpop.permute.xlu0 %5150
      %v5153 = vsel %vm1042, %v5137, 0
      %v5156 = vsel %vm1042, %v5139, 0
      %v5159 = vsel %vm1042, %v5141, 0
      %v5162 = vsel %vm1042, %v5143, 0
      %v5165 = vsel %vm1042, %v5145, 0
      %v5168 = vsel %vm1042, %v5147, 0
      %v5171 = vsel %vm1042, %v5149, 0
      %v5174 = vsel %vm1042, %v5151, 0
      %5176 = vmatpush.bf16.xpose.msra.mxu0 0
      %5177 = vmatpush.bf16.xpose.msra.mxu0 0
      %5178 = vmatpush.bf16.xpose.msra.mxu0 0
      %5179 = vmatpush.bf16.xpose.msra.mxu0 0
      %5180 = vmatpush.bf16.xpose.msra.mxu0 %v5174
      %5181 = vmatpush.bf16.xpose.msra.mxu0 %v5171
      %5182 = vmatpush.bf16.xpose.msra.mxu0 %v5168
      %5183 = vmatpush.bf16.xpose.msra.mxu0 %v5165
      %5184 = vmatmul.bf16.gmra.mxu0 %v5153
      %v5185 = vpop.f32.mrf.mxu0
      %v5186 = vadd.f32 0.0, %v5185
      %v5187 = vpop.f32.mrf.mxu0
      %v5188 = vadd.f32 0.0, %v5187
      %5189 = vmatmul.bf16.gmra.mxu0 %v5156
      %v5190 = vpop.f32.mrf.mxu0
      %v5191 = vadd.f32 0.0, %v5190
      %v5192 = vpop.f32.mrf.mxu0
      %v5193 = vadd.f32 0.0, %v5192
      %5194 = vmatmul.bf16.gmra.mxu0 %v5159
      %v5195 = vpop.f32.mrf.mxu0
      %v5196 = vadd.f32 0.0, %v5195
      %v5197 = vpop.f32.mrf.mxu0
      %v5198 = vadd.f32 0.0, %v5197
      %5199 = vmatmul.bf16.gmra.mxu0 %v5162
      %v5200 = vpop.f32.mrf.mxu0
      %v5201 = vadd.f32 0.0, %v5200
      %v5202 = vpop.f32.mrf.mxu0
      %v5203 = vadd.f32 0.0, %v5202
      %5204 = vdwg.mxu0
      %5205 = vrot.lane.b32.xlu0 %v1598, 120
      %v5206 = vpop.permute.xlu0 %5205
      %5207 = vrot.lane.b32.xlu0 %v1599, 120
      %v5208 = vpop.permute.xlu0 %5207
      %5209 = vrot.lane.b32.xlu0 %v1600, 120
      %v5210 = vpop.permute.xlu0 %5209
      %5211 = vrot.lane.b32.xlu0 %v1601, 120
      %v5212 = vpop.permute.xlu0 %5211
      %5213 = vrot.lane.b32.xlu0 %v1598, 104
      %v5214 = vpop.permute.xlu0 %5213
      %5215 = vrot.lane.b32.xlu0 %v1599, 104
      %v5216 = vpop.permute.xlu0 %5215
      %5217 = vrot.lane.b32.xlu0 %v1600, 104
      %v5218 = vpop.permute.xlu0 %5217
      %5219 = vrot.lane.b32.xlu0 %v1601, 104
      %v5220 = vpop.permute.xlu0 %5219
      %v5222 = vsel %vm1042, %v5206, 0
      %v5225 = vsel %vm1042, %v5208, 0
      %v5228 = vsel %vm1042, %v5210, 0
      %v5231 = vsel %vm1042, %v5212, 0
      %v5234 = vsel %vm1042, %v5214, 0
      %v5237 = vsel %vm1042, %v5216, 0
      %v5240 = vsel %vm1042, %v5218, 0
      %v5243 = vsel %vm1042, %v5220, 0
      %5245 = vmatpush.bf16.xpose.msra.mxu0 0
      %5246 = vmatpush.bf16.xpose.msra.mxu0 0
      %5247 = vmatpush.bf16.xpose.msra.mxu0 0
      %5248 = vmatpush.bf16.xpose.msra.mxu0 0
      %5249 = vmatpush.bf16.xpose.msra.mxu0 %v5243
      %5250 = vmatpush.bf16.xpose.msra.mxu0 %v5240
      %5251 = vmatpush.bf16.xpose.msra.mxu0 %v5237
      %5252 = vmatpush.bf16.xpose.msra.mxu0 %v5234
      %5253 = vmatmul.bf16.gmra.mxu0 %v5222
      %v5254 = vpop.f32.mrf.mxu0
      %v5255 = vadd.f32 0.0, %v5254
      %v5256 = vpop.f32.mrf.mxu0
      %v5257 = vadd.f32 0.0, %v5256
      %5258 = vmatmul.bf16.gmra.mxu0 %v5225
      %v5259 = vpop.f32.mrf.mxu0
      %v5260 = vadd.f32 0.0, %v5259
      %v5261 = vpop.f32.mrf.mxu0
      %v5262 = vadd.f32 0.0, %v5261
      %5263 = vmatmul.bf16.gmra.mxu0 %v5228
      %v5264 = vpop.f32.mrf.mxu0
      %v5265 = vadd.f32 0.0, %v5264
      %v5266 = vpop.f32.mrf.mxu0
      %v5267 = vadd.f32 0.0, %v5266
      %5268 = vmatmul.bf16.gmra.mxu0 %v5231
      %v5269 = vpop.f32.mrf.mxu0
      %v5270 = vadd.f32 0.0, %v5269
      %v5271 = vpop.f32.mrf.mxu0
      %v5272 = vadd.f32 0.0, %v5271
      %5273 = vdwg.mxu0
      %s5274 = scalar_lea.vmem %s3, 128
      %v5275 = vld [vmem:[%s5274] sm:$0xff]
      %v5276 = vld [vmem:[%s5274 + $0x8] sm:$0xff]
      %v5277 = vld [vmem:[%s5274 + $0x10] sm:$0xff]
      %v5278 = vld [vmem:[%s5274 + $0x18] sm:$0xff]
      %v5279 = vld [vmem:[%s5274 + $0x20] sm:$0xff]
      %v5280 = vld [vmem:[%s5274 + $0x28] sm:$0xff]
      %v5281 = vld [vmem:[%s5274 + $0x30] sm:$0xff]
      %v5282 = vld [vmem:[%s5274 + $0x38] sm:$0xff]
      %v5283 = vmul.f32 %v4772, %v5275
      %v5284 = vmul.f32 %v4774, %v5276
      %v5285 = vmul.f32 %v4777, %v5277
      %v5286 = vmul.f32 %v4779, %v5278
      %v5287 = vmul.f32 %v4782, %v5279
      %v5288 = vmul.f32 %v4784, %v5280
      %v5289 = vmul.f32 %v4787, %v5281
      %v5290 = vmul.f32 %v4789, %v5282
      %v5291 = vmul.f32 %v4841, %v5275
      %v5292 = vmul.f32 %v4843, %v5276
      %v5293 = vmul.f32 %v4846, %v5277
      %v5294 = vmul.f32 %v4848, %v5278
      %v5295 = vmul.f32 %v4851, %v5279
      %v5296 = vmul.f32 %v4853, %v5280
      %v5297 = vmul.f32 %v4856, %v5281
      %v5298 = vmul.f32 %v4858, %v5282
      %v5299 = vmul.f32 %v4910, %v5275
      %v5300 = vmul.f32 %v4912, %v5276
      %v5301 = vmul.f32 %v4915, %v5277
      %v5302 = vmul.f32 %v4917, %v5278
      %v5303 = vmul.f32 %v4920, %v5279
      %v5304 = vmul.f32 %v4922, %v5280
      %v5305 = vmul.f32 %v4925, %v5281
      %v5306 = vmul.f32 %v4927, %v5282
      %v5307 = vmul.f32 %v4979, %v5275
      %v5308 = vmul.f32 %v4981, %v5276
      %v5309 = vmul.f32 %v4984, %v5277
      %v5310 = vmul.f32 %v4986, %v5278
      %v5311 = vmul.f32 %v4989, %v5279
      %v5312 = vmul.f32 %v4991, %v5280
      %v5313 = vmul.f32 %v4994, %v5281
      %v5314 = vmul.f32 %v4996, %v5282
      %v5315 = vmul.f32 %v5048, %v5275
      %v5316 = vmul.f32 %v5050, %v5276
      %v5317 = vmul.f32 %v5053, %v5277
      %v5318 = vmul.f32 %v5055, %v5278
      %v5319 = vmul.f32 %v5058, %v5279
      %v5320 = vmul.f32 %v5060, %v5280
      %v5321 = vmul.f32 %v5063, %v5281
      %v5322 = vmul.f32 %v5065, %v5282
      %v5323 = vmul.f32 %v5117, %v5275
      %v5324 = vmul.f32 %v5119, %v5276
      %v5325 = vmul.f32 %v5122, %v5277
      %v5326 = vmul.f32 %v5124, %v5278
      %v5327 = vmul.f32 %v5127, %v5279
      %v5328 = vmul.f32 %v5129, %v5280
      %v5329 = vmul.f32 %v5132, %v5281
      %v5330 = vmul.f32 %v5134, %v5282
      %v5331 = vmul.f32 %v5186, %v5275
      %v5332 = vmul.f32 %v5188, %v5276
      %v5333 = vmul.f32 %v5191, %v5277
      %v5334 = vmul.f32 %v5193, %v5278
      %v5335 = vmul.f32 %v5196, %v5279
      %v5336 = vmul.f32 %v5198, %v5280
      %v5337 = vmul.f32 %v5201, %v5281
      %v5338 = vmul.f32 %v5203, %v5282
      %v5339 = vmul.f32 %v5255, %v5275
      %v5340 = vmul.f32 %v5257, %v5276
      %v5341 = vmul.f32 %v5260, %v5277
      %v5342 = vmul.f32 %v5262, %v5278
      %v5343 = vmul.f32 %v5265, %v5279
      %v5344 = vmul.f32 %v5267, %v5280
      %v5345 = vmul.f32 %v5270, %v5281
      %v5346 = vmul.f32 %v5272, %v5282
      %s5347 = scalar_lea.vmem %s4, 128
      %v5348 = vld [vmem:[%s5347] sm:$0xff]
      %v5349 = vld [vmem:[%s5347 + $0x8] sm:$0xff]
      %v5350 = vld [vmem:[%s5347 + $0x10] sm:$0xff]
      %v5351 = vld [vmem:[%s5347 + $0x18] sm:$0xff]
      %v5352 = vld [vmem:[%s5347 + $0x20] sm:$0xff]
      %v5353 = vld [vmem:[%s5347 + $0x28] sm:$0xff]
      %v5354 = vld [vmem:[%s5347 + $0x30] sm:$0xff]
      %v5355 = vld [vmem:[%s5347 + $0x38] sm:$0xff]
      %v5356 = vadd.f32 %v5283, %v5348
      %v5357 = vadd.f32 %v5284, %v5349
      %v5358 = vadd.f32 %v5285, %v5350
      %v5359 = vadd.f32 %v5286, %v5351
      %v5360 = vadd.f32 %v5287, %v5352
      %v5361 = vadd.f32 %v5288, %v5353
      %v5362 = vadd.f32 %v5289, %v5354
      %v5363 = vadd.f32 %v5290, %v5355
      %v5364 = vadd.f32 %v5291, %v5348
      %v5365 = vadd.f32 %v5292, %v5349
      %v5366 = vadd.f32 %v5293, %v5350
      %v5367 = vadd.f32 %v5294, %v5351
      %v5368 = vadd.f32 %v5295, %v5352
      %v5369 = vadd.f32 %v5296, %v5353
      %v5370 = vadd.f32 %v5297, %v5354
      %v5371 = vadd.f32 %v5298, %v5355
      %v5372 = vadd.f32 %v5299, %v5348
      %v5373 = vadd.f32 %v5300, %v5349
      %v5374 = vadd.f32 %v5301, %v5350
      %v5375 = vadd.f32 %v5302, %v5351
      %v5376 = vadd.f32 %v5303, %v5352
      %v5377 = vadd.f32 %v5304, %v5353
      %v5378 = vadd.f32 %v5305, %v5354
      %v5379 = vadd.f32 %v5306, %v5355
      %v5380 = vadd.f32 %v5307, %v5348
      %v5381 = vadd.f32 %v5308, %v5349
      %v5382 = vadd.f32 %v5309, %v5350
      %v5383 = vadd.f32 %v5310, %v5351
      %v5384 = vadd.f32 %v5311, %v5352
      %v5385 = vadd.f32 %v5312, %v5353
      %v5386 = vadd.f32 %v5313, %v5354
      %v5387 = vadd.f32 %v5314, %v5355
      %v5388 = vadd.f32 %v5315, %v5348
      %v5389 = vadd.f32 %v5316, %v5349
      %v5390 = vadd.f32 %v5317, %v5350
      %v5391 = vadd.f32 %v5318, %v5351
      %v5392 = vadd.f32 %v5319, %v5352
      %v5393 = vadd.f32 %v5320, %v5353
      %v5394 = vadd.f32 %v5321, %v5354
      %v5395 = vadd.f32 %v5322, %v5355
      %v5396 = vadd.f32 %v5323, %v5348
      %v5397 = vadd.f32 %v5324, %v5349
      %v5398 = vadd.f32 %v5325, %v5350
      %v5399 = vadd.f32 %v5326, %v5351
      %v5400 = vadd.f32 %v5327, %v5352
      %v5401 = vadd.f32 %v5328, %v5353
      %v5402 = vadd.f32 %v5329, %v5354
      %v5403 = vadd.f32 %v5330, %v5355
      %v5404 = vadd.f32 %v5331, %v5348
      %v5405 = vadd.f32 %v5332, %v5349
      %v5406 = vadd.f32 %v5333, %v5350
      %v5407 = vadd.f32 %v5334, %v5351
      %v5408 = vadd.f32 %v5335, %v5352
      %v5409 = vadd.f32 %v5336, %v5353
      %v5410 = vadd.f32 %v5337, %v5354
      %v5411 = vadd.f32 %v5338, %v5355
      %v5412 = vadd.f32 %v5339, %v5348
      %v5413 = vadd.f32 %v5340, %v5349
      %v5414 = vadd.f32 %v5341, %v5350
      %v5415 = vadd.f32 %v5342, %v5351
      %v5416 = vadd.f32 %v5343, %v5352
      %v5417 = vadd.f32 %v5344, %v5353
      %v5418 = vadd.f32 %v5345, %v5354
      %v5419 = vadd.f32 %v5346, %v5355
      %v5420 = vsel %vm1807, %v5356, -inf
      %5421 = vmax.xlane.f32.xlu0 %v5420
      %v5422 = vpop.xlane.xlu0 %5421
      %v5423 = vsel %vm1807, %v5357, -inf
      %5424 = vmax.xlane.f32.xlu0 %v5423
      %v5425 = vpop.xlane.xlu0 %5424
      %v5426 = vsel %vm1807, %v5358, -inf
      %5427 = vmax.xlane.f32.xlu0 %v5426
      %v5428 = vpop.xlane.xlu0 %5427
      %v5429 = vsel %vm1807, %v5359, -inf
      %5430 = vmax.xlane.f32.xlu0 %v5429
      %v5431 = vpop.xlane.xlu0 %5430
      %v5432 = vsel %vm1807, %v5360, -inf
      %5433 = vmax.xlane.f32.xlu0 %v5432
      %v5434 = vpop.xlane.xlu0 %5433
      %v5435 = vsel %vm1807, %v5361, -inf
      %5436 = vmax.xlane.f32.xlu0 %v5435
      %v5437 = vpop.xlane.xlu0 %5436
      %v5438 = vsel %vm1807, %v5362, -inf
      %5439 = vmax.xlane.f32.xlu0 %v5438
      %v5440 = vpop.xlane.xlu0 %5439
      %v5441 = vsel %vm1807, %v5363, -inf
      %5442 = vmax.xlane.f32.xlu0 %v5441
      %v5443 = vpop.xlane.xlu0 %5442
      %v5444 = vsel %vm1807, %v5364, -inf
      %5445 = vmax.xlane.f32.xlu0 %v5444
      %v5446 = vpop.xlane.xlu0 %5445
      %v5447 = vsel %vm1807, %v5365, -inf
      %5448 = vmax.xlane.f32.xlu0 %v5447
      %v5449 = vpop.xlane.xlu0 %5448
      %v5450 = vsel %vm1807, %v5366, -inf
      %5451 = vmax.xlane.f32.xlu0 %v5450
      %v5452 = vpop.xlane.xlu0 %5451
      %v5453 = vsel %vm1807, %v5367, -inf
      %5454 = vmax.xlane.f32.xlu0 %v5453
      %v5455 = vpop.xlane.xlu0 %5454
      %v5456 = vsel %vm1807, %v5368, -inf
      %5457 = vmax.xlane.f32.xlu0 %v5456
      %v5458 = vpop.xlane.xlu0 %5457
      %v5459 = vsel %vm1807, %v5369, -inf
      %5460 = vmax.xlane.f32.xlu0 %v5459
      %v5461 = vpop.xlane.xlu0 %5460
      %v5462 = vsel %vm1807, %v5370, -inf
      %5463 = vmax.xlane.f32.xlu0 %v5462
      %v5464 = vpop.xlane.xlu0 %5463
      %v5465 = vsel %vm1807, %v5371, -inf
      %5466 = vmax.xlane.f32.xlu0 %v5465
      %v5467 = vpop.xlane.xlu0 %5466
      %v5468 = vsel %vm1807, %v5372, -inf
      %5469 = vmax.xlane.f32.xlu0 %v5468
      %v5470 = vpop.xlane.xlu0 %5469
      %v5471 = vsel %vm1807, %v5373, -inf
      %5472 = vmax.xlane.f32.xlu0 %v5471
      %v5473 = vpop.xlane.xlu0 %5472
      %v5474 = vsel %vm1807, %v5374, -inf
      %5475 = vmax.xlane.f32.xlu0 %v5474
      %v5476 = vpop.xlane.xlu0 %5475
      %v5477 = vsel %vm1807, %v5375, -inf
      %5478 = vmax.xlane.f32.xlu0 %v5477
      %v5479 = vpop.xlane.xlu0 %5478
      %v5480 = vsel %vm1807, %v5376, -inf
      %5481 = vmax.xlane.f32.xlu0 %v5480
      %v5482 = vpop.xlane.xlu0 %5481
      %v5483 = vsel %vm1807, %v5377, -inf
      %5484 = vmax.xlane.f32.xlu0 %v5483
      %v5485 = vpop.xlane.xlu0 %5484
      %v5486 = vsel %vm1807, %v5378, -inf
      %5487 = vmax.xlane.f32.xlu0 %v5486
      %v5488 = vpop.xlane.xlu0 %5487
      %v5489 = vsel %vm1807, %v5379, -inf
      %5490 = vmax.xlane.f32.xlu0 %v5489
      %v5491 = vpop.xlane.xlu0 %5490
      %v5492 = vsel %vm1807, %v5380, -inf
      %5493 = vmax.xlane.f32.xlu0 %v5492
      %v5494 = vpop.xlane.xlu0 %5493
      %v5495 = vsel %vm1807, %v5381, -inf
      %5496 = vmax.xlane.f32.xlu0 %v5495
      %v5497 = vpop.xlane.xlu0 %5496
      %v5498 = vsel %vm1807, %v5382, -inf
      %5499 = vmax.xlane.f32.xlu0 %v5498
      %v5500 = vpop.xlane.xlu0 %5499
      %v5501 = vsel %vm1807, %v5383, -inf
      %5502 = vmax.xlane.f32.xlu0 %v5501
      %v5503 = vpop.xlane.xlu0 %5502
      %v5504 = vsel %vm1807, %v5384, -inf
      %5505 = vmax.xlane.f32.xlu0 %v5504
      %v5506 = vpop.xlane.xlu0 %5505
      %v5507 = vsel %vm1807, %v5385, -inf
      %5508 = vmax.xlane.f32.xlu0 %v5507
      %v5509 = vpop.xlane.xlu0 %5508
      %v5510 = vsel %vm1807, %v5386, -inf
      %5511 = vmax.xlane.f32.xlu0 %v5510
      %v5512 = vpop.xlane.xlu0 %5511
      %v5513 = vsel %vm1807, %v5387, -inf
      %5514 = vmax.xlane.f32.xlu0 %v5513
      %v5515 = vpop.xlane.xlu0 %5514
      %v5516 = vsel %vm1807, %v5388, -inf
      %5517 = vmax.xlane.f32.xlu0 %v5516
      %v5518 = vpop.xlane.xlu0 %5517
      %v5519 = vsel %vm1807, %v5389, -inf
      %5520 = vmax.xlane.f32.xlu0 %v5519
      %v5521 = vpop.xlane.xlu0 %5520
      %v5522 = vsel %vm1807, %v5390, -inf
      %5523 = vmax.xlane.f32.xlu0 %v5522
      %v5524 = vpop.xlane.xlu0 %5523
      %v5525 = vsel %vm1807, %v5391, -inf
      %5526 = vmax.xlane.f32.xlu0 %v5525
      %v5527 = vpop.xlane.xlu0 %5526
      %v5528 = vsel %vm1807, %v5392, -inf
      %5529 = vmax.xlane.f32.xlu0 %v5528
      %v5530 = vpop.xlane.xlu0 %5529
      %v5531 = vsel %vm1807, %v5393, -inf
      %5532 = vmax.xlane.f32.xlu0 %v5531
      %v5533 = vpop.xlane.xlu0 %5532
      %v5534 = vsel %vm1807, %v5394, -inf
      %5535 = vmax.xlane.f32.xlu0 %v5534
      %v5536 = vpop.xlane.xlu0 %5535
      %v5537 = vsel %vm1807, %v5395, -inf
      %5538 = vmax.xlane.f32.xlu0 %v5537
      %v5539 = vpop.xlane.xlu0 %5538
      %v5540 = vsel %vm1807, %v5396, -inf
      %5541 = vmax.xlane.f32.xlu0 %v5540
      %v5542 = vpop.xlane.xlu0 %5541
      %v5543 = vsel %vm1807, %v5397, -inf
      %5544 = vmax.xlane.f32.xlu0 %v5543
      %v5545 = vpop.xlane.xlu0 %5544
      %v5546 = vsel %vm1807, %v5398, -inf
      %5547 = vmax.xlane.f32.xlu0 %v5546
      %v5548 = vpop.xlane.xlu0 %5547
      %v5549 = vsel %vm1807, %v5399, -inf
      %5550 = vmax.xlane.f32.xlu0 %v5549
      %v5551 = vpop.xlane.xlu0 %5550
      %v5552 = vsel %vm1807, %v5400, -inf
      %5553 = vmax.xlane.f32.xlu0 %v5552
      %v5554 = vpop.xlane.xlu0 %5553
      %v5555 = vsel %vm1807, %v5401, -inf
      %5556 = vmax.xlane.f32.xlu0 %v5555
      %v5557 = vpop.xlane.xlu0 %5556
      %v5558 = vsel %vm1807, %v5402, -inf
      %5559 = vmax.xlane.f32.xlu0 %v5558
      %v5560 = vpop.xlane.xlu0 %5559
      %v5561 = vsel %vm1807, %v5403, -inf
      %5562 = vmax.xlane.f32.xlu0 %v5561
      %v5563 = vpop.xlane.xlu0 %5562
      %v5564 = vsel %vm1807, %v5404, -inf
      %5565 = vmax.xlane.f32.xlu0 %v5564
      %v5566 = vpop.xlane.xlu0 %5565
      %v5567 = vsel %vm1807, %v5405, -inf
      %5568 = vmax.xlane.f32.xlu0 %v5567
      %v5569 = vpop.xlane.xlu0 %5568
      %v5570 = vsel %vm1807, %v5406, -inf
      %5571 = vmax.xlane.f32.xlu0 %v5570
      %v5572 = vpop.xlane.xlu0 %5571
      %v5573 = vsel %vm1807, %v5407, -inf
      %5574 = vmax.xlane.f32.xlu0 %v5573
      %v5575 = vpop.xlane.xlu0 %5574
      %v5576 = vsel %vm1807, %v5408, -inf
      %5577 = vmax.xlane.f32.xlu0 %v5576
      %v5578 = vpop.xlane.xlu0 %5577
      %v5579 = vsel %vm1807, %v5409, -inf
      %5580 = vmax.xlane.f32.xlu0 %v5579
      %v5581 = vpop.xlane.xlu0 %5580
      %v5582 = vsel %vm1807, %v5410, -inf
      %5583 = vmax.xlane.f32.xlu0 %v5582
      %v5584 = vpop.xlane.xlu0 %5583
      %v5585 = vsel %vm1807, %v5411, -inf
      %5586 = vmax.xlane.f32.xlu0 %v5585
      %v5587 = vpop.xlane.xlu0 %5586
      %v5588 = vsel %vm1807, %v5412, -inf
      %5589 = vmax.xlane.f32.xlu0 %v5588
      %v5590 = vpop.xlane.xlu0 %5589
      %v5591 = vsel %vm1807, %v5413, -inf
      %5592 = vmax.xlane.f32.xlu0 %v5591
      %v5593 = vpop.xlane.xlu0 %5592
      %v5594 = vsel %vm1807, %v5414, -inf
      %5595 = vmax.xlane.f32.xlu0 %v5594
      %v5596 = vpop.xlane.xlu0 %5595
      %v5597 = vsel %vm1807, %v5415, -inf
      %5598 = vmax.xlane.f32.xlu0 %v5597
      %v5599 = vpop.xlane.xlu0 %5598
      %v5600 = vsel %vm1807, %v5416, -inf
      %5601 = vmax.xlane.f32.xlu0 %v5600
      %v5602 = vpop.xlane.xlu0 %5601
      %v5603 = vsel %vm1807, %v5417, -inf
      %5604 = vmax.xlane.f32.xlu0 %v5603
      %v5605 = vpop.xlane.xlu0 %5604
      %v5606 = vsel %vm1807, %v5418, -inf
      %5607 = vmax.xlane.f32.xlu0 %v5606
      %v5608 = vpop.xlane.xlu0 %5607
      %v5609 = vsel %vm1807, %v5419, -inf
      %5610 = vmax.xlane.f32.xlu0 %v5609
      %v5611 = vpop.xlane.xlu0 %5610
      %v5612 = vsub.f32 %v5356, %v5422
      %v5613 = vsub.f32 %v5357, %v5425
      %v5614 = vsub.f32 %v5358, %v5428
      %v5615 = vsub.f32 %v5359, %v5431
      %v5616 = vsub.f32 %v5360, %v5434
      %v5617 = vsub.f32 %v5361, %v5437
      %v5618 = vsub.f32 %v5362, %v5440
      %v5619 = vsub.f32 %v5363, %v5443
      %v5620 = vsub.f32 %v5364, %v5446
      %v5621 = vsub.f32 %v5365, %v5449
      %v5622 = vsub.f32 %v5366, %v5452
      %v5623 = vsub.f32 %v5367, %v5455
      %v5624 = vsub.f32 %v5368, %v5458
      %v5625 = vsub.f32 %v5369, %v5461
      %v5626 = vsub.f32 %v5370, %v5464
      %v5627 = vsub.f32 %v5371, %v5467
      %v5628 = vsub.f32 %v5372, %v5470
      %v5629 = vsub.f32 %v5373, %v5473
      %v5630 = vsub.f32 %v5374, %v5476
      %v5631 = vsub.f32 %v5375, %v5479
      %v5632 = vsub.f32 %v5376, %v5482
      %v5633 = vsub.f32 %v5377, %v5485
      %v5634 = vsub.f32 %v5378, %v5488
      %v5635 = vsub.f32 %v5379, %v5491
      %v5636 = vsub.f32 %v5380, %v5494
      %v5637 = vsub.f32 %v5381, %v5497
      %v5638 = vsub.f32 %v5382, %v5500
      %v5639 = vsub.f32 %v5383, %v5503
      %v5640 = vsub.f32 %v5384, %v5506
      %v5641 = vsub.f32 %v5385, %v5509
      %v5642 = vsub.f32 %v5386, %v5512
      %v5643 = vsub.f32 %v5387, %v5515
      %v5644 = vsub.f32 %v5388, %v5518
      %v5645 = vsub.f32 %v5389, %v5521
      %v5646 = vsub.f32 %v5390, %v5524
      %v5647 = vsub.f32 %v5391, %v5527
      %v5648 = vsub.f32 %v5392, %v5530
      %v5649 = vsub.f32 %v5393, %v5533
      %v5650 = vsub.f32 %v5394, %v5536
      %v5651 = vsub.f32 %v5395, %v5539
      %v5652 = vsub.f32 %v5396, %v5542
      %v5653 = vsub.f32 %v5397, %v5545
      %v5654 = vsub.f32 %v5398, %v5548
      %v5655 = vsub.f32 %v5399, %v5551
      %v5656 = vsub.f32 %v5400, %v5554
      %v5657 = vsub.f32 %v5401, %v5557
      %v5658 = vsub.f32 %v5402, %v5560
      %v5659 = vsub.f32 %v5403, %v5563
      %v5660 = vsub.f32 %v5404, %v5566
      %v5661 = vsub.f32 %v5405, %v5569
      %v5662 = vsub.f32 %v5406, %v5572
      %v5663 = vsub.f32 %v5407, %v5575
      %v5664 = vsub.f32 %v5408, %v5578
      %v5665 = vsub.f32 %v5409, %v5581
      %v5666 = vsub.f32 %v5410, %v5584
      %v5667 = vsub.f32 %v5411, %v5587
      %v5668 = vsub.f32 %v5412, %v5590
      %v5669 = vsub.f32 %v5413, %v5593
      %v5670 = vsub.f32 %v5414, %v5596
      %v5671 = vsub.f32 %v5415, %v5599
      %v5672 = vsub.f32 %v5416, %v5602
      %v5673 = vsub.f32 %v5417, %v5605
      %v5674 = vsub.f32 %v5418, %v5608
      %v5675 = vsub.f32 %v5419, %v5611
      %v5676 = vmul.f32 %v5612, 1.442695
      %v5677 = vpow.pop %v5676
      %v5678 = vmul.f32 %v5613, 1.442695
      %v5679 = vpow.pop %v5678
      %v5680 = vmul.f32 %v5614, 1.442695
      %v5681 = vpow.pop %v5680
      %v5682 = vmul.f32 %v5615, 1.442695
      %v5683 = vpow.pop %v5682
      %v5684 = vmul.f32 %v5616, 1.442695
      %v5685 = vpow.pop %v5684
      %v5686 = vmul.f32 %v5617, 1.442695
      %v5687 = vpow.pop %v5686
      %v5688 = vmul.f32 %v5618, 1.442695
      %v5689 = vpow.pop %v5688
      %v5690 = vmul.f32 %v5619, 1.442695
      %v5691 = vpow.pop %v5690
      %v5692 = vmul.f32 %v5620, 1.442695
      %v5693 = vpow.pop %v5692
      %v5694 = vmul.f32 %v5621, 1.442695
      %v5695 = vpow.pop %v5694
      %v5696 = vmul.f32 %v5622, 1.442695
      %v5697 = vpow.pop %v5696
      %v5698 = vmul.f32 %v5623, 1.442695
      %v5699 = vpow.pop %v5698
      %v5700 = vmul.f32 %v5624, 1.442695
      %v5701 = vpow.pop %v5700
      %v5702 = vmul.f32 %v5625, 1.442695
      %v5703 = vpow.pop %v5702
      %v5704 = vmul.f32 %v5626, 1.442695
      %v5705 = vpow.pop %v5704
      %v5706 = vmul.f32 %v5627, 1.442695
      %v5707 = vpow.pop %v5706
      %v5708 = vmul.f32 %v5628, 1.442695
      %v5709 = vpow.pop %v5708
      %v5710 = vmul.f32 %v5629, 1.442695
      %v5711 = vpow.pop %v5710
      %v5712 = vmul.f32 %v5630, 1.442695
      %v5713 = vpow.pop %v5712
      %v5714 = vmul.f32 %v5631, 1.442695
      %v5715 = vpow.pop %v5714
      %v5716 = vmul.f32 %v5632, 1.442695
      %v5717 = vpow.pop %v5716
      %v5718 = vmul.f32 %v5633, 1.442695
      %v5719 = vpow.pop %v5718
      %v5720 = vmul.f32 %v5634, 1.442695
      %v5721 = vpow.pop %v5720
      %v5722 = vmul.f32 %v5635, 1.442695
      %v5723 = vpow.pop %v5722
      %v5724 = vmul.f32 %v5636, 1.442695
      %v5725 = vpow.pop %v5724
      %v5726 = vmul.f32 %v5637, 1.442695
      %v5727 = vpow.pop %v5726
      %v5728 = vmul.f32 %v5638, 1.442695
      %v5729 = vpow.pop %v5728
      %v5730 = vmul.f32 %v5639, 1.442695
      %v5731 = vpow.pop %v5730
      %v5732 = vmul.f32 %v5640, 1.442695
      %v5733 = vpow.pop %v5732
      %v5734 = vmul.f32 %v5641, 1.442695
      %v5735 = vpow.pop %v5734
      %v5736 = vmul.f32 %v5642, 1.442695
      %v5737 = vpow.pop %v5736
      %v5738 = vmul.f32 %v5643, 1.442695
      %v5739 = vpow.pop %v5738
      %v5740 = vmul.f32 %v5644, 1.442695
      %v5741 = vpow.pop %v5740
      %v5742 = vmul.f32 %v5645, 1.442695
      %v5743 = vpow.pop %v5742
      %v5744 = vmul.f32 %v5646, 1.442695
      %v5745 = vpow.pop %v5744
      %v5746 = vmul.f32 %v5647, 1.442695
      %v5747 = vpow.pop %v5746
      %v5748 = vmul.f32 %v5648, 1.442695
      %v5749 = vpow.pop %v5748
      %v5750 = vmul.f32 %v5649, 1.442695
      %v5751 = vpow.pop %v5750
      %v5752 = vmul.f32 %v5650, 1.442695
      %v5753 = vpow.pop %v5752
      %v5754 = vmul.f32 %v5651, 1.442695
      %v5755 = vpow.pop %v5754
      %v5756 = vmul.f32 %v5652, 1.442695
      %v5757 = vpow.pop %v5756
      %v5758 = vmul.f32 %v5653, 1.442695
      %v5759 = vpow.pop %v5758
      %v5760 = vmul.f32 %v5654, 1.442695
      %v5761 = vpow.pop %v5760
      %v5762 = vmul.f32 %v5655, 1.442695
      %v5763 = vpow.pop %v5762
      %v5764 = vmul.f32 %v5656, 1.442695
      %v5765 = vpow.pop %v5764
      %v5766 = vmul.f32 %v5657, 1.442695
      %v5767 = vpow.pop %v5766
      %v5768 = vmul.f32 %v5658, 1.442695
      %v5769 = vpow.pop %v5768
      %v5770 = vmul.f32 %v5659, 1.442695
      %v5771 = vpow.pop %v5770
      %v5772 = vmul.f32 %v5660, 1.442695
      %v5773 = vpow.pop %v5772
      %v5774 = vmul.f32 %v5661, 1.442695
      %v5775 = vpow.pop %v5774
      %v5776 = vmul.f32 %v5662, 1.442695
      %v5777 = vpow.pop %v5776
      %v5778 = vmul.f32 %v5663, 1.442695
      %v5779 = vpow.pop %v5778
      %v5780 = vmul.f32 %v5664, 1.442695
      %v5781 = vpow.pop %v5780
      %v5782 = vmul.f32 %v5665, 1.442695
      %v5783 = vpow.pop %v5782
      %v5784 = vmul.f32 %v5666, 1.442695
      %v5785 = vpow.pop %v5784
      %v5786 = vmul.f32 %v5667, 1.442695
      %v5787 = vpow.pop %v5786
      %v5788 = vmul.f32 %v5668, 1.442695
      %v5789 = vpow.pop %v5788
      %v5790 = vmul.f32 %v5669, 1.442695
      %v5791 = vpow.pop %v5790
      %v5792 = vmul.f32 %v5670, 1.442695
      %v5793 = vpow.pop %v5792
      %v5794 = vmul.f32 %v5671, 1.442695
      %v5795 = vpow.pop %v5794
      %v5796 = vmul.f32 %v5672, 1.442695
      %v5797 = vpow.pop %v5796
      %v5798 = vmul.f32 %v5673, 1.442695
      %v5799 = vpow.pop %v5798
      %v5800 = vmul.f32 %v5674, 1.442695
      %v5801 = vpow.pop %v5800
      %v5802 = vmul.f32 %v5675, 1.442695
      %v5803 = vpow.pop %v5802
      %v5804 = vsel %vm1807, %v5677, 0.0
      %5805 = vadd.xlane.f32.xlu0 %v5804
      %v5806 = vpop.xlane.xlu0 %5805
      %v5807 = vsel %vm1807, %v5679, 0.0
      %5808 = vadd.xlane.f32.xlu0 %v5807
      %v5809 = vpop.xlane.xlu0 %5808
      %v5810 = vsel %vm1807, %v5681, 0.0
      %5811 = vadd.xlane.f32.xlu0 %v5810
      %v5812 = vpop.xlane.xlu0 %5811
      %v5813 = vsel %vm1807, %v5683, 0.0
      %5814 = vadd.xlane.f32.xlu0 %v5813
      %v5815 = vpop.xlane.xlu0 %5814
      %v5816 = vsel %vm1807, %v5685, 0.0
      %5817 = vadd.xlane.f32.xlu0 %v5816
      %v5818 = vpop.xlane.xlu0 %5817
      %v5819 = vsel %vm1807, %v5687, 0.0
      %5820 = vadd.xlane.f32.xlu0 %v5819
      %v5821 = vpop.xlane.xlu0 %5820
      %v5822 = vsel %vm1807, %v5689, 0.0
      %5823 = vadd.xlane.f32.xlu0 %v5822
      %v5824 = vpop.xlane.xlu0 %5823
      %v5825 = vsel %vm1807, %v5691, 0.0
      %5826 = vadd.xlane.f32.xlu0 %v5825
      %v5827 = vpop.xlane.xlu0 %5826
      %v5828 = vsel %vm1807, %v5693, 0.0
      %5829 = vadd.xlane.f32.xlu0 %v5828
      %v5830 = vpop.xlane.xlu0 %5829
      %v5831 = vsel %vm1807, %v5695, 0.0
      %5832 = vadd.xlane.f32.xlu0 %v5831
      %v5833 = vpop.xlane.xlu0 %5832
      %v5834 = vsel %vm1807, %v5697, 0.0
      %5835 = vadd.xlane.f32.xlu0 %v5834
      %v5836 = vpop.xlane.xlu0 %5835
      %v5837 = vsel %vm1807, %v5699, 0.0
      %5838 = vadd.xlane.f32.xlu0 %v5837
      %v5839 = vpop.xlane.xlu0 %5838
      %v5840 = vsel %vm1807, %v5701, 0.0
      %5841 = vadd.xlane.f32.xlu0 %v5840
      %v5842 = vpop.xlane.xlu0 %5841
      %v5843 = vsel %vm1807, %v5703, 0.0
      %5844 = vadd.xlane.f32.xlu0 %v5843
      %v5845 = vpop.xlane.xlu0 %5844
      %v5846 = vsel %vm1807, %v5705, 0.0
      %5847 = vadd.xlane.f32.xlu0 %v5846
      %v5848 = vpop.xlane.xlu0 %5847
      %v5849 = vsel %vm1807, %v5707, 0.0
      %5850 = vadd.xlane.f32.xlu0 %v5849
      %v5851 = vpop.xlane.xlu0 %5850
      %v5852 = vsel %vm1807, %v5709, 0.0
      %5853 = vadd.xlane.f32.xlu0 %v5852
      %v5854 = vpop.xlane.xlu0 %5853
      %v5855 = vsel %vm1807, %v5711, 0.0
      %5856 = vadd.xlane.f32.xlu0 %v5855
      %v5857 = vpop.xlane.xlu0 %5856
      %v5858 = vsel %vm1807, %v5713, 0.0
      %5859 = vadd.xlane.f32.xlu0 %v5858
      %v5860 = vpop.xlane.xlu0 %5859
      %v5861 = vsel %vm1807, %v5715, 0.0
      %5862 = vadd.xlane.f32.xlu0 %v5861
      %v5863 = vpop.xlane.xlu0 %5862
      %v5864 = vsel %vm1807, %v5717, 0.0
      %5865 = vadd.xlane.f32.xlu0 %v5864
      %v5866 = vpop.xlane.xlu0 %5865
      %v5867 = vsel %vm1807, %v5719, 0.0
      %5868 = vadd.xlane.f32.xlu0 %v5867
      %v5869 = vpop.xlane.xlu0 %5868
      %v5870 = vsel %vm1807, %v5721, 0.0
      %5871 = vadd.xlane.f32.xlu0 %v5870
      %v5872 = vpop.xlane.xlu0 %5871
      %v5873 = vsel %vm1807, %v5723, 0.0
      %5874 = vadd.xlane.f32.xlu0 %v5873
      %v5875 = vpop.xlane.xlu0 %5874
      %v5876 = vsel %vm1807, %v5725, 0.0
      %5877 = vadd.xlane.f32.xlu0 %v5876
      %v5878 = vpop.xlane.xlu0 %5877
      %v5879 = vsel %vm1807, %v5727, 0.0
      %5880 = vadd.xlane.f32.xlu0 %v5879
      %v5881 = vpop.xlane.xlu0 %5880
      %v5882 = vsel %vm1807, %v5729, 0.0
      %5883 = vadd.xlane.f32.xlu0 %v5882
      %v5884 = vpop.xlane.xlu0 %5883
      %v5885 = vsel %vm1807, %v5731, 0.0
      %5886 = vadd.xlane.f32.xlu0 %v5885
      %v5887 = vpop.xlane.xlu0 %5886
      %v5888 = vsel %vm1807, %v5733, 0.0
      %5889 = vadd.xlane.f32.xlu0 %v5888
      %v5890 = vpop.xlane.xlu0 %5889
      %v5891 = vsel %vm1807, %v5735, 0.0
      %5892 = vadd.xlane.f32.xlu0 %v5891
      %v5893 = vpop.xlane.xlu0 %5892
      %v5894 = vsel %vm1807, %v5737, 0.0
      %5895 = vadd.xlane.f32.xlu0 %v5894
      %v5896 = vpop.xlane.xlu0 %5895
      %v5897 = vsel %vm1807, %v5739, 0.0
      %5898 = vadd.xlane.f32.xlu0 %v5897
      %v5899 = vpop.xlane.xlu0 %5898
      %v5900 = vsel %vm1807, %v5741, 0.0
      %5901 = vadd.xlane.f32.xlu0 %v5900
      %v5902 = vpop.xlane.xlu0 %5901
      %v5903 = vsel %vm1807, %v5743, 0.0
      %5904 = vadd.xlane.f32.xlu0 %v5903
      %v5905 = vpop.xlane.xlu0 %5904
      %v5906 = vsel %vm1807, %v5745, 0.0
      %5907 = vadd.xlane.f32.xlu0 %v5906
      %v5908 = vpop.xlane.xlu0 %5907
      %v5909 = vsel %vm1807, %v5747, 0.0
      %5910 = vadd.xlane.f32.xlu0 %v5909
      %v5911 = vpop.xlane.xlu0 %5910
      %v5912 = vsel %vm1807, %v5749, 0.0
      %5913 = vadd.xlane.f32.xlu0 %v5912
      %v5914 = vpop.xlane.xlu0 %5913
      %v5915 = vsel %vm1807, %v5751, 0.0
      %5916 = vadd.xlane.f32.xlu0 %v5915
      %v5917 = vpop.xlane.xlu0 %5916
      %v5918 = vsel %vm1807, %v5753, 0.0
      %5919 = vadd.xlane.f32.xlu0 %v5918
      %v5920 = vpop.xlane.xlu0 %5919
      %v5921 = vsel %vm1807, %v5755, 0.0
      %5922 = vadd.xlane.f32.xlu0 %v5921
      %v5923 = vpop.xlane.xlu0 %5922
      %v5924 = vsel %vm1807, %v5757, 0.0
      %5925 = vadd.xlane.f32.xlu0 %v5924
      %v5926 = vpop.xlane.xlu0 %5925
      %v5927 = vsel %vm1807, %v5759, 0.0
      %5928 = vadd.xlane.f32.xlu0 %v5927
      %v5929 = vpop.xlane.xlu0 %5928
      %v5930 = vsel %vm1807, %v5761, 0.0
      %5931 = vadd.xlane.f32.xlu0 %v5930
      %v5932 = vpop.xlane.xlu0 %5931
      %v5933 = vsel %vm1807, %v5763, 0.0
      %5934 = vadd.xlane.f32.xlu0 %v5933
      %v5935 = vpop.xlane.xlu0 %5934
      %v5936 = vsel %vm1807, %v5765, 0.0
      %5937 = vadd.xlane.f32.xlu0 %v5936
      %v5938 = vpop.xlane.xlu0 %5937
      %v5939 = vsel %vm1807, %v5767, 0.0
      %5940 = vadd.xlane.f32.xlu0 %v5939
      %v5941 = vpop.xlane.xlu0 %5940
      %v5942 = vsel %vm1807, %v5769, 0.0
      %5943 = vadd.xlane.f32.xlu0 %v5942
      %v5944 = vpop.xlane.xlu0 %5943
      %v5945 = vsel %vm1807, %v5771, 0.0
      %5946 = vadd.xlane.f32.xlu0 %v5945
      %v5947 = vpop.xlane.xlu0 %5946
      %v5948 = vsel %vm1807, %v5773, 0.0
      %5949 = vadd.xlane.f32.xlu0 %v5948
      %v5950 = vpop.xlane.xlu0 %5949
      %v5951 = vsel %vm1807, %v5775, 0.0
      %5952 = vadd.xlane.f32.xlu0 %v5951
      %v5953 = vpop.xlane.xlu0 %5952
      %v5954 = vsel %vm1807, %v5777, 0.0
      %5955 = vadd.xlane.f32.xlu0 %v5954
      %v5956 = vpop.xlane.xlu0 %5955
      %v5957 = vsel %vm1807, %v5779, 0.0
      %5958 = vadd.xlane.f32.xlu0 %v5957
      %v5959 = vpop.xlane.xlu0 %5958
      %v5960 = vsel %vm1807, %v5781, 0.0
      %5961 = vadd.xlane.f32.xlu0 %v5960
      %v5962 = vpop.xlane.xlu0 %5961
      %v5963 = vsel %vm1807, %v5783, 0.0
      %5964 = vadd.xlane.f32.xlu0 %v5963
      %v5965 = vpop.xlane.xlu0 %5964
      %v5966 = vsel %vm1807, %v5785, 0.0
      %5967 = vadd.xlane.f32.xlu0 %v5966
      %v5968 = vpop.xlane.xlu0 %5967
      %v5969 = vsel %vm1807, %v5787, 0.0
      %5970 = vadd.xlane.f32.xlu0 %v5969
      %v5971 = vpop.xlane.xlu0 %5970
      %v5972 = vsel %vm1807, %v5789, 0.0
      %5973 = vadd.xlane.f32.xlu0 %v5972
      %v5974 = vpop.xlane.xlu0 %5973
      %v5975 = vsel %vm1807, %v5791, 0.0
      %5976 = vadd.xlane.f32.xlu0 %v5975
      %v5977 = vpop.xlane.xlu0 %5976
      %v5978 = vsel %vm1807, %v5793, 0.0
      %5979 = vadd.xlane.f32.xlu0 %v5978
      %v5980 = vpop.xlane.xlu0 %5979
      %v5981 = vsel %vm1807, %v5795, 0.0
      %5982 = vadd.xlane.f32.xlu0 %v5981
      %v5983 = vpop.xlane.xlu0 %5982
      %v5984 = vsel %vm1807, %v5797, 0.0
      %5985 = vadd.xlane.f32.xlu0 %v5984
      %v5986 = vpop.xlane.xlu0 %5985
      %v5987 = vsel %vm1807, %v5799, 0.0
      %5988 = vadd.xlane.f32.xlu0 %v5987
      %v5989 = vpop.xlane.xlu0 %5988
      %v5990 = vsel %vm1807, %v5801, 0.0
      %5991 = vadd.xlane.f32.xlu0 %v5990
      %v5992 = vpop.xlane.xlu0 %5991
      %v5993 = vsel %vm1807, %v5803, 0.0
      %5994 = vadd.xlane.f32.xlu0 %v5993
      %v5995 = vpop.xlane.xlu0 %5994
      %v5996 = vrcp.pop %v5806
      %v5997 = vrcp.pop %v5809
      %v5998 = vrcp.pop %v5812
      %v5999 = vrcp.pop %v5815
      %v6000 = vrcp.pop %v5818
      %v6001 = vrcp.pop %v5821
      %v6002 = vrcp.pop %v5824
      %v6003 = vrcp.pop %v5827
      %v6004 = vrcp.pop %v5830
      %v6005 = vrcp.pop %v5833
      %v6006 = vrcp.pop %v5836
      %v6007 = vrcp.pop %v5839
      %v6008 = vrcp.pop %v5842
      %v6009 = vrcp.pop %v5845
      %v6010 = vrcp.pop %v5848
      %v6011 = vrcp.pop %v5851
      %v6012 = vrcp.pop %v5854
      %v6013 = vrcp.pop %v5857
      %v6014 = vrcp.pop %v5860
      %v6015 = vrcp.pop %v5863
      %v6016 = vrcp.pop %v5866
      %v6017 = vrcp.pop %v5869
      %v6018 = vrcp.pop %v5872
      %v6019 = vrcp.pop %v5875
      %v6020 = vrcp.pop %v5878
      %v6021 = vrcp.pop %v5881
      %v6022 = vrcp.pop %v5884
      %v6023 = vrcp.pop %v5887
      %v6024 = vrcp.pop %v5890
      %v6025 = vrcp.pop %v5893
      %v6026 = vrcp.pop %v5896
      %v6027 = vrcp.pop %v5899
      %v6028 = vrcp.pop %v5902
      %v6029 = vrcp.pop %v5905
      %v6030 = vrcp.pop %v5908
      %v6031 = vrcp.pop %v5911
      %v6032 = vrcp.pop %v5914
      %v6033 = vrcp.pop %v5917
      %v6034 = vrcp.pop %v5920
      %v6035 = vrcp.pop %v5923
      %v6036 = vrcp.pop %v5926
      %v6037 = vrcp.pop %v5929
      %v6038 = vrcp.pop %v5932
      %v6039 = vrcp.pop %v5935
      %v6040 = vrcp.pop %v5938
      %v6041 = vrcp.pop %v5941
      %v6042 = vrcp.pop %v5944
      %v6043 = vrcp.pop %v5947
      %v6044 = vrcp.pop %v5950
      %v6045 = vrcp.pop %v5953
      %v6046 = vrcp.pop %v5956
      %v6047 = vrcp.pop %v5959
      %v6048 = vrcp.pop %v5962
      %v6049 = vrcp.pop %v5965
      %v6050 = vrcp.pop %v5968
      %v6051 = vrcp.pop %v5971
      %v6052 = vrcp.pop %v5974
      %v6053 = vrcp.pop %v5977
      %v6054 = vrcp.pop %v5980
      %v6055 = vrcp.pop %v5983
      %v6056 = vrcp.pop %v5986
      %v6057 = vrcp.pop %v5989
      %v6058 = vrcp.pop %v5992
      %v6059 = vrcp.pop %v5995
      %v6060 = vpack.c.bf16 %v5677, %v5677
      %v6061 = vpack.c.bf16 %v5679, %v5679
      %v6062 = vpack.c.bf16 %v5681, %v5681
      %v6063 = vpack.c.bf16 %v5683, %v5683
      %v6064 = vpack.c.bf16 %v5685, %v5685
      %v6065 = vpack.c.bf16 %v5687, %v5687
      %v6066 = vpack.c.bf16 %v5689, %v5689
      %v6067 = vpack.c.bf16 %v5691, %v5691
      %v6068 = vpack.c.bf16 %v5693, %v5693
      %v6069 = vpack.c.bf16 %v5695, %v5695
      %v6070 = vpack.c.bf16 %v5697, %v5697
      %v6071 = vpack.c.bf16 %v5699, %v5699
      %v6072 = vpack.c.bf16 %v5701, %v5701
      %v6073 = vpack.c.bf16 %v5703, %v5703
      %v6074 = vpack.c.bf16 %v5705, %v5705
      %v6075 = vpack.c.bf16 %v5707, %v5707
      %v6076 = vpack.c.bf16 %v5709, %v5709
      %v6077 = vpack.c.bf16 %v5711, %v5711
      %v6078 = vpack.c.bf16 %v5713, %v5713
      %v6079 = vpack.c.bf16 %v5715, %v5715
      %v6080 = vpack.c.bf16 %v5717, %v5717
      %v6081 = vpack.c.bf16 %v5719, %v5719
      %v6082 = vpack.c.bf16 %v5721, %v5721
      %v6083 = vpack.c.bf16 %v5723, %v5723
      %v6084 = vpack.c.bf16 %v5725, %v5725
      %v6085 = vpack.c.bf16 %v5727, %v5727
      %v6086 = vpack.c.bf16 %v5729, %v5729
      %v6087 = vpack.c.bf16 %v5731, %v5731
      %v6088 = vpack.c.bf16 %v5733, %v5733
      %v6089 = vpack.c.bf16 %v5735, %v5735
      %v6090 = vpack.c.bf16 %v5737, %v5737
      %v6091 = vpack.c.bf16 %v5739, %v5739
      %v6092 = vpack.c.bf16 %v5741, %v5741
      %v6093 = vpack.c.bf16 %v5743, %v5743
      %v6094 = vpack.c.bf16 %v5745, %v5745
      %v6095 = vpack.c.bf16 %v5747, %v5747
      %v6096 = vpack.c.bf16 %v5749, %v5749
      %v6097 = vpack.c.bf16 %v5751, %v5751
      %v6098 = vpack.c.bf16 %v5753, %v5753
      %v6099 = vpack.c.bf16 %v5755, %v5755
      %v6100 = vpack.c.bf16 %v5757, %v5757
      %v6101 = vpack.c.bf16 %v5759, %v5759
      %v6102 = vpack.c.bf16 %v5761, %v5761
      %v6103 = vpack.c.bf16 %v5763, %v5763
      %v6104 = vpack.c.bf16 %v5765, %v5765
      %v6105 = vpack.c.bf16 %v5767, %v5767
      %v6106 = vpack.c.bf16 %v5769, %v5769
      %v6107 = vpack.c.bf16 %v5771, %v5771
      %v6108 = vpack.c.bf16 %v5773, %v5773
      %v6109 = vpack.c.bf16 %v5775, %v5775
      %v6110 = vpack.c.bf16 %v5777, %v5777
      %v6111 = vpack.c.bf16 %v5779, %v5779
      %v6112 = vpack.c.bf16 %v5781, %v5781
      %v6113 = vpack.c.bf16 %v5783, %v5783
      %v6114 = vpack.c.bf16 %v5785, %v5785
      %v6115 = vpack.c.bf16 %v5787, %v5787
      %v6116 = vpack.c.bf16 %v5789, %v5789
      %v6117 = vpack.c.bf16 %v5791, %v5791
      %v6118 = vpack.c.bf16 %v5793, %v5793
      %v6119 = vpack.c.bf16 %v5795, %v5795
      %v6120 = vpack.c.bf16 %v5797, %v5797
      %v6121 = vpack.c.bf16 %v5799, %v5799
      %v6122 = vpack.c.bf16 %v5801, %v5801
      %v6123 = vpack.c.bf16 %v5803, %v5803
      %v6132 = vunpack.c.l.b16 %v6060
      %v6133 = vunpack.c.l.b16 %v6061
      %v6134 = vunpack.c.l.b16 %v6062
      %v6135 = vunpack.c.l.b16 %v6063
      %v6136 = vunpack.c.l.b16 %v6064
      %v6137 = vunpack.c.l.b16 %v6065
      %v6138 = vunpack.c.l.b16 %v6066
      %v6139 = vunpack.c.l.b16 %v6067
      %v6140 = vpack.c.b16 %v6133, %v6132
      %v6141 = vpack.c.b16 %v6135, %v6134
      %v6142 = vpack.c.b16 %v6137, %v6136
      %v6143 = vpack.c.b16 %v6139, %v6138
      %6144 = vrot.lane.b32.xlu0 %v1030, 32
      %v6145 = vpop.permute.xlu0 %6144
      %6146 = vrot.lane.b32.xlu0 %v1031, 32
      %v6147 = vpop.permute.xlu0 %6146
      %6148 = vrot.lane.b32.xlu0 %v1032, 32
      %v6149 = vpop.permute.xlu0 %6148
      %6150 = vrot.lane.b32.xlu0 %v1033, 32
      %v6151 = vpop.permute.xlu0 %6150
      %v6157 = vsel %vm1807, %v6140, 0
      %v6160 = vsel %vm1807, %v6141, 0
      %v6163 = vsel %vm1807, %v6142, 0
      %v6166 = vsel %vm1807, %v6143, 0
      %6168 = vmatpush.bf16.msra.mxu0 0
      %6169 = vmatpush.bf16.msra.mxu0 0
      %6170 = vmatpush.bf16.msra.mxu0 0
      %6171 = vmatpush.bf16.msra.mxu0 0
      %6172 = vmatpush.bf16.msra.mxu0 %v6151
      %6173 = vmatpush.bf16.msra.mxu0 %v6149
      %6174 = vmatpush.bf16.msra.mxu0 %v6147
      %6175 = vmatpush.bf16.msra.mxu0 %v6145
      %6176 = vmatmul.bf16.gmra.mxu0 %v6157
      %v6177 = vpop.f32.mrf.mxu0
      %v6178 = vadd.f32 0.0, %v6177
      %v6179 = vpop.f32.mrf.mxu0
      %v6180 = vadd.f32 0.0, %v6179
      %6181 = vmatmul.bf16.gmra.mxu0 %v6160
      %v6182 = vpop.f32.mrf.mxu0
      %v6183 = vadd.f32 0.0, %v6182
      %v6184 = vpop.f32.mrf.mxu0
      %v6185 = vadd.f32 0.0, %v6184
      %6186 = vmatmul.bf16.gmra.mxu0 %v6163
      %v6187 = vpop.f32.mrf.mxu0
      %v6188 = vadd.f32 0.0, %v6187
      %v6189 = vpop.f32.mrf.mxu0
      %v6190 = vadd.f32 0.0, %v6189
      %6191 = vmatmul.bf16.gmra.mxu0 %v6166
      %v6192 = vpop.f32.mrf.mxu0
      %v6193 = vadd.f32 0.0, %v6192
      %v6194 = vpop.f32.mrf.mxu0
      %v6195 = vadd.f32 0.0, %v6194
      %6196 = vdwg.mxu0
      %v6205 = vunpack.c.l.b16 %v6068
      %v6206 = vunpack.c.l.b16 %v6069
      %v6207 = vunpack.c.l.b16 %v6070
      %v6208 = vunpack.c.l.b16 %v6071
      %v6209 = vunpack.c.l.b16 %v6072
      %v6210 = vunpack.c.l.b16 %v6073
      %v6211 = vunpack.c.l.b16 %v6074
      %v6212 = vunpack.c.l.b16 %v6075
      %v6213 = vpack.c.b16 %v6206, %v6205
      %v6214 = vpack.c.b16 %v6208, %v6207
      %v6215 = vpack.c.b16 %v6210, %v6209
      %v6216 = vpack.c.b16 %v6212, %v6211
      %6217 = vrot.lane.b32.xlu0 %v1112, 32
      %v6218 = vpop.permute.xlu0 %6217
      %6219 = vrot.lane.b32.xlu0 %v1113, 32
      %v6220 = vpop.permute.xlu0 %6219
      %6221 = vrot.lane.b32.xlu0 %v1114, 32
      %v6222 = vpop.permute.xlu0 %6221
      %6223 = vrot.lane.b32.xlu0 %v1115, 32
      %v6224 = vpop.permute.xlu0 %6223
      %v6230 = vsel %vm1807, %v6213, 0
      %v6233 = vsel %vm1807, %v6214, 0
      %v6236 = vsel %vm1807, %v6215, 0
      %v6239 = vsel %vm1807, %v6216, 0
      %6241 = vmatpush.bf16.msra.mxu0 0
      %6242 = vmatpush.bf16.msra.mxu0 0
      %6243 = vmatpush.bf16.msra.mxu0 0
      %6244 = vmatpush.bf16.msra.mxu0 0
      %6245 = vmatpush.bf16.msra.mxu0 %v6224
      %6246 = vmatpush.bf16.msra.mxu0 %v6222
      %6247 = vmatpush.bf16.msra.mxu0 %v6220
      %6248 = vmatpush.bf16.msra.mxu0 %v6218
      %6249 = vmatmul.bf16.gmra.mxu0 %v6230
      %v6250 = vpop.f32.mrf.mxu0
      %v6251 = vadd.f32 0.0, %v6250
      %v6252 = vpop.f32.mrf.mxu0
      %v6253 = vadd.f32 0.0, %v6252
      %6254 = vmatmul.bf16.gmra.mxu0 %v6233
      %v6255 = vpop.f32.mrf.mxu0
      %v6256 = vadd.f32 0.0, %v6255
      %v6257 = vpop.f32.mrf.mxu0
      %v6258 = vadd.f32 0.0, %v6257
      %6259 = vmatmul.bf16.gmra.mxu0 %v6236
      %v6260 = vpop.f32.mrf.mxu0
      %v6261 = vadd.f32 0.0, %v6260
      %v6262 = vpop.f32.mrf.mxu0
      %v6263 = vadd.f32 0.0, %v6262
      %6264 = vmatmul.bf16.gmra.mxu0 %v6239
      %v6265 = vpop.f32.mrf.mxu0
      %v6266 = vadd.f32 0.0, %v6265
      %v6267 = vpop.f32.mrf.mxu0
      %v6268 = vadd.f32 0.0, %v6267
      %6269 = vdwg.mxu0
      %v6278 = vunpack.c.l.b16 %v6076
      %v6279 = vunpack.c.l.b16 %v6077
      %v6280 = vunpack.c.l.b16 %v6078
      %v6281 = vunpack.c.l.b16 %v6079
      %v6282 = vunpack.c.l.b16 %v6080
      %v6283 = vunpack.c.l.b16 %v6081
      %v6284 = vunpack.c.l.b16 %v6082
      %v6285 = vunpack.c.l.b16 %v6083
      %v6286 = vpack.c.b16 %v6279, %v6278
      %v6287 = vpack.c.b16 %v6281, %v6280
      %v6288 = vpack.c.b16 %v6283, %v6282
      %v6289 = vpack.c.b16 %v6285, %v6284
      %6290 = vrot.lane.b32.xlu0 %v1193, 32
      %v6291 = vpop.permute.xlu0 %6290
      %6292 = vrot.lane.b32.xlu0 %v1194, 32
      %v6293 = vpop.permute.xlu0 %6292
      %6294 = vrot.lane.b32.xlu0 %v1195, 32
      %v6295 = vpop.permute.xlu0 %6294
      %6296 = vrot.lane.b32.xlu0 %v1196, 32
      %v6297 = vpop.permute.xlu0 %6296
      %v6303 = vsel %vm1807, %v6286, 0
      %v6306 = vsel %vm1807, %v6287, 0
      %v6309 = vsel %vm1807, %v6288, 0
      %v6312 = vsel %vm1807, %v6289, 0
      %6314 = vmatpush.bf16.msra.mxu0 0
      %6315 = vmatpush.bf16.msra.mxu0 0
      %6316 = vmatpush.bf16.msra.mxu0 0
      %6317 = vmatpush.bf16.msra.mxu0 0
      %6318 = vmatpush.bf16.msra.mxu0 %v6297
      %6319 = vmatpush.bf16.msra.mxu0 %v6295
      %6320 = vmatpush.bf16.msra.mxu0 %v6293
      %6321 = vmatpush.bf16.msra.mxu0 %v6291
      %6322 = vmatmul.bf16.gmra.mxu0 %v6303
      %v6323 = vpop.f32.mrf.mxu0
      %v6324 = vadd.f32 0.0, %v6323
      %v6325 = vpop.f32.mrf.mxu0
      %v6326 = vadd.f32 0.0, %v6325
      %6327 = vmatmul.bf16.gmra.mxu0 %v6306
      %v6328 = vpop.f32.mrf.mxu0
      %v6329 = vadd.f32 0.0, %v6328
      %v6330 = vpop.f32.mrf.mxu0
      %v6331 = vadd.f32 0.0, %v6330
      %6332 = vmatmul.bf16.gmra.mxu0 %v6309
      %v6333 = vpop.f32.mrf.mxu0
      %v6334 = vadd.f32 0.0, %v6333
      %v6335 = vpop.f32.mrf.mxu0
      %v6336 = vadd.f32 0.0, %v6335
      %6337 = vmatmul.bf16.gmra.mxu0 %v6312
      %v6338 = vpop.f32.mrf.mxu0
      %v6339 = vadd.f32 0.0, %v6338
      %v6340 = vpop.f32.mrf.mxu0
      %v6341 = vadd.f32 0.0, %v6340
      %6342 = vdwg.mxu0
      %v6351 = vunpack.c.l.b16 %v6084
      %v6352 = vunpack.c.l.b16 %v6085
      %v6353 = vunpack.c.l.b16 %v6086
      %v6354 = vunpack.c.l.b16 %v6087
      %v6355 = vunpack.c.l.b16 %v6088
      %v6356 = vunpack.c.l.b16 %v6089
      %v6357 = vunpack.c.l.b16 %v6090
      %v6358 = vunpack.c.l.b16 %v6091
      %v6359 = vpack.c.b16 %v6352, %v6351
      %v6360 = vpack.c.b16 %v6354, %v6353
      %v6361 = vpack.c.b16 %v6356, %v6355
      %v6362 = vpack.c.b16 %v6358, %v6357
      %6363 = vrot.lane.b32.xlu0 %v1274, 32
      %v6364 = vpop.permute.xlu0 %6363
      %6365 = vrot.lane.b32.xlu0 %v1275, 32
      %v6366 = vpop.permute.xlu0 %6365
      %6367 = vrot.lane.b32.xlu0 %v1276, 32
      %v6368 = vpop.permute.xlu0 %6367
      %6369 = vrot.lane.b32.xlu0 %v1277, 32
      %v6370 = vpop.permute.xlu0 %6369
      %v6376 = vsel %vm1807, %v6359, 0
      %v6379 = vsel %vm1807, %v6360, 0
      %v6382 = vsel %vm1807, %v6361, 0
      %v6385 = vsel %vm1807, %v6362, 0
      %6387 = vmatpush.bf16.msra.mxu0 0
      %6388 = vmatpush.bf16.msra.mxu0 0
      %6389 = vmatpush.bf16.msra.mxu0 0
      %6390 = vmatpush.bf16.msra.mxu0 0
      %6391 = vmatpush.bf16.msra.mxu0 %v6370
      %6392 = vmatpush.bf16.msra.mxu0 %v6368
      %6393 = vmatpush.bf16.msra.mxu0 %v6366
      %6394 = vmatpush.bf16.msra.mxu0 %v6364
      %6395 = vmatmul.bf16.gmra.mxu0 %v6376
      %v6396 = vpop.f32.mrf.mxu0
      %v6397 = vadd.f32 0.0, %v6396
      %v6398 = vpop.f32.mrf.mxu0
      %v6399 = vadd.f32 0.0, %v6398
      %6400 = vmatmul.bf16.gmra.mxu0 %v6379
      %v6401 = vpop.f32.mrf.mxu0
      %v6402 = vadd.f32 0.0, %v6401
      %v6403 = vpop.f32.mrf.mxu0
      %v6404 = vadd.f32 0.0, %v6403
      %6405 = vmatmul.bf16.gmra.mxu0 %v6382
      %v6406 = vpop.f32.mrf.mxu0
      %v6407 = vadd.f32 0.0, %v6406
      %v6408 = vpop.f32.mrf.mxu0
      %v6409 = vadd.f32 0.0, %v6408
      %6410 = vmatmul.bf16.gmra.mxu0 %v6385
      %v6411 = vpop.f32.mrf.mxu0
      %v6412 = vadd.f32 0.0, %v6411
      %v6413 = vpop.f32.mrf.mxu0
      %v6414 = vadd.f32 0.0, %v6413
      %6415 = vdwg.mxu0
      %v6424 = vunpack.c.l.b16 %v6092
      %v6425 = vunpack.c.l.b16 %v6093
      %v6426 = vunpack.c.l.b16 %v6094
      %v6427 = vunpack.c.l.b16 %v6095
      %v6428 = vunpack.c.l.b16 %v6096
      %v6429 = vunpack.c.l.b16 %v6097
      %v6430 = vunpack.c.l.b16 %v6098
      %v6431 = vunpack.c.l.b16 %v6099
      %v6432 = vpack.c.b16 %v6425, %v6424
      %v6433 = vpack.c.b16 %v6427, %v6426
      %v6434 = vpack.c.b16 %v6429, %v6428
      %v6435 = vpack.c.b16 %v6431, %v6430
      %6436 = vrot.lane.b32.xlu0 %v1355, 32
      %v6437 = vpop.permute.xlu0 %6436
      %6438 = vrot.lane.b32.xlu0 %v1356, 32
      %v6439 = vpop.permute.xlu0 %6438
      %6440 = vrot.lane.b32.xlu0 %v1357, 32
      %v6441 = vpop.permute.xlu0 %6440
      %6442 = vrot.lane.b32.xlu0 %v1358, 32
      %v6443 = vpop.permute.xlu0 %6442
      %v6449 = vsel %vm1807, %v6432, 0
      %v6452 = vsel %vm1807, %v6433, 0
      %v6455 = vsel %vm1807, %v6434, 0
      %v6458 = vsel %vm1807, %v6435, 0
      %6460 = vmatpush.bf16.msra.mxu0 0
      %6461 = vmatpush.bf16.msra.mxu0 0
      %6462 = vmatpush.bf16.msra.mxu0 0
      %6463 = vmatpush.bf16.msra.mxu0 0
      %6464 = vmatpush.bf16.msra.mxu0 %v6443
      %6465 = vmatpush.bf16.msra.mxu0 %v6441
      %6466 = vmatpush.bf16.msra.mxu0 %v6439
      %6467 = vmatpush.bf16.msra.mxu0 %v6437
      %6468 = vmatmul.bf16.gmra.mxu0 %v6449
      %v6469 = vpop.f32.mrf.mxu0
      %v6470 = vadd.f32 0.0, %v6469
      %v6471 = vpop.f32.mrf.mxu0
      %v6472 = vadd.f32 0.0, %v6471
      %6473 = vmatmul.bf16.gmra.mxu0 %v6452
      %v6474 = vpop.f32.mrf.mxu0
      %v6475 = vadd.f32 0.0, %v6474
      %v6476 = vpop.f32.mrf.mxu0
      %v6477 = vadd.f32 0.0, %v6476
      %6478 = vmatmul.bf16.gmra.mxu0 %v6455
      %v6479 = vpop.f32.mrf.mxu0
      %v6480 = vadd.f32 0.0, %v6479
      %v6481 = vpop.f32.mrf.mxu0
      %v6482 = vadd.f32 0.0, %v6481
      %6483 = vmatmul.bf16.gmra.mxu0 %v6458
      %v6484 = vpop.f32.mrf.mxu0
      %v6485 = vadd.f32 0.0, %v6484
      %v6486 = vpop.f32.mrf.mxu0
      %v6487 = vadd.f32 0.0, %v6486
      %6488 = vdwg.mxu0
      %v6497 = vunpack.c.l.b16 %v6100
      %v6498 = vunpack.c.l.b16 %v6101
      %v6499 = vunpack.c.l.b16 %v6102
      %v6500 = vunpack.c.l.b16 %v6103
      %v6501 = vunpack.c.l.b16 %v6104
      %v6502 = vunpack.c.l.b16 %v6105
      %v6503 = vunpack.c.l.b16 %v6106
      %v6504 = vunpack.c.l.b16 %v6107
      %v6505 = vpack.c.b16 %v6498, %v6497
      %v6506 = vpack.c.b16 %v6500, %v6499
      %v6507 = vpack.c.b16 %v6502, %v6501
      %v6508 = vpack.c.b16 %v6504, %v6503
      %6509 = vrot.lane.b32.xlu0 %v1436, 32
      %v6510 = vpop.permute.xlu0 %6509
      %6511 = vrot.lane.b32.xlu0 %v1437, 32
      %v6512 = vpop.permute.xlu0 %6511
      %6513 = vrot.lane.b32.xlu0 %v1438, 32
      %v6514 = vpop.permute.xlu0 %6513
      %6515 = vrot.lane.b32.xlu0 %v1439, 32
      %v6516 = vpop.permute.xlu0 %6515
      %v6522 = vsel %vm1807, %v6505, 0
      %v6525 = vsel %vm1807, %v6506, 0
      %v6528 = vsel %vm1807, %v6507, 0
      %v6531 = vsel %vm1807, %v6508, 0
      %6533 = vmatpush.bf16.msra.mxu0 0
      %6534 = vmatpush.bf16.msra.mxu0 0
      %6535 = vmatpush.bf16.msra.mxu0 0
      %6536 = vmatpush.bf16.msra.mxu0 0
      %6537 = vmatpush.bf16.msra.mxu0 %v6516
      %6538 = vmatpush.bf16.msra.mxu0 %v6514
      %6539 = vmatpush.bf16.msra.mxu0 %v6512
      %6540 = vmatpush.bf16.msra.mxu0 %v6510
      %6541 = vmatmul.bf16.gmra.mxu0 %v6522
      %v6542 = vpop.f32.mrf.mxu0
      %v6543 = vadd.f32 0.0, %v6542
      %v6544 = vpop.f32.mrf.mxu0
      %v6545 = vadd.f32 0.0, %v6544
      %6546 = vmatmul.bf16.gmra.mxu0 %v6525
      %v6547 = vpop.f32.mrf.mxu0
      %v6548 = vadd.f32 0.0, %v6547
      %v6549 = vpop.f32.mrf.mxu0
      %v6550 = vadd.f32 0.0, %v6549
      %6551 = vmatmul.bf16.gmra.mxu0 %v6528
      %v6552 = vpop.f32.mrf.mxu0
      %v6553 = vadd.f32 0.0, %v6552
      %v6554 = vpop.f32.mrf.mxu0
      %v6555 = vadd.f32 0.0, %v6554
      %6556 = vmatmul.bf16.gmra.mxu0 %v6531
      %v6557 = vpop.f32.mrf.mxu0
      %v6558 = vadd.f32 0.0, %v6557
      %v6559 = vpop.f32.mrf.mxu0
      %v6560 = vadd.f32 0.0, %v6559
      %6561 = vdwg.mxu0
      %v6570 = vunpack.c.l.b16 %v6108
      %v6571 = vunpack.c.l.b16 %v6109
      %v6572 = vunpack.c.l.b16 %v6110
      %v6573 = vunpack.c.l.b16 %v6111
      %v6574 = vunpack.c.l.b16 %v6112
      %v6575 = vunpack.c.l.b16 %v6113
      %v6576 = vunpack.c.l.b16 %v6114
      %v6577 = vunpack.c.l.b16 %v6115
      %v6578 = vpack.c.b16 %v6571, %v6570
      %v6579 = vpack.c.b16 %v6573, %v6572
      %v6580 = vpack.c.b16 %v6575, %v6574
      %v6581 = vpack.c.b16 %v6577, %v6576
      %6582 = vrot.lane.b32.xlu0 %v1517, 32
      %v6583 = vpop.permute.xlu0 %6582
      %6584 = vrot.lane.b32.xlu0 %v1518, 32
      %v6585 = vpop.permute.xlu0 %6584
      %6586 = vrot.lane.b32.xlu0 %v1519, 32
      %v6587 = vpop.permute.xlu0 %6586
      %6588 = vrot.lane.b32.xlu0 %v1520, 32
      %v6589 = vpop.permute.xlu0 %6588
      %v6595 = vsel %vm1807, %v6578, 0
      %v6598 = vsel %vm1807, %v6579, 0
      %v6601 = vsel %vm1807, %v6580, 0
      %v6604 = vsel %vm1807, %v6581, 0
      %6606 = vmatpush.bf16.msra.mxu0 0
      %6607 = vmatpush.bf16.msra.mxu0 0
      %6608 = vmatpush.bf16.msra.mxu0 0
      %6609 = vmatpush.bf16.msra.mxu0 0
      %6610 = vmatpush.bf16.msra.mxu0 %v6589
      %6611 = vmatpush.bf16.msra.mxu0 %v6587
      %6612 = vmatpush.bf16.msra.mxu0 %v6585
      %6613 = vmatpush.bf16.msra.mxu0 %v6583
      %6614 = vmatmul.bf16.gmra.mxu0 %v6595
      %v6615 = vpop.f32.mrf.mxu0
      %v6616 = vadd.f32 0.0, %v6615
      %v6617 = vpop.f32.mrf.mxu0
      %v6618 = vadd.f32 0.0, %v6617
      %6619 = vmatmul.bf16.gmra.mxu0 %v6598
      %v6620 = vpop.f32.mrf.mxu0
      %v6621 = vadd.f32 0.0, %v6620
      %v6622 = vpop.f32.mrf.mxu0
      %v6623 = vadd.f32 0.0, %v6622
      %6624 = vmatmul.bf16.gmra.mxu0 %v6601
      %v6625 = vpop.f32.mrf.mxu0
      %v6626 = vadd.f32 0.0, %v6625
      %v6627 = vpop.f32.mrf.mxu0
      %v6628 = vadd.f32 0.0, %v6627
      %6629 = vmatmul.bf16.gmra.mxu0 %v6604
      %v6630 = vpop.f32.mrf.mxu0
      %v6631 = vadd.f32 0.0, %v6630
      %v6632 = vpop.f32.mrf.mxu0
      %v6633 = vadd.f32 0.0, %v6632
      %6634 = vdwg.mxu0
      %v6643 = vunpack.c.l.b16 %v6116
      %v6644 = vunpack.c.l.b16 %v6117
      %v6645 = vunpack.c.l.b16 %v6118
      %v6646 = vunpack.c.l.b16 %v6119
      %v6647 = vunpack.c.l.b16 %v6120
      %v6648 = vunpack.c.l.b16 %v6121
      %v6649 = vunpack.c.l.b16 %v6122
      %v6650 = vunpack.c.l.b16 %v6123
      %v6651 = vpack.c.b16 %v6644, %v6643
      %v6652 = vpack.c.b16 %v6646, %v6645
      %v6653 = vpack.c.b16 %v6648, %v6647
      %v6654 = vpack.c.b16 %v6650, %v6649
      %6655 = vrot.lane.b32.xlu0 %v1598, 32
      %v6656 = vpop.permute.xlu0 %6655
      %6657 = vrot.lane.b32.xlu0 %v1599, 32
      %v6658 = vpop.permute.xlu0 %6657
      %6659 = vrot.lane.b32.xlu0 %v1600, 32
      %v6660 = vpop.permute.xlu0 %6659
      %6661 = vrot.lane.b32.xlu0 %v1601, 32
      %v6662 = vpop.permute.xlu0 %6661
      %v6668 = vsel %vm1807, %v6651, 0
      %v6671 = vsel %vm1807, %v6652, 0
      %v6674 = vsel %vm1807, %v6653, 0
      %v6677 = vsel %vm1807, %v6654, 0
      %6679 = vmatpush.bf16.msra.mxu0 0
      %6680 = vmatpush.bf16.msra.mxu0 0
      %6681 = vmatpush.bf16.msra.mxu0 0
      %6682 = vmatpush.bf16.msra.mxu0 0
      %6683 = vmatpush.bf16.msra.mxu0 %v6662
      %6684 = vmatpush.bf16.msra.mxu0 %v6660
      %6685 = vmatpush.bf16.msra.mxu0 %v6658
      %6686 = vmatpush.bf16.msra.mxu0 %v6656
      %6687 = vmatmul.bf16.gmra.mxu0 %v6668
      %v6688 = vpop.f32.mrf.mxu0
      %v6689 = vadd.f32 0.0, %v6688
      %v6690 = vpop.f32.mrf.mxu0
      %v6691 = vadd.f32 0.0, %v6690
      %6692 = vmatmul.bf16.gmra.mxu0 %v6671
      %v6693 = vpop.f32.mrf.mxu0
      %v6694 = vadd.f32 0.0, %v6693
      %v6695 = vpop.f32.mrf.mxu0
      %v6696 = vadd.f32 0.0, %v6695
      %6697 = vmatmul.bf16.gmra.mxu0 %v6674
      %v6698 = vpop.f32.mrf.mxu0
      %v6699 = vadd.f32 0.0, %v6698
      %v6700 = vpop.f32.mrf.mxu0
      %v6701 = vadd.f32 0.0, %v6700
      %6702 = vmatmul.bf16.gmra.mxu0 %v6677
      %v6703 = vpop.f32.mrf.mxu0
      %v6704 = vadd.f32 0.0, %v6703
      %v6705 = vpop.f32.mrf.mxu0
      %v6706 = vadd.f32 0.0, %v6705
      %6707 = vdwg.mxu0
      %v6708 = vmul.f32 %v6178, %v5996
      %v6709 = vmul.f32 %v6180, %v5997
      %v6710 = vmul.f32 %v6183, %v5998
      %v6711 = vmul.f32 %v6185, %v5999
      %v6712 = vmul.f32 %v6188, %v6000
      %v6713 = vmul.f32 %v6190, %v6001
      %v6714 = vmul.f32 %v6193, %v6002
      %v6715 = vmul.f32 %v6195, %v6003
      %v6716 = vmul.f32 %v6251, %v6004
      %v6717 = vmul.f32 %v6253, %v6005
      %v6718 = vmul.f32 %v6256, %v6006
      %v6719 = vmul.f32 %v6258, %v6007
      %v6720 = vmul.f32 %v6261, %v6008
      %v6721 = vmul.f32 %v6263, %v6009
      %v6722 = vmul.f32 %v6266, %v6010
      %v6723 = vmul.f32 %v6268, %v6011
      %v6724 = vmul.f32 %v6324, %v6012
      %v6725 = vmul.f32 %v6326, %v6013
      %v6726 = vmul.f32 %v6329, %v6014
      %v6727 = vmul.f32 %v6331, %v6015
      %v6728 = vmul.f32 %v6334, %v6016
      %v6729 = vmul.f32 %v6336, %v6017
      %v6730 = vmul.f32 %v6339, %v6018
      %v6731 = vmul.f32 %v6341, %v6019
      %v6732 = vmul.f32 %v6397, %v6020
      %v6733 = vmul.f32 %v6399, %v6021
      %v6734 = vmul.f32 %v6402, %v6022
      %v6735 = vmul.f32 %v6404, %v6023
      %v6736 = vmul.f32 %v6407, %v6024
      %v6737 = vmul.f32 %v6409, %v6025
      %v6738 = vmul.f32 %v6412, %v6026
      %v6739 = vmul.f32 %v6414, %v6027
      %v6740 = vmul.f32 %v6470, %v6028
      %v6741 = vmul.f32 %v6472, %v6029
      %v6742 = vmul.f32 %v6475, %v6030
      %v6743 = vmul.f32 %v6477, %v6031
      %v6744 = vmul.f32 %v6480, %v6032
      %v6745 = vmul.f32 %v6482, %v6033
      %v6746 = vmul.f32 %v6485, %v6034
      %v6747 = vmul.f32 %v6487, %v6035
      %v6748 = vmul.f32 %v6543, %v6036
      %v6749 = vmul.f32 %v6545, %v6037
      %v6750 = vmul.f32 %v6548, %v6038
      %v6751 = vmul.f32 %v6550, %v6039
      %v6752 = vmul.f32 %v6553, %v6040
      %v6753 = vmul.f32 %v6555, %v6041
      %v6754 = vmul.f32 %v6558, %v6042
      %v6755 = vmul.f32 %v6560, %v6043
      %v6756 = vmul.f32 %v6616, %v6044
      %v6757 = vmul.f32 %v6618, %v6045
      %v6758 = vmul.f32 %v6621, %v6046
      %v6759 = vmul.f32 %v6623, %v6047
      %v6760 = vmul.f32 %v6626, %v6048
      %v6761 = vmul.f32 %v6628, %v6049
      %v6762 = vmul.f32 %v6631, %v6050
      %v6763 = vmul.f32 %v6633, %v6051
      %v6764 = vmul.f32 %v6689, %v6052
      %v6765 = vmul.f32 %v6691, %v6053
      %v6766 = vmul.f32 %v6694, %v6054
      %v6767 = vmul.f32 %v6696, %v6055
      %v6768 = vmul.f32 %v6699, %v6056
      %v6769 = vmul.f32 %v6701, %v6057
      %v6770 = vmul.f32 %v6704, %v6058
      %v6771 = vmul.f32 %v6706, %v6059
      %v6772 = vadd.f32 %v4658, %v6708
      %v6773 = vadd.f32 %v4659, %v6709
      %v6774 = vadd.f32 %v4660, %v6710
      %v6775 = vadd.f32 %v4661, %v6711
      %v6776 = vadd.f32 %v4662, %v6712
      %v6777 = vadd.f32 %v4663, %v6713
      %v6778 = vadd.f32 %v4664, %v6714
      %v6779 = vadd.f32 %v4665, %v6715
      %v6780 = vadd.f32 %v4666, %v6716
      %v6781 = vadd.f32 %v4667, %v6717
      %v6782 = vadd.f32 %v4668, %v6718
      %v6783 = vadd.f32 %v4669, %v6719
      %v6784 = vadd.f32 %v4670, %v6720
      %v6785 = vadd.f32 %v4671, %v6721
      %v6786 = vadd.f32 %v4672, %v6722
      %v6787 = vadd.f32 %v4673, %v6723
      %v6788 = vadd.f32 %v4674, %v6724
      %v6789 = vadd.f32 %v4675, %v6725
      %v6790 = vadd.f32 %v4676, %v6726
      %v6791 = vadd.f32 %v4677, %v6727
      %v6792 = vadd.f32 %v4678, %v6728
      %v6793 = vadd.f32 %v4679, %v6729
      %v6794 = vadd.f32 %v4680, %v6730
      %v6795 = vadd.f32 %v4681, %v6731
      %v6796 = vadd.f32 %v4682, %v6732
      %v6797 = vadd.f32 %v4683, %v6733
      %v6798 = vadd.f32 %v4684, %v6734
      %v6799 = vadd.f32 %v4685, %v6735
      %v6800 = vadd.f32 %v4686, %v6736
      %v6801 = vadd.f32 %v4687, %v6737
      %v6802 = vadd.f32 %v4688, %v6738
      %v6803 = vadd.f32 %v4689, %v6739
      %v6804 = vadd.f32 %v4690, %v6740
      %v6805 = vadd.f32 %v4691, %v6741
      %v6806 = vadd.f32 %v4692, %v6742
      %v6807 = vadd.f32 %v4693, %v6743
      %v6808 = vadd.f32 %v4694, %v6744
      %v6809 = vadd.f32 %v4695, %v6745
      %v6810 = vadd.f32 %v4696, %v6746
      %v6811 = vadd.f32 %v4697, %v6747
      %v6812 = vadd.f32 %v4698, %v6748
      %v6813 = vadd.f32 %v4699, %v6749
      %v6814 = vadd.f32 %v4700, %v6750
      %v6815 = vadd.f32 %v4701, %v6751
      %v6816 = vadd.f32 %v4702, %v6752
      %v6817 = vadd.f32 %v4703, %v6753
      %v6818 = vadd.f32 %v4704, %v6754
      %v6819 = vadd.f32 %v4705, %v6755
      %v6820 = vadd.f32 %v4706, %v6756
      %v6821 = vadd.f32 %v4707, %v6757
      %v6822 = vadd.f32 %v4708, %v6758
      %v6823 = vadd.f32 %v4709, %v6759
      %v6824 = vadd.f32 %v4710, %v6760
      %v6825 = vadd.f32 %v4711, %v6761
      %v6826 = vadd.f32 %v4712, %v6762
      %v6827 = vadd.f32 %v4713, %v6763
      %v6828 = vadd.f32 %v4714, %v6764
      %v6829 = vadd.f32 %v4715, %v6765
      %v6830 = vadd.f32 %v4716, %v6766
      %v6831 = vadd.f32 %v4717, %v6767
      %v6832 = vadd.f32 %v4718, %v6768
      %v6833 = vadd.f32 %v4719, %v6769
      %v6834 = vadd.f32 %v4720, %v6770
      %v6835 = vadd.f32 %v4721, %v6771
      %s6836 = scalar_lea.vmem %s3, 192
      %v6837 = vld [vmem:[%s6836] sm:$0xff]
      %v6838 = vld [vmem:[%s6836 + $0x8] sm:$0xff]
      %v6839 = vld [vmem:[%s6836 + $0x10] sm:$0xff]
      %v6840 = vld [vmem:[%s6836 + $0x18] sm:$0xff]
      %v6841 = vld [vmem:[%s6836 + $0x20] sm:$0xff]
      %v6842 = vld [vmem:[%s6836 + $0x28] sm:$0xff]
      %v6843 = vld [vmem:[%s6836 + $0x30] sm:$0xff]
      %v6844 = vld [vmem:[%s6836 + $0x38] sm:$0xff]
      %v6845 = vmul.f32 %v4772, %v6837
      %v6846 = vmul.f32 %v4774, %v6838
      %v6847 = vmul.f32 %v4777, %v6839
      %v6848 = vmul.f32 %v4779, %v6840
      %v6849 = vmul.f32 %v4782, %v6841
      %v6850 = vmul.f32 %v4784, %v6842
      %v6851 = vmul.f32 %v4787, %v6843
      %v6852 = vmul.f32 %v4789, %v6844
      %v6853 = vmul.f32 %v4841, %v6837
      %v6854 = vmul.f32 %v4843, %v6838
      %v6855 = vmul.f32 %v4846, %v6839
      %v6856 = vmul.f32 %v4848, %v6840
      %v6857 = vmul.f32 %v4851, %v6841
      %v6858 = vmul.f32 %v4853, %v6842
      %v6859 = vmul.f32 %v4856, %v6843
      %v6860 = vmul.f32 %v4858, %v6844
      %v6861 = vmul.f32 %v4910, %v6837
      %v6862 = vmul.f32 %v4912, %v6838
      %v6863 = vmul.f32 %v4915, %v6839
      %v6864 = vmul.f32 %v4917, %v6840
      %v6865 = vmul.f32 %v4920, %v6841
      %v6866 = vmul.f32 %v4922, %v6842
      %v6867 = vmul.f32 %v4925, %v6843
      %v6868 = vmul.f32 %v4927, %v6844
      %v6869 = vmul.f32 %v4979, %v6837
      %v6870 = vmul.f32 %v4981, %v6838
      %v6871 = vmul.f32 %v4984, %v6839
      %v6872 = vmul.f32 %v4986, %v6840
      %v6873 = vmul.f32 %v4989, %v6841
      %v6874 = vmul.f32 %v4991, %v6842
      %v6875 = vmul.f32 %v4994, %v6843
      %v6876 = vmul.f32 %v4996, %v6844
      %v6877 = vmul.f32 %v5048, %v6837
      %v6878 = vmul.f32 %v5050, %v6838
      %v6879 = vmul.f32 %v5053, %v6839
      %v6880 = vmul.f32 %v5055, %v6840
      %v6881 = vmul.f32 %v5058, %v6841
      %v6882 = vmul.f32 %v5060, %v6842
      %v6883 = vmul.f32 %v5063, %v6843
      %v6884 = vmul.f32 %v5065, %v6844
      %v6885 = vmul.f32 %v5117, %v6837
      %v6886 = vmul.f32 %v5119, %v6838
      %v6887 = vmul.f32 %v5122, %v6839
      %v6888 = vmul.f32 %v5124, %v6840
      %v6889 = vmul.f32 %v5127, %v6841
      %v6890 = vmul.f32 %v5129, %v6842
      %v6891 = vmul.f32 %v5132, %v6843
      %v6892 = vmul.f32 %v5134, %v6844
      %v6893 = vmul.f32 %v5186, %v6837
      %v6894 = vmul.f32 %v5188, %v6838
      %v6895 = vmul.f32 %v5191, %v6839
      %v6896 = vmul.f32 %v5193, %v6840
      %v6897 = vmul.f32 %v5196, %v6841
      %v6898 = vmul.f32 %v5198, %v6842
      %v6899 = vmul.f32 %v5201, %v6843
      %v6900 = vmul.f32 %v5203, %v6844
      %v6901 = vmul.f32 %v5255, %v6837
      %v6902 = vmul.f32 %v5257, %v6838
      %v6903 = vmul.f32 %v5260, %v6839
      %v6904 = vmul.f32 %v5262, %v6840
      %v6905 = vmul.f32 %v5265, %v6841
      %v6906 = vmul.f32 %v5267, %v6842
      %v6907 = vmul.f32 %v5270, %v6843
      %v6908 = vmul.f32 %v5272, %v6844
      %s6909 = scalar_lea.vmem %s4, 192
      %v6910 = vld [vmem:[%s6909] sm:$0xff]
      %v6911 = vld [vmem:[%s6909 + $0x8] sm:$0xff]
      %v6912 = vld [vmem:[%s6909 + $0x10] sm:$0xff]
      %v6913 = vld [vmem:[%s6909 + $0x18] sm:$0xff]
      %v6914 = vld [vmem:[%s6909 + $0x20] sm:$0xff]
      %v6915 = vld [vmem:[%s6909 + $0x28] sm:$0xff]
      %v6916 = vld [vmem:[%s6909 + $0x30] sm:$0xff]
      %v6917 = vld [vmem:[%s6909 + $0x38] sm:$0xff]
      %v6918 = vadd.f32 %v6845, %v6910
      %v6919 = vadd.f32 %v6846, %v6911
      %v6920 = vadd.f32 %v6847, %v6912
      %v6921 = vadd.f32 %v6848, %v6913
      %v6922 = vadd.f32 %v6849, %v6914
      %v6923 = vadd.f32 %v6850, %v6915
      %v6924 = vadd.f32 %v6851, %v6916
      %v6925 = vadd.f32 %v6852, %v6917
      %v6926 = vadd.f32 %v6853, %v6910
      %v6927 = vadd.f32 %v6854, %v6911
      %v6928 = vadd.f32 %v6855, %v6912
      %v6929 = vadd.f32 %v6856, %v6913
      %v6930 = vadd.f32 %v6857, %v6914
      %v6931 = vadd.f32 %v6858, %v6915
      %v6932 = vadd.f32 %v6859, %v6916
      %v6933 = vadd.f32 %v6860, %v6917
      %v6934 = vadd.f32 %v6861, %v6910
      %v6935 = vadd.f32 %v6862, %v6911
      %v6936 = vadd.f32 %v6863, %v6912
      %v6937 = vadd.f32 %v6864, %v6913
      %v6938 = vadd.f32 %v6865, %v6914
      %v6939 = vadd.f32 %v6866, %v6915
      %v6940 = vadd.f32 %v6867, %v6916
      %v6941 = vadd.f32 %v6868, %v6917
      %v6942 = vadd.f32 %v6869, %v6910
      %v6943 = vadd.f32 %v6870, %v6911
      %v6944 = vadd.f32 %v6871, %v6912
      %v6945 = vadd.f32 %v6872, %v6913
      %v6946 = vadd.f32 %v6873, %v6914
      %v6947 = vadd.f32 %v6874, %v6915
      %v6948 = vadd.f32 %v6875, %v6916
      %v6949 = vadd.f32 %v6876, %v6917
      %v6950 = vadd.f32 %v6877, %v6910
      %v6951 = vadd.f32 %v6878, %v6911
      %v6952 = vadd.f32 %v6879, %v6912
      %v6953 = vadd.f32 %v6880, %v6913
      %v6954 = vadd.f32 %v6881, %v6914
      %v6955 = vadd.f32 %v6882, %v6915
      %v6956 = vadd.f32 %v6883, %v6916
      %v6957 = vadd.f32 %v6884, %v6917
      %v6958 = vadd.f32 %v6885, %v6910
      %v6959 = vadd.f32 %v6886, %v6911
      %v6960 = vadd.f32 %v6887, %v6912
      %v6961 = vadd.f32 %v6888, %v6913
      %v6962 = vadd.f32 %v6889, %v6914
      %v6963 = vadd.f32 %v6890, %v6915
      %v6964 = vadd.f32 %v6891, %v6916
      %v6965 = vadd.f32 %v6892, %v6917
      %v6966 = vadd.f32 %v6893, %v6910
      %v6967 = vadd.f32 %v6894, %v6911
      %v6968 = vadd.f32 %v6895, %v6912
      %v6969 = vadd.f32 %v6896, %v6913
      %v6970 = vadd.f32 %v6897, %v6914
      %v6971 = vadd.f32 %v6898, %v6915
      %v6972 = vadd.f32 %v6899, %v6916
      %v6973 = vadd.f32 %v6900, %v6917
      %v6974 = vadd.f32 %v6901, %v6910
      %v6975 = vadd.f32 %v6902, %v6911
      %v6976 = vadd.f32 %v6903, %v6912
      %v6977 = vadd.f32 %v6904, %v6913
      %v6978 = vadd.f32 %v6905, %v6914
      %v6979 = vadd.f32 %v6906, %v6915
      %v6980 = vadd.f32 %v6907, %v6916
      %v6981 = vadd.f32 %v6908, %v6917
      %v6982 = vsel %vm1807, %v6918, -inf
      %6983 = vmax.xlane.f32.xlu0 %v6982
      %v6984 = vpop.xlane.xlu0 %6983
      %v6985 = vsel %vm1807, %v6919, -inf
      %6986 = vmax.xlane.f32.xlu0 %v6985
      %v6987 = vpop.xlane.xlu0 %6986
      %v6988 = vsel %vm1807, %v6920, -inf
      %6989 = vmax.xlane.f32.xlu0 %v6988
      %v6990 = vpop.xlane.xlu0 %6989
      %v6991 = vsel %vm1807, %v6921, -inf
      %6992 = vmax.xlane.f32.xlu0 %v6991
      %v6993 = vpop.xlane.xlu0 %6992
      %v6994 = vsel %vm1807, %v6922, -inf
      %6995 = vmax.xlane.f32.xlu0 %v6994
      %v6996 = vpop.xlane.xlu0 %6995
      %v6997 = vsel %vm1807, %v6923, -inf
      %6998 = vmax.xlane.f32.xlu0 %v6997
      %v6999 = vpop.xlane.xlu0 %6998
      %v7000 = vsel %vm1807, %v6924, -inf
      %7001 = vmax.xlane.f32.xlu0 %v7000
      %v7002 = vpop.xlane.xlu0 %7001
      %v7003 = vsel %vm1807, %v6925, -inf
      %7004 = vmax.xlane.f32.xlu0 %v7003
      %v7005 = vpop.xlane.xlu0 %7004
      %v7006 = vsel %vm1807, %v6926, -inf
      %7007 = vmax.xlane.f32.xlu0 %v7006
      %v7008 = vpop.xlane.xlu0 %7007
      %v7009 = vsel %vm1807, %v6927, -inf
      %7010 = vmax.xlane.f32.xlu0 %v7009
      %v7011 = vpop.xlane.xlu0 %7010
      %v7012 = vsel %vm1807, %v6928, -inf
      %7013 = vmax.xlane.f32.xlu0 %v7012
      %v7014 = vpop.xlane.xlu0 %7013
      %v7015 = vsel %vm1807, %v6929, -inf
      %7016 = vmax.xlane.f32.xlu0 %v7015
      %v7017 = vpop.xlane.xlu0 %7016
      %v7018 = vsel %vm1807, %v6930, -inf
      %7019 = vmax.xlane.f32.xlu0 %v7018
      %v7020 = vpop.xlane.xlu0 %7019
      %v7021 = vsel %vm1807, %v6931, -inf
      %7022 = vmax.xlane.f32.xlu0 %v7021
      %v7023 = vpop.xlane.xlu0 %7022
      %v7024 = vsel %vm1807, %v6932, -inf
      %7025 = vmax.xlane.f32.xlu0 %v7024
      %v7026 = vpop.xlane.xlu0 %7025
      %v7027 = vsel %vm1807, %v6933, -inf
      %7028 = vmax.xlane.f32.xlu0 %v7027
      %v7029 = vpop.xlane.xlu0 %7028
      %v7030 = vsel %vm1807, %v6934, -inf
      %7031 = vmax.xlane.f32.xlu0 %v7030
      %v7032 = vpop.xlane.xlu0 %7031
      %v7033 = vsel %vm1807, %v6935, -inf
      %7034 = vmax.xlane.f32.xlu0 %v7033
      %v7035 = vpop.xlane.xlu0 %7034
      %v7036 = vsel %vm1807, %v6936, -inf
      %7037 = vmax.xlane.f32.xlu0 %v7036
      %v7038 = vpop.xlane.xlu0 %7037
      %v7039 = vsel %vm1807, %v6937, -inf
      %7040 = vmax.xlane.f32.xlu0 %v7039
      %v7041 = vpop.xlane.xlu0 %7040
      %v7042 = vsel %vm1807, %v6938, -inf
      %7043 = vmax.xlane.f32.xlu0 %v7042
      %v7044 = vpop.xlane.xlu0 %7043
      %v7045 = vsel %vm1807, %v6939, -inf
      %7046 = vmax.xlane.f32.xlu0 %v7045
      %v7047 = vpop.xlane.xlu0 %7046
      %v7048 = vsel %vm1807, %v6940, -inf
      %7049 = vmax.xlane.f32.xlu0 %v7048
      %v7050 = vpop.xlane.xlu0 %7049
      %v7051 = vsel %vm1807, %v6941, -inf
      %7052 = vmax.xlane.f32.xlu0 %v7051
      %v7053 = vpop.xlane.xlu0 %7052
      %v7054 = vsel %vm1807, %v6942, -inf
      %7055 = vmax.xlane.f32.xlu0 %v7054
      %v7056 = vpop.xlane.xlu0 %7055
      %v7057 = vsel %vm1807, %v6943, -inf
      %7058 = vmax.xlane.f32.xlu0 %v7057
      %v7059 = vpop.xlane.xlu0 %7058
      %v7060 = vsel %vm1807, %v6944, -inf
      %7061 = vmax.xlane.f32.xlu0 %v7060
      %v7062 = vpop.xlane.xlu0 %7061
      %v7063 = vsel %vm1807, %v6945, -inf
      %7064 = vmax.xlane.f32.xlu0 %v7063
      %v7065 = vpop.xlane.xlu0 %7064
      %v7066 = vsel %vm1807, %v6946, -inf
      %7067 = vmax.xlane.f32.xlu0 %v7066
      %v7068 = vpop.xlane.xlu0 %7067
      %v7069 = vsel %vm1807, %v6947, -inf
      %7070 = vmax.xlane.f32.xlu0 %v7069
      %v7071 = vpop.xlane.xlu0 %7070
      %v7072 = vsel %vm1807, %v6948, -inf
      %7073 = vmax.xlane.f32.xlu0 %v7072
      %v7074 = vpop.xlane.xlu0 %7073
      %v7075 = vsel %vm1807, %v6949, -inf
      %7076 = vmax.xlane.f32.xlu0 %v7075
      %v7077 = vpop.xlane.xlu0 %7076
      %v7078 = vsel %vm1807, %v6950, -inf
      %7079 = vmax.xlane.f32.xlu0 %v7078
      %v7080 = vpop.xlane.xlu0 %7079
      %v7081 = vsel %vm1807, %v6951, -inf
      %7082 = vmax.xlane.f32.xlu0 %v7081
      %v7083 = vpop.xlane.xlu0 %7082
      %v7084 = vsel %vm1807, %v6952, -inf
      %7085 = vmax.xlane.f32.xlu0 %v7084
      %v7086 = vpop.xlane.xlu0 %7085
      %v7087 = vsel %vm1807, %v6953, -inf
      %7088 = vmax.xlane.f32.xlu0 %v7087
      %v7089 = vpop.xlane.xlu0 %7088
      %v7090 = vsel %vm1807, %v6954, -inf
      %7091 = vmax.xlane.f32.xlu0 %v7090
      %v7092 = vpop.xlane.xlu0 %7091
      %v7093 = vsel %vm1807, %v6955, -inf
      %7094 = vmax.xlane.f32.xlu0 %v7093
      %v7095 = vpop.xlane.xlu0 %7094
      %v7096 = vsel %vm1807, %v6956, -inf
      %7097 = vmax.xlane.f32.xlu0 %v7096
      %v7098 = vpop.xlane.xlu0 %7097
      %v7099 = vsel %vm1807, %v6957, -inf
      %7100 = vmax.xlane.f32.xlu0 %v7099
      %v7101 = vpop.xlane.xlu0 %7100
      %v7102 = vsel %vm1807, %v6958, -inf
      %7103 = vmax.xlane.f32.xlu0 %v7102
      %v7104 = vpop.xlane.xlu0 %7103
      %v7105 = vsel %vm1807, %v6959, -inf
      %7106 = vmax.xlane.f32.xlu0 %v7105
      %v7107 = vpop.xlane.xlu0 %7106
      %v7108 = vsel %vm1807, %v6960, -inf
      %7109 = vmax.xlane.f32.xlu0 %v7108
      %v7110 = vpop.xlane.xlu0 %7109
      %v7111 = vsel %vm1807, %v6961, -inf
      %7112 = vmax.xlane.f32.xlu0 %v7111
      %v7113 = vpop.xlane.xlu0 %7112
      %v7114 = vsel %vm1807, %v6962, -inf
      %7115 = vmax.xlane.f32.xlu0 %v7114
      %v7116 = vpop.xlane.xlu0 %7115
      %v7117 = vsel %vm1807, %v6963, -inf
      %7118 = vmax.xlane.f32.xlu0 %v7117
      %v7119 = vpop.xlane.xlu0 %7118
      %v7120 = vsel %vm1807, %v6964, -inf
      %7121 = vmax.xlane.f32.xlu0 %v7120
      %v7122 = vpop.xlane.xlu0 %7121
      %v7123 = vsel %vm1807, %v6965, -inf
      %7124 = vmax.xlane.f32.xlu0 %v7123
      %v7125 = vpop.xlane.xlu0 %7124
      %v7126 = vsel %vm1807, %v6966, -inf
      %7127 = vmax.xlane.f32.xlu0 %v7126
      %v7128 = vpop.xlane.xlu0 %7127
      %v7129 = vsel %vm1807, %v6967, -inf
      %7130 = vmax.xlane.f32.xlu0 %v7129
      %v7131 = vpop.xlane.xlu0 %7130
      %v7132 = vsel %vm1807, %v6968, -inf
      %7133 = vmax.xlane.f32.xlu0 %v7132
      %v7134 = vpop.xlane.xlu0 %7133
      %v7135 = vsel %vm1807, %v6969, -inf
      %7136 = vmax.xlane.f32.xlu0 %v7135
      %v7137 = vpop.xlane.xlu0 %7136
      %v7138 = vsel %vm1807, %v6970, -inf
      %7139 = vmax.xlane.f32.xlu0 %v7138
      %v7140 = vpop.xlane.xlu0 %7139
      %v7141 = vsel %vm1807, %v6971, -inf
      %7142 = vmax.xlane.f32.xlu0 %v7141
      %v7143 = vpop.xlane.xlu0 %7142
      %v7144 = vsel %vm1807, %v6972, -inf
      %7145 = vmax.xlane.f32.xlu0 %v7144
      %v7146 = vpop.xlane.xlu0 %7145
      %v7147 = vsel %vm1807, %v6973, -inf
      %7148 = vmax.xlane.f32.xlu0 %v7147
      %v7149 = vpop.xlane.xlu0 %7148
      %v7150 = vsel %vm1807, %v6974, -inf
      %7151 = vmax.xlane.f32.xlu0 %v7150
      %v7152 = vpop.xlane.xlu0 %7151
      %v7153 = vsel %vm1807, %v6975, -inf
      %7154 = vmax.xlane.f32.xlu0 %v7153
      %v7155 = vpop.xlane.xlu0 %7154
      %v7156 = vsel %vm1807, %v6976, -inf
      %7157 = vmax.xlane.f32.xlu0 %v7156
      %v7158 = vpop.xlane.xlu0 %7157
      %v7159 = vsel %vm1807, %v6977, -inf
      %7160 = vmax.xlane.f32.xlu0 %v7159
      %v7161 = vpop.xlane.xlu0 %7160
      %v7162 = vsel %vm1807, %v6978, -inf
      %7163 = vmax.xlane.f32.xlu0 %v7162
      %v7164 = vpop.xlane.xlu0 %7163
      %v7165 = vsel %vm1807, %v6979, -inf
      %7166 = vmax.xlane.f32.xlu0 %v7165
      %v7167 = vpop.xlane.xlu0 %7166
      %v7168 = vsel %vm1807, %v6980, -inf
      %7169 = vmax.xlane.f32.xlu0 %v7168
      %v7170 = vpop.xlane.xlu0 %7169
      %v7171 = vsel %vm1807, %v6981, -inf
      %7172 = vmax.xlane.f32.xlu0 %v7171
      %v7173 = vpop.xlane.xlu0 %7172
      %v7174 = vsub.f32 %v6918, %v6984
      %v7175 = vsub.f32 %v6919, %v6987
      %v7176 = vsub.f32 %v6920, %v6990
      %v7177 = vsub.f32 %v6921, %v6993
      %v7178 = vsub.f32 %v6922, %v6996
      %v7179 = vsub.f32 %v6923, %v6999
      %v7180 = vsub.f32 %v6924, %v7002
      %v7181 = vsub.f32 %v6925, %v7005
      %v7182 = vsub.f32 %v6926, %v7008
      %v7183 = vsub.f32 %v6927, %v7011
      %v7184 = vsub.f32 %v6928, %v7014
      %v7185 = vsub.f32 %v6929, %v7017
      %v7186 = vsub.f32 %v6930, %v7020
      %v7187 = vsub.f32 %v6931, %v7023
      %v7188 = vsub.f32 %v6932, %v7026
      %v7189 = vsub.f32 %v6933, %v7029
      %v7190 = vsub.f32 %v6934, %v7032
      %v7191 = vsub.f32 %v6935, %v7035
      %v7192 = vsub.f32 %v6936, %v7038
      %v7193 = vsub.f32 %v6937, %v7041
      %v7194 = vsub.f32 %v6938, %v7044
      %v7195 = vsub.f32 %v6939, %v7047
      %v7196 = vsub.f32 %v6940, %v7050
      %v7197 = vsub.f32 %v6941, %v7053
      %v7198 = vsub.f32 %v6942, %v7056
      %v7199 = vsub.f32 %v6943, %v7059
      %v7200 = vsub.f32 %v6944, %v7062
      %v7201 = vsub.f32 %v6945, %v7065
      %v7202 = vsub.f32 %v6946, %v7068
      %v7203 = vsub.f32 %v6947, %v7071
      %v7204 = vsub.f32 %v6948, %v7074
      %v7205 = vsub.f32 %v6949, %v7077
      %v7206 = vsub.f32 %v6950, %v7080
      %v7207 = vsub.f32 %v6951, %v7083
      %v7208 = vsub.f32 %v6952, %v7086
      %v7209 = vsub.f32 %v6953, %v7089
      %v7210 = vsub.f32 %v6954, %v7092
      %v7211 = vsub.f32 %v6955, %v7095
      %v7212 = vsub.f32 %v6956, %v7098
      %v7213 = vsub.f32 %v6957, %v7101
      %v7214 = vsub.f32 %v6958, %v7104
      %v7215 = vsub.f32 %v6959, %v7107
      %v7216 = vsub.f32 %v6960, %v7110
      %v7217 = vsub.f32 %v6961, %v7113
      %v7218 = vsub.f32 %v6962, %v7116
      %v7219 = vsub.f32 %v6963, %v7119
      %v7220 = vsub.f32 %v6964, %v7122
      %v7221 = vsub.f32 %v6965, %v7125
      %v7222 = vsub.f32 %v6966, %v7128
      %v7223 = vsub.f32 %v6967, %v7131
      %v7224 = vsub.f32 %v6968, %v7134
      %v7225 = vsub.f32 %v6969, %v7137
      %v7226 = vsub.f32 %v6970, %v7140
      %v7227 = vsub.f32 %v6971, %v7143
      %v7228 = vsub.f32 %v6972, %v7146
      %v7229 = vsub.f32 %v6973, %v7149
      %v7230 = vsub.f32 %v6974, %v7152
      %v7231 = vsub.f32 %v6975, %v7155
      %v7232 = vsub.f32 %v6976, %v7158
      %v7233 = vsub.f32 %v6977, %v7161
      %v7234 = vsub.f32 %v6978, %v7164
      %v7235 = vsub.f32 %v6979, %v7167
      %v7236 = vsub.f32 %v6980, %v7170
      %v7237 = vsub.f32 %v6981, %v7173
      %v7238 = vmul.f32 %v7174, 1.442695
      %v7239 = vpow.pop %v7238
      %v7240 = vmul.f32 %v7175, 1.442695
      %v7241 = vpow.pop %v7240
      %v7242 = vmul.f32 %v7176, 1.442695
      %v7243 = vpow.pop %v7242
      %v7244 = vmul.f32 %v7177, 1.442695
      %v7245 = vpow.pop %v7244
      %v7246 = vmul.f32 %v7178, 1.442695
      %v7247 = vpow.pop %v7246
      %v7248 = vmul.f32 %v7179, 1.442695
      %v7249 = vpow.pop %v7248
      %v7250 = vmul.f32 %v7180, 1.442695
      %v7251 = vpow.pop %v7250
      %v7252 = vmul.f32 %v7181, 1.442695
      %v7253 = vpow.pop %v7252
      %v7254 = vmul.f32 %v7182, 1.442695
      %v7255 = vpow.pop %v7254
      %v7256 = vmul.f32 %v7183, 1.442695
      %v7257 = vpow.pop %v7256
      %v7258 = vmul.f32 %v7184, 1.442695
      %v7259 = vpow.pop %v7258
      %v7260 = vmul.f32 %v7185, 1.442695
      %v7261 = vpow.pop %v7260
      %v7262 = vmul.f32 %v7186, 1.442695
      %v7263 = vpow.pop %v7262
      %v7264 = vmul.f32 %v7187, 1.442695
      %v7265 = vpow.pop %v7264
      %v7266 = vmul.f32 %v7188, 1.442695
      %v7267 = vpow.pop %v7266
      %v7268 = vmul.f32 %v7189, 1.442695
      %v7269 = vpow.pop %v7268
      %v7270 = vmul.f32 %v7190, 1.442695
      %v7271 = vpow.pop %v7270
      %v7272 = vmul.f32 %v7191, 1.442695
      %v7273 = vpow.pop %v7272
      %v7274 = vmul.f32 %v7192, 1.442695
      %v7275 = vpow.pop %v7274
      %v7276 = vmul.f32 %v7193, 1.442695
      %v7277 = vpow.pop %v7276
      %v7278 = vmul.f32 %v7194, 1.442695
      %v7279 = vpow.pop %v7278
      %v7280 = vmul.f32 %v7195, 1.442695
      %v7281 = vpow.pop %v7280
      %v7282 = vmul.f32 %v7196, 1.442695
      %v7283 = vpow.pop %v7282
      %v7284 = vmul.f32 %v7197, 1.442695
      %v7285 = vpow.pop %v7284
      %v7286 = vmul.f32 %v7198, 1.442695
      %v7287 = vpow.pop %v7286
      %v7288 = vmul.f32 %v7199, 1.442695
      %v7289 = vpow.pop %v7288
      %v7290 = vmul.f32 %v7200, 1.442695
      %v7291 = vpow.pop %v7290
      %v7292 = vmul.f32 %v7201, 1.442695
      %v7293 = vpow.pop %v7292
      %v7294 = vmul.f32 %v7202, 1.442695
      %v7295 = vpow.pop %v7294
      %v7296 = vmul.f32 %v7203, 1.442695
      %v7297 = vpow.pop %v7296
      %v7298 = vmul.f32 %v7204, 1.442695
      %v7299 = vpow.pop %v7298
      %v7300 = vmul.f32 %v7205, 1.442695
      %v7301 = vpow.pop %v7300
      %v7302 = vmul.f32 %v7206, 1.442695
      %v7303 = vpow.pop %v7302
      %v7304 = vmul.f32 %v7207, 1.442695
      %v7305 = vpow.pop %v7304
      %v7306 = vmul.f32 %v7208, 1.442695
      %v7307 = vpow.pop %v7306
      %v7308 = vmul.f32 %v7209, 1.442695
      %v7309 = vpow.pop %v7308
      %v7310 = vmul.f32 %v7210, 1.442695
      %v7311 = vpow.pop %v7310
      %v7312 = vmul.f32 %v7211, 1.442695
      %v7313 = vpow.pop %v7312
      %v7314 = vmul.f32 %v7212, 1.442695
      %v7315 = vpow.pop %v7314
      %v7316 = vmul.f32 %v7213, 1.442695
      %v7317 = vpow.pop %v7316
      %v7318 = vmul.f32 %v7214, 1.442695
      %v7319 = vpow.pop %v7318
      %v7320 = vmul.f32 %v7215, 1.442695
      %v7321 = vpow.pop %v7320
      %v7322 = vmul.f32 %v7216, 1.442695
      %v7323 = vpow.pop %v7322
      %v7324 = vmul.f32 %v7217, 1.442695
      %v7325 = vpow.pop %v7324
      %v7326 = vmul.f32 %v7218, 1.442695
      %v7327 = vpow.pop %v7326
      %v7328 = vmul.f32 %v7219, 1.442695
      %v7329 = vpow.pop %v7328
      %v7330 = vmul.f32 %v7220, 1.442695
      %v7331 = vpow.pop %v7330
      %v7332 = vmul.f32 %v7221, 1.442695
      %v7333 = vpow.pop %v7332
      %v7334 = vmul.f32 %v7222, 1.442695
      %v7335 = vpow.pop %v7334
      %v7336 = vmul.f32 %v7223, 1.442695
      %v7337 = vpow.pop %v7336
      %v7338 = vmul.f32 %v7224, 1.442695
      %v7339 = vpow.pop %v7338
      %v7340 = vmul.f32 %v7225, 1.442695
      %v7341 = vpow.pop %v7340
      %v7342 = vmul.f32 %v7226, 1.442695
      %v7343 = vpow.pop %v7342
      %v7344 = vmul.f32 %v7227, 1.442695
      %v7345 = vpow.pop %v7344
      %v7346 = vmul.f32 %v7228, 1.442695
      %v7347 = vpow.pop %v7346
      %v7348 = vmul.f32 %v7229, 1.442695
      %v7349 = vpow.pop %v7348
      %v7350 = vmul.f32 %v7230, 1.442695
      %v7351 = vpow.pop %v7350
      %v7352 = vmul.f32 %v7231, 1.442695
      %v7353 = vpow.pop %v7352
      %v7354 = vmul.f32 %v7232, 1.442695
      %v7355 = vpow.pop %v7354
      %v7356 = vmul.f32 %v7233, 1.442695
      %v7357 = vpow.pop %v7356
      %v7358 = vmul.f32 %v7234, 1.442695
      %v7359 = vpow.pop %v7358
      %v7360 = vmul.f32 %v7235, 1.442695
      %v7361 = vpow.pop %v7360
      %v7362 = vmul.f32 %v7236, 1.442695
      %v7363 = vpow.pop %v7362
      %v7364 = vmul.f32 %v7237, 1.442695
      %v7365 = vpow.pop %v7364
      %v7366 = vsel %vm1807, %v7239, 0.0
      %7367 = vadd.xlane.f32.xlu0 %v7366
      %v7368 = vpop.xlane.xlu0 %7367
      %v7369 = vsel %vm1807, %v7241, 0.0
      %7370 = vadd.xlane.f32.xlu0 %v7369
      %v7371 = vpop.xlane.xlu0 %7370
      %v7372 = vsel %vm1807, %v7243, 0.0
      %7373 = vadd.xlane.f32.xlu0 %v7372
      %v7374 = vpop.xlane.xlu0 %7373
      %v7375 = vsel %vm1807, %v7245, 0.0
      %7376 = vadd.xlane.f32.xlu0 %v7375
      %v7377 = vpop.xlane.xlu0 %7376
      %v7378 = vsel %vm1807, %v7247, 0.0
      %7379 = vadd.xlane.f32.xlu0 %v7378
      %v7380 = vpop.xlane.xlu0 %7379
      %v7381 = vsel %vm1807, %v7249, 0.0
      %7382 = vadd.xlane.f32.xlu0 %v7381
      %v7383 = vpop.xlane.xlu0 %7382
      %v7384 = vsel %vm1807, %v7251, 0.0
      %7385 = vadd.xlane.f32.xlu0 %v7384
      %v7386 = vpop.xlane.xlu0 %7385
      %v7387 = vsel %vm1807, %v7253, 0.0
      %7388 = vadd.xlane.f32.xlu0 %v7387
      %v7389 = vpop.xlane.xlu0 %7388
      %v7390 = vsel %vm1807, %v7255, 0.0
      %7391 = vadd.xlane.f32.xlu0 %v7390
      %v7392 = vpop.xlane.xlu0 %7391
      %v7393 = vsel %vm1807, %v7257, 0.0
      %7394 = vadd.xlane.f32.xlu0 %v7393
      %v7395 = vpop.xlane.xlu0 %7394
      %v7396 = vsel %vm1807, %v7259, 0.0
      %7397 = vadd.xlane.f32.xlu0 %v7396
      %v7398 = vpop.xlane.xlu0 %7397
      %v7399 = vsel %vm1807, %v7261, 0.0
      %7400 = vadd.xlane.f32.xlu0 %v7399
      %v7401 = vpop.xlane.xlu0 %7400
      %v7402 = vsel %vm1807, %v7263, 0.0
      %7403 = vadd.xlane.f32.xlu0 %v7402
      %v7404 = vpop.xlane.xlu0 %7403
      %v7405 = vsel %vm1807, %v7265, 0.0
      %7406 = vadd.xlane.f32.xlu0 %v7405
      %v7407 = vpop.xlane.xlu0 %7406
      %v7408 = vsel %vm1807, %v7267, 0.0
      %7409 = vadd.xlane.f32.xlu0 %v7408
      %v7410 = vpop.xlane.xlu0 %7409
      %v7411 = vsel %vm1807, %v7269, 0.0
      %7412 = vadd.xlane.f32.xlu0 %v7411
      %v7413 = vpop.xlane.xlu0 %7412
      %v7414 = vsel %vm1807, %v7271, 0.0
      %7415 = vadd.xlane.f32.xlu0 %v7414
      %v7416 = vpop.xlane.xlu0 %7415
      %v7417 = vsel %vm1807, %v7273, 0.0
      %7418 = vadd.xlane.f32.xlu0 %v7417
      %v7419 = vpop.xlane.xlu0 %7418
      %v7420 = vsel %vm1807, %v7275, 0.0
      %7421 = vadd.xlane.f32.xlu0 %v7420
      %v7422 = vpop.xlane.xlu0 %7421
      %v7423 = vsel %vm1807, %v7277, 0.0
      %7424 = vadd.xlane.f32.xlu0 %v7423
      %v7425 = vpop.xlane.xlu0 %7424
      %v7426 = vsel %vm1807, %v7279, 0.0
      %7427 = vadd.xlane.f32.xlu0 %v7426
      %v7428 = vpop.xlane.xlu0 %7427
      %v7429 = vsel %vm1807, %v7281, 0.0
      %7430 = vadd.xlane.f32.xlu0 %v7429
      %v7431 = vpop.xlane.xlu0 %7430
      %v7432 = vsel %vm1807, %v7283, 0.0
      %7433 = vadd.xlane.f32.xlu0 %v7432
      %v7434 = vpop.xlane.xlu0 %7433
      %v7435 = vsel %vm1807, %v7285, 0.0
      %7436 = vadd.xlane.f32.xlu0 %v7435
      %v7437 = vpop.xlane.xlu0 %7436
      %v7438 = vsel %vm1807, %v7287, 0.0
      %7439 = vadd.xlane.f32.xlu0 %v7438
      %v7440 = vpop.xlane.xlu0 %7439
      %v7441 = vsel %vm1807, %v7289, 0.0
      %7442 = vadd.xlane.f32.xlu0 %v7441
      %v7443 = vpop.xlane.xlu0 %7442
      %v7444 = vsel %vm1807, %v7291, 0.0
      %7445 = vadd.xlane.f32.xlu0 %v7444
      %v7446 = vpop.xlane.xlu0 %7445
      %v7447 = vsel %vm1807, %v7293, 0.0
      %7448 = vadd.xlane.f32.xlu0 %v7447
      %v7449 = vpop.xlane.xlu0 %7448
      %v7450 = vsel %vm1807, %v7295, 0.0
      %7451 = vadd.xlane.f32.xlu0 %v7450
      %v7452 = vpop.xlane.xlu0 %7451
      %v7453 = vsel %vm1807, %v7297, 0.0
      %7454 = vadd.xlane.f32.xlu0 %v7453
      %v7455 = vpop.xlane.xlu0 %7454
      %v7456 = vsel %vm1807, %v7299, 0.0
      %7457 = vadd.xlane.f32.xlu0 %v7456
      %v7458 = vpop.xlane.xlu0 %7457
      %v7459 = vsel %vm1807, %v7301, 0.0
      %7460 = vadd.xlane.f32.xlu0 %v7459
      %v7461 = vpop.xlane.xlu0 %7460
      %v7462 = vsel %vm1807, %v7303, 0.0
      %7463 = vadd.xlane.f32.xlu0 %v7462
      %v7464 = vpop.xlane.xlu0 %7463
      %v7465 = vsel %vm1807, %v7305, 0.0
      %7466 = vadd.xlane.f32.xlu0 %v7465
      %v7467 = vpop.xlane.xlu0 %7466
      %v7468 = vsel %vm1807, %v7307, 0.0
      %7469 = vadd.xlane.f32.xlu0 %v7468
      %v7470 = vpop.xlane.xlu0 %7469
      %v7471 = vsel %vm1807, %v7309, 0.0
      %7472 = vadd.xlane.f32.xlu0 %v7471
      %v7473 = vpop.xlane.xlu0 %7472
      %v7474 = vsel %vm1807, %v7311, 0.0
      %7475 = vadd.xlane.f32.xlu0 %v7474
      %v7476 = vpop.xlane.xlu0 %7475
      %v7477 = vsel %vm1807, %v7313, 0.0
      %7478 = vadd.xlane.f32.xlu0 %v7477
      %v7479 = vpop.xlane.xlu0 %7478
      %v7480 = vsel %vm1807, %v7315, 0.0
      %7481 = vadd.xlane.f32.xlu0 %v7480
      %v7482 = vpop.xlane.xlu0 %7481
      %v7483 = vsel %vm1807, %v7317, 0.0
      %7484 = vadd.xlane.f32.xlu0 %v7483
      %v7485 = vpop.xlane.xlu0 %7484
      %v7486 = vsel %vm1807, %v7319, 0.0
      %7487 = vadd.xlane.f32.xlu0 %v7486
      %v7488 = vpop.xlane.xlu0 %7487
      %v7489 = vsel %vm1807, %v7321, 0.0
      %7490 = vadd.xlane.f32.xlu0 %v7489
      %v7491 = vpop.xlane.xlu0 %7490
      %v7492 = vsel %vm1807, %v7323, 0.0
      %7493 = vadd.xlane.f32.xlu0 %v7492
      %v7494 = vpop.xlane.xlu0 %7493
      %v7495 = vsel %vm1807, %v7325, 0.0
      %7496 = vadd.xlane.f32.xlu0 %v7495
      %v7497 = vpop.xlane.xlu0 %7496
      %v7498 = vsel %vm1807, %v7327, 0.0
      %7499 = vadd.xlane.f32.xlu0 %v7498
      %v7500 = vpop.xlane.xlu0 %7499
      %v7501 = vsel %vm1807, %v7329, 0.0
      %7502 = vadd.xlane.f32.xlu0 %v7501
      %v7503 = vpop.xlane.xlu0 %7502
      %v7504 = vsel %vm1807, %v7331, 0.0
      %7505 = vadd.xlane.f32.xlu0 %v7504
      %v7506 = vpop.xlane.xlu0 %7505
      %v7507 = vsel %vm1807, %v7333, 0.0
      %7508 = vadd.xlane.f32.xlu0 %v7507
      %v7509 = vpop.xlane.xlu0 %7508
      %v7510 = vsel %vm1807, %v7335, 0.0
      %7511 = vadd.xlane.f32.xlu0 %v7510
      %v7512 = vpop.xlane.xlu0 %7511
      %v7513 = vsel %vm1807, %v7337, 0.0
      %7514 = vadd.xlane.f32.xlu0 %v7513
      %v7515 = vpop.xlane.xlu0 %7514
      %v7516 = vsel %vm1807, %v7339, 0.0
      %7517 = vadd.xlane.f32.xlu0 %v7516
      %v7518 = vpop.xlane.xlu0 %7517
      %v7519 = vsel %vm1807, %v7341, 0.0
      %7520 = vadd.xlane.f32.xlu0 %v7519
      %v7521 = vpop.xlane.xlu0 %7520
      %v7522 = vsel %vm1807, %v7343, 0.0
      %7523 = vadd.xlane.f32.xlu0 %v7522
      %v7524 = vpop.xlane.xlu0 %7523
      %v7525 = vsel %vm1807, %v7345, 0.0
      %7526 = vadd.xlane.f32.xlu0 %v7525
      %v7527 = vpop.xlane.xlu0 %7526
      %v7528 = vsel %vm1807, %v7347, 0.0
      %7529 = vadd.xlane.f32.xlu0 %v7528
      %v7530 = vpop.xlane.xlu0 %7529
      %v7531 = vsel %vm1807, %v7349, 0.0
      %7532 = vadd.xlane.f32.xlu0 %v7531
      %v7533 = vpop.xlane.xlu0 %7532
      %v7534 = vsel %vm1807, %v7351, 0.0
      %7535 = vadd.xlane.f32.xlu0 %v7534
      %v7536 = vpop.xlane.xlu0 %7535
      %v7537 = vsel %vm1807, %v7353, 0.0
      %7538 = vadd.xlane.f32.xlu0 %v7537
      %v7539 = vpop.xlane.xlu0 %7538
      %v7540 = vsel %vm1807, %v7355, 0.0
      %7541 = vadd.xlane.f32.xlu0 %v7540
      %v7542 = vpop.xlane.xlu0 %7541
      %v7543 = vsel %vm1807, %v7357, 0.0
      %7544 = vadd.xlane.f32.xlu0 %v7543
      %v7545 = vpop.xlane.xlu0 %7544
      %v7546 = vsel %vm1807, %v7359, 0.0
      %7547 = vadd.xlane.f32.xlu0 %v7546
      %v7548 = vpop.xlane.xlu0 %7547
      %v7549 = vsel %vm1807, %v7361, 0.0
      %7550 = vadd.xlane.f32.xlu0 %v7549
      %v7551 = vpop.xlane.xlu0 %7550
      %v7552 = vsel %vm1807, %v7363, 0.0
      %7553 = vadd.xlane.f32.xlu0 %v7552
      %v7554 = vpop.xlane.xlu0 %7553
      %v7555 = vsel %vm1807, %v7365, 0.0
      %7556 = vadd.xlane.f32.xlu0 %v7555
      %v7557 = vpop.xlane.xlu0 %7556
      %v7558 = vrcp.pop %v7368
      %v7559 = vrcp.pop %v7371
      %v7560 = vrcp.pop %v7374
      %v7561 = vrcp.pop %v7377
      %v7562 = vrcp.pop %v7380
      %v7563 = vrcp.pop %v7383
      %v7564 = vrcp.pop %v7386
      %v7565 = vrcp.pop %v7389
      %v7566 = vrcp.pop %v7392
      %v7567 = vrcp.pop %v7395
      %v7568 = vrcp.pop %v7398
      %v7569 = vrcp.pop %v7401
      %v7570 = vrcp.pop %v7404
      %v7571 = vrcp.pop %v7407
      %v7572 = vrcp.pop %v7410
      %v7573 = vrcp.pop %v7413
      %v7574 = vrcp.pop %v7416
      %v7575 = vrcp.pop %v7419
      %v7576 = vrcp.pop %v7422
      %v7577 = vrcp.pop %v7425
      %v7578 = vrcp.pop %v7428
      %v7579 = vrcp.pop %v7431
      %v7580 = vrcp.pop %v7434
      %v7581 = vrcp.pop %v7437
      %v7582 = vrcp.pop %v7440
      %v7583 = vrcp.pop %v7443
      %v7584 = vrcp.pop %v7446
      %v7585 = vrcp.pop %v7449
      %v7586 = vrcp.pop %v7452
      %v7587 = vrcp.pop %v7455
      %v7588 = vrcp.pop %v7458
      %v7589 = vrcp.pop %v7461
      %v7590 = vrcp.pop %v7464
      %v7591 = vrcp.pop %v7467
      %v7592 = vrcp.pop %v7470
      %v7593 = vrcp.pop %v7473
      %v7594 = vrcp.pop %v7476
      %v7595 = vrcp.pop %v7479
      %v7596 = vrcp.pop %v7482
      %v7597 = vrcp.pop %v7485
      %v7598 = vrcp.pop %v7488
      %v7599 = vrcp.pop %v7491
      %v7600 = vrcp.pop %v7494
      %v7601 = vrcp.pop %v7497
      %v7602 = vrcp.pop %v7500
      %v7603 = vrcp.pop %v7503
      %v7604 = vrcp.pop %v7506
      %v7605 = vrcp.pop %v7509
      %v7606 = vrcp.pop %v7512
      %v7607 = vrcp.pop %v7515
      %v7608 = vrcp.pop %v7518
      %v7609 = vrcp.pop %v7521
      %v7610 = vrcp.pop %v7524
      %v7611 = vrcp.pop %v7527
      %v7612 = vrcp.pop %v7530
      %v7613 = vrcp.pop %v7533
      %v7614 = vrcp.pop %v7536
      %v7615 = vrcp.pop %v7539
      %v7616 = vrcp.pop %v7542
      %v7617 = vrcp.pop %v7545
      %v7618 = vrcp.pop %v7548
      %v7619 = vrcp.pop %v7551
      %v7620 = vrcp.pop %v7554
      %v7621 = vrcp.pop %v7557
      %v7622 = vpack.c.bf16 %v7239, %v7239
      %v7623 = vpack.c.bf16 %v7241, %v7241
      %v7624 = vpack.c.bf16 %v7243, %v7243
      %v7625 = vpack.c.bf16 %v7245, %v7245
      %v7626 = vpack.c.bf16 %v7247, %v7247
      %v7627 = vpack.c.bf16 %v7249, %v7249
      %v7628 = vpack.c.bf16 %v7251, %v7251
      %v7629 = vpack.c.bf16 %v7253, %v7253
      %v7630 = vpack.c.bf16 %v7255, %v7255
      %v7631 = vpack.c.bf16 %v7257, %v7257
      %v7632 = vpack.c.bf16 %v7259, %v7259
      %v7633 = vpack.c.bf16 %v7261, %v7261
      %v7634 = vpack.c.bf16 %v7263, %v7263
      %v7635 = vpack.c.bf16 %v7265, %v7265
      %v7636 = vpack.c.bf16 %v7267, %v7267
      %v7637 = vpack.c.bf16 %v7269, %v7269
      %v7638 = vpack.c.bf16 %v7271, %v7271
      %v7639 = vpack.c.bf16 %v7273, %v7273
      %v7640 = vpack.c.bf16 %v7275, %v7275
      %v7641 = vpack.c.bf16 %v7277, %v7277
      %v7642 = vpack.c.bf16 %v7279, %v7279
      %v7643 = vpack.c.bf16 %v7281, %v7281
      %v7644 = vpack.c.bf16 %v7283, %v7283
      %v7645 = vpack.c.bf16 %v7285, %v7285
      %v7646 = vpack.c.bf16 %v7287, %v7287
      %v7647 = vpack.c.bf16 %v7289, %v7289
      %v7648 = vpack.c.bf16 %v7291, %v7291
      %v7649 = vpack.c.bf16 %v7293, %v7293
      %v7650 = vpack.c.bf16 %v7295, %v7295
      %v7651 = vpack.c.bf16 %v7297, %v7297
      %v7652 = vpack.c.bf16 %v7299, %v7299
      %v7653 = vpack.c.bf16 %v7301, %v7301
      %v7654 = vpack.c.bf16 %v7303, %v7303
      %v7655 = vpack.c.bf16 %v7305, %v7305
      %v7656 = vpack.c.bf16 %v7307, %v7307
      %v7657 = vpack.c.bf16 %v7309, %v7309
      %v7658 = vpack.c.bf16 %v7311, %v7311
      %v7659 = vpack.c.bf16 %v7313, %v7313
      %v7660 = vpack.c.bf16 %v7315, %v7315
      %v7661 = vpack.c.bf16 %v7317, %v7317
      %v7662 = vpack.c.bf16 %v7319, %v7319
      %v7663 = vpack.c.bf16 %v7321, %v7321
      %v7664 = vpack.c.bf16 %v7323, %v7323
      %v7665 = vpack.c.bf16 %v7325, %v7325
      %v7666 = vpack.c.bf16 %v7327, %v7327
      %v7667 = vpack.c.bf16 %v7329, %v7329
      %v7668 = vpack.c.bf16 %v7331, %v7331
      %v7669 = vpack.c.bf16 %v7333, %v7333
      %v7670 = vpack.c.bf16 %v7335, %v7335
      %v7671 = vpack.c.bf16 %v7337, %v7337
      %v7672 = vpack.c.bf16 %v7339, %v7339
      %v7673 = vpack.c.bf16 %v7341, %v7341
      %v7674 = vpack.c.bf16 %v7343, %v7343
      %v7675 = vpack.c.bf16 %v7345, %v7345
      %v7676 = vpack.c.bf16 %v7347, %v7347
      %v7677 = vpack.c.bf16 %v7349, %v7349
      %v7678 = vpack.c.bf16 %v7351, %v7351
      %v7679 = vpack.c.bf16 %v7353, %v7353
      %v7680 = vpack.c.bf16 %v7355, %v7355
      %v7681 = vpack.c.bf16 %v7357, %v7357
      %v7682 = vpack.c.bf16 %v7359, %v7359
      %v7683 = vpack.c.bf16 %v7361, %v7361
      %v7684 = vpack.c.bf16 %v7363, %v7363
      %v7685 = vpack.c.bf16 %v7365, %v7365
      %v7686 = vrot.slane %v950, 4
      %v7687 = vrot.slane %v951, 4
      %v7688 = vrot.slane %v952, 4
      %v7689 = vrot.slane %v953, 4
      %v7690 = vrot.slane %v954, 4
      %v7691 = vrot.slane %v955, 4
      %v7692 = vrot.slane %v956, 4
      %v7693 = vrot.slane %v957, 4
      %v7702 = vunpack.c.l.b16 %v7622
      %v7703 = vunpack.c.l.b16 %v7623
      %v7704 = vunpack.c.l.b16 %v7624
      %v7705 = vunpack.c.l.b16 %v7625
      %v7706 = vunpack.c.l.b16 %v7626
      %v7707 = vunpack.c.l.b16 %v7627
      %v7708 = vunpack.c.l.b16 %v7628
      %v7709 = vunpack.c.l.b16 %v7629
      %v7710 = vpack.c.b16 %v7703, %v7702
      %v7711 = vpack.c.b16 %v7705, %v7704
      %v7712 = vpack.c.b16 %v7707, %v7706
      %v7713 = vpack.c.b16 %v7709, %v7708
      %v7714 = vunpack.c.l.b16 %v7686
      %v7715 = vunpack.c.l.b16 %v7687
      %v7716 = vunpack.c.l.b16 %v7688
      %v7717 = vunpack.c.l.b16 %v7689
      %v7718 = vunpack.c.l.b16 %v7690
      %v7719 = vunpack.c.l.b16 %v7691
      %v7720 = vunpack.c.l.b16 %v7692
      %v7721 = vunpack.c.l.b16 %v7693
      %v7722 = vpack.c.b16 %v7715, %v7714
      %v7723 = vpack.c.b16 %v7717, %v7716
      %v7724 = vpack.c.b16 %v7719, %v7718
      %v7725 = vpack.c.b16 %v7721, %v7720
      %v7731 = vsel %vm1807, %v7710, 0
      %v7734 = vsel %vm1807, %v7711, 0
      %v7737 = vsel %vm1807, %v7712, 0
      %v7740 = vsel %vm1807, %v7713, 0
      %7742 = vmatpush.bf16.msra.mxu0 0
      %7743 = vmatpush.bf16.msra.mxu0 0
      %7744 = vmatpush.bf16.msra.mxu0 0
      %7745 = vmatpush.bf16.msra.mxu0 0
      %7746 = vmatpush.bf16.msra.mxu0 %v7725
      %7747 = vmatpush.bf16.msra.mxu0 %v7724
      %7748 = vmatpush.bf16.msra.mxu0 %v7723
      %7749 = vmatpush.bf16.msra.mxu0 %v7722
      %7750 = vmatmul.bf16.gmra.mxu0 %v7731
      %v7751 = vpop.f32.mrf.mxu0
      %v7752 = vadd.f32 0.0, %v7751
      %v7753 = vpop.f32.mrf.mxu0
      %v7754 = vadd.f32 0.0, %v7753
      %7755 = vmatmul.bf16.gmra.mxu0 %v7734
      %v7756 = vpop.f32.mrf.mxu0
      %v7757 = vadd.f32 0.0, %v7756
      %v7758 = vpop.f32.mrf.mxu0
      %v7759 = vadd.f32 0.0, %v7758
      %7760 = vmatmul.bf16.gmra.mxu0 %v7737
      %v7761 = vpop.f32.mrf.mxu0
      %v7762 = vadd.f32 0.0, %v7761
      %v7763 = vpop.f32.mrf.mxu0
      %v7764 = vadd.f32 0.0, %v7763
      %7765 = vmatmul.bf16.gmra.mxu0 %v7740
      %v7766 = vpop.f32.mrf.mxu0
      %v7767 = vadd.f32 0.0, %v7766
      %v7768 = vpop.f32.mrf.mxu0
      %v7769 = vadd.f32 0.0, %v7768
      %7770 = vdwg.mxu0
      %v7771 = vrot.slane %v958, 4
      %v7772 = vrot.slane %v959, 4
      %v7773 = vrot.slane %v960, 4
      %v7774 = vrot.slane %v961, 4
      %v7775 = vrot.slane %v962, 4
      %v7776 = vrot.slane %v963, 4
      %v7777 = vrot.slane %v964, 4
      %v7778 = vrot.slane %v965, 4
      %v7787 = vunpack.c.l.b16 %v7630
      %v7788 = vunpack.c.l.b16 %v7631
      %v7789 = vunpack.c.l.b16 %v7632
      %v7790 = vunpack.c.l.b16 %v7633
      %v7791 = vunpack.c.l.b16 %v7634
      %v7792 = vunpack.c.l.b16 %v7635
      %v7793 = vunpack.c.l.b16 %v7636
      %v7794 = vunpack.c.l.b16 %v7637
      %v7795 = vpack.c.b16 %v7788, %v7787
      %v7796 = vpack.c.b16 %v7790, %v7789
      %v7797 = vpack.c.b16 %v7792, %v7791
      %v7798 = vpack.c.b16 %v7794, %v7793
      %v7799 = vunpack.c.l.b16 %v7771
      %v7800 = vunpack.c.l.b16 %v7772
      %v7801 = vunpack.c.l.b16 %v7773
      %v7802 = vunpack.c.l.b16 %v7774
      %v7803 = vunpack.c.l.b16 %v7775
      %v7804 = vunpack.c.l.b16 %v7776
      %v7805 = vunpack.c.l.b16 %v7777
      %v7806 = vunpack.c.l.b16 %v7778
      %v7807 = vpack.c.b16 %v7800, %v7799
      %v7808 = vpack.c.b16 %v7802, %v7801
      %v7809 = vpack.c.b16 %v7804, %v7803
      %v7810 = vpack.c.b16 %v7806, %v7805
      %v7816 = vsel %vm1807, %v7795, 0
      %v7819 = vsel %vm1807, %v7796, 0
      %v7822 = vsel %vm1807, %v7797, 0
      %v7825 = vsel %vm1807, %v7798, 0
      %7827 = vmatpush.bf16.msra.mxu0 0
      %7828 = vmatpush.bf16.msra.mxu0 0
      %7829 = vmatpush.bf16.msra.mxu0 0
      %7830 = vmatpush.bf16.msra.mxu0 0
      %7831 = vmatpush.bf16.msra.mxu0 %v7810
      %7832 = vmatpush.bf16.msra.mxu0 %v7809
      %7833 = vmatpush.bf16.msra.mxu0 %v7808
      %7834 = vmatpush.bf16.msra.mxu0 %v7807
      %7835 = vmatmul.bf16.gmra.mxu0 %v7816
      %v7836 = vpop.f32.mrf.mxu0
      %v7837 = vadd.f32 0.0, %v7836
      %v7838 = vpop.f32.mrf.mxu0
      %v7839 = vadd.f32 0.0, %v7838
      %7840 = vmatmul.bf16.gmra.mxu0 %v7819
      %v7841 = vpop.f32.mrf.mxu0
      %v7842 = vadd.f32 0.0, %v7841
      %v7843 = vpop.f32.mrf.mxu0
      %v7844 = vadd.f32 0.0, %v7843
      %7845 = vmatmul.bf16.gmra.mxu0 %v7822
      %v7846 = vpop.f32.mrf.mxu0
      %v7847 = vadd.f32 0.0, %v7846
      %v7848 = vpop.f32.mrf.mxu0
      %v7849 = vadd.f32 0.0, %v7848
      %7850 = vmatmul.bf16.gmra.mxu0 %v7825
      %v7851 = vpop.f32.mrf.mxu0
      %v7852 = vadd.f32 0.0, %v7851
      %v7853 = vpop.f32.mrf.mxu0
      %v7854 = vadd.f32 0.0, %v7853
      %7855 = vdwg.mxu0
      %v7856 = vrot.slane %v966, 4
      %v7857 = vrot.slane %v967, 4
      %v7858 = vrot.slane %v968, 4
      %v7859 = vrot.slane %v969, 4
      %v7860 = vrot.slane %v970, 4
      %v7861 = vrot.slane %v971, 4
      %v7862 = vrot.slane %v972, 4
      %v7863 = vrot.slane %v973, 4
      %v7872 = vunpack.c.l.b16 %v7638
      %v7873 = vunpack.c.l.b16 %v7639
      %v7874 = vunpack.c.l.b16 %v7640
      %v7875 = vunpack.c.l.b16 %v7641
      %v7876 = vunpack.c.l.b16 %v7642
      %v7877 = vunpack.c.l.b16 %v7643
      %v7878 = vunpack.c.l.b16 %v7644
      %v7879 = vunpack.c.l.b16 %v7645
      %v7880 = vpack.c.b16 %v7873, %v7872
      %v7881 = vpack.c.b16 %v7875, %v7874
      %v7882 = vpack.c.b16 %v7877, %v7876
      %v7883 = vpack.c.b16 %v7879, %v7878
      %v7884 = vunpack.c.l.b16 %v7856
      %v7885 = vunpack.c.l.b16 %v7857
      %v7886 = vunpack.c.l.b16 %v7858
      %v7887 = vunpack.c.l.b16 %v7859
      %v7888 = vunpack.c.l.b16 %v7860
      %v7889 = vunpack.c.l.b16 %v7861
      %v7890 = vunpack.c.l.b16 %v7862
      %v7891 = vunpack.c.l.b16 %v7863
      %v7892 = vpack.c.b16 %v7885, %v7884
      %v7893 = vpack.c.b16 %v7887, %v7886
      %v7894 = vpack.c.b16 %v7889, %v7888
      %v7895 = vpack.c.b16 %v7891, %v7890
      %v7901 = vsel %vm1807, %v7880, 0
      %v7904 = vsel %vm1807, %v7881, 0
      %v7907 = vsel %vm1807, %v7882, 0
      %v7910 = vsel %vm1807, %v7883, 0
      %7912 = vmatpush.bf16.msra.mxu0 0
      %7913 = vmatpush.bf16.msra.mxu0 0
      %7914 = vmatpush.bf16.msra.mxu0 0
      %7915 = vmatpush.bf16.msra.mxu0 0
      %7916 = vmatpush.bf16.msra.mxu0 %v7895
      %7917 = vmatpush.bf16.msra.mxu0 %v7894
      %7918 = vmatpush.bf16.msra.mxu0 %v7893
      %7919 = vmatpush.bf16.msra.mxu0 %v7892
      %7920 = vmatmul.bf16.gmra.mxu0 %v7901
      %v7921 = vpop.f32.mrf.mxu0
      %v7922 = vadd.f32 0.0, %v7921
      %v7923 = vpop.f32.mrf.mxu0
      %v7924 = vadd.f32 0.0, %v7923
      %7925 = vmatmul.bf16.gmra.mxu0 %v7904
      %v7926 = vpop.f32.mrf.mxu0
      %v7927 = vadd.f32 0.0, %v7926
      %v7928 = vpop.f32.mrf.mxu0
      %v7929 = vadd.f32 0.0, %v7928
      %7930 = vmatmul.bf16.gmra.mxu0 %v7907
      %v7931 = vpop.f32.mrf.mxu0
      %v7932 = vadd.f32 0.0, %v7931
      %v7933 = vpop.f32.mrf.mxu0
      %v7934 = vadd.f32 0.0, %v7933
      %7935 = vmatmul.bf16.gmra.mxu0 %v7910
      %v7936 = vpop.f32.mrf.mxu0
      %v7937 = vadd.f32 0.0, %v7936
      %v7938 = vpop.f32.mrf.mxu0
      %v7939 = vadd.f32 0.0, %v7938
      %7940 = vdwg.mxu0
      %v7941 = vrot.slane %v974, 4
      %v7942 = vrot.slane %v975, 4
      %v7943 = vrot.slane %v976, 4
      %v7944 = vrot.slane %v977, 4
      %v7945 = vrot.slane %v978, 4
      %v7946 = vrot.slane %v979, 4
      %v7947 = vrot.slane %v980, 4
      %v7948 = vrot.slane %v981, 4
      %v7957 = vunpack.c.l.b16 %v7646
      %v7958 = vunpack.c.l.b16 %v7647
      %v7959 = vunpack.c.l.b16 %v7648
      %v7960 = vunpack.c.l.b16 %v7649
      %v7961 = vunpack.c.l.b16 %v7650
      %v7962 = vunpack.c.l.b16 %v7651
      %v7963 = vunpack.c.l.b16 %v7652
      %v7964 = vunpack.c.l.b16 %v7653
      %v7965 = vpack.c.b16 %v7958, %v7957
      %v7966 = vpack.c.b16 %v7960, %v7959
      %v7967 = vpack.c.b16 %v7962, %v7961
      %v7968 = vpack.c.b16 %v7964, %v7963
      %v7969 = vunpack.c.l.b16 %v7941
      %v7970 = vunpack.c.l.b16 %v7942
      %v7971 = vunpack.c.l.b16 %v7943
      %v7972 = vunpack.c.l.b16 %v7944
      %v7973 = vunpack.c.l.b16 %v7945
      %v7974 = vunpack.c.l.b16 %v7946
      %v7975 = vunpack.c.l.b16 %v7947
      %v7976 = vunpack.c.l.b16 %v7948
      %v7977 = vpack.c.b16 %v7970, %v7969
      %v7978 = vpack.c.b16 %v7972, %v7971
      %v7979 = vpack.c.b16 %v7974, %v7973
      %v7980 = vpack.c.b16 %v7976, %v7975
      %v7986 = vsel %vm1807, %v7965, 0
      %v7989 = vsel %vm1807, %v7966, 0
      %v7992 = vsel %vm1807, %v7967, 0
      %v7995 = vsel %vm1807, %v7968, 0
      %7997 = vmatpush.bf16.msra.mxu0 0
      %7998 = vmatpush.bf16.msra.mxu0 0
      %7999 = vmatpush.bf16.msra.mxu0 0
      %8000 = vmatpush.bf16.msra.mxu0 0
      %8001 = vmatpush.bf16.msra.mxu0 %v7980
      %8002 = vmatpush.bf16.msra.mxu0 %v7979
      %8003 = vmatpush.bf16.msra.mxu0 %v7978
      %8004 = vmatpush.bf16.msra.mxu0 %v7977
      %8005 = vmatmul.bf16.gmra.mxu0 %v7986
      %v8006 = vpop.f32.mrf.mxu0
      %v8007 = vadd.f32 0.0, %v8006
      %v8008 = vpop.f32.mrf.mxu0
      %v8009 = vadd.f32 0.0, %v8008
      %8010 = vmatmul.bf16.gmra.mxu0 %v7989
      %v8011 = vpop.f32.mrf.mxu0
      %v8012 = vadd.f32 0.0, %v8011
      %v8013 = vpop.f32.mrf.mxu0
      %v8014 = vadd.f32 0.0, %v8013
      %8015 = vmatmul.bf16.gmra.mxu0 %v7992
      %v8016 = vpop.f32.mrf.mxu0
      %v8017 = vadd.f32 0.0, %v8016
      %v8018 = vpop.f32.mrf.mxu0
      %v8019 = vadd.f32 0.0, %v8018
      %8020 = vmatmul.bf16.gmra.mxu0 %v7995
      %v8021 = vpop.f32.mrf.mxu0
      %v8022 = vadd.f32 0.0, %v8021
      %v8023 = vpop.f32.mrf.mxu0
      %v8024 = vadd.f32 0.0, %v8023
      %8025 = vdwg.mxu0
      %v8026 = vrot.slane %v982, 4
      %v8027 = vrot.slane %v983, 4
      %v8028 = vrot.slane %v984, 4
      %v8029 = vrot.slane %v985, 4
      %v8030 = vrot.slane %v986, 4
      %v8031 = vrot.slane %v987, 4
      %v8032 = vrot.slane %v988, 4
      %v8033 = vrot.slane %v989, 4
      %v8042 = vunpack.c.l.b16 %v7654
      %v8043 = vunpack.c.l.b16 %v7655
      %v8044 = vunpack.c.l.b16 %v7656
      %v8045 = vunpack.c.l.b16 %v7657
      %v8046 = vunpack.c.l.b16 %v7658
      %v8047 = vunpack.c.l.b16 %v7659
      %v8048 = vunpack.c.l.b16 %v7660
      %v8049 = vunpack.c.l.b16 %v7661
      %v8050 = vpack.c.b16 %v8043, %v8042
      %v8051 = vpack.c.b16 %v8045, %v8044
      %v8052 = vpack.c.b16 %v8047, %v8046
      %v8053 = vpack.c.b16 %v8049, %v8048
      %v8054 = vunpack.c.l.b16 %v8026
      %v8055 = vunpack.c.l.b16 %v8027
      %v8056 = vunpack.c.l.b16 %v8028
      %v8057 = vunpack.c.l.b16 %v8029
      %v8058 = vunpack.c.l.b16 %v8030
      %v8059 = vunpack.c.l.b16 %v8031
      %v8060 = vunpack.c.l.b16 %v8032
      %v8061 = vunpack.c.l.b16 %v8033
      %v8062 = vpack.c.b16 %v8055, %v8054
      %v8063 = vpack.c.b16 %v8057, %v8056
      %v8064 = vpack.c.b16 %v8059, %v8058
      %v8065 = vpack.c.b16 %v8061, %v8060
      %v8071 = vsel %vm1807, %v8050, 0
      %v8074 = vsel %vm1807, %v8051, 0
      %v8077 = vsel %vm1807, %v8052, 0
      %v8080 = vsel %vm1807, %v8053, 0
      %8082 = vmatpush.bf16.msra.mxu0 0
      %8083 = vmatpush.bf16.msra.mxu0 0
      %8084 = vmatpush.bf16.msra.mxu0 0
      %8085 = vmatpush.bf16.msra.mxu0 0
      %8086 = vmatpush.bf16.msra.mxu0 %v8065
      %8087 = vmatpush.bf16.msra.mxu0 %v8064
      %8088 = vmatpush.bf16.msra.mxu0 %v8063
      %8089 = vmatpush.bf16.msra.mxu0 %v8062
      %8090 = vmatmul.bf16.gmra.mxu0 %v8071
      %v8091 = vpop.f32.mrf.mxu0
      %v8092 = vadd.f32 0.0, %v8091
      %v8093 = vpop.f32.mrf.mxu0
      %v8094 = vadd.f32 0.0, %v8093
      %8095 = vmatmul.bf16.gmra.mxu0 %v8074
      %v8096 = vpop.f32.mrf.mxu0
      %v8097 = vadd.f32 0.0, %v8096
      %v8098 = vpop.f32.mrf.mxu0
      %v8099 = vadd.f32 0.0, %v8098
      %8100 = vmatmul.bf16.gmra.mxu0 %v8077
      %v8101 = vpop.f32.mrf.mxu0
      %v8102 = vadd.f32 0.0, %v8101
      %v8103 = vpop.f32.mrf.mxu0
      %v8104 = vadd.f32 0.0, %v8103
      %8105 = vmatmul.bf16.gmra.mxu0 %v8080
      %v8106 = vpop.f32.mrf.mxu0
      %v8107 = vadd.f32 0.0, %v8106
      %v8108 = vpop.f32.mrf.mxu0
      %v8109 = vadd.f32 0.0, %v8108
      %8110 = vdwg.mxu0
      %v8111 = vrot.slane %v990, 4
      %v8112 = vrot.slane %v991, 4
      %v8113 = vrot.slane %v992, 4
      %v8114 = vrot.slane %v993, 4
      %v8115 = vrot.slane %v994, 4
      %v8116 = vrot.slane %v995, 4
      %v8117 = vrot.slane %v996, 4
      %v8118 = vrot.slane %v997, 4
      %v8127 = vunpack.c.l.b16 %v7662
      %v8128 = vunpack.c.l.b16 %v7663
      %v8129 = vunpack.c.l.b16 %v7664
      %v8130 = vunpack.c.l.b16 %v7665
      %v8131 = vunpack.c.l.b16 %v7666
      %v8132 = vunpack.c.l.b16 %v7667
      %v8133 = vunpack.c.l.b16 %v7668
      %v8134 = vunpack.c.l.b16 %v7669
      %v8135 = vpack.c.b16 %v8128, %v8127
      %v8136 = vpack.c.b16 %v8130, %v8129
      %v8137 = vpack.c.b16 %v8132, %v8131
      %v8138 = vpack.c.b16 %v8134, %v8133
      %v8139 = vunpack.c.l.b16 %v8111
      %v8140 = vunpack.c.l.b16 %v8112
      %v8141 = vunpack.c.l.b16 %v8113
      %v8142 = vunpack.c.l.b16 %v8114
      %v8143 = vunpack.c.l.b16 %v8115
      %v8144 = vunpack.c.l.b16 %v8116
      %v8145 = vunpack.c.l.b16 %v8117
      %v8146 = vunpack.c.l.b16 %v8118
      %v8147 = vpack.c.b16 %v8140, %v8139
      %v8148 = vpack.c.b16 %v8142, %v8141
      %v8149 = vpack.c.b16 %v8144, %v8143
      %v8150 = vpack.c.b16 %v8146, %v8145
      %v8156 = vsel %vm1807, %v8135, 0
      %v8159 = vsel %vm1807, %v8136, 0
      %v8162 = vsel %vm1807, %v8137, 0
      %v8165 = vsel %vm1807, %v8138, 0
      %8167 = vmatpush.bf16.msra.mxu0 0
      %8168 = vmatpush.bf16.msra.mxu0 0
      %8169 = vmatpush.bf16.msra.mxu0 0
      %8170 = vmatpush.bf16.msra.mxu0 0
      %8171 = vmatpush.bf16.msra.mxu0 %v8150
      %8172 = vmatpush.bf16.msra.mxu0 %v8149
      %8173 = vmatpush.bf16.msra.mxu0 %v8148
      %8174 = vmatpush.bf16.msra.mxu0 %v8147
      %8175 = vmatmul.bf16.gmra.mxu0 %v8156
      %v8176 = vpop.f32.mrf.mxu0
      %v8177 = vadd.f32 0.0, %v8176
      %v8178 = vpop.f32.mrf.mxu0
      %v8179 = vadd.f32 0.0, %v8178
      %8180 = vmatmul.bf16.gmra.mxu0 %v8159
      %v8181 = vpop.f32.mrf.mxu0
      %v8182 = vadd.f32 0.0, %v8181
      %v8183 = vpop.f32.mrf.mxu0
      %v8184 = vadd.f32 0.0, %v8183
      %8185 = vmatmul.bf16.gmra.mxu0 %v8162
      %v8186 = vpop.f32.mrf.mxu0
      %v8187 = vadd.f32 0.0, %v8186
      %v8188 = vpop.f32.mrf.mxu0
      %v8189 = vadd.f32 0.0, %v8188
      %8190 = vmatmul.bf16.gmra.mxu0 %v8165
      %v8191 = vpop.f32.mrf.mxu0
      %v8192 = vadd.f32 0.0, %v8191
      %v8193 = vpop.f32.mrf.mxu0
      %v8194 = vadd.f32 0.0, %v8193
      %8195 = vdwg.mxu0
      %v8196 = vrot.slane %v998, 4
      %v8197 = vrot.slane %v999, 4
      %v8198 = vrot.slane %v1000, 4
      %v8199 = vrot.slane %v1001, 4
      %v8200 = vrot.slane %v1002, 4
      %v8201 = vrot.slane %v1003, 4
      %v8202 = vrot.slane %v1004, 4
      %v8203 = vrot.slane %v1005, 4
      %v8212 = vunpack.c.l.b16 %v7670
      %v8213 = vunpack.c.l.b16 %v7671
      %v8214 = vunpack.c.l.b16 %v7672
      %v8215 = vunpack.c.l.b16 %v7673
      %v8216 = vunpack.c.l.b16 %v7674
      %v8217 = vunpack.c.l.b16 %v7675
      %v8218 = vunpack.c.l.b16 %v7676
      %v8219 = vunpack.c.l.b16 %v7677
      %v8220 = vpack.c.b16 %v8213, %v8212
      %v8221 = vpack.c.b16 %v8215, %v8214
      %v8222 = vpack.c.b16 %v8217, %v8216
      %v8223 = vpack.c.b16 %v8219, %v8218
      %v8224 = vunpack.c.l.b16 %v8196
      %v8225 = vunpack.c.l.b16 %v8197
      %v8226 = vunpack.c.l.b16 %v8198
      %v8227 = vunpack.c.l.b16 %v8199
      %v8228 = vunpack.c.l.b16 %v8200
      %v8229 = vunpack.c.l.b16 %v8201
      %v8230 = vunpack.c.l.b16 %v8202
      %v8231 = vunpack.c.l.b16 %v8203
      %v8232 = vpack.c.b16 %v8225, %v8224
      %v8233 = vpack.c.b16 %v8227, %v8226
      %v8234 = vpack.c.b16 %v8229, %v8228
      %v8235 = vpack.c.b16 %v8231, %v8230
      %v8241 = vsel %vm1807, %v8220, 0
      %v8244 = vsel %vm1807, %v8221, 0
      %v8247 = vsel %vm1807, %v8222, 0
      %v8250 = vsel %vm1807, %v8223, 0
      %8252 = vmatpush.bf16.msra.mxu0 0
      %8253 = vmatpush.bf16.msra.mxu0 0
      %8254 = vmatpush.bf16.msra.mxu0 0
      %8255 = vmatpush.bf16.msra.mxu0 0
      %8256 = vmatpush.bf16.msra.mxu0 %v8235
      %8257 = vmatpush.bf16.msra.mxu0 %v8234
      %8258 = vmatpush.bf16.msra.mxu0 %v8233
      %8259 = vmatpush.bf16.msra.mxu0 %v8232
      %8260 = vmatmul.bf16.gmra.mxu0 %v8241
      %v8261 = vpop.f32.mrf.mxu0
      %v8262 = vadd.f32 0.0, %v8261
      %v8263 = vpop.f32.mrf.mxu0
      %v8264 = vadd.f32 0.0, %v8263
      %8265 = vmatmul.bf16.gmra.mxu0 %v8244
      %v8266 = vpop.f32.mrf.mxu0
      %v8267 = vadd.f32 0.0, %v8266
      %v8268 = vpop.f32.mrf.mxu0
      %v8269 = vadd.f32 0.0, %v8268
      %8270 = vmatmul.bf16.gmra.mxu0 %v8247
      %v8271 = vpop.f32.mrf.mxu0
      %v8272 = vadd.f32 0.0, %v8271
      %v8273 = vpop.f32.mrf.mxu0
      %v8274 = vadd.f32 0.0, %v8273
      %8275 = vmatmul.bf16.gmra.mxu0 %v8250
      %v8276 = vpop.f32.mrf.mxu0
      %v8277 = vadd.f32 0.0, %v8276
      %v8278 = vpop.f32.mrf.mxu0
      %v8279 = vadd.f32 0.0, %v8278
      %8280 = vdwg.mxu0
      %v8281 = vrot.slane %v1006, 4
      %v8282 = vrot.slane %v1007, 4
      %v8283 = vrot.slane %v1008, 4
      %v8284 = vrot.slane %v1009, 4
      %v8285 = vrot.slane %v1010, 4
      %v8286 = vrot.slane %v1011, 4
      %v8287 = vrot.slane %v1012, 4
      %v8288 = vrot.slane %v1013, 4
      %v8297 = vunpack.c.l.b16 %v7678
      %v8298 = vunpack.c.l.b16 %v7679
      %v8299 = vunpack.c.l.b16 %v7680
      %v8300 = vunpack.c.l.b16 %v7681
      %v8301 = vunpack.c.l.b16 %v7682
      %v8302 = vunpack.c.l.b16 %v7683
      %v8303 = vunpack.c.l.b16 %v7684
      %v8304 = vunpack.c.l.b16 %v7685
      %v8305 = vpack.c.b16 %v8298, %v8297
      %v8306 = vpack.c.b16 %v8300, %v8299
      %v8307 = vpack.c.b16 %v8302, %v8301
      %v8308 = vpack.c.b16 %v8304, %v8303
      %v8309 = vunpack.c.l.b16 %v8281
      %v8310 = vunpack.c.l.b16 %v8282
      %v8311 = vunpack.c.l.b16 %v8283
      %v8312 = vunpack.c.l.b16 %v8284
      %v8313 = vunpack.c.l.b16 %v8285
      %v8314 = vunpack.c.l.b16 %v8286
      %v8315 = vunpack.c.l.b16 %v8287
      %v8316 = vunpack.c.l.b16 %v8288
      %v8317 = vpack.c.b16 %v8310, %v8309
      %v8318 = vpack.c.b16 %v8312, %v8311
      %v8319 = vpack.c.b16 %v8314, %v8313
      %v8320 = vpack.c.b16 %v8316, %v8315
      %v8326 = vsel %vm1807, %v8305, 0
      %v8329 = vsel %vm1807, %v8306, 0
      %v8332 = vsel %vm1807, %v8307, 0
      %v8335 = vsel %vm1807, %v8308, 0
      %8337 = vmatpush.bf16.msra.mxu0 0
      %8338 = vmatpush.bf16.msra.mxu0 0
      %8339 = vmatpush.bf16.msra.mxu0 0
      %8340 = vmatpush.bf16.msra.mxu0 0
      %8341 = vmatpush.bf16.msra.mxu0 %v8320
      %8342 = vmatpush.bf16.msra.mxu0 %v8319
      %8343 = vmatpush.bf16.msra.mxu0 %v8318
      %8344 = vmatpush.bf16.msra.mxu0 %v8317
      %8345 = vmatmul.bf16.gmra.mxu0 %v8326
      %v8346 = vpop.f32.mrf.mxu0
      %v8347 = vadd.f32 0.0, %v8346
      %v8348 = vpop.f32.mrf.mxu0
      %v8349 = vadd.f32 0.0, %v8348
      %8350 = vmatmul.bf16.gmra.mxu0 %v8329
      %v8351 = vpop.f32.mrf.mxu0
      %v8352 = vadd.f32 0.0, %v8351
      %v8353 = vpop.f32.mrf.mxu0
      %v8354 = vadd.f32 0.0, %v8353
      %8355 = vmatmul.bf16.gmra.mxu0 %v8332
      %v8356 = vpop.f32.mrf.mxu0
      %v8357 = vadd.f32 0.0, %v8356
      %v8358 = vpop.f32.mrf.mxu0
      %v8359 = vadd.f32 0.0, %v8358
      %8360 = vmatmul.bf16.gmra.mxu0 %v8335
      %v8361 = vpop.f32.mrf.mxu0
      %v8362 = vadd.f32 0.0, %v8361
      %v8363 = vpop.f32.mrf.mxu0
      %v8364 = vadd.f32 0.0, %v8363
      %8365 = vdwg.mxu0
      %v8366 = vmul.f32 %v7752, %v7558
      %v8367 = vmul.f32 %v7754, %v7559
      %v8368 = vmul.f32 %v7757, %v7560
      %v8369 = vmul.f32 %v7759, %v7561
      %v8370 = vmul.f32 %v7762, %v7562
      %v8371 = vmul.f32 %v7764, %v7563
      %v8372 = vmul.f32 %v7767, %v7564
      %v8373 = vmul.f32 %v7769, %v7565
      %v8374 = vmul.f32 %v7837, %v7566
      %v8375 = vmul.f32 %v7839, %v7567
      %v8376 = vmul.f32 %v7842, %v7568
      %v8377 = vmul.f32 %v7844, %v7569
      %v8378 = vmul.f32 %v7847, %v7570
      %v8379 = vmul.f32 %v7849, %v7571
      %v8380 = vmul.f32 %v7852, %v7572
      %v8381 = vmul.f32 %v7854, %v7573
      %v8382 = vmul.f32 %v7922, %v7574
      %v8383 = vmul.f32 %v7924, %v7575
      %v8384 = vmul.f32 %v7927, %v7576
      %v8385 = vmul.f32 %v7929, %v7577
      %v8386 = vmul.f32 %v7932, %v7578
      %v8387 = vmul.f32 %v7934, %v7579
      %v8388 = vmul.f32 %v7937, %v7580
      %v8389 = vmul.f32 %v7939, %v7581
      %v8390 = vmul.f32 %v8007, %v7582
      %v8391 = vmul.f32 %v8009, %v7583
      %v8392 = vmul.f32 %v8012, %v7584
      %v8393 = vmul.f32 %v8014, %v7585
      %v8394 = vmul.f32 %v8017, %v7586
      %v8395 = vmul.f32 %v8019, %v7587
      %v8396 = vmul.f32 %v8022, %v7588
      %v8397 = vmul.f32 %v8024, %v7589
      %v8398 = vmul.f32 %v8092, %v7590
      %v8399 = vmul.f32 %v8094, %v7591
      %v8400 = vmul.f32 %v8097, %v7592
      %v8401 = vmul.f32 %v8099, %v7593
      %v8402 = vmul.f32 %v8102, %v7594
      %v8403 = vmul.f32 %v8104, %v7595
      %v8404 = vmul.f32 %v8107, %v7596
      %v8405 = vmul.f32 %v8109, %v7597
      %v8406 = vmul.f32 %v8177, %v7598
      %v8407 = vmul.f32 %v8179, %v7599
      %v8408 = vmul.f32 %v8182, %v7600
      %v8409 = vmul.f32 %v8184, %v7601
      %v8410 = vmul.f32 %v8187, %v7602
      %v8411 = vmul.f32 %v8189, %v7603
      %v8412 = vmul.f32 %v8192, %v7604
      %v8413 = vmul.f32 %v8194, %v7605
      %v8414 = vmul.f32 %v8262, %v7606
      %v8415 = vmul.f32 %v8264, %v7607
      %v8416 = vmul.f32 %v8267, %v7608
      %v8417 = vmul.f32 %v8269, %v7609
      %v8418 = vmul.f32 %v8272, %v7610
      %v8419 = vmul.f32 %v8274, %v7611
      %v8420 = vmul.f32 %v8277, %v7612
      %v8421 = vmul.f32 %v8279, %v7613
      %v8422 = vmul.f32 %v8347, %v7614
      %v8423 = vmul.f32 %v8349, %v7615
      %v8424 = vmul.f32 %v8352, %v7616
      %v8425 = vmul.f32 %v8354, %v7617
      %v8426 = vmul.f32 %v8357, %v7618
      %v8427 = vmul.f32 %v8359, %v7619
      %v8428 = vmul.f32 %v8362, %v7620
      %v8429 = vmul.f32 %v8364, %v7621
      %v8430 = vadd.f32 %v6772, %v8366
      %v8431 = vadd.f32 %v6773, %v8367
      %v8432 = vadd.f32 %v6774, %v8368
      %v8433 = vadd.f32 %v6775, %v8369
      %v8434 = vadd.f32 %v6776, %v8370
      %v8435 = vadd.f32 %v6777, %v8371
      %v8436 = vadd.f32 %v6778, %v8372
      %v8437 = vadd.f32 %v6779, %v8373
      %v8438 = vadd.f32 %v6780, %v8374
      %v8439 = vadd.f32 %v6781, %v8375
      %v8440 = vadd.f32 %v6782, %v8376
      %v8441 = vadd.f32 %v6783, %v8377
      %v8442 = vadd.f32 %v6784, %v8378
      %v8443 = vadd.f32 %v6785, %v8379
      %v8444 = vadd.f32 %v6786, %v8380
      %v8445 = vadd.f32 %v6787, %v8381
      %v8446 = vadd.f32 %v6788, %v8382
      %v8447 = vadd.f32 %v6789, %v8383
      %v8448 = vadd.f32 %v6790, %v8384
      %v8449 = vadd.f32 %v6791, %v8385
      %v8450 = vadd.f32 %v6792, %v8386
      %v8451 = vadd.f32 %v6793, %v8387
      %v8452 = vadd.f32 %v6794, %v8388
      %v8453 = vadd.f32 %v6795, %v8389
      %v8454 = vadd.f32 %v6796, %v8390
      %v8455 = vadd.f32 %v6797, %v8391
      %v8456 = vadd.f32 %v6798, %v8392
      %v8457 = vadd.f32 %v6799, %v8393
      %v8458 = vadd.f32 %v6800, %v8394
      %v8459 = vadd.f32 %v6801, %v8395
      %v8460 = vadd.f32 %v6802, %v8396
      %v8461 = vadd.f32 %v6803, %v8397
      %v8462 = vadd.f32 %v6804, %v8398
      %v8463 = vadd.f32 %v6805, %v8399
      %v8464 = vadd.f32 %v6806, %v8400
      %v8465 = vadd.f32 %v6807, %v8401
      %v8466 = vadd.f32 %v6808, %v8402
      %v8467 = vadd.f32 %v6809, %v8403
      %v8468 = vadd.f32 %v6810, %v8404
      %v8469 = vadd.f32 %v6811, %v8405
      %v8470 = vadd.f32 %v6812, %v8406
      %v8471 = vadd.f32 %v6813, %v8407
      %v8472 = vadd.f32 %v6814, %v8408
      %v8473 = vadd.f32 %v6815, %v8409
      %v8474 = vadd.f32 %v6816, %v8410
      %v8475 = vadd.f32 %v6817, %v8411
      %v8476 = vadd.f32 %v6818, %v8412
      %v8477 = vadd.f32 %v6819, %v8413
      %v8478 = vadd.f32 %v6820, %v8414
      %v8479 = vadd.f32 %v6821, %v8415
      %v8480 = vadd.f32 %v6822, %v8416
      %v8481 = vadd.f32 %v6823, %v8417
      %v8482 = vadd.f32 %v6824, %v8418
      %v8483 = vadd.f32 %v6825, %v8419
      %v8484 = vadd.f32 %v6826, %v8420
      %v8485 = vadd.f32 %v6827, %v8421
      %v8486 = vadd.f32 %v6828, %v8422
      %v8487 = vadd.f32 %v6829, %v8423
      %v8488 = vadd.f32 %v6830, %v8424
      %v8489 = vadd.f32 %v6831, %v8425
      %v8490 = vadd.f32 %v6832, %v8426
      %v8491 = vadd.f32 %v6833, %v8427
      %v8492 = vadd.f32 %v6834, %v8428
      %v8493 = vadd.f32 %v6835, %v8429
      %v8494 = vld [vmem:[%s5] sm:$0x1]
      %v8496 = vperm.slane %v8494, 0
      %v8498 = vadd.f32 %v8430, %v8496
      %v8499 = vadd.f32 %v8431, %v8496
      %v8500 = vadd.f32 %v8432, %v8496
      %v8501 = vadd.f32 %v8433, %v8496
      %v8502 = vadd.f32 %v8434, %v8496
      %v8503 = vadd.f32 %v8435, %v8496
      %v8504 = vadd.f32 %v8436, %v8496
      %v8505 = vadd.f32 %v8437, %v8496
      %v8506 = vadd.f32 %v8438, %v8496
      %v8507 = vadd.f32 %v8439, %v8496
      %v8508 = vadd.f32 %v8440, %v8496
      %v8509 = vadd.f32 %v8441, %v8496
      %v8510 = vadd.f32 %v8442, %v8496
      %v8511 = vadd.f32 %v8443, %v8496
      %v8512 = vadd.f32 %v8444, %v8496
      %v8513 = vadd.f32 %v8445, %v8496
      %v8514 = vadd.f32 %v8446, %v8496
      %v8515 = vadd.f32 %v8447, %v8496
      %v8516 = vadd.f32 %v8448, %v8496
      %v8517 = vadd.f32 %v8449, %v8496
      %v8518 = vadd.f32 %v8450, %v8496
      %v8519 = vadd.f32 %v8451, %v8496
      %v8520 = vadd.f32 %v8452, %v8496
      %v8521 = vadd.f32 %v8453, %v8496
      %v8522 = vadd.f32 %v8454, %v8496
      %v8523 = vadd.f32 %v8455, %v8496
      %v8524 = vadd.f32 %v8456, %v8496
      %v8525 = vadd.f32 %v8457, %v8496
      %v8526 = vadd.f32 %v8458, %v8496
      %v8527 = vadd.f32 %v8459, %v8496
      %v8528 = vadd.f32 %v8460, %v8496
      %v8529 = vadd.f32 %v8461, %v8496
      %v8530 = vadd.f32 %v8462, %v8496
      %v8531 = vadd.f32 %v8463, %v8496
      %v8532 = vadd.f32 %v8464, %v8496
      %v8533 = vadd.f32 %v8465, %v8496
      %v8534 = vadd.f32 %v8466, %v8496
      %v8535 = vadd.f32 %v8467, %v8496
      %v8536 = vadd.f32 %v8468, %v8496
      %v8537 = vadd.f32 %v8469, %v8496
      %v8538 = vadd.f32 %v8470, %v8496
      %v8539 = vadd.f32 %v8471, %v8496
      %v8540 = vadd.f32 %v8472, %v8496
      %v8541 = vadd.f32 %v8473, %v8496
      %v8542 = vadd.f32 %v8474, %v8496
      %v8543 = vadd.f32 %v8475, %v8496
      %v8544 = vadd.f32 %v8476, %v8496
      %v8545 = vadd.f32 %v8477, %v8496
      %v8546 = vadd.f32 %v8478, %v8496
      %v8547 = vadd.f32 %v8479, %v8496
      %v8548 = vadd.f32 %v8480, %v8496
      %v8549 = vadd.f32 %v8481, %v8496
      %v8550 = vadd.f32 %v8482, %v8496
      %v8551 = vadd.f32 %v8483, %v8496
      %v8552 = vadd.f32 %v8484, %v8496
      %v8553 = vadd.f32 %v8485, %v8496
      %v8554 = vadd.f32 %v8486, %v8496
      %v8555 = vadd.f32 %v8487, %v8496
      %v8556 = vadd.f32 %v8488, %v8496
      %v8557 = vadd.f32 %v8489, %v8496
      %v8558 = vadd.f32 %v8490, %v8496
      %v8559 = vadd.f32 %v8491, %v8496
      %v8560 = vadd.f32 %v8492, %v8496
      %v8561 = vadd.f32 %v8493, %v8496
      %v8562 = vpack.c.bf16 %v8498, %v8498
      %v8563 = vpack.c.bf16 %v8499, %v8499
      %v8564 = vpack.c.bf16 %v8500, %v8500
      %v8565 = vpack.c.bf16 %v8501, %v8501
      %v8566 = vpack.c.bf16 %v8502, %v8502
      %v8567 = vpack.c.bf16 %v8503, %v8503
      %v8568 = vpack.c.bf16 %v8504, %v8504
      %v8569 = vpack.c.bf16 %v8505, %v8505
      %v8570 = vpack.c.bf16 %v8506, %v8506
      %v8571 = vpack.c.bf16 %v8507, %v8507
      %v8572 = vpack.c.bf16 %v8508, %v8508
      %v8573 = vpack.c.bf16 %v8509, %v8509
      %v8574 = vpack.c.bf16 %v8510, %v8510
      %v8575 = vpack.c.bf16 %v8511, %v8511
      %v8576 = vpack.c.bf16 %v8512, %v8512
      %v8577 = vpack.c.bf16 %v8513, %v8513
      %v8578 = vpack.c.bf16 %v8514, %v8514
      %v8579 = vpack.c.bf16 %v8515, %v8515
      %v8580 = vpack.c.bf16 %v8516, %v8516
      %v8581 = vpack.c.bf16 %v8517, %v8517
      %v8582 = vpack.c.bf16 %v8518, %v8518
      %v8583 = vpack.c.bf16 %v8519, %v8519
      %v8584 = vpack.c.bf16 %v8520, %v8520
      %v8585 = vpack.c.bf16 %v8521, %v8521
      %v8586 = vpack.c.bf16 %v8522, %v8522
      %v8587 = vpack.c.bf16 %v8523, %v8523
      %v8588 = vpack.c.bf16 %v8524, %v8524
      %v8589 = vpack.c.bf16 %v8525, %v8525
      %v8590 = vpack.c.bf16 %v8526, %v8526
      %v8591 = vpack.c.bf16 %v8527, %v8527
      %v8592 = vpack.c.bf16 %v8528, %v8528
      %v8593 = vpack.c.bf16 %v8529, %v8529
      %v8594 = vpack.c.bf16 %v8530, %v8530
      %v8595 = vpack.c.bf16 %v8531, %v8531
      %v8596 = vpack.c.bf16 %v8532, %v8532
      %v8597 = vpack.c.bf16 %v8533, %v8533
      %v8598 = vpack.c.bf16 %v8534, %v8534
      %v8599 = vpack.c.bf16 %v8535, %v8535
      %v8600 = vpack.c.bf16 %v8536, %v8536
      %v8601 = vpack.c.bf16 %v8537, %v8537
      %v8602 = vpack.c.bf16 %v8538, %v8538
      %v8603 = vpack.c.bf16 %v8539, %v8539
      %v8604 = vpack.c.bf16 %v8540, %v8540
      %v8605 = vpack.c.bf16 %v8541, %v8541
      %v8606 = vpack.c.bf16 %v8542, %v8542
      %v8607 = vpack.c.bf16 %v8543, %v8543
      %v8608 = vpack.c.bf16 %v8544, %v8544
      %v8609 = vpack.c.bf16 %v8545, %v8545
      %v8610 = vpack.c.bf16 %v8546, %v8546
      %v8611 = vpack.c.bf16 %v8547, %v8547
      %v8612 = vpack.c.bf16 %v8548, %v8548
      %v8613 = vpack.c.bf16 %v8549, %v8549
      %v8614 = vpack.c.bf16 %v8550, %v8550
      %v8615 = vpack.c.bf16 %v8551, %v8551
      %v8616 = vpack.c.bf16 %v8552, %v8552
      %v8617 = vpack.c.bf16 %v8553, %v8553
      %v8618 = vpack.c.bf16 %v8554, %v8554
      %v8619 = vpack.c.bf16 %v8555, %v8555
      %v8620 = vpack.c.bf16 %v8556, %v8556
      %v8621 = vpack.c.bf16 %v8557, %v8557
      %v8622 = vpack.c.bf16 %v8558, %v8558
      %v8623 = vpack.c.bf16 %v8559, %v8559
      %v8624 = vpack.c.bf16 %v8560, %v8560
      %v8625 = vpack.c.bf16 %v8561, %v8561
      %vm8626 = vcmask 257024
      %8627 = vst.msk [vmem:[%s258] sm:$0xf] %vm8626, %v8562
      %8628 = vst.msk [vmem:[%s258 + $0x4] sm:$0xf] %vm8626, %v8563
      %8629 = vst.msk [vmem:[%s258 + $0x8] sm:$0xf] %vm8626, %v8564
      %8630 = vst.msk [vmem:[%s258 + $0xc] sm:$0xf] %vm8626, %v8565
      %8631 = vst.msk [vmem:[%s258 + $0x10] sm:$0xf] %vm8626, %v8566
      %8632 = vst.msk [vmem:[%s258 + $0x14] sm:$0xf] %vm8626, %v8567
      %8633 = vst.msk [vmem:[%s258 + $0x18] sm:$0xf] %vm8626, %v8568
      %8634 = vst.msk [vmem:[%s258 + $0x1c] sm:$0xf] %vm8626, %v8569
      %8635 = vst.msk [vmem:[%s258 + $0x20] sm:$0xf] %vm8626, %v8570
      %8636 = vst.msk [vmem:[%s258 + $0x24] sm:$0xf] %vm8626, %v8571
      %8637 = vst.msk [vmem:[%s258 + $0x28] sm:$0xf] %vm8626, %v8572
      %8638 = vst.msk [vmem:[%s258 + $0x2c] sm:$0xf] %vm8626, %v8573
      %8639 = vst.msk [vmem:[%s258 + $0x30] sm:$0xf] %vm8626, %v8574
      %8640 = vst.msk [vmem:[%s258 + $0x34] sm:$0xf] %vm8626, %v8575
      %8641 = vst.msk [vmem:[%s258 + $0x38] sm:$0xf] %vm8626, %v8576
      %8642 = vst.msk [vmem:[%s258 + $0x3c] sm:$0xf] %vm8626, %v8577
      %8643 = vst.msk [vmem:[%s258 + $0x40] sm:$0xf] %vm8626, %v8578
      %8644 = vst.msk [vmem:[%s258 + $0x44] sm:$0xf] %vm8626, %v8579
      %8645 = vst.msk [vmem:[%s258 + $0x48] sm:$0xf] %vm8626, %v8580
      %8646 = vst.msk [vmem:[%s258 + $0x4c] sm:$0xf] %vm8626, %v8581
      %8647 = vst.msk [vmem:[%s258 + $0x50] sm:$0xf] %vm8626, %v8582
      %8648 = vst.msk [vmem:[%s258 + $0x54] sm:$0xf] %vm8626, %v8583
      %8649 = vst.msk [vmem:[%s258 + $0x58] sm:$0xf] %vm8626, %v8584
      %8650 = vst.msk [vmem:[%s258 + $0x5c] sm:$0xf] %vm8626, %v8585
      %8651 = vst.msk [vmem:[%s258 + $0x60] sm:$0xf] %vm8626, %v8586
      %8652 = vst.msk [vmem:[%s258 + $0x64] sm:$0xf] %vm8626, %v8587
      %8653 = vst.msk [vmem:[%s258 + $0x68] sm:$0xf] %vm8626, %v8588
      %8654 = vst.msk [vmem:[%s258 + $0x6c] sm:$0xf] %vm8626, %v8589
      %8655 = vst.msk [vmem:[%s258 + $0x70] sm:$0xf] %vm8626, %v8590
      %8656 = vst.msk [vmem:[%s258 + $0x74] sm:$0xf] %vm8626, %v8591
      %8657 = vst.msk [vmem:[%s258 + $0x78] sm:$0xf] %vm8626, %v8592
      %8658 = vst.msk [vmem:[%s258 + $0x7c] sm:$0xf] %vm8626, %v8593
      %8659 = vst.msk [vmem:[%s258 + $0x80] sm:$0xf] %vm8626, %v8594
      %8660 = vst.msk [vmem:[%s258 + $0x84] sm:$0xf] %vm8626, %v8595
      %8661 = vst.msk [vmem:[%s258 + $0x88] sm:$0xf] %vm8626, %v8596
      %8662 = vst.msk [vmem:[%s258 + $0x8c] sm:$0xf] %vm8626, %v8597
      %8663 = vst.msk [vmem:[%s258 + $0x90] sm:$0xf] %vm8626, %v8598
      %8664 = vst.msk [vmem:[%s258 + $0x94] sm:$0xf] %vm8626, %v8599
      %8665 = vst.msk [vmem:[%s258 + $0x98] sm:$0xf] %vm8626, %v8600
      %8666 = vst.msk [vmem:[%s258 + $0x9c] sm:$0xf] %vm8626, %v8601
      %8667 = vst.msk [vmem:[%s258 + $0xa0] sm:$0xf] %vm8626, %v8602
      %8668 = vst.msk [vmem:[%s258 + $0xa4] sm:$0xf] %vm8626, %v8603
      %8669 = vst.msk [vmem:[%s258 + $0xa8] sm:$0xf] %vm8626, %v8604
      %8670 = vst.msk [vmem:[%s258 + $0xac] sm:$0xf] %vm8626, %v8605
      %8671 = vst.msk [vmem:[%s258 + $0xb0] sm:$0xf] %vm8626, %v8606
      %8672 = vst.msk [vmem:[%s258 + $0xb4] sm:$0xf] %vm8626, %v8607
      %8673 = vst.msk [vmem:[%s258 + $0xb8] sm:$0xf] %vm8626, %v8608
      %8674 = vst.msk [vmem:[%s258 + $0xbc] sm:$0xf] %vm8626, %v8609
      %8675 = vst.msk [vmem:[%s258 + $0xc0] sm:$0xf] %vm8626, %v8610
      %8676 = vst.msk [vmem:[%s258 + $0xc4] sm:$0xf] %vm8626, %v8611
      %8677 = vst.msk [vmem:[%s258 + $0xc8] sm:$0xf] %vm8626, %v8612
      %8678 = vst.msk [vmem:[%s258 + $0xcc] sm:$0xf] %vm8626, %v8613
      %8679 = vst.msk [vmem:[%s258 + $0xd0] sm:$0xf] %vm8626, %v8614
      %8680 = vst.msk [vmem:[%s258 + $0xd4] sm:$0xf] %vm8626, %v8615
      %8681 = vst.msk [vmem:[%s258 + $0xd8] sm:$0xf] %vm8626, %v8616
      %8682 = vst.msk [vmem:[%s258 + $0xdc] sm:$0xf] %vm8626, %v8617
      %8683 = vst.msk [vmem:[%s258 + $0xe0] sm:$0xf] %vm8626, %v8618
      %8684 = vst.msk [vmem:[%s258 + $0xe4] sm:$0xf] %vm8626, %v8619
      %8685 = vst.msk [vmem:[%s258 + $0xe8] sm:$0xf] %vm8626, %v8620
      %8686 = vst.msk [vmem:[%s258 + $0xec] sm:$0xf] %vm8626, %v8621
      %8687 = vst.msk [vmem:[%s258 + $0xf0] sm:$0xf] %vm8626, %v8622
      %8688 = vst.msk [vmem:[%s258 + $0xf4] sm:$0xf] %vm8626, %v8623
      %8689 = vst.msk [vmem:[%s258 + $0xf8] sm:$0xf] %vm8626, %v8624
      %8690 = vst.msk [vmem:[%s258 + $0xfc] sm:$0xf] %vm8626, %v8625
      %s8691 = smul.u32 8, %s17
      %p8692 = scmp.lt.s32.totalorder %s8691, 15
      %s8693 = scalar_select %p8692, %s8691, 15
      %s8694 = smul.addr %s8693, 8
      %s8695 = smul.addr %s8694, 4
      %s8696 = scalar_lea.vmem %s6, %s8695
      // Predicated region
      $region45: #{tpu_custom_call.1} parent=43 // pred_check
        %p8697 = pneg %p166
      $region46: #{tpu_custom_call.1} parent=43 // pred_check_branch
        %8699 = sbr.rel (%p8697) target = $region48
      $region47: #{tpu_custom_call.1} parent=43 // pred_region
        %s8700 = smul.u32 8, %s17
      $region48: #{tpu_custom_call.1} parent=43 // pred_fallthru
        _
    $region44: #{tpu_custom_call.1} parent=5 // pred_fallthru
      _
    %p8701 = scmp.le.s32.totalorder 2, %s12
    // Predicated region
    $region49: #{tpu_custom_call.1} parent=5 // pred_check
      %p8702 = pneg %p8701
    $region50: #{tpu_custom_call.1} parent=5 // pred_check_branch
      %8704 = sbr.rel (%p8702) target = $region52
    $region51: #{tpu_custom_call.1} parent=5 // pred_region
      %s8705 = ssub.s32 %s12, 2
      // Predicated region
      $region53: #{tpu_custom_call.1} parent=51 // pred_check
        %p8706 = pneg %p172
      $region54: #{tpu_custom_call.1} parent=51 // pred_check_branch
        %8708 = sbr.rel (%p8706) target = $region56
      $region55: #{tpu_custom_call.1} parent=51 // pred_region
        %s8709 = smul.u32 8, %s18
        %p8710 = scmp.lt.s32.totalorder %s8709, 15
        %s8711 = scalar_select %p8710, %s8709, 15
        %s8712 = smul.addr %s8711, 8
        %s8713 = smul.addr %s8712, 4
        %s8714 = scalar_lea.vmem %s6, %s8713
      $region56: #{tpu_custom_call.1} parent=51 // pred_fallthru
        _
    $region52: #{tpu_custom_call.1} parent=5 // pred_fallthru
      _
  $region6: #{tpu_custom_call.1} parent=0 // loop_footer
    %s16 = sadd.s32 1, %s12
  $region7: #{tpu_custom_call.1} parent=0 // loop_footer_branch
    %11 = sbr.rel target = $region3
  $region8: #{tpu_custom_call.1} parent=0 // loop_exit
    _

</llo_original>
